<compile_context>
chip_gen: v7x
topology: tpu7x:2x2x1
jax: 0.10.0
libtpu: 0.0.40
codegen_flags: <defaults>
</compile_context>

<pallas_src>
import functools

import jax
import jax.numpy as jnp
from jax.experimental import pallas as pl
from jax.experimental.pallas import tpu as pltpu


# ----------------------------- in-kernel math helpers -----------------------------

def _silu(x):
    # x * sigmoid(x); reciprocal goes to the EUP slot (approx), exp is EUP as well.
    return x * pl.reciprocal(1.0 + jnp.exp(-x), approx=True)


def _erf(x):
    # Abramowitz & Stegun 7.1.26 polynomial (|abs err| < 1.5e-7).
    # TODO(synk): lax.erf has no Pallas/Mosaic TPU lowering; this polynomial stands in
    # for torch.nn.GELU()'s exact erf-based formulation.
    a1, a2, a3, a4, a5 = 0.254829592, -0.284496736, 1.421413741, -1.453152027, 1.061405429
    p = 0.3275911
    sgn = jnp.where(x >= 0.0, 1.0, -1.0)
    ax = jnp.abs(x)
    t = pl.reciprocal(1.0 + p * ax, approx=True)          # EUP instead of VPU divide
    poly = ((((a5 * t + a4) * t + a3) * t + a2) * t + a1) * t
    y = 1.0 - poly * jnp.exp(-ax * ax)
    return sgn * y


def _gelu(x):
    # exact (erf-based) GELU, matching torch.nn.GELU() default
    return 0.5 * x * (1.0 + _erf(x * 0.7071067811865475))


def _group_norm(h, gamma, beta, G, S, P, eps=1e-5):
    """GroupNorm on (C, S*P) activations (channels on sublanes, S folded samples on lanes).

    Statistics are per sample and per contiguous channel group, computed with lane sums +
    masked sublane reductions (pure f32 on VPU/XLU; no MXU, no bf16 truncation).
    Matches torch.nn.GroupNorm (biased variance, eps=1e-5, affine).
    """
    C = h.shape[0]
    cg = C // G
    inv_n = 1.0 / float(cg * P)
    cidx = jax.lax.broadcasted_iota(jnp.int32, (C, 1), 0)
    gmasks = [((cidx >= g * cg) & (cidx < (g + 1) * cg)).astype(jnp.float32)
              for g in range(G)]

    pieces = []
    for s in range(S):
        hs = h[:, s * P:(s + 1) * P]                               # lane-tile aligned slice
        csum = jnp.sum(hs, axis=1, keepdims=True)                  # (C, 1)
        mean = jnp.zeros((C, 1), jnp.float32)
        for g in range(G):
            sg = jnp.sum(csum * gmasks[g], axis=0, keepdims=True)  # (1, 1)
            mean = mean + gmasks[g] * sg
        mean = mean * inv_n
        d = hs - mean
        dsum = jnp.sum(d * d, axis=1, keepdims=True)               # (C, 1)
        var = jnp.zeros((C, 1), jnp.float32)
        for g in range(G):
            vg = jnp.sum(dsum * gmasks[g], axis=0, keepdims=True)
            var = var + gmasks[g] * vg
        var = var * inv_n
        pieces.append(d * jax.lax.rsqrt(var + eps))
    hn = pieces[0] if S == 1 else jnp.concatenate(pieces, axis=1)
    return hn * gamma + beta


def _depthwise7x7(h, wm_ref, W, SP):
    """Depthwise 7x7 conv, stride 1, zero padding 3, on (C, S*P) lane-folded activations.

    wm_ref: (49, C, S*P) pre-fused (tap weight x boundary mask) tables.  Each tap is one
    static lane rotation (XLU) + one VPU multiply + one add; taps reaching outside an
    image (incl. across folded-sample boundaries / roll wrap) are zeroed by the mask.
    """
    acc = None
    for dy in range(7):
        for dx in range(7):
            k = dy * 7 + dx
            s = (dy - 3) * W + (dx - 3)            # out[q] needs in[q + s]
            shift = (-s) % SP                      # roll(h, -s)[q] == h[q + s]
            rolled = h if shift == 0 else pltpu.roll(h, shift, 1)
            tap = rolled * wm_ref[k]
            acc = tap if acc is None else acc + tap
    return acc


# ----------------------------------- kernel ---------------------------------------

def _resnet_block_kernel(
    x_ref, t_ref, c_ref, wm1_ref, wm2_ref, w_ref,      # inputs
    o_ref,                                             # output
    *, H, W, S, out_dim, g1, g2, gn, has_res_conv, layout,
):
    P = H * W
    SP = S * P

    wtab = w_ref[...]                                  # one consolidated (Rmax, ncols) slab

    def gw(name):                                      # static slice -> (rows, cols) view
        r, c0, cw_ = layout[name]
        return wtab[0:r, c0:c0 + cw_]

    x = x_ref[0]                                       # (in_dim, S*P), f32, lane-dense

    # ---- t_mlp / c_mlp: Linear(SiLU(.)) per folded sample -> (out_dim, S*P) modulation ----
    t_all = t_ref[0]                                   # (S, t_dim)
    c_all = c_ref[0]                                   # (S, c_dim)
    tw, tb, cw, cb = gw("tw"), gw("tb"), gw("cw"), gw("cb")
    mods = []
    for s in range(S):
        temb = jnp.sum(tw * _silu(t_all[s:s + 1, :]), axis=1, keepdims=True) + tb
        cemb = jnp.sum(cw * _silu(c_all[s:s + 1, :]), axis=1, keepdims=True) + cb
        mods.append(jnp.broadcast_to(temb * cemb, (out_dim, P)))
    mod = mods[0] if S == 1 else jnp.concatenate(mods, axis=1)

    # ---- conv1: dw7x7 -> GroupNorm -> 1x1 (expand) -> GELU -> 1x1 (project) ----
    h = _depthwise7x7(x, wm1_ref, W, SP) + gw("dw1_b")
    h = _group_norm(h, gw("g1_g"), gw("g1_b"), g1, S, P)
    h = jnp.dot(gw("pw1a_w"), h, preferred_element_type=jnp.float32) + gw("pw1a_b")
    h = _gelu(h)
    h = jnp.dot(gw("pw1b_w"), h, preferred_element_type=jnp.float32) + gw("pw1b_b")

    # ---- norm1, modulate by (t * c), act1 ----
    h = _group_norm(h, gw("n1_g"), gw("n1_b"), gn, S, P)
    h = _silu(h * mod)

    # ---- conv2: dw7x7 -> GroupNorm -> 1x1 (expand) -> GELU -> 1x1 (project) ----
    h = _depthwise7x7(h, wm2_ref, W, SP) + gw("dw2_b")
    h = _group_norm(h, gw("g2_g"), gw("g2_b"), g2, S, P)
    h = jnp.dot(gw("pw2a_w"), h, preferred_element_type=jnp.float32) + gw("pw2a_b")
    h = _gelu(h)
    h = jnp.dot(gw("pw2b_w"), h, preferred_element_type=jnp.float32) + gw("pw2b_b")

    # ---- norm2, act2, residual ----
    h = _group_norm(h, gw("n2_g"), gw("n2_b"), gn, S, P)
    h = _silu(h)
    if has_res_conv:
        res = jnp.dot(gw("res_w"), x, preferred_element_type=jnp.float32) + gw("res_b")
    else:
        res = x
    # Lane-dense output store: last dim of the block is S*P (multiple of 128 here).
    o_ref[...] = (h + res).reshape(1, out_dim, SP)


# ----------------------------------- wrapper ---------------------------------------

def _make_tap_masks(H, W, S):
    """(49, S*H*W) 0/1 masks: 1 iff the 7x7 tap stays inside its own image."""
    P = H * W
    hh = jnp.arange(P, dtype=jnp.int32) // W
    ww = jnp.arange(P, dtype=jnp.int32) % W
    rows = []
    for dy in range(7):
        for dx in range(7):
            ok = ((hh + dy - 3 >= 0) & (hh + dy - 3 < H) &
                  (ww + dx - 3 >= 0) & (ww + dx - 3 < W))
            rows.append(ok.astype(jnp.float32))
    m = jnp.stack(rows, axis=0)                       # (49, P)
    return jnp.tile(m, (1, S))                        # replicate per folded sample


def _make_wm(dw_w, masks):
    """Fuse per-channel taps with boundary masks: (C,49),(49,SP) -> (49, C, SP)."""
    return dw_w.T[:, :, None] * masks[:, None, :]


def _pack_weight_table(params, has_res_conv):
    """Pack every small parameter array into one (Rmax, ncols) f32 slab (single DMA)."""
    names = ["tw", "tb", "cw", "cb",
             "dw1_b", "g1_g", "g1_b", "pw1a_w", "pw1a_b", "pw1b_w", "pw1b_b",
             "n1_g", "n1_b",
             "dw2_b", "g2_g", "g2_b", "pw2a_w", "pw2a_b", "pw2b_w", "pw2b_b",
             "n2_g", "n2_b"]
    if has_res_conv:
        names += ["res_w", "res_b"]
    rmax = max(params[n].shape[0] for n in names)
    layout, cols, off = {}, [], 0
    for n in names:
        a = params[n].astype(jnp.float32)
        r, c = a.shape
        layout[n] = (r, off, c)
        if r < rmax:
            a = jnp.pad(a, ((0, rmax - r), (0, 0)))
        cols.append(a)
        off += c
    return jnp.concatenate(cols, axis=1), layout


def resnet_block_forward(x_nchw, t, c, params, samples_per_step=None):
    B, Cin, H, W = x_nchw.shape
    out_dim = params["n1_g"].shape[0]
    t_dim = t.shape[1]
    c_dim = c.shape[1]
    P = H * W

    # Fold S samples into the lane axis per grid step.  Default: whole batch in one step
    # (best on single-TC v5e/v6e).  NOTE: on v7x with B > 2, pass samples_per_step=B//2
    # to keep 2 "parallel" grid steps (one per TensorCore).
    S = B if samples_per_step is None else samples_per_step
    assert B % S == 0
    nsteps = B // S
    SP = S * P

    has_res_conv = (Cin != out_dim)
    g1 = Cin // 4 if Cin > 4 else 1                   # GroupNorm inside conv1
    g2 = out_dim // 4 if out_dim > 4 else 1           # GroupNorm inside conv2
    gn = 4 if out_dim % 4 == 0 else 1                 # norm1 / norm2
    assert Cin % g1 == 0 and out_dim % g2 == 0 and out_dim % gn == 0

    # NCHW is channel-major: the fold is a cheap wrapper-side layout shuffle (8 KiB here).
    xf = (x_nchw.astype(jnp.float32).reshape(nsteps, S, Cin, P)
          .transpose(0, 2, 1, 3).reshape(nsteps, Cin, SP))
    tf = t.astype(jnp.float32).reshape(nsteps, S, t_dim)
    cf = c.astype(jnp.float32).reshape(nsteps, S, c_dim)

    masks = _make_tap_masks(H, W, S)                                  # (49, SP)
    wm1 = _make_wm(params["dw1_w"].astype(jnp.float32), masks)        # (49, Cin, SP)
    wm2 = _make_wm(params["dw2_w"].astype(jnp.float32), masks)        # (49, out, SP)
    wtab, layout = _pack_weight_table(params, has_res_conv)           # (Rmax, ncols)

    kernel = functools.partial(
        _resnet_block_kernel,
        H=H, W=W, S=S, out_dim=out_dim, g1=g1, g2=g2, gn=gn,
        has_res_conv=has_res_conv, layout=layout,
    )

    out = pl.pallas_call(
        kernel,
        out_shape=jax.ShapeDtypeStruct((nsteps, out_dim, SP), jnp.float32),
        grid=(nsteps,),
        in_specs=[
            pl.BlockSpec((1, Cin, SP), lambda b: (b, 0, 0)),
            pl.BlockSpec((1, S, t_dim), lambda b: (b, 0, 0)),
            pl.BlockSpec((1, S, c_dim), lambda b: (b, 0, 0)),
            pl.BlockSpec(wm1.shape, lambda b: (0, 0, 0)),     # constant block -> no re-DMA
            pl.BlockSpec(wm2.shape, lambda b: (0, 0, 0)),
            pl.BlockSpec(wtab.shape, lambda b: (0, 0)),
        ],
        out_specs=pl.BlockSpec((1, out_dim, SP), lambda b: (b, 0, 0)),
        compiler_params=pltpu.CompilerParams(
            dimension_semantics=("parallel",),                # 2-TC split on v7x if nsteps>1
            vmem_limit_bytes=32 * 1024 * 1024,                # conservative on all gens
        ),
    )(xf, tf, cf, wm1, wm2, wtab)

    # Unfold lanes back to (B, out_dim, H, W).
    return (out.reshape(nsteps, out_dim, S, P)
            .transpose(0, 2, 1, 3).reshape(B, out_dim, H, W))


# -------------------------------- parameter init -----------------------------------

def init_params(key, in_dim, out_dim, t_dim, c_dim):
    ks = jax.random.split(key, 18)

    def w(k, shape, scale=0.1):
        return scale * jax.random.normal(k, shape, jnp.float32)

    p = dict(
        # t_mlp / c_mlp (Linear weight in PyTorch layout (out, in); bias as column)
        tw=w(ks[0], (out_dim, t_dim)), tb=w(ks[1], (out_dim, 1)),
        cw=w(ks[2], (out_dim, c_dim)), cb=w(ks[3], (out_dim, 1)),
        # conv1: depthwise 7x7 (== torch (C,1,7,7).reshape(C,49)), GN, 1x1, GELU, 1x1
        dw1_w=w(ks[4], (in_dim, 49)), dw1_b=w(ks[5], (in_dim, 1)),
        g1_g=jnp.ones((in_dim, 1), jnp.float32), g1_b=jnp.zeros((in_dim, 1), jnp.float32),
        pw1a_w=w(ks[6], (2 * in_dim, in_dim)), pw1a_b=w(ks[7], (2 * in_dim, 1)),
        pw1b_w=w(ks[8], (out_dim, 2 * in_dim)), pw1b_b=w(ks[9], (out_dim, 1)),
        n1_g=jnp.ones((out_dim, 1), jnp.float32), n1_b=jnp.zeros((out_dim, 1), jnp.float32),
        # conv2
        dw2_w=w(ks[10], (out_dim, 49)), dw2_b=w(ks[11], (out_dim, 1)),
        g2_g=jnp.ones((out_dim, 1), jnp.float32), g2_b=jnp.zeros((out_dim, 1), jnp.float32),
        pw2a_w=w(ks[12], (2 * out_dim, out_dim)), pw2a_b=w(ks[13], (2 * out_dim, 1)),
        pw2b_w=w(ks[14], (out_dim, 2 * out_dim)), pw2b_b=w(ks[15], (out_dim, 1)),
        n2_g=jnp.ones((out_dim, 1), jnp.float32), n2_b=jnp.zeros((out_dim, 1), jnp.float32),
    )
    if in_dim != out_dim:
        p["res_w"] = w(ks[16], (out_dim, in_dim))
        p["res_b"] = w(ks[17], (out_dim, 1))
    # nn.Identity residual: no extra parameters (and none are DMA'd).
    return p


# ------------------------------------- main -----------------------------------------

if __name__ == "__main__":
    B, in_dim, out_dim, t_dim, c_dim, H, W = 2, 4, 8, 16, 16, 16, 16

    key = jax.random.PRNGKey(0)
    kx, kt, kc, kp = jax.random.split(key, 4)
    x = jax.random.normal(kx, (B, in_dim, H, W), jnp.float32)   # NCHW, like PyTorch
    t = jax.random.normal(kt, (B, t_dim), jnp.float32)
    c = jax.random.normal(kc, (B, c_dim), jnp.float32)
    params = init_params(kp, in_dim, out_dim, t_dim, c_dim)

    out = resnet_block_forward(x, t, c, params)
    jax.block_until_ready(out)
    assert out.shape == (B, out_dim, H, W)
    assert bool(jnp.all(jnp.isfinite(out)))
    print("KERNEL_OK")
</pallas_src>

<mosaic_0001>
module attributes {stable_mosaic.version = 11 : i64} {
  func.func @_resnet_block_kernel(%arg0: i32, %arg1: memref<1x4x512xf32, #tpu.memory_space<vmem>>, %arg2: memref<1x2x16xf32, #tpu.memory_space<vmem>>, %arg3: memref<1x2x16xf32, #tpu.memory_space<vmem>>, %arg4: memref<49x4x512xf32, #tpu.memory_space<vmem>>, %arg5: memref<49x8x512xf32, #tpu.memory_space<vmem>>, %arg6: memref<16x89xf32, #tpu.memory_space<vmem>>, %arg7: memref<1x8x512xf32, #tpu.memory_space<vmem>>) attributes {dimension_semantics = [#tpu.dimension_semantics<parallel>], iteration_bounds = array<i64: 1>, scalar_prefetch = 0 : i64, scratch_operands = 0 : i64, tpu.core_type = #tpu.core_type<tc>, window_params = [{transform_indices = @transform_0, window_bounds = array<i64: 1, 4, 512>}, {transform_indices = @transform_1, window_bounds = array<i64: 1, 2, 16>}, {transform_indices = @transform_2, window_bounds = array<i64: 1, 2, 16>}, {pipeline_mode = #tpu.pipeline_mode<synchronous>, transform_indices = @transform_3, window_bounds = array<i64: 49, 4, 512>}, {pipeline_mode = #tpu.pipeline_mode<synchronous>, transform_indices = @transform_4, window_bounds = array<i64: 49, 8, 512>}, {pipeline_mode = #tpu.pipeline_mode<synchronous>, transform_indices = @transform_5, window_bounds = array<i64: 16, 89>}, {transform_indices = @transform_6, window_bounds = array<i64: 1, 8, 512>}]} {
    %c0 = arith.constant 0 : index
    %c0_0 = arith.constant 0 : index
    %0 = vector.load %arg6[%c0, %c0_0] : memref<16x89xf32, #tpu.memory_space<vmem>>, vector<16x89xf32>
    %c0_1 = arith.constant 0 : index
    %c0_2 = arith.constant 0 : index
    %c0_3 = arith.constant 0 : index
    %1 = vector.load %arg1[%c0_1, %c0_2, %c0_3] : memref<1x4x512xf32, #tpu.memory_space<vmem>>, vector<1x4x512xf32>
    %2 = vector.shape_cast %1 : vector<1x4x512xf32> to vector<4x512xf32>
    %c0_4 = arith.constant 0 : index
    %c0_5 = arith.constant 0 : index
    %c0_6 = arith.constant 0 : index
    %3 = vector.load %arg2[%c0_4, %c0_5, %c0_6] : memref<1x2x16xf32, #tpu.memory_space<vmem>>, vector<1x2x16xf32>
    %4 = vector.shape_cast %3 : vector<1x2x16xf32> to vector<2x16xf32>
    %c0_7 = arith.constant 0 : index
    %c0_8 = arith.constant 0 : index
    %c0_9 = arith.constant 0 : index
    %5 = vector.load %arg3[%c0_7, %c0_8, %c0_9] : memref<1x2x16xf32, #tpu.memory_space<vmem>>, vector<1x2x16xf32>
    %6 = vector.shape_cast %5 : vector<1x2x16xf32> to vector<2x16xf32>
    %7 = vector.extract_strided_slice %0 {offsets = [0, 0], sizes = [8, 16], strides = [1, 1]} : vector<16x89xf32> to vector<8x16xf32>
    %8 = vector.extract_strided_slice %0 {offsets = [0, 16], sizes = [8, 1], strides = [1, 1]} : vector<16x89xf32> to vector<8x1xf32>
    %9 = vector.extract_strided_slice %0 {offsets = [0, 17], sizes = [8, 16], strides = [1, 1]} : vector<16x89xf32> to vector<8x16xf32>
    %10 = vector.extract_strided_slice %0 {offsets = [0, 33], sizes = [8, 1], strides = [1, 1]} : vector<16x89xf32> to vector<8x1xf32>
    %11 = vector.extract_strided_slice %4 {offsets = [0, 0], sizes = [1, 16], strides = [1, 1]} : vector<2x16xf32> to vector<1x16xf32>
    %cst = arith.constant 0.000000e+00 : f32
    %12 = vector.broadcast %cst : f32 to vector<1x16xf32>
    %13 = arith.subf %12, %11 : vector<1x16xf32>
    %14 = math.exp %13 : vector<1x16xf32>
    %cst_10 = arith.constant 1.000000e+00 : f32
    %15 = vector.broadcast %cst_10 : f32 to vector<1x16xf32>
    %16 = arith.addf %15, %14 : vector<1x16xf32>
    %17 = tpu.reciprocal %16 {approx = true} : vector<1x16xf32> -> vector<1x16xf32>
    %18 = arith.mulf %11, %17 : vector<1x16xf32>
    %19 = vector.broadcast %18 : vector<1x16xf32> to vector<8x16xf32>
    %20 = arith.mulf %7, %19 : vector<8x16xf32>
    %cst_11 = arith.constant dense<0.000000e+00> : vector<8xf32>
    %21 = vector.multi_reduction <add>, %20, %cst_11 [1] : vector<8x16xf32> to vector<8xf32>
    %22 = vector.shape_cast %21 : vector<8xf32> to vector<8x1xf32>
    %23 = arith.addf %22, %8 : vector<8x1xf32>
    %24 = vector.extract_strided_slice %6 {offsets = [0, 0], sizes = [1, 16], strides = [1, 1]} : vector<2x16xf32> to vector<1x16xf32>
    %cst_12 = arith.constant 0.000000e+00 : f32
    %25 = vector.broadcast %cst_12 : f32 to vector<1x16xf32>
    %26 = arith.subf %25, %24 : vector<1x16xf32>
    %27 = math.exp %26 : vector<1x16xf32>
    %cst_13 = arith.constant 1.000000e+00 : f32
    %28 = vector.broadcast %cst_13 : f32 to vector<1x16xf32>
    %29 = arith.addf %28, %27 : vector<1x16xf32>
    %30 = tpu.reciprocal %29 {approx = true} : vector<1x16xf32> -> vector<1x16xf32>
    %31 = arith.mulf %24, %30 : vector<1x16xf32>
    %32 = vector.broadcast %31 : vector<1x16xf32> to vector<8x16xf32>
    %33 = arith.mulf %9, %32 : vector<8x16xf32>
    %cst_14 = arith.constant dense<0.000000e+00> : vector<8xf32>
    %34 = vector.multi_reduction <add>, %33, %cst_14 [1] : vector<8x16xf32> to vector<8xf32>
    %35 = vector.shape_cast %34 : vector<8xf32> to vector<8x1xf32>
    %36 = arith.addf %35, %10 : vector<8x1xf32>
    %37 = arith.mulf %23, %36 : vector<8x1xf32>
    %38 = vector.shape_cast %37 : vector<8x1xf32> to vector<8x1xf32>
    %39 = vector.broadcast %38 : vector<8x1xf32> to vector<8x256xf32>
    %40 = vector.extract_strided_slice %4 {offsets = [1, 0], sizes = [1, 16], strides = [1, 1]} : vector<2x16xf32> to vector<1x16xf32>
    %cst_15 = arith.constant 0.000000e+00 : f32
    %41 = vector.broadcast %cst_15 : f32 to vector<1x16xf32>
    %42 = arith.subf %41, %40 : vector<1x16xf32>
    %43 = math.exp %42 : vector<1x16xf32>
    %cst_16 = arith.constant 1.000000e+00 : f32
    %44 = vector.broadcast %cst_16 : f32 to vector<1x16xf32>
    %45 = arith.addf %44, %43 : vector<1x16xf32>
    %46 = tpu.reciprocal %45 {approx = true} : vector<1x16xf32> -> vector<1x16xf32>
    %47 = arith.mulf %40, %46 : vector<1x16xf32>
    %48 = vector.broadcast %47 : vector<1x16xf32> to vector<8x16xf32>
    %49 = arith.mulf %7, %48 : vector<8x16xf32>
    %cst_17 = arith.constant dense<0.000000e+00> : vector<8xf32>
    %50 = vector.multi_reduction <add>, %49, %cst_17 [1] : vector<8x16xf32> to vector<8xf32>
    %51 = vector.shape_cast %50 : vector<8xf32> to vector<8x1xf32>
    %52 = arith.addf %51, %8 : vector<8x1xf32>
    %53 = vector.extract_strided_slice %6 {offsets = [1, 0], sizes = [1, 16], strides = [1, 1]} : vector<2x16xf32> to vector<1x16xf32>
    %cst_18 = arith.constant 0.000000e+00 : f32
    %54 = vector.broadcast %cst_18 : f32 to vector<1x16xf32>
    %55 = arith.subf %54, %53 : vector<1x16xf32>
    %56 = math.exp %55 : vector<1x16xf32>
    %cst_19 = arith.constant 1.000000e+00 : f32
    %57 = vector.broadcast %cst_19 : f32 to vector<1x16xf32>
    %58 = arith.addf %57, %56 : vector<1x16xf32>
    %59 = tpu.reciprocal %58 {approx = true} : vector<1x16xf32> -> vector<1x16xf32>
    %60 = arith.mulf %53, %59 : vector<1x16xf32>
    %61 = vector.broadcast %60 : vector<1x16xf32> to vector<8x16xf32>
    %62 = arith.mulf %9, %61 : vector<8x16xf32>
    %cst_20 = arith.constant dense<0.000000e+00> : vector<8xf32>
    %63 = vector.multi_reduction <add>, %62, %cst_20 [1] : vector<8x16xf32> to vector<8xf32>
    %64 = vector.shape_cast %63 : vector<8xf32> to vector<8x1xf32>
    %65 = arith.addf %64, %10 : vector<8x1xf32>
    %66 = arith.mulf %52, %65 : vector<8x1xf32>
    %67 = vector.shape_cast %66 : vector<8x1xf32> to vector<8x1xf32>
    %68 = vector.broadcast %67 : vector<8x1xf32> to vector<8x256xf32>
    %69 = tpu.concatenate %39, %68 in 1 : vector<8x256xf32>, vector<8x256xf32> -> vector<8x512xf32>
    %c51_i32 = arith.constant 51 : i32
    %70 = tpu.dynamic_rotate %2 by %c51_i32 dim 1 : vector<4x512xf32>, i32 -> vector<4x512xf32>
    %c0_21 = arith.constant 0 : index
    %c0_22 = arith.constant 0 : index
    %c0_23 = arith.constant 0 : index
    %71 = vector.load %arg4[%c0_21, %c0_22, %c0_23] : memref<49x4x512xf32, #tpu.memory_space<vmem>>, vector<1x4x512xf32>
    %72 = vector.shape_cast %71 : vector<1x4x512xf32> to vector<4x512xf32>
    %73 = arith.mulf %70, %72 : vector<4x512xf32>
    %c50_i32 = arith.constant 50 : i32
    %74 = tpu.dynamic_rotate %2 by %c50_i32 dim 1 : vector<4x512xf32>, i32 -> vector<4x512xf32>
    %c1 = arith.constant 1 : index
    %c0_24 = arith.constant 0 : index
    %c0_25 = arith.constant 0 : index
    %75 = vector.load %arg4[%c1, %c0_24, %c0_25] : memref<49x4x512xf32, #tpu.memory_space<vmem>>, vector<1x4x512xf32>
    %76 = vector.shape_cast %75 : vector<1x4x512xf32> to vector<4x512xf32>
    %77 = arith.mulf %74, %76 : vector<4x512xf32>
    %78 = arith.addf %73, %77 : vector<4x512xf32>
    %c49_i32 = arith.constant 49 : i32
    %79 = tpu.dynamic_rotate %2 by %c49_i32 dim 1 : vector<4x512xf32>, i32 -> vector<4x512xf32>
    %c2 = arith.constant 2 : index
    %c0_26 = arith.constant 0 : index
    %c0_27 = arith.constant 0 : index
    %80 = vector.load %arg4[%c2, %c0_26, %c0_27] : memref<49x4x512xf32, #tpu.memory_space<vmem>>, vector<1x4x512xf32>
    %81 = vector.shape_cast %80 : vector<1x4x512xf32> to vector<4x512xf32>
    %82 = arith.mulf %79, %81 : vector<4x512xf32>
    %83 = arith.addf %78, %82 : vector<4x512xf32>
    %c48_i32 = arith.constant 48 : i32
    %84 = tpu.dynamic_rotate %2 by %c48_i32 dim 1 : vector<4x512xf32>, i32 -> vector<4x512xf32>
    %c3 = arith.constant 3 : index
    %c0_28 = arith.constant 0 : index
    %c0_29 = arith.constant 0 : index
    %85 = vector.load %arg4[%c3, %c0_28, %c0_29] : memref<49x4x512xf32, #tpu.memory_space<vmem>>, vector<1x4x512xf32>
    %86 = vector.shape_cast %85 : vector<1x4x512xf32> to vector<4x512xf32>
    %87 = arith.mulf %84, %86 : vector<4x512xf32>
    %88 = arith.addf %83, %87 : vector<4x512xf32>
    %c47_i32 = arith.constant 47 : i32
    %89 = tpu.dynamic_rotate %2 by %c47_i32 dim 1 : vector<4x512xf32>, i32 -> vector<4x512xf32>
    %c4 = arith.constant 4 : index
    %c0_30 = arith.constant 0 : index
    %c0_31 = arith.constant 0 : index
    %90 = vector.load %arg4[%c4, %c0_30, %c0_31] : memref<49x4x512xf32, #tpu.memory_space<vmem>>, vector<1x4x512xf32>
    %91 = vector.shape_cast %90 : vector<1x4x512xf32> to vector<4x512xf32>
    %92 = arith.mulf %89, %91 : vector<4x512xf32>
    %93 = arith.addf %88, %92 : vector<4x512xf32>
    %c46_i32 = arith.constant 46 : i32
    %94 = tpu.dynamic_rotate %2 by %c46_i32 dim 1 : vector<4x512xf32>, i32 -> vector<4x512xf32>
    %c5 = arith.constant 5 : index
    %c0_32 = arith.constant 0 : index
    %c0_33 = arith.constant 0 : index
    %95 = vector.load %arg4[%c5, %c0_32, %c0_33] : memref<49x4x512xf32, #tpu.memory_space<vmem>>, vector<1x4x512xf32>
    %96 = vector.shape_cast %95 : vector<1x4x512xf32> to vector<4x512xf32>
    %97 = arith.mulf %94, %96 : vector<4x512xf32>
    %98 = arith.addf %93, %97 : vector<4x512xf32>
    %c45_i32 = arith.constant 45 : i32
    %99 = tpu.dynamic_rotate %2 by %c45_i32 dim 1 : vector<4x512xf32>, i32 -> vector<4x512xf32>
    %c6 = arith.constant 6 : index
    %c0_34 = arith.constant 0 : index
    %c0_35 = arith.constant 0 : index
    %100 = vector.load %arg4[%c6, %c0_34, %c0_35] : memref<49x4x512xf32, #tpu.memory_space<vmem>>, vector<1x4x512xf32>
    %101 = vector.shape_cast %100 : vector<1x4x512xf32> to vector<4x512xf32>
    %102 = arith.mulf %99, %101 : vector<4x512xf32>
    %103 = arith.addf %98, %102 : vector<4x512xf32>
    %c35_i32 = arith.constant 35 : i32
    %104 = tpu.dynamic_rotate %2 by %c35_i32 dim 1 : vector<4x512xf32>, i32 -> vector<4x512xf32>
    %c7 = arith.constant 7 : index
    %c0_36 = arith.constant 0 : index
    %c0_37 = arith.constant 0 : index
    %105 = vector.load %arg4[%c7, %c0_36, %c0_37] : memref<49x4x512xf32, #tpu.memory_space<vmem>>, vector<1x4x512xf32>
    %106 = vector.shape_cast %105 : vector<1x4x512xf32> to vector<4x512xf32>
    %107 = arith.mulf %104, %106 : vector<4x512xf32>
    %108 = arith.addf %103, %107 : vector<4x512xf32>
    %c34_i32 = arith.constant 34 : i32
    %109 = tpu.dynamic_rotate %2 by %c34_i32 dim 1 : vector<4x512xf32>, i32 -> vector<4x512xf32>
    %c8 = arith.constant 8 : index
    %c0_38 = arith.constant 0 : index
    %c0_39 = arith.constant 0 : index
    %110 = vector.load %arg4[%c8, %c0_38, %c0_39] : memref<49x4x512xf32, #tpu.memory_space<vmem>>, vector<1x4x512xf32>
    %111 = vector.shape_cast %110 : vector<1x4x512xf32> to vector<4x512xf32>
    %112 = arith.mulf %109, %111 : vector<4x512xf32>
    %113 = arith.addf %108, %112 : vector<4x512xf32>
    %c33_i32 = arith.constant 33 : i32
    %114 = tpu.dynamic_rotate %2 by %c33_i32 dim 1 : vector<4x512xf32>, i32 -> vector<4x512xf32>
    %c9 = arith.constant 9 : index
    %c0_40 = arith.constant 0 : index
    %c0_41 = arith.constant 0 : index
    %115 = vector.load %arg4[%c9, %c0_40, %c0_41] : memref<49x4x512xf32, #tpu.memory_space<vmem>>, vector<1x4x512xf32>
    %116 = vector.shape_cast %115 : vector<1x4x512xf32> to vector<4x512xf32>
    %117 = arith.mulf %114, %116 : vector<4x512xf32>
    %118 = arith.addf %113, %117 : vector<4x512xf32>
    %c32_i32 = arith.constant 32 : i32
    %119 = tpu.dynamic_rotate %2 by %c32_i32 dim 1 : vector<4x512xf32>, i32 -> vector<4x512xf32>
    %c10 = arith.constant 10 : index
    %c0_42 = arith.constant 0 : index
    %c0_43 = arith.constant 0 : index
    %120 = vector.load %arg4[%c10, %c0_42, %c0_43] : memref<49x4x512xf32, #tpu.memory_space<vmem>>, vector<1x4x512xf32>
    %121 = vector.shape_cast %120 : vector<1x4x512xf32> to vector<4x512xf32>
    %122 = arith.mulf %119, %121 : vector<4x512xf32>
    %123 = arith.addf %118, %122 : vector<4x512xf32>
    %c31_i32 = arith.constant 31 : i32
    %124 = tpu.dynamic_rotate %2 by %c31_i32 dim 1 : vector<4x512xf32>, i32 -> vector<4x512xf32>
    %c11 = arith.constant 11 : index
    %c0_44 = arith.constant 0 : index
    %c0_45 = arith.constant 0 : index
    %125 = vector.load %arg4[%c11, %c0_44, %c0_45] : memref<49x4x512xf32, #tpu.memory_space<vmem>>, vector<1x4x512xf32>
    %126 = vector.shape_cast %125 : vector<1x4x512xf32> to vector<4x512xf32>
    %127 = arith.mulf %124, %126 : vector<4x512xf32>
    %128 = arith.addf %123, %127 : vector<4x512xf32>
    %c30_i32 = arith.constant 30 : i32
    %129 = tpu.dynamic_rotate %2 by %c30_i32 dim 1 : vector<4x512xf32>, i32 -> vector<4x512xf32>
    %c12 = arith.constant 12 : index
    %c0_46 = arith.constant 0 : index
    %c0_47 = arith.constant 0 : index
    %130 = vector.load %arg4[%c12, %c0_46, %c0_47] : memref<49x4x512xf32, #tpu.memory_space<vmem>>, vector<1x4x512xf32>
    %131 = vector.shape_cast %130 : vector<1x4x512xf32> to vector<4x512xf32>
    %132 = arith.mulf %129, %131 : vector<4x512xf32>
    %133 = arith.addf %128, %132 : vector<4x512xf32>
    %c29_i32 = arith.constant 29 : i32
    %134 = tpu.dynamic_rotate %2 by %c29_i32 dim 1 : vector<4x512xf32>, i32 -> vector<4x512xf32>
    %c13 = arith.constant 13 : index
    %c0_48 = arith.constant 0 : index
    %c0_49 = arith.constant 0 : index
    %135 = vector.load %arg4[%c13, %c0_48, %c0_49] : memref<49x4x512xf32, #tpu.memory_space<vmem>>, vector<1x4x512xf32>
    %136 = vector.shape_cast %135 : vector<1x4x512xf32> to vector<4x512xf32>
    %137 = arith.mulf %134, %136 : vector<4x512xf32>
    %138 = arith.addf %133, %137 : vector<4x512xf32>
    %c19_i32 = arith.constant 19 : i32
    %139 = tpu.dynamic_rotate %2 by %c19_i32 dim 1 : vector<4x512xf32>, i32 -> vector<4x512xf32>
    %c14 = arith.constant 14 : index
    %c0_50 = arith.constant 0 : index
    %c0_51 = arith.constant 0 : index
    %140 = vector.load %arg4[%c14, %c0_50, %c0_51] : memref<49x4x512xf32, #tpu.memory_space<vmem>>, vector<1x4x512xf32>
    %141 = vector.shape_cast %140 : vector<1x4x512xf32> to vector<4x512xf32>
    %142 = arith.mulf %139, %141 : vector<4x512xf32>
    %143 = arith.addf %138, %142 : vector<4x512xf32>
    %c18_i32 = arith.constant 18 : i32
    %144 = tpu.dynamic_rotate %2 by %c18_i32 dim 1 : vector<4x512xf32>, i32 -> vector<4x512xf32>
    %c15 = arith.constant 15 : index
    %c0_52 = arith.constant 0 : index
    %c0_53 = arith.constant 0 : index
    %145 = vector.load %arg4[%c15, %c0_52, %c0_53] : memref<49x4x512xf32, #tpu.memory_space<vmem>>, vector<1x4x512xf32>
    %146 = vector.shape_cast %145 : vector<1x4x512xf32> to vector<4x512xf32>
    %147 = arith.mulf %144, %146 : vector<4x512xf32>
    %148 = arith.addf %143, %147 : vector<4x512xf32>
    %c17_i32 = arith.constant 17 : i32
    %149 = tpu.dynamic_rotate %2 by %c17_i32 dim 1 : vector<4x512xf32>, i32 -> vector<4x512xf32>
    %c16 = arith.constant 16 : index
    %c0_54 = arith.constant 0 : index
    %c0_55 = arith.constant 0 : index
    %150 = vector.load %arg4[%c16, %c0_54, %c0_55] : memref<49x4x512xf32, #tpu.memory_space<vmem>>, vector<1x4x512xf32>
    %151 = vector.shape_cast %150 : vector<1x4x512xf32> to vector<4x512xf32>
    %152 = arith.mulf %149, %151 : vector<4x512xf32>
    %153 = arith.addf %148, %152 : vector<4x512xf32>
    %c16_i32 = arith.constant 16 : i32
    %154 = tpu.dynamic_rotate %2 by %c16_i32 dim 1 : vector<4x512xf32>, i32 -> vector<4x512xf32>
    %c17 = arith.constant 17 : index
    %c0_56 = arith.constant 0 : index
    %c0_57 = arith.constant 0 : index
    %155 = vector.load %arg4[%c17, %c0_56, %c0_57] : memref<49x4x512xf32, #tpu.memory_space<vmem>>, vector<1x4x512xf32>
    %156 = vector.shape_cast %155 : vector<1x4x512xf32> to vector<4x512xf32>
    %157 = arith.mulf %154, %156 : vector<4x512xf32>
    %158 = arith.addf %153, %157 : vector<4x512xf32>
    %c15_i32 = arith.constant 15 : i32
    %159 = tpu.dynamic_rotate %2 by %c15_i32 dim 1 : vector<4x512xf32>, i32 -> vector<4x512xf32>
    %c18 = arith.constant 18 : index
    %c0_58 = arith.constant 0 : index
    %c0_59 = arith.constant 0 : index
    %160 = vector.load %arg4[%c18, %c0_58, %c0_59] : memref<49x4x512xf32, #tpu.memory_space<vmem>>, vector<1x4x512xf32>
    %161 = vector.shape_cast %160 : vector<1x4x512xf32> to vector<4x512xf32>
    %162 = arith.mulf %159, %161 : vector<4x512xf32>
    %163 = arith.addf %158, %162 : vector<4x512xf32>
    %c14_i32 = arith.constant 14 : i32
    %164 = tpu.dynamic_rotate %2 by %c14_i32 dim 1 : vector<4x512xf32>, i32 -> vector<4x512xf32>
    %c19 = arith.constant 19 : index
    %c0_60 = arith.constant 0 : index
    %c0_61 = arith.constant 0 : index
    %165 = vector.load %arg4[%c19, %c0_60, %c0_61] : memref<49x4x512xf32, #tpu.memory_space<vmem>>, vector<1x4x512xf32>
    %166 = vector.shape_cast %165 : vector<1x4x512xf32> to vector<4x512xf32>
    %167 = arith.mulf %164, %166 : vector<4x512xf32>
    %168 = arith.addf %163, %167 : vector<4x512xf32>
    %c13_i32 = arith.constant 13 : i32
    %169 = tpu.dynamic_rotate %2 by %c13_i32 dim 1 : vector<4x512xf32>, i32 -> vector<4x512xf32>
    %c20 = arith.constant 20 : index
    %c0_62 = arith.constant 0 : index
    %c0_63 = arith.constant 0 : index
    %170 = vector.load %arg4[%c20, %c0_62, %c0_63] : memref<49x4x512xf32, #tpu.memory_space<vmem>>, vector<1x4x512xf32>
    %171 = vector.shape_cast %170 : vector<1x4x512xf32> to vector<4x512xf32>
    %172 = arith.mulf %169, %171 : vector<4x512xf32>
    %173 = arith.addf %168, %172 : vector<4x512xf32>
    %c3_i32 = arith.constant 3 : i32
    %174 = tpu.dynamic_rotate %2 by %c3_i32 dim 1 : vector<4x512xf32>, i32 -> vector<4x512xf32>
    %c21 = arith.constant 21 : index
    %c0_64 = arith.constant 0 : index
    %c0_65 = arith.constant 0 : index
    %175 = vector.load %arg4[%c21, %c0_64, %c0_65] : memref<49x4x512xf32, #tpu.memory_space<vmem>>, vector<1x4x512xf32>
    %176 = vector.shape_cast %175 : vector<1x4x512xf32> to vector<4x512xf32>
    %177 = arith.mulf %174, %176 : vector<4x512xf32>
    %178 = arith.addf %173, %177 : vector<4x512xf32>
    %c2_i32 = arith.constant 2 : i32
    %179 = tpu.dynamic_rotate %2 by %c2_i32 dim 1 : vector<4x512xf32>, i32 -> vector<4x512xf32>
    %c22 = arith.constant 22 : index
    %c0_66 = arith.constant 0 : index
    %c0_67 = arith.constant 0 : index
    %180 = vector.load %arg4[%c22, %c0_66, %c0_67] : memref<49x4x512xf32, #tpu.memory_space<vmem>>, vector<1x4x512xf32>
    %181 = vector.shape_cast %180 : vector<1x4x512xf32> to vector<4x512xf32>
    %182 = arith.mulf %179, %181 : vector<4x512xf32>
    %183 = arith.addf %178, %182 : vector<4x512xf32>
    %c1_i32 = arith.constant 1 : i32
    %184 = tpu.dynamic_rotate %2 by %c1_i32 dim 1 : vector<4x512xf32>, i32 -> vector<4x512xf32>
    %c23 = arith.constant 23 : index
    %c0_68 = arith.constant 0 : index
    %c0_69 = arith.constant 0 : index
    %185 = vector.load %arg4[%c23, %c0_68, %c0_69] : memref<49x4x512xf32, #tpu.memory_space<vmem>>, vector<1x4x512xf32>
    %186 = vector.shape_cast %185 : vector<1x4x512xf32> to vector<4x512xf32>
    %187 = arith.mulf %184, %186 : vector<4x512xf32>
    %188 = arith.addf %183, %187 : vector<4x512xf32>
    %c24 = arith.constant 24 : index
    %c0_70 = arith.constant 0 : index
    %c0_71 = arith.constant 0 : index
    %189 = vector.load %arg4[%c24, %c0_70, %c0_71] : memref<49x4x512xf32, #tpu.memory_space<vmem>>, vector<1x4x512xf32>
    %190 = vector.shape_cast %189 : vector<1x4x512xf32> to vector<4x512xf32>
    %191 = arith.mulf %2, %190 : vector<4x512xf32>
    %192 = arith.addf %188, %191 : vector<4x512xf32>
    %c511_i32 = arith.constant 511 : i32
    %193 = tpu.dynamic_rotate %2 by %c511_i32 dim 1 : vector<4x512xf32>, i32 -> vector<4x512xf32>
    %c25 = arith.constant 25 : index
    %c0_72 = arith.constant 0 : index
    %c0_73 = arith.constant 0 : index
    %194 = vector.load %arg4[%c25, %c0_72, %c0_73] : memref<49x4x512xf32, #tpu.memory_space<vmem>>, vector<1x4x512xf32>
    %195 = vector.shape_cast %194 : vector<1x4x512xf32> to vector<4x512xf32>
    %196 = arith.mulf %193, %195 : vector<4x512xf32>
    %197 = arith.addf %192, %196 : vector<4x512xf32>
    %c510_i32 = arith.constant 510 : i32
    %198 = tpu.dynamic_rotate %2 by %c510_i32 dim 1 : vector<4x512xf32>, i32 -> vector<4x512xf32>
    %c26 = arith.constant 26 : index
    %c0_74 = arith.constant 0 : index
    %c0_75 = arith.constant 0 : index
    %199 = vector.load %arg4[%c26, %c0_74, %c0_75] : memref<49x4x512xf32, #tpu.memory_space<vmem>>, vector<1x4x512xf32>
    %200 = vector.shape_cast %199 : vector<1x4x512xf32> to vector<4x512xf32>
    %201 = arith.mulf %198, %200 : vector<4x512xf32>
    %202 = arith.addf %197, %201 : vector<4x512xf32>
    %c509_i32 = arith.constant 509 : i32
    %203 = tpu.dynamic_rotate %2 by %c509_i32 dim 1 : vector<4x512xf32>, i32 -> vector<4x512xf32>
    %c27 = arith.constant 27 : index
    %c0_76 = arith.constant 0 : index
    %c0_77 = arith.constant 0 : index
    %204 = vector.load %arg4[%c27, %c0_76, %c0_77] : memref<49x4x512xf32, #tpu.memory_space<vmem>>, vector<1x4x512xf32>
    %205 = vector.shape_cast %204 : vector<1x4x512xf32> to vector<4x512xf32>
    %206 = arith.mulf %203, %205 : vector<4x512xf32>
    %207 = arith.addf %202, %206 : vector<4x512xf32>
    %c499_i32 = arith.constant 499 : i32
    %208 = tpu.dynamic_rotate %2 by %c499_i32 dim 1 : vector<4x512xf32>, i32 -> vector<4x512xf32>
    %c28 = arith.constant 28 : index
    %c0_78 = arith.constant 0 : index
    %c0_79 = arith.constant 0 : index
    %209 = vector.load %arg4[%c28, %c0_78, %c0_79] : memref<49x4x512xf32, #tpu.memory_space<vmem>>, vector<1x4x512xf32>
    %210 = vector.shape_cast %209 : vector<1x4x512xf32> to vector<4x512xf32>
    %211 = arith.mulf %208, %210 : vector<4x512xf32>
    %212 = arith.addf %207, %211 : vector<4x512xf32>
    %c498_i32 = arith.constant 498 : i32
    %213 = tpu.dynamic_rotate %2 by %c498_i32 dim 1 : vector<4x512xf32>, i32 -> vector<4x512xf32>
    %c29 = arith.constant 29 : index
    %c0_80 = arith.constant 0 : index
    %c0_81 = arith.constant 0 : index
    %214 = vector.load %arg4[%c29, %c0_80, %c0_81] : memref<49x4x512xf32, #tpu.memory_space<vmem>>, vector<1x4x512xf32>
    %215 = vector.shape_cast %214 : vector<1x4x512xf32> to vector<4x512xf32>
    %216 = arith.mulf %213, %215 : vector<4x512xf32>
    %217 = arith.addf %212, %216 : vector<4x512xf32>
    %c497_i32 = arith.constant 497 : i32
    %218 = tpu.dynamic_rotate %2 by %c497_i32 dim 1 : vector<4x512xf32>, i32 -> vector<4x512xf32>
    %c30 = arith.constant 30 : index
    %c0_82 = arith.constant 0 : index
    %c0_83 = arith.constant 0 : index
    %219 = vector.load %arg4[%c30, %c0_82, %c0_83] : memref<49x4x512xf32, #tpu.memory_space<vmem>>, vector<1x4x512xf32>
    %220 = vector.shape_cast %219 : vector<1x4x512xf32> to vector<4x512xf32>
    %221 = arith.mulf %218, %220 : vector<4x512xf32>
    %222 = arith.addf %217, %221 : vector<4x512xf32>
    %c496_i32 = arith.constant 496 : i32
    %223 = tpu.dynamic_rotate %2 by %c496_i32 dim 1 : vector<4x512xf32>, i32 -> vector<4x512xf32>
    %c31 = arith.constant 31 : index
    %c0_84 = arith.constant 0 : index
    %c0_85 = arith.constant 0 : index
    %224 = vector.load %arg4[%c31, %c0_84, %c0_85] : memref<49x4x512xf32, #tpu.memory_space<vmem>>, vector<1x4x512xf32>
    %225 = vector.shape_cast %224 : vector<1x4x512xf32> to vector<4x512xf32>
    %226 = arith.mulf %223, %225 : vector<4x512xf32>
    %227 = arith.addf %222, %226 : vector<4x512xf32>
    %c495_i32 = arith.constant 495 : i32
    %228 = tpu.dynamic_rotate %2 by %c495_i32 dim 1 : vector<4x512xf32>, i32 -> vector<4x512xf32>
    %c32 = arith.constant 32 : index
    %c0_86 = arith.constant 0 : index
    %c0_87 = arith.constant 0 : index
    %229 = vector.load %arg4[%c32, %c0_86, %c0_87] : memref<49x4x512xf32, #tpu.memory_space<vmem>>, vector<1x4x512xf32>
    %230 = vector.shape_cast %229 : vector<1x4x512xf32> to vector<4x512xf32>
    %231 = arith.mulf %228, %230 : vector<4x512xf32>
    %232 = arith.addf %227, %231 : vector<4x512xf32>
    %c494_i32 = arith.constant 494 : i32
    %233 = tpu.dynamic_rotate %2 by %c494_i32 dim 1 : vector<4x512xf32>, i32 -> vector<4x512xf32>
    %c33 = arith.constant 33 : index
    %c0_88 = arith.constant 0 : index
    %c0_89 = arith.constant 0 : index
    %234 = vector.load %arg4[%c33, %c0_88, %c0_89] : memref<49x4x512xf32, #tpu.memory_space<vmem>>, vector<1x4x512xf32>
    %235 = vector.shape_cast %234 : vector<1x4x512xf32> to vector<4x512xf32>
    %236 = arith.mulf %233, %235 : vector<4x512xf32>
    %237 = arith.addf %232, %236 : vector<4x512xf32>
    %c493_i32 = arith.constant 493 : i32
    %238 = tpu.dynamic_rotate %2 by %c493_i32 dim 1 : vector<4x512xf32>, i32 -> vector<4x512xf32>
    %c34 = arith.constant 34 : index
    %c0_90 = arith.constant 0 : index
    %c0_91 = arith.constant 0 : index
    %239 = vector.load %arg4[%c34, %c0_90, %c0_91] : memref<49x4x512xf32, #tpu.memory_space<vmem>>, vector<1x4x512xf32>
    %240 = vector.shape_cast %239 : vector<1x4x512xf32> to vector<4x512xf32>
    %241 = arith.mulf %238, %240 : vector<4x512xf32>
    %242 = arith.addf %237, %241 : vector<4x512xf32>
    %c483_i32 = arith.constant 483 : i32
    %243 = tpu.dynamic_rotate %2 by %c483_i32 dim 1 : vector<4x512xf32>, i32 -> vector<4x512xf32>
    %c35 = arith.constant 35 : index
    %c0_92 = arith.constant 0 : index
    %c0_93 = arith.constant 0 : index
    %244 = vector.load %arg4[%c35, %c0_92, %c0_93] : memref<49x4x512xf32, #tpu.memory_space<vmem>>, vector<1x4x512xf32>
    %245 = vector.shape_cast %244 : vector<1x4x512xf32> to vector<4x512xf32>
    %246 = arith.mulf %243, %245 : vector<4x512xf32>
    %247 = arith.addf %242, %246 : vector<4x512xf32>
    %c482_i32 = arith.constant 482 : i32
    %248 = tpu.dynamic_rotate %2 by %c482_i32 dim 1 : vector<4x512xf32>, i32 -> vector<4x512xf32>
    %c36 = arith.constant 36 : index
    %c0_94 = arith.constant 0 : index
    %c0_95 = arith.constant 0 : index
    %249 = vector.load %arg4[%c36, %c0_94, %c0_95] : memref<49x4x512xf32, #tpu.memory_space<vmem>>, vector<1x4x512xf32>
    %250 = vector.shape_cast %249 : vector<1x4x512xf32> to vector<4x512xf32>
    %251 = arith.mulf %248, %250 : vector<4x512xf32>
    %252 = arith.addf %247, %251 : vector<4x512xf32>
    %c481_i32 = arith.constant 481 : i32
    %253 = tpu.dynamic_rotate %2 by %c481_i32 dim 1 : vector<4x512xf32>, i32 -> vector<4x512xf32>
    %c37 = arith.constant 37 : index
    %c0_96 = arith.constant 0 : index
    %c0_97 = arith.constant 0 : index
    %254 = vector.load %arg4[%c37, %c0_96, %c0_97] : memref<49x4x512xf32, #tpu.memory_space<vmem>>, vector<1x4x512xf32>
    %255 = vector.shape_cast %254 : vector<1x4x512xf32> to vector<4x512xf32>
    %256 = arith.mulf %253, %255 : vector<4x512xf32>
    %257 = arith.addf %252, %256 : vector<4x512xf32>
    %c480_i32 = arith.constant 480 : i32
    %258 = tpu.dynamic_rotate %2 by %c480_i32 dim 1 : vector<4x512xf32>, i32 -> vector<4x512xf32>
    %c38 = arith.constant 38 : index
    %c0_98 = arith.constant 0 : index
    %c0_99 = arith.constant 0 : index
    %259 = vector.load %arg4[%c38, %c0_98, %c0_99] : memref<49x4x512xf32, #tpu.memory_space<vmem>>, vector<1x4x512xf32>
    %260 = vector.shape_cast %259 : vector<1x4x512xf32> to vector<4x512xf32>
    %261 = arith.mulf %258, %260 : vector<4x512xf32>
    %262 = arith.addf %257, %261 : vector<4x512xf32>
    %c479_i32 = arith.constant 479 : i32
    %263 = tpu.dynamic_rotate %2 by %c479_i32 dim 1 : vector<4x512xf32>, i32 -> vector<4x512xf32>
    %c39 = arith.constant 39 : index
    %c0_100 = arith.constant 0 : index
    %c0_101 = arith.constant 0 : index
    %264 = vector.load %arg4[%c39, %c0_100, %c0_101] : memref<49x4x512xf32, #tpu.memory_space<vmem>>, vector<1x4x512xf32>
    %265 = vector.shape_cast %264 : vector<1x4x512xf32> to vector<4x512xf32>
    %266 = arith.mulf %263, %265 : vector<4x512xf32>
    %267 = arith.addf %262, %266 : vector<4x512xf32>
    %c478_i32 = arith.constant 478 : i32
    %268 = tpu.dynamic_rotate %2 by %c478_i32 dim 1 : vector<4x512xf32>, i32 -> vector<4x512xf32>
    %c40 = arith.constant 40 : index
    %c0_102 = arith.constant 0 : index
    %c0_103 = arith.constant 0 : index
    %269 = vector.load %arg4[%c40, %c0_102, %c0_103] : memref<49x4x512xf32, #tpu.memory_space<vmem>>, vector<1x4x512xf32>
    %270 = vector.shape_cast %269 : vector<1x4x512xf32> to vector<4x512xf32>
    %271 = arith.mulf %268, %270 : vector<4x512xf32>
    %272 = arith.addf %267, %271 : vector<4x512xf32>
    %c477_i32 = arith.constant 477 : i32
    %273 = tpu.dynamic_rotate %2 by %c477_i32 dim 1 : vector<4x512xf32>, i32 -> vector<4x512xf32>
    %c41 = arith.constant 41 : index
    %c0_104 = arith.constant 0 : index
    %c0_105 = arith.constant 0 : index
    %274 = vector.load %arg4[%c41, %c0_104, %c0_105] : memref<49x4x512xf32, #tpu.memory_space<vmem>>, vector<1x4x512xf32>
    %275 = vector.shape_cast %274 : vector<1x4x512xf32> to vector<4x512xf32>
    %276 = arith.mulf %273, %275 : vector<4x512xf32>
    %277 = arith.addf %272, %276 : vector<4x512xf32>
    %c467_i32 = arith.constant 467 : i32
    %278 = tpu.dynamic_rotate %2 by %c467_i32 dim 1 : vector<4x512xf32>, i32 -> vector<4x512xf32>
    %c42 = arith.constant 42 : index
    %c0_106 = arith.constant 0 : index
    %c0_107 = arith.constant 0 : index
    %279 = vector.load %arg4[%c42, %c0_106, %c0_107] : memref<49x4x512xf32, #tpu.memory_space<vmem>>, vector<1x4x512xf32>
    %280 = vector.shape_cast %279 : vector<1x4x512xf32> to vector<4x512xf32>
    %281 = arith.mulf %278, %280 : vector<4x512xf32>
    %282 = arith.addf %277, %281 : vector<4x512xf32>
    %c466_i32 = arith.constant 466 : i32
    %283 = tpu.dynamic_rotate %2 by %c466_i32 dim 1 : vector<4x512xf32>, i32 -> vector<4x512xf32>
    %c43 = arith.constant 43 : index
    %c0_108 = arith.constant 0 : index
    %c0_109 = arith.constant 0 : index
    %284 = vector.load %arg4[%c43, %c0_108, %c0_109] : memref<49x4x512xf32, #tpu.memory_space<vmem>>, vector<1x4x512xf32>
    %285 = vector.shape_cast %284 : vector<1x4x512xf32> to vector<4x512xf32>
    %286 = arith.mulf %283, %285 : vector<4x512xf32>
    %287 = arith.addf %282, %286 : vector<4x512xf32>
    %c465_i32 = arith.constant 465 : i32
    %288 = tpu.dynamic_rotate %2 by %c465_i32 dim 1 : vector<4x512xf32>, i32 -> vector<4x512xf32>
    %c44 = arith.constant 44 : index
    %c0_110 = arith.constant 0 : index
    %c0_111 = arith.constant 0 : index
    %289 = vector.load %arg4[%c44, %c0_110, %c0_111] : memref<49x4x512xf32, #tpu.memory_space<vmem>>, vector<1x4x512xf32>
    %290 = vector.shape_cast %289 : vector<1x4x512xf32> to vector<4x512xf32>
    %291 = arith.mulf %288, %290 : vector<4x512xf32>
    %292 = arith.addf %287, %291 : vector<4x512xf32>
    %c464_i32 = arith.constant 464 : i32
    %293 = tpu.dynamic_rotate %2 by %c464_i32 dim 1 : vector<4x512xf32>, i32 -> vector<4x512xf32>
    %c45 = arith.constant 45 : index
    %c0_112 = arith.constant 0 : index
    %c0_113 = arith.constant 0 : index
    %294 = vector.load %arg4[%c45, %c0_112, %c0_113] : memref<49x4x512xf32, #tpu.memory_space<vmem>>, vector<1x4x512xf32>
    %295 = vector.shape_cast %294 : vector<1x4x512xf32> to vector<4x512xf32>
    %296 = arith.mulf %293, %295 : vector<4x512xf32>
    %297 = arith.addf %292, %296 : vector<4x512xf32>
    %c463_i32 = arith.constant 463 : i32
    %298 = tpu.dynamic_rotate %2 by %c463_i32 dim 1 : vector<4x512xf32>, i32 -> vector<4x512xf32>
    %c46 = arith.constant 46 : index
    %c0_114 = arith.constant 0 : index
    %c0_115 = arith.constant 0 : index
    %299 = vector.load %arg4[%c46, %c0_114, %c0_115] : memref<49x4x512xf32, #tpu.memory_space<vmem>>, vector<1x4x512xf32>
    %300 = vector.shape_cast %299 : vector<1x4x512xf32> to vector<4x512xf32>
    %301 = arith.mulf %298, %300 : vector<4x512xf32>
    %302 = arith.addf %297, %301 : vector<4x512xf32>
    %c462_i32 = arith.constant 462 : i32
    %303 = tpu.dynamic_rotate %2 by %c462_i32 dim 1 : vector<4x512xf32>, i32 -> vector<4x512xf32>
    %c47 = arith.constant 47 : index
    %c0_116 = arith.constant 0 : index
    %c0_117 = arith.constant 0 : index
    %304 = vector.load %arg4[%c47, %c0_116, %c0_117] : memref<49x4x512xf32, #tpu.memory_space<vmem>>, vector<1x4x512xf32>
    %305 = vector.shape_cast %304 : vector<1x4x512xf32> to vector<4x512xf32>
    %306 = arith.mulf %303, %305 : vector<4x512xf32>
    %307 = arith.addf %302, %306 : vector<4x512xf32>
    %c461_i32 = arith.constant 461 : i32
    %308 = tpu.dynamic_rotate %2 by %c461_i32 dim 1 : vector<4x512xf32>, i32 -> vector<4x512xf32>
    %c48 = arith.constant 48 : index
    %c0_118 = arith.constant 0 : index
    %c0_119 = arith.constant 0 : index
    %309 = vector.load %arg4[%c48, %c0_118, %c0_119] : memref<49x4x512xf32, #tpu.memory_space<vmem>>, vector<1x4x512xf32>
    %310 = vector.shape_cast %309 : vector<1x4x512xf32> to vector<4x512xf32>
    %311 = arith.mulf %308, %310 : vector<4x512xf32>
    %312 = arith.addf %307, %311 : vector<4x512xf32>
    %313 = vector.extract_strided_slice %0 {offsets = [0, 34], sizes = [4, 1], strides = [1, 1]} : vector<16x89xf32> to vector<4x1xf32>
    %314 = vector.broadcast %313 : vector<4x1xf32> to vector<4x512xf32>
    %315 = arith.addf %312, %314 : vector<4x512xf32>
    %316 = vector.extract_strided_slice %0 {offsets = [0, 35], sizes = [4, 1], strides = [1, 1]} : vector<16x89xf32> to vector<4x1xf32>
    %317 = vector.extract_strided_slice %0 {offsets = [0, 36], sizes = [4, 1], strides = [1, 1]} : vector<16x89xf32> to vector<4x1xf32>
    %318 = tpu.iota {dimensions = array<i32: 0>} : vector<4x1xi32>
    %c0_i32 = arith.constant 0 : i32
    %319 = vector.broadcast %c0_i32 : i32 to vector<4x1xi32>
    %320 = arith.cmpi sge, %318, %319 : vector<4x1xi32>
    %c4_i32 = arith.constant 4 : i32
    %321 = vector.broadcast %c4_i32 : i32 to vector<4x1xi32>
    %322 = arith.cmpi slt, %318, %321 : vector<4x1xi32>
    %323 = arith.andi %320, %322 : vector<4x1xi1>
    %324 = arith.extui %323 : vector<4x1xi1> to vector<4x1xi32>
    %325 = arith.sitofp %324 : vector<4x1xi32> to vector<4x1xf32>
    %326 = vector.extract_strided_slice %315 {offsets = [0, 0], sizes = [4, 256], strides = [1, 1]} : vector<4x512xf32> to vector<4x256xf32>
    %cst_120 = arith.constant dense<0.000000e+00> : vector<4xf32>
    %327 = vector.multi_reduction <add>, %326, %cst_120 [1] : vector<4x256xf32> to vector<4xf32>
    %328 = vector.shape_cast %327 : vector<4xf32> to vector<4x1xf32>
    %cst_121 = arith.constant 0.000000e+00 : f32
    %329 = vector.broadcast %cst_121 : f32 to vector<4x1xf32>
    %330 = arith.mulf %328, %325 : vector<4x1xf32>
    %cst_122 = arith.constant dense<0.000000e+00> : vector<1xf32>
    %331 = vector.multi_reduction <add>, %330, %cst_122 [0] : vector<4x1xf32> to vector<1xf32>
    %332 = vector.shape_cast %331 : vector<1xf32> to vector<1x1xf32>
    %333 = vector.broadcast %332 : vector<1x1xf32> to vector<4x1xf32>
    %334 = arith.mulf %325, %333 : vector<4x1xf32>
    %335 = arith.addf %329, %334 : vector<4x1xf32>
    %cst_123 = arith.constant 9.765625E-4 : f32
    %336 = vector.broadcast %cst_123 : f32 to vector<4x1xf32>
    %337 = arith.mulf %335, %336 : vector<4x1xf32>
    %338 = vector.broadcast %337 : vector<4x1xf32> to vector<4x256xf32>
    %339 = arith.subf %326, %338 : vector<4x256xf32>
    %340 = arith.mulf %339, %339 : vector<4x256xf32>
    %cst_124 = arith.constant dense<0.000000e+00> : vector<4xf32>
    %341 = vector.multi_reduction <add>, %340, %cst_124 [1] : vector<4x256xf32> to vector<4xf32>
    %342 = vector.shape_cast %341 : vector<4xf32> to vector<4x1xf32>
    %cst_125 = arith.constant 0.000000e+00 : f32
    %343 = vector.broadcast %cst_125 : f32 to vector<4x1xf32>
    %344 = arith.mulf %342, %325 : vector<4x1xf32>
    %cst_126 = arith.constant dense<0.000000e+00> : vector<1xf32>
    %345 = vector.multi_reduction <add>, %344, %cst_126 [0] : vector<4x1xf32> to vector<1xf32>
    %346 = vector.shape_cast %345 : vector<1xf32> to vector<1x1xf32>
    %347 = vector.broadcast %346 : vector<1x1xf32> to vector<4x1xf32>
    %348 = arith.mulf %325, %347 : vector<4x1xf32>
    %349 = arith.addf %343, %348 : vector<4x1xf32>
    %cst_127 = arith.constant 9.765625E-4 : f32
    %350 = vector.broadcast %cst_127 : f32 to vector<4x1xf32>
    %351 = arith.mulf %349, %350 : vector<4x1xf32>
    %cst_128 = arith.constant 9.99999974E-6 : f32
    %352 = vector.broadcast %cst_128 : f32 to vector<4x1xf32>
    %353 = arith.addf %351, %352 : vector<4x1xf32>
    %354 = math.rsqrt %353 : vector<4x1xf32>
    %355 = vector.broadcast %354 : vector<4x1xf32> to vector<4x256xf32>
    %356 = arith.mulf %339, %355 : vector<4x256xf32>
    %357 = vector.extract_strided_slice %315 {offsets = [0, 256], sizes = [4, 256], strides = [1, 1]} : vector<4x512xf32> to vector<4x256xf32>
    %cst_129 = arith.constant dense<0.000000e+00> : vector<4xf32>
    %358 = vector.multi_reduction <add>, %357, %cst_129 [1] : vector<4x256xf32> to vector<4xf32>
    %359 = vector.shape_cast %358 : vector<4xf32> to vector<4x1xf32>
    %cst_130 = arith.constant 0.000000e+00 : f32
    %360 = vector.broadcast %cst_130 : f32 to vector<4x1xf32>
    %361 = arith.mulf %359, %325 : vector<4x1xf32>
    %cst_131 = arith.constant dense<0.000000e+00> : vector<1xf32>
    %362 = vector.multi_reduction <add>, %361, %cst_131 [0] : vector<4x1xf32> to vector<1xf32>
    %363 = vector.shape_cast %362 : vector<1xf32> to vector<1x1xf32>
    %364 = vector.broadcast %363 : vector<1x1xf32> to vector<4x1xf32>
    %365 = arith.mulf %325, %364 : vector<4x1xf32>
    %366 = arith.addf %360, %365 : vector<4x1xf32>
    %cst_132 = arith.constant 9.765625E-4 : f32
    %367 = vector.broadcast %cst_132 : f32 to vector<4x1xf32>
    %368 = arith.mulf %366, %367 : vector<4x1xf32>
    %369 = vector.broadcast %368 : vector<4x1xf32> to vector<4x256xf32>
    %370 = arith.subf %357, %369 : vector<4x256xf32>
    %371 = arith.mulf %370, %370 : vector<4x256xf32>
    %cst_133 = arith.constant dense<0.000000e+00> : vector<4xf32>
    %372 = vector.multi_reduction <add>, %371, %cst_133 [1] : vector<4x256xf32> to vector<4xf32>
    %373 = vector.shape_cast %372 : vector<4xf32> to vector<4x1xf32>
    %cst_134 = arith.constant 0.000000e+00 : f32
    %374 = vector.broadcast %cst_134 : f32 to vector<4x1xf32>
    %375 = arith.mulf %373, %325 : vector<4x1xf32>
    %cst_135 = arith.constant dense<0.000000e+00> : vector<1xf32>
    %376 = vector.multi_reduction <add>, %375, %cst_135 [0] : vector<4x1xf32> to vector<1xf32>
    %377 = vector.shape_cast %376 : vector<1xf32> to vector<1x1xf32>
    %378 = vector.broadcast %377 : vector<1x1xf32> to vector<4x1xf32>
    %379 = arith.mulf %325, %378 : vector<4x1xf32>
    %380 = arith.addf %374, %379 : vector<4x1xf32>
    %cst_136 = arith.constant 9.765625E-4 : f32
    %381 = vector.broadcast %cst_136 : f32 to vector<4x1xf32>
    %382 = arith.mulf %380, %381 : vector<4x1xf32>
    %cst_137 = arith.constant 9.99999974E-6 : f32
    %383 = vector.broadcast %cst_137 : f32 to vector<4x1xf32>
    %384 = arith.addf %382, %383 : vector<4x1xf32>
    %385 = math.rsqrt %384 : vector<4x1xf32>
    %386 = vector.broadcast %385 : vector<4x1xf32> to vector<4x256xf32>
    %387 = arith.mulf %370, %386 : vector<4x256xf32>
    %388 = tpu.concatenate %356, %387 in 1 : vector<4x256xf32>, vector<4x256xf32> -> vector<4x512xf32>
    %389 = vector.broadcast %316 : vector<4x1xf32> to vector<4x512xf32>
    %390 = arith.mulf %388, %389 : vector<4x512xf32>
    %391 = vector.broadcast %317 : vector<4x1xf32> to vector<4x512xf32>
    %392 = arith.addf %390, %391 : vector<4x512xf32>
    %393 = vector.extract_strided_slice %0 {offsets = [0, 37], sizes = [8, 4], strides = [1, 1]} : vector<16x89xf32> to vector<8x4xf32>
    %cst_138 = arith.constant dense<0.000000e+00> : vector<8x512xf32>
    %394 = tpu.matmul %393, %392, %cst_138 {dimension_numbers = #tpu.dot_dimension_numbers<[1], [0], [0], [1], [0, 0, 1, 1], [], []>} : vector<8x4xf32>, vector<4x512xf32>, vector<8x512xf32> -> vector<8x512xf32>
    %395 = vector.extract_strided_slice %0 {offsets = [0, 41], sizes = [8, 1], strides = [1, 1]} : vector<16x89xf32> to vector<8x1xf32>
    %396 = vector.broadcast %395 : vector<8x1xf32> to vector<8x512xf32>
    %397 = arith.addf %394, %396 : vector<8x512xf32>
    %cst_139 = arith.constant 5.000000e-01 : f32
    %398 = vector.broadcast %cst_139 : f32 to vector<8x512xf32>
    %399 = arith.mulf %398, %397 : vector<8x512xf32>
    %cst_140 = arith.constant 0.707106769 : f32
    %400 = vector.broadcast %cst_140 : f32 to vector<8x512xf32>
    %401 = arith.mulf %397, %400 : vector<8x512xf32>
    %cst_141 = arith.constant 0.000000e+00 : f32
    %402 = vector.broadcast %cst_141 : f32 to vector<8x512xf32>
    %403 = arith.cmpf oge, %401, %402 : vector<8x512xf32>
    %cst_142 = arith.constant 1.000000e+00 : f32
    %cst_143 = arith.constant -1.000000e+00 : f32
    %404 = vector.broadcast %cst_142 : f32 to vector<8x512xf32>
    %405 = vector.broadcast %cst_143 : f32 to vector<8x512xf32>
    %406 = arith.select %403, %404, %405 : vector<8x512xi1>, vector<8x512xf32>
    %407 = math.absf %401 : vector<8x512xf32>
    %cst_144 = arith.constant 0.327591091 : f32
    %408 = vector.broadcast %cst_144 : f32 to vector<8x512xf32>
    %409 = arith.mulf %408, %407 : vector<8x512xf32>
    %cst_145 = arith.constant 1.000000e+00 : f32
    %410 = vector.broadcast %cst_145 : f32 to vector<8x512xf32>
    %411 = arith.addf %410, %409 : vector<8x512xf32>
    %412 = tpu.reciprocal %411 {approx = true} : vector<8x512xf32> -> vector<8x512xf32>
    %cst_146 = arith.constant 1.06140542 : f32
    %413 = vector.broadcast %cst_146 : f32 to vector<8x512xf32>
    %414 = arith.mulf %413, %412 : vector<8x512xf32>
    %cst_147 = arith.constant -1.45315206 : f32
    %415 = vector.broadcast %cst_147 : f32 to vector<8x512xf32>
    %416 = arith.addf %414, %415 : vector<8x512xf32>
    %417 = arith.mulf %416, %412 : vector<8x512xf32>
    %cst_148 = arith.constant 1.42141378 : f32
    %418 = vector.broadcast %cst_148 : f32 to vector<8x512xf32>
    %419 = arith.addf %417, %418 : vector<8x512xf32>
    %420 = arith.mulf %419, %412 : vector<8x512xf32>
    %cst_149 = arith.constant -0.284496725 : f32
    %421 = vector.broadcast %cst_149 : f32 to vector<8x512xf32>
    %422 = arith.addf %420, %421 : vector<8x512xf32>
    %423 = arith.mulf %422, %412 : vector<8x512xf32>
    %cst_150 = arith.constant 0.254829586 : f32
    %424 = vector.broadcast %cst_150 : f32 to vector<8x512xf32>
    %425 = arith.addf %423, %424 : vector<8x512xf32>
    %426 = arith.mulf %425, %412 : vector<8x512xf32>
    %cst_151 = arith.constant 0.000000e+00 : f32
    %427 = vector.broadcast %cst_151 : f32 to vector<8x512xf32>
    %428 = arith.subf %427, %407 : vector<8x512xf32>
    %429 = arith.mulf %428, %407 : vector<8x512xf32>
    %430 = math.exp %429 : vector<8x512xf32>
    %431 = arith.mulf %426, %430 : vector<8x512xf32>
    %cst_152 = arith.constant 1.000000e+00 : f32
    %432 = vector.broadcast %cst_152 : f32 to vector<8x512xf32>
    %433 = arith.subf %432, %431 : vector<8x512xf32>
    %434 = arith.mulf %406, %433 : vector<8x512xf32>
    %cst_153 = arith.constant 1.000000e+00 : f32
    %435 = vector.broadcast %cst_153 : f32 to vector<8x512xf32>
    %436 = arith.addf %435, %434 : vector<8x512xf32>
    %437 = arith.mulf %399, %436 : vector<8x512xf32>
    %438 = vector.extract_strided_slice %0 {offsets = [0, 42], sizes = [8, 8], strides = [1, 1]} : vector<16x89xf32> to vector<8x8xf32>
    %cst_154 = arith.constant dense<0.000000e+00> : vector<8x512xf32>
    %439 = tpu.matmul %438, %437, %cst_154 {dimension_numbers = #tpu.dot_dimension_numbers<[1], [0], [0], [1], [0, 0, 1, 1], [], []>} : vector<8x8xf32>, vector<8x512xf32>, vector<8x512xf32> -> vector<8x512xf32>
    %440 = vector.extract_strided_slice %0 {offsets = [0, 50], sizes = [8, 1], strides = [1, 1]} : vector<16x89xf32> to vector<8x1xf32>
    %441 = vector.broadcast %440 : vector<8x1xf32> to vector<8x512xf32>
    %442 = arith.addf %439, %441 : vector<8x512xf32>
    %443 = vector.extract_strided_slice %0 {offsets = [0, 51], sizes = [8, 1], strides = [1, 1]} : vector<16x89xf32> to vector<8x1xf32>
    %444 = vector.extract_strided_slice %0 {offsets = [0, 52], sizes = [8, 1], strides = [1, 1]} : vector<16x89xf32> to vector<8x1xf32>
    %445 = tpu.iota {dimensions = array<i32: 0>} : vector<8x1xi32>
    %c0_i32_155 = arith.constant 0 : i32
    %446 = vector.broadcast %c0_i32_155 : i32 to vector<8x1xi32>
    %447 = arith.cmpi sge, %445, %446 : vector<8x1xi32>
    %c2_i32_156 = arith.constant 2 : i32
    %448 = vector.broadcast %c2_i32_156 : i32 to vector<8x1xi32>
    %449 = arith.cmpi slt, %445, %448 : vector<8x1xi32>
    %450 = arith.andi %447, %449 : vector<8x1xi1>
    %451 = arith.extui %450 : vector<8x1xi1> to vector<8x1xi32>
    %452 = arith.sitofp %451 : vector<8x1xi32> to vector<8x1xf32>
    %c2_i32_157 = arith.constant 2 : i32
    %453 = vector.broadcast %c2_i32_157 : i32 to vector<8x1xi32>
    %454 = arith.cmpi sge, %445, %453 : vector<8x1xi32>
    %c4_i32_158 = arith.constant 4 : i32
    %455 = vector.broadcast %c4_i32_158 : i32 to vector<8x1xi32>
    %456 = arith.cmpi slt, %445, %455 : vector<8x1xi32>
    %457 = arith.andi %454, %456 : vector<8x1xi1>
    %458 = arith.extui %457 : vector<8x1xi1> to vector<8x1xi32>
    %459 = arith.sitofp %458 : vector<8x1xi32> to vector<8x1xf32>
    %c4_i32_159 = arith.constant 4 : i32
    %460 = vector.broadcast %c4_i32_159 : i32 to vector<8x1xi32>
    %461 = arith.cmpi sge, %445, %460 : vector<8x1xi32>
    %c6_i32 = arith.constant 6 : i32
    %462 = vector.broadcast %c6_i32 : i32 to vector<8x1xi32>
    %463 = arith.cmpi slt, %445, %462 : vector<8x1xi32>
    %464 = arith.andi %461, %463 : vector<8x1xi1>
    %465 = arith.extui %464 : vector<8x1xi1> to vector<8x1xi32>
    %466 = arith.sitofp %465 : vector<8x1xi32> to vector<8x1xf32>
    %c6_i32_160 = arith.constant 6 : i32
    %467 = vector.broadcast %c6_i32_160 : i32 to vector<8x1xi32>
    %468 = arith.cmpi sge, %445, %467 : vector<8x1xi32>
    %c8_i32 = arith.constant 8 : i32
    %469 = vector.broadcast %c8_i32 : i32 to vector<8x1xi32>
    %470 = arith.cmpi slt, %445, %469 : vector<8x1xi32>
    %471 = arith.andi %468, %470 : vector<8x1xi1>
    %472 = arith.extui %471 : vector<8x1xi1> to vector<8x1xi32>
    %473 = arith.sitofp %472 : vector<8x1xi32> to vector<8x1xf32>
    %474 = vector.extract_strided_slice %442 {offsets = [0, 0], sizes = [8, 256], strides = [1, 1]} : vector<8x512xf32> to vector<8x256xf32>
    %cst_161 = arith.constant dense<0.000000e+00> : vector<8xf32>
    %475 = vector.multi_reduction <add>, %474, %cst_161 [1] : vector<8x256xf32> to vector<8xf32>
    %476 = vector.shape_cast %475 : vector<8xf32> to vector<8x1xf32>
    %cst_162 = arith.constant 0.000000e+00 : f32
    %477 = vector.broadcast %cst_162 : f32 to vector<8x1xf32>
    %478 = arith.mulf %476, %452 : vector<8x1xf32>
    %cst_163 = arith.constant dense<0.000000e+00> : vector<1xf32>
    %479 = vector.multi_reduction <add>, %478, %cst_163 [0] : vector<8x1xf32> to vector<1xf32>
    %480 = vector.shape_cast %479 : vector<1xf32> to vector<1x1xf32>
    %481 = vector.broadcast %480 : vector<1x1xf32> to vector<8x1xf32>
    %482 = arith.mulf %452, %481 : vector<8x1xf32>
    %483 = arith.addf %477, %482 : vector<8x1xf32>
    %484 = arith.mulf %476, %459 : vector<8x1xf32>
    %cst_164 = arith.constant dense<0.000000e+00> : vector<1xf32>
    %485 = vector.multi_reduction <add>, %484, %cst_164 [0] : vector<8x1xf32> to vector<1xf32>
    %486 = vector.shape_cast %485 : vector<1xf32> to vector<1x1xf32>
    %487 = vector.broadcast %486 : vector<1x1xf32> to vector<8x1xf32>
    %488 = arith.mulf %459, %487 : vector<8x1xf32>
    %489 = arith.addf %483, %488 : vector<8x1xf32>
    %490 = arith.mulf %476, %466 : vector<8x1xf32>
    %cst_165 = arith.constant dense<0.000000e+00> : vector<1xf32>
    %491 = vector.multi_reduction <add>, %490, %cst_165 [0] : vector<8x1xf32> to vector<1xf32>
    %492 = vector.shape_cast %491 : vector<1xf32> to vector<1x1xf32>
    %493 = vector.broadcast %492 : vector<1x1xf32> to vector<8x1xf32>
    %494 = arith.mulf %466, %493 : vector<8x1xf32>
    %495 = arith.addf %489, %494 : vector<8x1xf32>
    %496 = arith.mulf %476, %473 : vector<8x1xf32>
    %cst_166 = arith.constant dense<0.000000e+00> : vector<1xf32>
    %497 = vector.multi_reduction <add>, %496, %cst_166 [0] : vector<8x1xf32> to vector<1xf32>
    %498 = vector.shape_cast %497 : vector<1xf32> to vector<1x1xf32>
    %499 = vector.broadcast %498 : vector<1x1xf32> to vector<8x1xf32>
    %500 = arith.mulf %473, %499 : vector<8x1xf32>
    %501 = arith.addf %495, %500 : vector<8x1xf32>
    %cst_167 = arith.constant 0.001953125 : f32
    %502 = vector.broadcast %cst_167 : f32 to vector<8x1xf32>
    %503 = arith.mulf %501, %502 : vector<8x1xf32>
    %504 = vector.broadcast %503 : vector<8x1xf32> to vector<8x256xf32>
    %505 = arith.subf %474, %504 : vector<8x256xf32>
    %506 = arith.mulf %505, %505 : vector<8x256xf32>
    %cst_168 = arith.constant dense<0.000000e+00> : vector<8xf32>
    %507 = vector.multi_reduction <add>, %506, %cst_168 [1] : vector<8x256xf32> to vector<8xf32>
    %508 = vector.shape_cast %507 : vector<8xf32> to vector<8x1xf32>
    %cst_169 = arith.constant 0.000000e+00 : f32
    %509 = vector.broadcast %cst_169 : f32 to vector<8x1xf32>
    %510 = arith.mulf %508, %452 : vector<8x1xf32>
    %cst_170 = arith.constant dense<0.000000e+00> : vector<1xf32>
    %511 = vector.multi_reduction <add>, %510, %cst_170 [0] : vector<8x1xf32> to vector<1xf32>
    %512 = vector.shape_cast %511 : vector<1xf32> to vector<1x1xf32>
    %513 = vector.broadcast %512 : vector<1x1xf32> to vector<8x1xf32>
    %514 = arith.mulf %452, %513 : vector<8x1xf32>
    %515 = arith.addf %509, %514 : vector<8x1xf32>
    %516 = arith.mulf %508, %459 : vector<8x1xf32>
    %cst_171 = arith.constant dense<0.000000e+00> : vector<1xf32>
    %517 = vector.multi_reduction <add>, %516, %cst_171 [0] : vector<8x1xf32> to vector<1xf32>
    %518 = vector.shape_cast %517 : vector<1xf32> to vector<1x1xf32>
    %519 = vector.broadcast %518 : vector<1x1xf32> to vector<8x1xf32>
    %520 = arith.mulf %459, %519 : vector<8x1xf32>
    %521 = arith.addf %515, %520 : vector<8x1xf32>
    %522 = arith.mulf %508, %466 : vector<8x1xf32>
    %cst_172 = arith.constant dense<0.000000e+00> : vector<1xf32>
    %523 = vector.multi_reduction <add>, %522, %cst_172 [0] : vector<8x1xf32> to vector<1xf32>
    %524 = vector.shape_cast %523 : vector<1xf32> to vector<1x1xf32>
    %525 = vector.broadcast %524 : vector<1x1xf32> to vector<8x1xf32>
    %526 = arith.mulf %466, %525 : vector<8x1xf32>
    %527 = arith.addf %521, %526 : vector<8x1xf32>
    %528 = arith.mulf %508, %473 : vector<8x1xf32>
    %cst_173 = arith.constant dense<0.000000e+00> : vector<1xf32>
    %529 = vector.multi_reduction <add>, %528, %cst_173 [0] : vector<8x1xf32> to vector<1xf32>
    %530 = vector.shape_cast %529 : vector<1xf32> to vector<1x1xf32>
    %531 = vector.broadcast %530 : vector<1x1xf32> to vector<8x1xf32>
    %532 = arith.mulf %473, %531 : vector<8x1xf32>
    %533 = arith.addf %527, %532 : vector<8x1xf32>
    %cst_174 = arith.constant 0.001953125 : f32
    %534 = vector.broadcast %cst_174 : f32 to vector<8x1xf32>
    %535 = arith.mulf %533, %534 : vector<8x1xf32>
    %cst_175 = arith.constant 9.99999974E-6 : f32
    %536 = vector.broadcast %cst_175 : f32 to vector<8x1xf32>
    %537 = arith.addf %535, %536 : vector<8x1xf32>
    %538 = math.rsqrt %537 : vector<8x1xf32>
    %539 = vector.broadcast %538 : vector<8x1xf32> to vector<8x256xf32>
    %540 = arith.mulf %505, %539 : vector<8x256xf32>
    %541 = vector.extract_strided_slice %442 {offsets = [0, 256], sizes = [8, 256], strides = [1, 1]} : vector<8x512xf32> to vector<8x256xf32>
    %cst_176 = arith.constant dense<0.000000e+00> : vector<8xf32>
    %542 = vector.multi_reduction <add>, %541, %cst_176 [1] : vector<8x256xf32> to vector<8xf32>
    %543 = vector.shape_cast %542 : vector<8xf32> to vector<8x1xf32>
    %cst_177 = arith.constant 0.000000e+00 : f32
    %544 = vector.broadcast %cst_177 : f32 to vector<8x1xf32>
    %545 = arith.mulf %543, %452 : vector<8x1xf32>
    %cst_178 = arith.constant dense<0.000000e+00> : vector<1xf32>
    %546 = vector.multi_reduction <add>, %545, %cst_178 [0] : vector<8x1xf32> to vector<1xf32>
    %547 = vector.shape_cast %546 : vector<1xf32> to vector<1x1xf32>
    %548 = vector.broadcast %547 : vector<1x1xf32> to vector<8x1xf32>
    %549 = arith.mulf %452, %548 : vector<8x1xf32>
    %550 = arith.addf %544, %549 : vector<8x1xf32>
    %551 = arith.mulf %543, %459 : vector<8x1xf32>
    %cst_179 = arith.constant dense<0.000000e+00> : vector<1xf32>
    %552 = vector.multi_reduction <add>, %551, %cst_179 [0] : vector<8x1xf32> to vector<1xf32>
    %553 = vector.shape_cast %552 : vector<1xf32> to vector<1x1xf32>
    %554 = vector.broadcast %553 : vector<1x1xf32> to vector<8x1xf32>
    %555 = arith.mulf %459, %554 : vector<8x1xf32>
    %556 = arith.addf %550, %555 : vector<8x1xf32>
    %557 = arith.mulf %543, %466 : vector<8x1xf32>
    %cst_180 = arith.constant dense<0.000000e+00> : vector<1xf32>
    %558 = vector.multi_reduction <add>, %557, %cst_180 [0] : vector<8x1xf32> to vector<1xf32>
    %559 = vector.shape_cast %558 : vector<1xf32> to vector<1x1xf32>
    %560 = vector.broadcast %559 : vector<1x1xf32> to vector<8x1xf32>
    %561 = arith.mulf %466, %560 : vector<8x1xf32>
    %562 = arith.addf %556, %561 : vector<8x1xf32>
    %563 = arith.mulf %543, %473 : vector<8x1xf32>
    %cst_181 = arith.constant dense<0.000000e+00> : vector<1xf32>
    %564 = vector.multi_reduction <add>, %563, %cst_181 [0] : vector<8x1xf32> to vector<1xf32>
    %565 = vector.shape_cast %564 : vector<1xf32> to vector<1x1xf32>
    %566 = vector.broadcast %565 : vector<1x1xf32> to vector<8x1xf32>
    %567 = arith.mulf %473, %566 : vector<8x1xf32>
    %568 = arith.addf %562, %567 : vector<8x1xf32>
    %cst_182 = arith.constant 0.001953125 : f32
    %569 = vector.broadcast %cst_182 : f32 to vector<8x1xf32>
    %570 = arith.mulf %568, %569 : vector<8x1xf32>
    %571 = vector.broadcast %570 : vector<8x1xf32> to vector<8x256xf32>
    %572 = arith.subf %541, %571 : vector<8x256xf32>
    %573 = arith.mulf %572, %572 : vector<8x256xf32>
    %cst_183 = arith.constant dense<0.000000e+00> : vector<8xf32>
    %574 = vector.multi_reduction <add>, %573, %cst_183 [1] : vector<8x256xf32> to vector<8xf32>
    %575 = vector.shape_cast %574 : vector<8xf32> to vector<8x1xf32>
    %cst_184 = arith.constant 0.000000e+00 : f32
    %576 = vector.broadcast %cst_184 : f32 to vector<8x1xf32>
    %577 = arith.mulf %575, %452 : vector<8x1xf32>
    %cst_185 = arith.constant dense<0.000000e+00> : vector<1xf32>
    %578 = vector.multi_reduction <add>, %577, %cst_185 [0] : vector<8x1xf32> to vector<1xf32>
    %579 = vector.shape_cast %578 : vector<1xf32> to vector<1x1xf32>
    %580 = vector.broadcast %579 : vector<1x1xf32> to vector<8x1xf32>
    %581 = arith.mulf %452, %580 : vector<8x1xf32>
    %582 = arith.addf %576, %581 : vector<8x1xf32>
    %583 = arith.mulf %575, %459 : vector<8x1xf32>
    %cst_186 = arith.constant dense<0.000000e+00> : vector<1xf32>
    %584 = vector.multi_reduction <add>, %583, %cst_186 [0] : vector<8x1xf32> to vector<1xf32>
    %585 = vector.shape_cast %584 : vector<1xf32> to vector<1x1xf32>
    %586 = vector.broadcast %585 : vector<1x1xf32> to vector<8x1xf32>
    %587 = arith.mulf %459, %586 : vector<8x1xf32>
    %588 = arith.addf %582, %587 : vector<8x1xf32>
    %589 = arith.mulf %575, %466 : vector<8x1xf32>
    %cst_187 = arith.constant dense<0.000000e+00> : vector<1xf32>
    %590 = vector.multi_reduction <add>, %589, %cst_187 [0] : vector<8x1xf32> to vector<1xf32>
    %591 = vector.shape_cast %590 : vector<1xf32> to vector<1x1xf32>
    %592 = vector.broadcast %591 : vector<1x1xf32> to vector<8x1xf32>
    %593 = arith.mulf %466, %592 : vector<8x1xf32>
    %594 = arith.addf %588, %593 : vector<8x1xf32>
    %595 = arith.mulf %575, %473 : vector<8x1xf32>
    %cst_188 = arith.constant dense<0.000000e+00> : vector<1xf32>
    %596 = vector.multi_reduction <add>, %595, %cst_188 [0] : vector<8x1xf32> to vector<1xf32>
    %597 = vector.shape_cast %596 : vector<1xf32> to vector<1x1xf32>
    %598 = vector.broadcast %597 : vector<1x1xf32> to vector<8x1xf32>
    %599 = arith.mulf %473, %598 : vector<8x1xf32>
    %600 = arith.addf %594, %599 : vector<8x1xf32>
    %cst_189 = arith.constant 0.001953125 : f32
    %601 = vector.broadcast %cst_189 : f32 to vector<8x1xf32>
    %602 = arith.mulf %600, %601 : vector<8x1xf32>
    %cst_190 = arith.constant 9.99999974E-6 : f32
    %603 = vector.broadcast %cst_190 : f32 to vector<8x1xf32>
    %604 = arith.addf %602, %603 : vector<8x1xf32>
    %605 = math.rsqrt %604 : vector<8x1xf32>
    %606 = vector.broadcast %605 : vector<8x1xf32> to vector<8x256xf32>
    %607 = arith.mulf %572, %606 : vector<8x256xf32>
    %608 = tpu.concatenate %540, %607 in 1 : vector<8x256xf32>, vector<8x256xf32> -> vector<8x512xf32>
    %609 = vector.broadcast %443 : vector<8x1xf32> to vector<8x512xf32>
    %610 = arith.mulf %608, %609 : vector<8x512xf32>
    %611 = vector.broadcast %444 : vector<8x1xf32> to vector<8x512xf32>
    %612 = arith.addf %610, %611 : vector<8x512xf32>
    %613 = arith.mulf %612, %69 : vector<8x512xf32>
    %cst_191 = arith.constant 0.000000e+00 : f32
    %614 = vector.broadcast %cst_191 : f32 to vector<8x512xf32>
    %615 = arith.subf %614, %613 : vector<8x512xf32>
    %616 = math.exp %615 : vector<8x512xf32>
    %cst_192 = arith.constant 1.000000e+00 : f32
    %617 = vector.broadcast %cst_192 : f32 to vector<8x512xf32>
    %618 = arith.addf %617, %616 : vector<8x512xf32>
    %619 = tpu.reciprocal %618 {approx = true} : vector<8x512xf32> -> vector<8x512xf32>
    %620 = arith.mulf %613, %619 : vector<8x512xf32>
    %c51_i32_193 = arith.constant 51 : i32
    %621 = tpu.dynamic_rotate %620 by %c51_i32_193 dim 1 : vector<8x512xf32>, i32 -> vector<8x512xf32>
    %c0_194 = arith.constant 0 : index
    %c0_195 = arith.constant 0 : index
    %c0_196 = arith.constant 0 : index
    %622 = vector.load %arg5[%c0_194, %c0_195, %c0_196] : memref<49x8x512xf32, #tpu.memory_space<vmem>>, vector<1x8x512xf32>
    %623 = vector.shape_cast %622 : vector<1x8x512xf32> to vector<8x512xf32>
    %624 = arith.mulf %621, %623 : vector<8x512xf32>
    %c50_i32_197 = arith.constant 50 : i32
    %625 = tpu.dynamic_rotate %620 by %c50_i32_197 dim 1 : vector<8x512xf32>, i32 -> vector<8x512xf32>
    %c1_198 = arith.constant 1 : index
    %c0_199 = arith.constant 0 : index
    %c0_200 = arith.constant 0 : index
    %626 = vector.load %arg5[%c1_198, %c0_199, %c0_200] : memref<49x8x512xf32, #tpu.memory_space<vmem>>, vector<1x8x512xf32>
    %627 = vector.shape_cast %626 : vector<1x8x512xf32> to vector<8x512xf32>
    %628 = arith.mulf %625, %627 : vector<8x512xf32>
    %629 = arith.addf %624, %628 : vector<8x512xf32>
    %c49_i32_201 = arith.constant 49 : i32
    %630 = tpu.dynamic_rotate %620 by %c49_i32_201 dim 1 : vector<8x512xf32>, i32 -> vector<8x512xf32>
    %c2_202 = arith.constant 2 : index
    %c0_203 = arith.constant 0 : index
    %c0_204 = arith.constant 0 : index
    %631 = vector.load %arg5[%c2_202, %c0_203, %c0_204] : memref<49x8x512xf32, #tpu.memory_space<vmem>>, vector<1x8x512xf32>
    %632 = vector.shape_cast %631 : vector<1x8x512xf32> to vector<8x512xf32>
    %633 = arith.mulf %630, %632 : vector<8x512xf32>
    %634 = arith.addf %629, %633 : vector<8x512xf32>
    %c48_i32_205 = arith.constant 48 : i32
    %635 = tpu.dynamic_rotate %620 by %c48_i32_205 dim 1 : vector<8x512xf32>, i32 -> vector<8x512xf32>
    %c3_206 = arith.constant 3 : index
    %c0_207 = arith.constant 0 : index
    %c0_208 = arith.constant 0 : index
    %636 = vector.load %arg5[%c3_206, %c0_207, %c0_208] : memref<49x8x512xf32, #tpu.memory_space<vmem>>, vector<1x8x512xf32>
    %637 = vector.shape_cast %636 : vector<1x8x512xf32> to vector<8x512xf32>
    %638 = arith.mulf %635, %637 : vector<8x512xf32>
    %639 = arith.addf %634, %638 : vector<8x512xf32>
    %c47_i32_209 = arith.constant 47 : i32
    %640 = tpu.dynamic_rotate %620 by %c47_i32_209 dim 1 : vector<8x512xf32>, i32 -> vector<8x512xf32>
    %c4_210 = arith.constant 4 : index
    %c0_211 = arith.constant 0 : index
    %c0_212 = arith.constant 0 : index
    %641 = vector.load %arg5[%c4_210, %c0_211, %c0_212] : memref<49x8x512xf32, #tpu.memory_space<vmem>>, vector<1x8x512xf32>
    %642 = vector.shape_cast %641 : vector<1x8x512xf32> to vector<8x512xf32>
    %643 = arith.mulf %640, %642 : vector<8x512xf32>
    %644 = arith.addf %639, %643 : vector<8x512xf32>
    %c46_i32_213 = arith.constant 46 : i32
    %645 = tpu.dynamic_rotate %620 by %c46_i32_213 dim 1 : vector<8x512xf32>, i32 -> vector<8x512xf32>
    %c5_214 = arith.constant 5 : index
    %c0_215 = arith.constant 0 : index
    %c0_216 = arith.constant 0 : index
    %646 = vector.load %arg5[%c5_214, %c0_215, %c0_216] : memref<49x8x512xf32, #tpu.memory_space<vmem>>, vector<1x8x512xf32>
    %647 = vector.shape_cast %646 : vector<1x8x512xf32> to vector<8x512xf32>
    %648 = arith.mulf %645, %647 : vector<8x512xf32>
    %649 = arith.addf %644, %648 : vector<8x512xf32>
    %c45_i32_217 = arith.constant 45 : i32
    %650 = tpu.dynamic_rotate %620 by %c45_i32_217 dim 1 : vector<8x512xf32>, i32 -> vector<8x512xf32>
    %c6_218 = arith.constant 6 : index
    %c0_219 = arith.constant 0 : index
    %c0_220 = arith.constant 0 : index
    %651 = vector.load %arg5[%c6_218, %c0_219, %c0_220] : memref<49x8x512xf32, #tpu.memory_space<vmem>>, vector<1x8x512xf32>
    %652 = vector.shape_cast %651 : vector<1x8x512xf32> to vector<8x512xf32>
    %653 = arith.mulf %650, %652 : vector<8x512xf32>
    %654 = arith.addf %649, %653 : vector<8x512xf32>
    %c35_i32_221 = arith.constant 35 : i32
    %655 = tpu.dynamic_rotate %620 by %c35_i32_221 dim 1 : vector<8x512xf32>, i32 -> vector<8x512xf32>
    %c7_222 = arith.constant 7 : index
    %c0_223 = arith.constant 0 : index
    %c0_224 = arith.constant 0 : index
    %656 = vector.load %arg5[%c7_222, %c0_223, %c0_224] : memref<49x8x512xf32, #tpu.memory_space<vmem>>, vector<1x8x512xf32>
    %657 = vector.shape_cast %656 : vector<1x8x512xf32> to vector<8x512xf32>
    %658 = arith.mulf %655, %657 : vector<8x512xf32>
    %659 = arith.addf %654, %658 : vector<8x512xf32>
    %c34_i32_225 = arith.constant 34 : i32
    %660 = tpu.dynamic_rotate %620 by %c34_i32_225 dim 1 : vector<8x512xf32>, i32 -> vector<8x512xf32>
    %c8_226 = arith.constant 8 : index
    %c0_227 = arith.constant 0 : index
    %c0_228 = arith.constant 0 : index
    %661 = vector.load %arg5[%c8_226, %c0_227, %c0_228] : memref<49x8x512xf32, #tpu.memory_space<vmem>>, vector<1x8x512xf32>
    %662 = vector.shape_cast %661 : vector<1x8x512xf32> to vector<8x512xf32>
    %663 = arith.mulf %660, %662 : vector<8x512xf32>
    %664 = arith.addf %659, %663 : vector<8x512xf32>
    %c33_i32_229 = arith.constant 33 : i32
    %665 = tpu.dynamic_rotate %620 by %c33_i32_229 dim 1 : vector<8x512xf32>, i32 -> vector<8x512xf32>
    %c9_230 = arith.constant 9 : index
    %c0_231 = arith.constant 0 : index
    %c0_232 = arith.constant 0 : index
    %666 = vector.load %arg5[%c9_230, %c0_231, %c0_232] : memref<49x8x512xf32, #tpu.memory_space<vmem>>, vector<1x8x512xf32>
    %667 = vector.shape_cast %666 : vector<1x8x512xf32> to vector<8x512xf32>
    %668 = arith.mulf %665, %667 : vector<8x512xf32>
    %669 = arith.addf %664, %668 : vector<8x512xf32>
    %c32_i32_233 = arith.constant 32 : i32
    %670 = tpu.dynamic_rotate %620 by %c32_i32_233 dim 1 : vector<8x512xf32>, i32 -> vector<8x512xf32>
    %c10_234 = arith.constant 10 : index
    %c0_235 = arith.constant 0 : index
    %c0_236 = arith.constant 0 : index
    %671 = vector.load %arg5[%c10_234, %c0_235, %c0_236] : memref<49x8x512xf32, #tpu.memory_space<vmem>>, vector<1x8x512xf32>
    %672 = vector.shape_cast %671 : vector<1x8x512xf32> to vector<8x512xf32>
    %673 = arith.mulf %670, %672 : vector<8x512xf32>
    %674 = arith.addf %669, %673 : vector<8x512xf32>
    %c31_i32_237 = arith.constant 31 : i32
    %675 = tpu.dynamic_rotate %620 by %c31_i32_237 dim 1 : vector<8x512xf32>, i32 -> vector<8x512xf32>
    %c11_238 = arith.constant 11 : index
    %c0_239 = arith.constant 0 : index
    %c0_240 = arith.constant 0 : index
    %676 = vector.load %arg5[%c11_238, %c0_239, %c0_240] : memref<49x8x512xf32, #tpu.memory_space<vmem>>, vector<1x8x512xf32>
    %677 = vector.shape_cast %676 : vector<1x8x512xf32> to vector<8x512xf32>
    %678 = arith.mulf %675, %677 : vector<8x512xf32>
    %679 = arith.addf %674, %678 : vector<8x512xf32>
    %c30_i32_241 = arith.constant 30 : i32
    %680 = tpu.dynamic_rotate %620 by %c30_i32_241 dim 1 : vector<8x512xf32>, i32 -> vector<8x512xf32>
    %c12_242 = arith.constant 12 : index
    %c0_243 = arith.constant 0 : index
    %c0_244 = arith.constant 0 : index
    %681 = vector.load %arg5[%c12_242, %c0_243, %c0_244] : memref<49x8x512xf32, #tpu.memory_space<vmem>>, vector<1x8x512xf32>
    %682 = vector.shape_cast %681 : vector<1x8x512xf32> to vector<8x512xf32>
    %683 = arith.mulf %680, %682 : vector<8x512xf32>
    %684 = arith.addf %679, %683 : vector<8x512xf32>
    %c29_i32_245 = arith.constant 29 : i32
    %685 = tpu.dynamic_rotate %620 by %c29_i32_245 dim 1 : vector<8x512xf32>, i32 -> vector<8x512xf32>
    %c13_246 = arith.constant 13 : index
    %c0_247 = arith.constant 0 : index
    %c0_248 = arith.constant 0 : index
    %686 = vector.load %arg5[%c13_246, %c0_247, %c0_248] : memref<49x8x512xf32, #tpu.memory_space<vmem>>, vector<1x8x512xf32>
    %687 = vector.shape_cast %686 : vector<1x8x512xf32> to vector<8x512xf32>
    %688 = arith.mulf %685, %687 : vector<8x512xf32>
    %689 = arith.addf %684, %688 : vector<8x512xf32>
    %c19_i32_249 = arith.constant 19 : i32
    %690 = tpu.dynamic_rotate %620 by %c19_i32_249 dim 1 : vector<8x512xf32>, i32 -> vector<8x512xf32>
    %c14_250 = arith.constant 14 : index
    %c0_251 = arith.constant 0 : index
    %c0_252 = arith.constant 0 : index
    %691 = vector.load %arg5[%c14_250, %c0_251, %c0_252] : memref<49x8x512xf32, #tpu.memory_space<vmem>>, vector<1x8x512xf32>
    %692 = vector.shape_cast %691 : vector<1x8x512xf32> to vector<8x512xf32>
    %693 = arith.mulf %690, %692 : vector<8x512xf32>
    %694 = arith.addf %689, %693 : vector<8x512xf32>
    %c18_i32_253 = arith.constant 18 : i32
    %695 = tpu.dynamic_rotate %620 by %c18_i32_253 dim 1 : vector<8x512xf32>, i32 -> vector<8x512xf32>
    %c15_254 = arith.constant 15 : index
    %c0_255 = arith.constant 0 : index
    %c0_256 = arith.constant 0 : index
    %696 = vector.load %arg5[%c15_254, %c0_255, %c0_256] : memref<49x8x512xf32, #tpu.memory_space<vmem>>, vector<1x8x512xf32>
    %697 = vector.shape_cast %696 : vector<1x8x512xf32> to vector<8x512xf32>
    %698 = arith.mulf %695, %697 : vector<8x512xf32>
    %699 = arith.addf %694, %698 : vector<8x512xf32>
    %c17_i32_257 = arith.constant 17 : i32
    %700 = tpu.dynamic_rotate %620 by %c17_i32_257 dim 1 : vector<8x512xf32>, i32 -> vector<8x512xf32>
    %c16_258 = arith.constant 16 : index
    %c0_259 = arith.constant 0 : index
    %c0_260 = arith.constant 0 : index
    %701 = vector.load %arg5[%c16_258, %c0_259, %c0_260] : memref<49x8x512xf32, #tpu.memory_space<vmem>>, vector<1x8x512xf32>
    %702 = vector.shape_cast %701 : vector<1x8x512xf32> to vector<8x512xf32>
    %703 = arith.mulf %700, %702 : vector<8x512xf32>
    %704 = arith.addf %699, %703 : vector<8x512xf32>
    %c16_i32_261 = arith.constant 16 : i32
    %705 = tpu.dynamic_rotate %620 by %c16_i32_261 dim 1 : vector<8x512xf32>, i32 -> vector<8x512xf32>
    %c17_262 = arith.constant 17 : index
    %c0_263 = arith.constant 0 : index
    %c0_264 = arith.constant 0 : index
    %706 = vector.load %arg5[%c17_262, %c0_263, %c0_264] : memref<49x8x512xf32, #tpu.memory_space<vmem>>, vector<1x8x512xf32>
    %707 = vector.shape_cast %706 : vector<1x8x512xf32> to vector<8x512xf32>
    %708 = arith.mulf %705, %707 : vector<8x512xf32>
    %709 = arith.addf %704, %708 : vector<8x512xf32>
    %c15_i32_265 = arith.constant 15 : i32
    %710 = tpu.dynamic_rotate %620 by %c15_i32_265 dim 1 : vector<8x512xf32>, i32 -> vector<8x512xf32>
    %c18_266 = arith.constant 18 : index
    %c0_267 = arith.constant 0 : index
    %c0_268 = arith.constant 0 : index
    %711 = vector.load %arg5[%c18_266, %c0_267, %c0_268] : memref<49x8x512xf32, #tpu.memory_space<vmem>>, vector<1x8x512xf32>
    %712 = vector.shape_cast %711 : vector<1x8x512xf32> to vector<8x512xf32>
    %713 = arith.mulf %710, %712 : vector<8x512xf32>
    %714 = arith.addf %709, %713 : vector<8x512xf32>
    %c14_i32_269 = arith.constant 14 : i32
    %715 = tpu.dynamic_rotate %620 by %c14_i32_269 dim 1 : vector<8x512xf32>, i32 -> vector<8x512xf32>
    %c19_270 = arith.constant 19 : index
    %c0_271 = arith.constant 0 : index
    %c0_272 = arith.constant 0 : index
    %716 = vector.load %arg5[%c19_270, %c0_271, %c0_272] : memref<49x8x512xf32, #tpu.memory_space<vmem>>, vector<1x8x512xf32>
    %717 = vector.shape_cast %716 : vector<1x8x512xf32> to vector<8x512xf32>
    %718 = arith.mulf %715, %717 : vector<8x512xf32>
    %719 = arith.addf %714, %718 : vector<8x512xf32>
    %c13_i32_273 = arith.constant 13 : i32
    %720 = tpu.dynamic_rotate %620 by %c13_i32_273 dim 1 : vector<8x512xf32>, i32 -> vector<8x512xf32>
    %c20_274 = arith.constant 20 : index
    %c0_275 = arith.constant 0 : index
    %c0_276 = arith.constant 0 : index
    %721 = vector.load %arg5[%c20_274, %c0_275, %c0_276] : memref<49x8x512xf32, #tpu.memory_space<vmem>>, vector<1x8x512xf32>
    %722 = vector.shape_cast %721 : vector<1x8x512xf32> to vector<8x512xf32>
    %723 = arith.mulf %720, %722 : vector<8x512xf32>
    %724 = arith.addf %719, %723 : vector<8x512xf32>
    %c3_i32_277 = arith.constant 3 : i32
    %725 = tpu.dynamic_rotate %620 by %c3_i32_277 dim 1 : vector<8x512xf32>, i32 -> vector<8x512xf32>
    %c21_278 = arith.constant 21 : index
    %c0_279 = arith.constant 0 : index
    %c0_280 = arith.constant 0 : index
    %726 = vector.load %arg5[%c21_278, %c0_279, %c0_280] : memref<49x8x512xf32, #tpu.memory_space<vmem>>, vector<1x8x512xf32>
    %727 = vector.shape_cast %726 : vector<1x8x512xf32> to vector<8x512xf32>
    %728 = arith.mulf %725, %727 : vector<8x512xf32>
    %729 = arith.addf %724, %728 : vector<8x512xf32>
    %c2_i32_281 = arith.constant 2 : i32
    %730 = tpu.dynamic_rotate %620 by %c2_i32_281 dim 1 : vector<8x512xf32>, i32 -> vector<8x512xf32>
    %c22_282 = arith.constant 22 : index
    %c0_283 = arith.constant 0 : index
    %c0_284 = arith.constant 0 : index
    %731 = vector.load %arg5[%c22_282, %c0_283, %c0_284] : memref<49x8x512xf32, #tpu.memory_space<vmem>>, vector<1x8x512xf32>
    %732 = vector.shape_cast %731 : vector<1x8x512xf32> to vector<8x512xf32>
    %733 = arith.mulf %730, %732 : vector<8x512xf32>
    %734 = arith.addf %729, %733 : vector<8x512xf32>
    %c1_i32_285 = arith.constant 1 : i32
    %735 = tpu.dynamic_rotate %620 by %c1_i32_285 dim 1 : vector<8x512xf32>, i32 -> vector<8x512xf32>
    %c23_286 = arith.constant 23 : index
    %c0_287 = arith.constant 0 : index
    %c0_288 = arith.constant 0 : index
    %736 = vector.load %arg5[%c23_286, %c0_287, %c0_288] : memref<49x8x512xf32, #tpu.memory_space<vmem>>, vector<1x8x512xf32>
    %737 = vector.shape_cast %736 : vector<1x8x512xf32> to vector<8x512xf32>
    %738 = arith.mulf %735, %737 : vector<8x512xf32>
    %739 = arith.addf %734, %738 : vector<8x512xf32>
    %c24_289 = arith.constant 24 : index
    %c0_290 = arith.constant 0 : index
    %c0_291 = arith.constant 0 : index
    %740 = vector.load %arg5[%c24_289, %c0_290, %c0_291] : memref<49x8x512xf32, #tpu.memory_space<vmem>>, vector<1x8x512xf32>
    %741 = vector.shape_cast %740 : vector<1x8x512xf32> to vector<8x512xf32>
    %742 = arith.mulf %620, %741 : vector<8x512xf32>
    %743 = arith.addf %739, %742 : vector<8x512xf32>
    %c511_i32_292 = arith.constant 511 : i32
    %744 = tpu.dynamic_rotate %620 by %c511_i32_292 dim 1 : vector<8x512xf32>, i32 -> vector<8x512xf32>
    %c25_293 = arith.constant 25 : index
    %c0_294 = arith.constant 0 : index
    %c0_295 = arith.constant 0 : index
    %745 = vector.load %arg5[%c25_293, %c0_294, %c0_295] : memref<49x8x512xf32, #tpu.memory_space<vmem>>, vector<1x8x512xf32>
    %746 = vector.shape_cast %745 : vector<1x8x512xf32> to vector<8x512xf32>
    %747 = arith.mulf %744, %746 : vector<8x512xf32>
    %748 = arith.addf %743, %747 : vector<8x512xf32>
    %c510_i32_296 = arith.constant 510 : i32
    %749 = tpu.dynamic_rotate %620 by %c510_i32_296 dim 1 : vector<8x512xf32>, i32 -> vector<8x512xf32>
    %c26_297 = arith.constant 26 : index
    %c0_298 = arith.constant 0 : index
    %c0_299 = arith.constant 0 : index
    %750 = vector.load %arg5[%c26_297, %c0_298, %c0_299] : memref<49x8x512xf32, #tpu.memory_space<vmem>>, vector<1x8x512xf32>
    %751 = vector.shape_cast %750 : vector<1x8x512xf32> to vector<8x512xf32>
    %752 = arith.mulf %749, %751 : vector<8x512xf32>
    %753 = arith.addf %748, %752 : vector<8x512xf32>
    %c509_i32_300 = arith.constant 509 : i32
    %754 = tpu.dynamic_rotate %620 by %c509_i32_300 dim 1 : vector<8x512xf32>, i32 -> vector<8x512xf32>
    %c27_301 = arith.constant 27 : index
    %c0_302 = arith.constant 0 : index
    %c0_303 = arith.constant 0 : index
    %755 = vector.load %arg5[%c27_301, %c0_302, %c0_303] : memref<49x8x512xf32, #tpu.memory_space<vmem>>, vector<1x8x512xf32>
    %756 = vector.shape_cast %755 : vector<1x8x512xf32> to vector<8x512xf32>
    %757 = arith.mulf %754, %756 : vector<8x512xf32>
    %758 = arith.addf %753, %757 : vector<8x512xf32>
    %c499_i32_304 = arith.constant 499 : i32
    %759 = tpu.dynamic_rotate %620 by %c499_i32_304 dim 1 : vector<8x512xf32>, i32 -> vector<8x512xf32>
    %c28_305 = arith.constant 28 : index
    %c0_306 = arith.constant 0 : index
    %c0_307 = arith.constant 0 : index
    %760 = vector.load %arg5[%c28_305, %c0_306, %c0_307] : memref<49x8x512xf32, #tpu.memory_space<vmem>>, vector<1x8x512xf32>
    %761 = vector.shape_cast %760 : vector<1x8x512xf32> to vector<8x512xf32>
    %762 = arith.mulf %759, %761 : vector<8x512xf32>
    %763 = arith.addf %758, %762 : vector<8x512xf32>
    %c498_i32_308 = arith.constant 498 : i32
    %764 = tpu.dynamic_rotate %620 by %c498_i32_308 dim 1 : vector<8x512xf32>, i32 -> vector<8x512xf32>
    %c29_309 = arith.constant 29 : index
    %c0_310 = arith.constant 0 : index
    %c0_311 = arith.constant 0 : index
    %765 = vector.load %arg5[%c29_309, %c0_310, %c0_311] : memref<49x8x512xf32, #tpu.memory_space<vmem>>, vector<1x8x512xf32>
    %766 = vector.shape_cast %765 : vector<1x8x512xf32> to vector<8x512xf32>
    %767 = arith.mulf %764, %766 : vector<8x512xf32>
    %768 = arith.addf %763, %767 : vector<8x512xf32>
    %c497_i32_312 = arith.constant 497 : i32
    %769 = tpu.dynamic_rotate %620 by %c497_i32_312 dim 1 : vector<8x512xf32>, i32 -> vector<8x512xf32>
    %c30_313 = arith.constant 30 : index
    %c0_314 = arith.constant 0 : index
    %c0_315 = arith.constant 0 : index
    %770 = vector.load %arg5[%c30_313, %c0_314, %c0_315] : memref<49x8x512xf32, #tpu.memory_space<vmem>>, vector<1x8x512xf32>
    %771 = vector.shape_cast %770 : vector<1x8x512xf32> to vector<8x512xf32>
    %772 = arith.mulf %769, %771 : vector<8x512xf32>
    %773 = arith.addf %768, %772 : vector<8x512xf32>
    %c496_i32_316 = arith.constant 496 : i32
    %774 = tpu.dynamic_rotate %620 by %c496_i32_316 dim 1 : vector<8x512xf32>, i32 -> vector<8x512xf32>
    %c31_317 = arith.constant 31 : index
    %c0_318 = arith.constant 0 : index
    %c0_319 = arith.constant 0 : index
    %775 = vector.load %arg5[%c31_317, %c0_318, %c0_319] : memref<49x8x512xf32, #tpu.memory_space<vmem>>, vector<1x8x512xf32>
    %776 = vector.shape_cast %775 : vector<1x8x512xf32> to vector<8x512xf32>
    %777 = arith.mulf %774, %776 : vector<8x512xf32>
    %778 = arith.addf %773, %777 : vector<8x512xf32>
    %c495_i32_320 = arith.constant 495 : i32
    %779 = tpu.dynamic_rotate %620 by %c495_i32_320 dim 1 : vector<8x512xf32>, i32 -> vector<8x512xf32>
    %c32_321 = arith.constant 32 : index
    %c0_322 = arith.constant 0 : index
    %c0_323 = arith.constant 0 : index
    %780 = vector.load %arg5[%c32_321, %c0_322, %c0_323] : memref<49x8x512xf32, #tpu.memory_space<vmem>>, vector<1x8x512xf32>
    %781 = vector.shape_cast %780 : vector<1x8x512xf32> to vector<8x512xf32>
    %782 = arith.mulf %779, %781 : vector<8x512xf32>
    %783 = arith.addf %778, %782 : vector<8x512xf32>
    %c494_i32_324 = arith.constant 494 : i32
    %784 = tpu.dynamic_rotate %620 by %c494_i32_324 dim 1 : vector<8x512xf32>, i32 -> vector<8x512xf32>
    %c33_325 = arith.constant 33 : index
    %c0_326 = arith.constant 0 : index
    %c0_327 = arith.constant 0 : index
    %785 = vector.load %arg5[%c33_325, %c0_326, %c0_327] : memref<49x8x512xf32, #tpu.memory_space<vmem>>, vector<1x8x512xf32>
    %786 = vector.shape_cast %785 : vector<1x8x512xf32> to vector<8x512xf32>
    %787 = arith.mulf %784, %786 : vector<8x512xf32>
    %788 = arith.addf %783, %787 : vector<8x512xf32>
    %c493_i32_328 = arith.constant 493 : i32
    %789 = tpu.dynamic_rotate %620 by %c493_i32_328 dim 1 : vector<8x512xf32>, i32 -> vector<8x512xf32>
    %c34_329 = arith.constant 34 : index
    %c0_330 = arith.constant 0 : index
    %c0_331 = arith.constant 0 : index
    %790 = vector.load %arg5[%c34_329, %c0_330, %c0_331] : memref<49x8x512xf32, #tpu.memory_space<vmem>>, vector<1x8x512xf32>
    %791 = vector.shape_cast %790 : vector<1x8x512xf32> to vector<8x512xf32>
    %792 = arith.mulf %789, %791 : vector<8x512xf32>
    %793 = arith.addf %788, %792 : vector<8x512xf32>
    %c483_i32_332 = arith.constant 483 : i32
    %794 = tpu.dynamic_rotate %620 by %c483_i32_332 dim 1 : vector<8x512xf32>, i32 -> vector<8x512xf32>
    %c35_333 = arith.constant 35 : index
    %c0_334 = arith.constant 0 : index
    %c0_335 = arith.constant 0 : index
    %795 = vector.load %arg5[%c35_333, %c0_334, %c0_335] : memref<49x8x512xf32, #tpu.memory_space<vmem>>, vector<1x8x512xf32>
    %796 = vector.shape_cast %795 : vector<1x8x512xf32> to vector<8x512xf32>
    %797 = arith.mulf %794, %796 : vector<8x512xf32>
    %798 = arith.addf %793, %797 : vector<8x512xf32>
    %c482_i32_336 = arith.constant 482 : i32
    %799 = tpu.dynamic_rotate %620 by %c482_i32_336 dim 1 : vector<8x512xf32>, i32 -> vector<8x512xf32>
    %c36_337 = arith.constant 36 : index
    %c0_338 = arith.constant 0 : index
    %c0_339 = arith.constant 0 : index
    %800 = vector.load %arg5[%c36_337, %c0_338, %c0_339] : memref<49x8x512xf32, #tpu.memory_space<vmem>>, vector<1x8x512xf32>
    %801 = vector.shape_cast %800 : vector<1x8x512xf32> to vector<8x512xf32>
    %802 = arith.mulf %799, %801 : vector<8x512xf32>
    %803 = arith.addf %798, %802 : vector<8x512xf32>
    %c481_i32_340 = arith.constant 481 : i32
    %804 = tpu.dynamic_rotate %620 by %c481_i32_340 dim 1 : vector<8x512xf32>, i32 -> vector<8x512xf32>
    %c37_341 = arith.constant 37 : index
    %c0_342 = arith.constant 0 : index
    %c0_343 = arith.constant 0 : index
    %805 = vector.load %arg5[%c37_341, %c0_342, %c0_343] : memref<49x8x512xf32, #tpu.memory_space<vmem>>, vector<1x8x512xf32>
    %806 = vector.shape_cast %805 : vector<1x8x512xf32> to vector<8x512xf32>
    %807 = arith.mulf %804, %806 : vector<8x512xf32>
    %808 = arith.addf %803, %807 : vector<8x512xf32>
    %c480_i32_344 = arith.constant 480 : i32
    %809 = tpu.dynamic_rotate %620 by %c480_i32_344 dim 1 : vector<8x512xf32>, i32 -> vector<8x512xf32>
    %c38_345 = arith.constant 38 : index
    %c0_346 = arith.constant 0 : index
    %c0_347 = arith.constant 0 : index
    %810 = vector.load %arg5[%c38_345, %c0_346, %c0_347] : memref<49x8x512xf32, #tpu.memory_space<vmem>>, vector<1x8x512xf32>
    %811 = vector.shape_cast %810 : vector<1x8x512xf32> to vector<8x512xf32>
    %812 = arith.mulf %809, %811 : vector<8x512xf32>
    %813 = arith.addf %808, %812 : vector<8x512xf32>
    %c479_i32_348 = arith.constant 479 : i32
    %814 = tpu.dynamic_rotate %620 by %c479_i32_348 dim 1 : vector<8x512xf32>, i32 -> vector<8x512xf32>
    %c39_349 = arith.constant 39 : index
    %c0_350 = arith.constant 0 : index
    %c0_351 = arith.constant 0 : index
    %815 = vector.load %arg5[%c39_349, %c0_350, %c0_351] : memref<49x8x512xf32, #tpu.memory_space<vmem>>, vector<1x8x512xf32>
    %816 = vector.shape_cast %815 : vector<1x8x512xf32> to vector<8x512xf32>
    %817 = arith.mulf %814, %816 : vector<8x512xf32>
    %818 = arith.addf %813, %817 : vector<8x512xf32>
    %c478_i32_352 = arith.constant 478 : i32
    %819 = tpu.dynamic_rotate %620 by %c478_i32_352 dim 1 : vector<8x512xf32>, i32 -> vector<8x512xf32>
    %c40_353 = arith.constant 40 : index
    %c0_354 = arith.constant 0 : index
    %c0_355 = arith.constant 0 : index
    %820 = vector.load %arg5[%c40_353, %c0_354, %c0_355] : memref<49x8x512xf32, #tpu.memory_space<vmem>>, vector<1x8x512xf32>
    %821 = vector.shape_cast %820 : vector<1x8x512xf32> to vector<8x512xf32>
    %822 = arith.mulf %819, %821 : vector<8x512xf32>
    %823 = arith.addf %818, %822 : vector<8x512xf32>
    %c477_i32_356 = arith.constant 477 : i32
    %824 = tpu.dynamic_rotate %620 by %c477_i32_356 dim 1 : vector<8x512xf32>, i32 -> vector<8x512xf32>
    %c41_357 = arith.constant 41 : index
    %c0_358 = arith.constant 0 : index
    %c0_359 = arith.constant 0 : index
    %825 = vector.load %arg5[%c41_357, %c0_358, %c0_359] : memref<49x8x512xf32, #tpu.memory_space<vmem>>, vector<1x8x512xf32>
    %826 = vector.shape_cast %825 : vector<1x8x512xf32> to vector<8x512xf32>
    %827 = arith.mulf %824, %826 : vector<8x512xf32>
    %828 = arith.addf %823, %827 : vector<8x512xf32>
    %c467_i32_360 = arith.constant 467 : i32
    %829 = tpu.dynamic_rotate %620 by %c467_i32_360 dim 1 : vector<8x512xf32>, i32 -> vector<8x512xf32>
    %c42_361 = arith.constant 42 : index
    %c0_362 = arith.constant 0 : index
    %c0_363 = arith.constant 0 : index
    %830 = vector.load %arg5[%c42_361, %c0_362, %c0_363] : memref<49x8x512xf32, #tpu.memory_space<vmem>>, vector<1x8x512xf32>
    %831 = vector.shape_cast %830 : vector<1x8x512xf32> to vector<8x512xf32>
    %832 = arith.mulf %829, %831 : vector<8x512xf32>
    %833 = arith.addf %828, %832 : vector<8x512xf32>
    %c466_i32_364 = arith.constant 466 : i32
    %834 = tpu.dynamic_rotate %620 by %c466_i32_364 dim 1 : vector<8x512xf32>, i32 -> vector<8x512xf32>
    %c43_365 = arith.constant 43 : index
    %c0_366 = arith.constant 0 : index
    %c0_367 = arith.constant 0 : index
    %835 = vector.load %arg5[%c43_365, %c0_366, %c0_367] : memref<49x8x512xf32, #tpu.memory_space<vmem>>, vector<1x8x512xf32>
    %836 = vector.shape_cast %835 : vector<1x8x512xf32> to vector<8x512xf32>
    %837 = arith.mulf %834, %836 : vector<8x512xf32>
    %838 = arith.addf %833, %837 : vector<8x512xf32>
    %c465_i32_368 = arith.constant 465 : i32
    %839 = tpu.dynamic_rotate %620 by %c465_i32_368 dim 1 : vector<8x512xf32>, i32 -> vector<8x512xf32>
    %c44_369 = arith.constant 44 : index
    %c0_370 = arith.constant 0 : index
    %c0_371 = arith.constant 0 : index
    %840 = vector.load %arg5[%c44_369, %c0_370, %c0_371] : memref<49x8x512xf32, #tpu.memory_space<vmem>>, vector<1x8x512xf32>
    %841 = vector.shape_cast %840 : vector<1x8x512xf32> to vector<8x512xf32>
    %842 = arith.mulf %839, %841 : vector<8x512xf32>
    %843 = arith.addf %838, %842 : vector<8x512xf32>
    %c464_i32_372 = arith.constant 464 : i32
    %844 = tpu.dynamic_rotate %620 by %c464_i32_372 dim 1 : vector<8x512xf32>, i32 -> vector<8x512xf32>
    %c45_373 = arith.constant 45 : index
    %c0_374 = arith.constant 0 : index
    %c0_375 = arith.constant 0 : index
    %845 = vector.load %arg5[%c45_373, %c0_374, %c0_375] : memref<49x8x512xf32, #tpu.memory_space<vmem>>, vector<1x8x512xf32>
    %846 = vector.shape_cast %845 : vector<1x8x512xf32> to vector<8x512xf32>
    %847 = arith.mulf %844, %846 : vector<8x512xf32>
    %848 = arith.addf %843, %847 : vector<8x512xf32>
    %c463_i32_376 = arith.constant 463 : i32
    %849 = tpu.dynamic_rotate %620 by %c463_i32_376 dim 1 : vector<8x512xf32>, i32 -> vector<8x512xf32>
    %c46_377 = arith.constant 46 : index
    %c0_378 = arith.constant 0 : index
    %c0_379 = arith.constant 0 : index
    %850 = vector.load %arg5[%c46_377, %c0_378, %c0_379] : memref<49x8x512xf32, #tpu.memory_space<vmem>>, vector<1x8x512xf32>
    %851 = vector.shape_cast %850 : vector<1x8x512xf32> to vector<8x512xf32>
    %852 = arith.mulf %849, %851 : vector<8x512xf32>
    %853 = arith.addf %848, %852 : vector<8x512xf32>
    %c462_i32_380 = arith.constant 462 : i32
    %854 = tpu.dynamic_rotate %620 by %c462_i32_380 dim 1 : vector<8x512xf32>, i32 -> vector<8x512xf32>
    %c47_381 = arith.constant 47 : index
    %c0_382 = arith.constant 0 : index
    %c0_383 = arith.constant 0 : index
    %855 = vector.load %arg5[%c47_381, %c0_382, %c0_383] : memref<49x8x512xf32, #tpu.memory_space<vmem>>, vector<1x8x512xf32>
    %856 = vector.shape_cast %855 : vector<1x8x512xf32> to vector<8x512xf32>
    %857 = arith.mulf %854, %856 : vector<8x512xf32>
    %858 = arith.addf %853, %857 : vector<8x512xf32>
    %c461_i32_384 = arith.constant 461 : i32
    %859 = tpu.dynamic_rotate %620 by %c461_i32_384 dim 1 : vector<8x512xf32>, i32 -> vector<8x512xf32>
    %c48_385 = arith.constant 48 : index
    %c0_386 = arith.constant 0 : index
    %c0_387 = arith.constant 0 : index
    %860 = vector.load %arg5[%c48_385, %c0_386, %c0_387] : memref<49x8x512xf32, #tpu.memory_space<vmem>>, vector<1x8x512xf32>
    %861 = vector.shape_cast %860 : vector<1x8x512xf32> to vector<8x512xf32>
    %862 = arith.mulf %859, %861 : vector<8x512xf32>
    %863 = arith.addf %858, %862 : vector<8x512xf32>
    %864 = vector.extract_strided_slice %0 {offsets = [0, 53], sizes = [8, 1], strides = [1, 1]} : vector<16x89xf32> to vector<8x1xf32>
    %865 = vector.broadcast %864 : vector<8x1xf32> to vector<8x512xf32>
    %866 = arith.addf %863, %865 : vector<8x512xf32>
    %867 = vector.extract_strided_slice %0 {offsets = [0, 54], sizes = [8, 1], strides = [1, 1]} : vector<16x89xf32> to vector<8x1xf32>
    %868 = vector.extract_strided_slice %0 {offsets = [0, 55], sizes = [8, 1], strides = [1, 1]} : vector<16x89xf32> to vector<8x1xf32>
    %869 = tpu.iota {dimensions = array<i32: 0>} : vector<8x1xi32>
    %c0_i32_388 = arith.constant 0 : i32
    %870 = vector.broadcast %c0_i32_388 : i32 to vector<8x1xi32>
    %871 = arith.cmpi sge, %869, %870 : vector<8x1xi32>
    %c4_i32_389 = arith.constant 4 : i32
    %872 = vector.broadcast %c4_i32_389 : i32 to vector<8x1xi32>
    %873 = arith.cmpi slt, %869, %872 : vector<8x1xi32>
    %874 = arith.andi %871, %873 : vector<8x1xi1>
    %875 = arith.extui %874 : vector<8x1xi1> to vector<8x1xi32>
    %876 = arith.sitofp %875 : vector<8x1xi32> to vector<8x1xf32>
    %c4_i32_390 = arith.constant 4 : i32
    %877 = vector.broadcast %c4_i32_390 : i32 to vector<8x1xi32>
    %878 = arith.cmpi sge, %869, %877 : vector<8x1xi32>
    %c8_i32_391 = arith.constant 8 : i32
    %879 = vector.broadcast %c8_i32_391 : i32 to vector<8x1xi32>
    %880 = arith.cmpi slt, %869, %879 : vector<8x1xi32>
    %881 = arith.andi %878, %880 : vector<8x1xi1>
    %882 = arith.extui %881 : vector<8x1xi1> to vector<8x1xi32>
    %883 = arith.sitofp %882 : vector<8x1xi32> to vector<8x1xf32>
    %884 = vector.extract_strided_slice %866 {offsets = [0, 0], sizes = [8, 256], strides = [1, 1]} : vector<8x512xf32> to vector<8x256xf32>
    %cst_392 = arith.constant dense<0.000000e+00> : vector<8xf32>
    %885 = vector.multi_reduction <add>, %884, %cst_392 [1] : vector<8x256xf32> to vector<8xf32>
    %886 = vector.shape_cast %885 : vector<8xf32> to vector<8x1xf32>
    %cst_393 = arith.constant 0.000000e+00 : f32
    %887 = vector.broadcast %cst_393 : f32 to vector<8x1xf32>
    %888 = arith.mulf %886, %876 : vector<8x1xf32>
    %cst_394 = arith.constant dense<0.000000e+00> : vector<1xf32>
    %889 = vector.multi_reduction <add>, %888, %cst_394 [0] : vector<8x1xf32> to vector<1xf32>
    %890 = vector.shape_cast %889 : vector<1xf32> to vector<1x1xf32>
    %891 = vector.broadcast %890 : vector<1x1xf32> to vector<8x1xf32>
    %892 = arith.mulf %876, %891 : vector<8x1xf32>
    %893 = arith.addf %887, %892 : vector<8x1xf32>
    %894 = arith.mulf %886, %883 : vector<8x1xf32>
    %cst_395 = arith.constant dense<0.000000e+00> : vector<1xf32>
    %895 = vector.multi_reduction <add>, %894, %cst_395 [0] : vector<8x1xf32> to vector<1xf32>
    %896 = vector.shape_cast %895 : vector<1xf32> to vector<1x1xf32>
    %897 = vector.broadcast %896 : vector<1x1xf32> to vector<8x1xf32>
    %898 = arith.mulf %883, %897 : vector<8x1xf32>
    %899 = arith.addf %893, %898 : vector<8x1xf32>
    %cst_396 = arith.constant 9.765625E-4 : f32
    %900 = vector.broadcast %cst_396 : f32 to vector<8x1xf32>
    %901 = arith.mulf %899, %900 : vector<8x1xf32>
    %902 = vector.broadcast %901 : vector<8x1xf32> to vector<8x256xf32>
    %903 = arith.subf %884, %902 : vector<8x256xf32>
    %904 = arith.mulf %903, %903 : vector<8x256xf32>
    %cst_397 = arith.constant dense<0.000000e+00> : vector<8xf32>
    %905 = vector.multi_reduction <add>, %904, %cst_397 [1] : vector<8x256xf32> to vector<8xf32>
    %906 = vector.shape_cast %905 : vector<8xf32> to vector<8x1xf32>
    %cst_398 = arith.constant 0.000000e+00 : f32
    %907 = vector.broadcast %cst_398 : f32 to vector<8x1xf32>
    %908 = arith.mulf %906, %876 : vector<8x1xf32>
    %cst_399 = arith.constant dense<0.000000e+00> : vector<1xf32>
    %909 = vector.multi_reduction <add>, %908, %cst_399 [0] : vector<8x1xf32> to vector<1xf32>
    %910 = vector.shape_cast %909 : vector<1xf32> to vector<1x1xf32>
    %911 = vector.broadcast %910 : vector<1x1xf32> to vector<8x1xf32>
    %912 = arith.mulf %876, %911 : vector<8x1xf32>
    %913 = arith.addf %907, %912 : vector<8x1xf32>
    %914 = arith.mulf %906, %883 : vector<8x1xf32>
    %cst_400 = arith.constant dense<0.000000e+00> : vector<1xf32>
    %915 = vector.multi_reduction <add>, %914, %cst_400 [0] : vector<8x1xf32> to vector<1xf32>
    %916 = vector.shape_cast %915 : vector<1xf32> to vector<1x1xf32>
    %917 = vector.broadcast %916 : vector<1x1xf32> to vector<8x1xf32>
    %918 = arith.mulf %883, %917 : vector<8x1xf32>
    %919 = arith.addf %913, %918 : vector<8x1xf32>
    %cst_401 = arith.constant 9.765625E-4 : f32
    %920 = vector.broadcast %cst_401 : f32 to vector<8x1xf32>
    %921 = arith.mulf %919, %920 : vector<8x1xf32>
    %cst_402 = arith.constant 9.99999974E-6 : f32
    %922 = vector.broadcast %cst_402 : f32 to vector<8x1xf32>
    %923 = arith.addf %921, %922 : vector<8x1xf32>
    %924 = math.rsqrt %923 : vector<8x1xf32>
    %925 = vector.broadcast %924 : vector<8x1xf32> to vector<8x256xf32>
    %926 = arith.mulf %903, %925 : vector<8x256xf32>
    %927 = vector.extract_strided_slice %866 {offsets = [0, 256], sizes = [8, 256], strides = [1, 1]} : vector<8x512xf32> to vector<8x256xf32>
    %cst_403 = arith.constant dense<0.000000e+00> : vector<8xf32>
    %928 = vector.multi_reduction <add>, %927, %cst_403 [1] : vector<8x256xf32> to vector<8xf32>
    %929 = vector.shape_cast %928 : vector<8xf32> to vector<8x1xf32>
    %cst_404 = arith.constant 0.000000e+00 : f32
    %930 = vector.broadcast %cst_404 : f32 to vector<8x1xf32>
    %931 = arith.mulf %929, %876 : vector<8x1xf32>
    %cst_405 = arith.constant dense<0.000000e+00> : vector<1xf32>
    %932 = vector.multi_reduction <add>, %931, %cst_405 [0] : vector<8x1xf32> to vector<1xf32>
    %933 = vector.shape_cast %932 : vector<1xf32> to vector<1x1xf32>
    %934 = vector.broadcast %933 : vector<1x1xf32> to vector<8x1xf32>
    %935 = arith.mulf %876, %934 : vector<8x1xf32>
    %936 = arith.addf %930, %935 : vector<8x1xf32>
    %937 = arith.mulf %929, %883 : vector<8x1xf32>
    %cst_406 = arith.constant dense<0.000000e+00> : vector<1xf32>
    %938 = vector.multi_reduction <add>, %937, %cst_406 [0] : vector<8x1xf32> to vector<1xf32>
    %939 = vector.shape_cast %938 : vector<1xf32> to vector<1x1xf32>
    %940 = vector.broadcast %939 : vector<1x1xf32> to vector<8x1xf32>
    %941 = arith.mulf %883, %940 : vector<8x1xf32>
    %942 = arith.addf %936, %941 : vector<8x1xf32>
    %cst_407 = arith.constant 9.765625E-4 : f32
    %943 = vector.broadcast %cst_407 : f32 to vector<8x1xf32>
    %944 = arith.mulf %942, %943 : vector<8x1xf32>
    %945 = vector.broadcast %944 : vector<8x1xf32> to vector<8x256xf32>
    %946 = arith.subf %927, %945 : vector<8x256xf32>
    %947 = arith.mulf %946, %946 : vector<8x256xf32>
    %cst_408 = arith.constant dense<0.000000e+00> : vector<8xf32>
    %948 = vector.multi_reduction <add>, %947, %cst_408 [1] : vector<8x256xf32> to vector<8xf32>
    %949 = vector.shape_cast %948 : vector<8xf32> to vector<8x1xf32>
    %cst_409 = arith.constant 0.000000e+00 : f32
    %950 = vector.broadcast %cst_409 : f32 to vector<8x1xf32>
    %951 = arith.mulf %949, %876 : vector<8x1xf32>
    %cst_410 = arith.constant dense<0.000000e+00> : vector<1xf32>
    %952 = vector.multi_reduction <add>, %951, %cst_410 [0] : vector<8x1xf32> to vector<1xf32>
    %953 = vector.shape_cast %952 : vector<1xf32> to vector<1x1xf32>
    %954 = vector.broadcast %953 : vector<1x1xf32> to vector<8x1xf32>
    %955 = arith.mulf %876, %954 : vector<8x1xf32>
    %956 = arith.addf %950, %955 : vector<8x1xf32>
    %957 = arith.mulf %949, %883 : vector<8x1xf32>
    %cst_411 = arith.constant dense<0.000000e+00> : vector<1xf32>
    %958 = vector.multi_reduction <add>, %957, %cst_411 [0] : vector<8x1xf32> to vector<1xf32>
    %959 = vector.shape_cast %958 : vector<1xf32> to vector<1x1xf32>
    %960 = vector.broadcast %959 : vector<1x1xf32> to vector<8x1xf32>
    %961 = arith.mulf %883, %960 : vector<8x1xf32>
    %962 = arith.addf %956, %961 : vector<8x1xf32>
    %cst_412 = arith.constant 9.765625E-4 : f32
    %963 = vector.broadcast %cst_412 : f32 to vector<8x1xf32>
    %964 = arith.mulf %962, %963 : vector<8x1xf32>
    %cst_413 = arith.constant 9.99999974E-6 : f32
    %965 = vector.broadcast %cst_413 : f32 to vector<8x1xf32>
    %966 = arith.addf %964, %965 : vector<8x1xf32>
    %967 = math.rsqrt %966 : vector<8x1xf32>
    %968 = vector.broadcast %967 : vector<8x1xf32> to vector<8x256xf32>
    %969 = arith.mulf %946, %968 : vector<8x256xf32>
    %970 = tpu.concatenate %926, %969 in 1 : vector<8x256xf32>, vector<8x256xf32> -> vector<8x512xf32>
    %971 = vector.broadcast %867 : vector<8x1xf32> to vector<8x512xf32>
    %972 = arith.mulf %970, %971 : vector<8x512xf32>
    %973 = vector.broadcast %868 : vector<8x1xf32> to vector<8x512xf32>
    %974 = arith.addf %972, %973 : vector<8x512xf32>
    %975 = vector.extract_strided_slice %0 {offsets = [0, 56], sizes = [16, 8], strides = [1, 1]} : vector<16x89xf32> to vector<16x8xf32>
    %cst_414 = arith.constant dense<0.000000e+00> : vector<16x512xf32>
    %976 = tpu.matmul %975, %974, %cst_414 {dimension_numbers = #tpu.dot_dimension_numbers<[1], [0], [0], [1], [0, 0, 1, 1], [], []>} : vector<16x8xf32>, vector<8x512xf32>, vector<16x512xf32> -> vector<16x512xf32>
    %977 = vector.extract_strided_slice %0 {offsets = [0, 64], sizes = [16, 1], strides = [1, 1]} : vector<16x89xf32> to vector<16x1xf32>
    %978 = vector.broadcast %977 : vector<16x1xf32> to vector<16x512xf32>
    %979 = arith.addf %976, %978 : vector<16x512xf32>
    %cst_415 = arith.constant 5.000000e-01 : f32
    %980 = vector.broadcast %cst_415 : f32 to vector<16x512xf32>
    %981 = arith.mulf %980, %979 : vector<16x512xf32>
    %cst_416 = arith.constant 0.707106769 : f32
    %982 = vector.broadcast %cst_416 : f32 to vector<16x512xf32>
    %983 = arith.mulf %979, %982 : vector<16x512xf32>
    %cst_417 = arith.constant 0.000000e+00 : f32
    %984 = vector.broadcast %cst_417 : f32 to vector<16x512xf32>
    %985 = arith.cmpf oge, %983, %984 : vector<16x512xf32>
    %cst_418 = arith.constant 1.000000e+00 : f32
    %cst_419 = arith.constant -1.000000e+00 : f32
    %986 = vector.broadcast %cst_418 : f32 to vector<16x512xf32>
    %987 = vector.broadcast %cst_419 : f32 to vector<16x512xf32>
    %988 = arith.select %985, %986, %987 : vector<16x512xi1>, vector<16x512xf32>
    %989 = math.absf %983 : vector<16x512xf32>
    %cst_420 = arith.constant 0.327591091 : f32
    %990 = vector.broadcast %cst_420 : f32 to vector<16x512xf32>
    %991 = arith.mulf %990, %989 : vector<16x512xf32>
    %cst_421 = arith.constant 1.000000e+00 : f32
    %992 = vector.broadcast %cst_421 : f32 to vector<16x512xf32>
    %993 = arith.addf %992, %991 : vector<16x512xf32>
    %994 = tpu.reciprocal %993 {approx = true} : vector<16x512xf32> -> vector<16x512xf32>
    %cst_422 = arith.constant 1.06140542 : f32
    %995 = vector.broadcast %cst_422 : f32 to vector<16x512xf32>
    %996 = arith.mulf %995, %994 : vector<16x512xf32>
    %cst_423 = arith.constant -1.45315206 : f32
    %997 = vector.broadcast %cst_423 : f32 to vector<16x512xf32>
    %998 = arith.addf %996, %997 : vector<16x512xf32>
    %999 = arith.mulf %998, %994 : vector<16x512xf32>
    %cst_424 = arith.constant 1.42141378 : f32
    %1000 = vector.broadcast %cst_424 : f32 to vector<16x512xf32>
    %1001 = arith.addf %999, %1000 : vector<16x512xf32>
    %1002 = arith.mulf %1001, %994 : vector<16x512xf32>
    %cst_425 = arith.constant -0.284496725 : f32
    %1003 = vector.broadcast %cst_425 : f32 to vector<16x512xf32>
    %1004 = arith.addf %1002, %1003 : vector<16x512xf32>
    %1005 = arith.mulf %1004, %994 : vector<16x512xf32>
    %cst_426 = arith.constant 0.254829586 : f32
    %1006 = vector.broadcast %cst_426 : f32 to vector<16x512xf32>
    %1007 = arith.addf %1005, %1006 : vector<16x512xf32>
    %1008 = arith.mulf %1007, %994 : vector<16x512xf32>
    %cst_427 = arith.constant 0.000000e+00 : f32
    %1009 = vector.broadcast %cst_427 : f32 to vector<16x512xf32>
    %1010 = arith.subf %1009, %989 : vector<16x512xf32>
    %1011 = arith.mulf %1010, %989 : vector<16x512xf32>
    %1012 = math.exp %1011 : vector<16x512xf32>
    %1013 = arith.mulf %1008, %1012 : vector<16x512xf32>
    %cst_428 = arith.constant 1.000000e+00 : f32
    %1014 = vector.broadcast %cst_428 : f32 to vector<16x512xf32>
    %1015 = arith.subf %1014, %1013 : vector<16x512xf32>
    %1016 = arith.mulf %988, %1015 : vector<16x512xf32>
    %cst_429 = arith.constant 1.000000e+00 : f32
    %1017 = vector.broadcast %cst_429 : f32 to vector<16x512xf32>
    %1018 = arith.addf %1017, %1016 : vector<16x512xf32>
    %1019 = arith.mulf %981, %1018 : vector<16x512xf32>
    %1020 = vector.extract_strided_slice %0 {offsets = [0, 65], sizes = [8, 16], strides = [1, 1]} : vector<16x89xf32> to vector<8x16xf32>
    %cst_430 = arith.constant dense<0.000000e+00> : vector<8x512xf32>
    %1021 = tpu.matmul %1020, %1019, %cst_430 {dimension_numbers = #tpu.dot_dimension_numbers<[1], [0], [0], [1], [0, 0, 1, 1], [], []>} : vector<8x16xf32>, vector<16x512xf32>, vector<8x512xf32> -> vector<8x512xf32>
    %1022 = vector.extract_strided_slice %0 {offsets = [0, 81], sizes = [8, 1], strides = [1, 1]} : vector<16x89xf32> to vector<8x1xf32>
    %1023 = vector.broadcast %1022 : vector<8x1xf32> to vector<8x512xf32>
    %1024 = arith.addf %1021, %1023 : vector<8x512xf32>
    %1025 = vector.extract_strided_slice %0 {offsets = [0, 82], sizes = [8, 1], strides = [1, 1]} : vector<16x89xf32> to vector<8x1xf32>
    %1026 = vector.extract_strided_slice %0 {offsets = [0, 83], sizes = [8, 1], strides = [1, 1]} : vector<16x89xf32> to vector<8x1xf32>
    %1027 = tpu.iota {dimensions = array<i32: 0>} : vector<8x1xi32>
    %c0_i32_431 = arith.constant 0 : i32
    %1028 = vector.broadcast %c0_i32_431 : i32 to vector<8x1xi32>
    %1029 = arith.cmpi sge, %1027, %1028 : vector<8x1xi32>
    %c2_i32_432 = arith.constant 2 : i32
    %1030 = vector.broadcast %c2_i32_432 : i32 to vector<8x1xi32>
    %1031 = arith.cmpi slt, %1027, %1030 : vector<8x1xi32>
    %1032 = arith.andi %1029, %1031 : vector<8x1xi1>
    %1033 = arith.extui %1032 : vector<8x1xi1> to vector<8x1xi32>
    %1034 = arith.sitofp %1033 : vector<8x1xi32> to vector<8x1xf32>
    %c2_i32_433 = arith.constant 2 : i32
    %1035 = vector.broadcast %c2_i32_433 : i32 to vector<8x1xi32>
    %1036 = arith.cmpi sge, %1027, %1035 : vector<8x1xi32>
    %c4_i32_434 = arith.constant 4 : i32
    %1037 = vector.broadcast %c4_i32_434 : i32 to vector<8x1xi32>
    %1038 = arith.cmpi slt, %1027, %1037 : vector<8x1xi32>
    %1039 = arith.andi %1036, %1038 : vector<8x1xi1>
    %1040 = arith.extui %1039 : vector<8x1xi1> to vector<8x1xi32>
    %1041 = arith.sitofp %1040 : vector<8x1xi32> to vector<8x1xf32>
    %c4_i32_435 = arith.constant 4 : i32
    %1042 = vector.broadcast %c4_i32_435 : i32 to vector<8x1xi32>
    %1043 = arith.cmpi sge, %1027, %1042 : vector<8x1xi32>
    %c6_i32_436 = arith.constant 6 : i32
    %1044 = vector.broadcast %c6_i32_436 : i32 to vector<8x1xi32>
    %1045 = arith.cmpi slt, %1027, %1044 : vector<8x1xi32>
    %1046 = arith.andi %1043, %1045 : vector<8x1xi1>
    %1047 = arith.extui %1046 : vector<8x1xi1> to vector<8x1xi32>
    %1048 = arith.sitofp %1047 : vector<8x1xi32> to vector<8x1xf32>
    %c6_i32_437 = arith.constant 6 : i32
    %1049 = vector.broadcast %c6_i32_437 : i32 to vector<8x1xi32>
    %1050 = arith.cmpi sge, %1027, %1049 : vector<8x1xi32>
    %c8_i32_438 = arith.constant 8 : i32
    %1051 = vector.broadcast %c8_i32_438 : i32 to vector<8x1xi32>
    %1052 = arith.cmpi slt, %1027, %1051 : vector<8x1xi32>
    %1053 = arith.andi %1050, %1052 : vector<8x1xi1>
    %1054 = arith.extui %1053 : vector<8x1xi1> to vector<8x1xi32>
    %1055 = arith.sitofp %1054 : vector<8x1xi32> to vector<8x1xf32>
    %1056 = vector.extract_strided_slice %1024 {offsets = [0, 0], sizes = [8, 256], strides = [1, 1]} : vector<8x512xf32> to vector<8x256xf32>
    %cst_439 = arith.constant dense<0.000000e+00> : vector<8xf32>
    %1057 = vector.multi_reduction <add>, %1056, %cst_439 [1] : vector<8x256xf32> to vector<8xf32>
    %1058 = vector.shape_cast %1057 : vector<8xf32> to vector<8x1xf32>
    %cst_440 = arith.constant 0.000000e+00 : f32
    %1059 = vector.broadcast %cst_440 : f32 to vector<8x1xf32>
    %1060 = arith.mulf %1058, %1034 : vector<8x1xf32>
    %cst_441 = arith.constant dense<0.000000e+00> : vector<1xf32>
    %1061 = vector.multi_reduction <add>, %1060, %cst_441 [0] : vector<8x1xf32> to vector<1xf32>
    %1062 = vector.shape_cast %1061 : vector<1xf32> to vector<1x1xf32>
    %1063 = vector.broadcast %1062 : vector<1x1xf32> to vector<8x1xf32>
    %1064 = arith.mulf %1034, %1063 : vector<8x1xf32>
    %1065 = arith.addf %1059, %1064 : vector<8x1xf32>
    %1066 = arith.mulf %1058, %1041 : vector<8x1xf32>
    %cst_442 = arith.constant dense<0.000000e+00> : vector<1xf32>
    %1067 = vector.multi_reduction <add>, %1066, %cst_442 [0] : vector<8x1xf32> to vector<1xf32>
    %1068 = vector.shape_cast %1067 : vector<1xf32> to vector<1x1xf32>
    %1069 = vector.broadcast %1068 : vector<1x1xf32> to vector<8x1xf32>
    %1070 = arith.mulf %1041, %1069 : vector<8x1xf32>
    %1071 = arith.addf %1065, %1070 : vector<8x1xf32>
    %1072 = arith.mulf %1058, %1048 : vector<8x1xf32>
    %cst_443 = arith.constant dense<0.000000e+00> : vector<1xf32>
    %1073 = vector.multi_reduction <add>, %1072, %cst_443 [0] : vector<8x1xf32> to vector<1xf32>
    %1074 = vector.shape_cast %1073 : vector<1xf32> to vector<1x1xf32>
    %1075 = vector.broadcast %1074 : vector<1x1xf32> to vector<8x1xf32>
    %1076 = arith.mulf %1048, %1075 : vector<8x1xf32>
    %1077 = arith.addf %1071, %1076 : vector<8x1xf32>
    %1078 = arith.mulf %1058, %1055 : vector<8x1xf32>
    %cst_444 = arith.constant dense<0.000000e+00> : vector<1xf32>
    %1079 = vector.multi_reduction <add>, %1078, %cst_444 [0] : vector<8x1xf32> to vector<1xf32>
    %1080 = vector.shape_cast %1079 : vector<1xf32> to vector<1x1xf32>
    %1081 = vector.broadcast %1080 : vector<1x1xf32> to vector<8x1xf32>
    %1082 = arith.mulf %1055, %1081 : vector<8x1xf32>
    %1083 = arith.addf %1077, %1082 : vector<8x1xf32>
    %cst_445 = arith.constant 0.001953125 : f32
    %1084 = vector.broadcast %cst_445 : f32 to vector<8x1xf32>
    %1085 = arith.mulf %1083, %1084 : vector<8x1xf32>
    %1086 = vector.broadcast %1085 : vector<8x1xf32> to vector<8x256xf32>
    %1087 = arith.subf %1056, %1086 : vector<8x256xf32>
    %1088 = arith.mulf %1087, %1087 : vector<8x256xf32>
    %cst_446 = arith.constant dense<0.000000e+00> : vector<8xf32>
    %1089 = vector.multi_reduction <add>, %1088, %cst_446 [1] : vector<8x256xf32> to vector<8xf32>
    %1090 = vector.shape_cast %1089 : vector<8xf32> to vector<8x1xf32>
    %cst_447 = arith.constant 0.000000e+00 : f32
    %1091 = vector.broadcast %cst_447 : f32 to vector<8x1xf32>
    %1092 = arith.mulf %1090, %1034 : vector<8x1xf32>
    %cst_448 = arith.constant dense<0.000000e+00> : vector<1xf32>
    %1093 = vector.multi_reduction <add>, %1092, %cst_448 [0] : vector<8x1xf32> to vector<1xf32>
    %1094 = vector.shape_cast %1093 : vector<1xf32> to vector<1x1xf32>
    %1095 = vector.broadcast %1094 : vector<1x1xf32> to vector<8x1xf32>
    %1096 = arith.mulf %1034, %1095 : vector<8x1xf32>
    %1097 = arith.addf %1091, %1096 : vector<8x1xf32>
    %1098 = arith.mulf %1090, %1041 : vector<8x1xf32>
    %cst_449 = arith.constant dense<0.000000e+00> : vector<1xf32>
    %1099 = vector.multi_reduction <add>, %1098, %cst_449 [0] : vector<8x1xf32> to vector<1xf32>
    %1100 = vector.shape_cast %1099 : vector<1xf32> to vector<1x1xf32>
    %1101 = vector.broadcast %1100 : vector<1x1xf32> to vector<8x1xf32>
    %1102 = arith.mulf %1041, %1101 : vector<8x1xf32>
    %1103 = arith.addf %1097, %1102 : vector<8x1xf32>
    %1104 = arith.mulf %1090, %1048 : vector<8x1xf32>
    %cst_450 = arith.constant dense<0.000000e+00> : vector<1xf32>
    %1105 = vector.multi_reduction <add>, %1104, %cst_450 [0] : vector<8x1xf32> to vector<1xf32>
    %1106 = vector.shape_cast %1105 : vector<1xf32> to vector<1x1xf32>
    %1107 = vector.broadcast %1106 : vector<1x1xf32> to vector<8x1xf32>
    %1108 = arith.mulf %1048, %1107 : vector<8x1xf32>
    %1109 = arith.addf %1103, %1108 : vector<8x1xf32>
    %1110 = arith.mulf %1090, %1055 : vector<8x1xf32>
    %cst_451 = arith.constant dense<0.000000e+00> : vector<1xf32>
    %1111 = vector.multi_reduction <add>, %1110, %cst_451 [0] : vector<8x1xf32> to vector<1xf32>
    %1112 = vector.shape_cast %1111 : vector<1xf32> to vector<1x1xf32>
    %1113 = vector.broadcast %1112 : vector<1x1xf32> to vector<8x1xf32>
    %1114 = arith.mulf %1055, %1113 : vector<8x1xf32>
    %1115 = arith.addf %1109, %1114 : vector<8x1xf32>
    %cst_452 = arith.constant 0.001953125 : f32
    %1116 = vector.broadcast %cst_452 : f32 to vector<8x1xf32>
    %1117 = arith.mulf %1115, %1116 : vector<8x1xf32>
    %cst_453 = arith.constant 9.99999974E-6 : f32
    %1118 = vector.broadcast %cst_453 : f32 to vector<8x1xf32>
    %1119 = arith.addf %1117, %1118 : vector<8x1xf32>
    %1120 = math.rsqrt %1119 : vector<8x1xf32>
    %1121 = vector.broadcast %1120 : vector<8x1xf32> to vector<8x256xf32>
    %1122 = arith.mulf %1087, %1121 : vector<8x256xf32>
    %1123 = vector.extract_strided_slice %1024 {offsets = [0, 256], sizes = [8, 256], strides = [1, 1]} : vector<8x512xf32> to vector<8x256xf32>
    %cst_454 = arith.constant dense<0.000000e+00> : vector<8xf32>
    %1124 = vector.multi_reduction <add>, %1123, %cst_454 [1] : vector<8x256xf32> to vector<8xf32>
    %1125 = vector.shape_cast %1124 : vector<8xf32> to vector<8x1xf32>
    %cst_455 = arith.constant 0.000000e+00 : f32
    %1126 = vector.broadcast %cst_455 : f32 to vector<8x1xf32>
    %1127 = arith.mulf %1125, %1034 : vector<8x1xf32>
    %cst_456 = arith.constant dense<0.000000e+00> : vector<1xf32>
    %1128 = vector.multi_reduction <add>, %1127, %cst_456 [0] : vector<8x1xf32> to vector<1xf32>
    %1129 = vector.shape_cast %1128 : vector<1xf32> to vector<1x1xf32>
    %1130 = vector.broadcast %1129 : vector<1x1xf32> to vector<8x1xf32>
    %1131 = arith.mulf %1034, %1130 : vector<8x1xf32>
    %1132 = arith.addf %1126, %1131 : vector<8x1xf32>
    %1133 = arith.mulf %1125, %1041 : vector<8x1xf32>
    %cst_457 = arith.constant dense<0.000000e+00> : vector<1xf32>
    %1134 = vector.multi_reduction <add>, %1133, %cst_457 [0] : vector<8x1xf32> to vector<1xf32>
    %1135 = vector.shape_cast %1134 : vector<1xf32> to vector<1x1xf32>
    %1136 = vector.broadcast %1135 : vector<1x1xf32> to vector<8x1xf32>
    %1137 = arith.mulf %1041, %1136 : vector<8x1xf32>
    %1138 = arith.addf %1132, %1137 : vector<8x1xf32>
    %1139 = arith.mulf %1125, %1048 : vector<8x1xf32>
    %cst_458 = arith.constant dense<0.000000e+00> : vector<1xf32>
    %1140 = vector.multi_reduction <add>, %1139, %cst_458 [0] : vector<8x1xf32> to vector<1xf32>
    %1141 = vector.shape_cast %1140 : vector<1xf32> to vector<1x1xf32>
    %1142 = vector.broadcast %1141 : vector<1x1xf32> to vector<8x1xf32>
    %1143 = arith.mulf %1048, %1142 : vector<8x1xf32>
    %1144 = arith.addf %1138, %1143 : vector<8x1xf32>
    %1145 = arith.mulf %1125, %1055 : vector<8x1xf32>
    %cst_459 = arith.constant dense<0.000000e+00> : vector<1xf32>
    %1146 = vector.multi_reduction <add>, %1145, %cst_459 [0] : vector<8x1xf32> to vector<1xf32>
    %1147 = vector.shape_cast %1146 : vector<1xf32> to vector<1x1xf32>
    %1148 = vector.broadcast %1147 : vector<1x1xf32> to vector<8x1xf32>
    %1149 = arith.mulf %1055, %1148 : vector<8x1xf32>
    %1150 = arith.addf %1144, %1149 : vector<8x1xf32>
    %cst_460 = arith.constant 0.001953125 : f32
    %1151 = vector.broadcast %cst_460 : f32 to vector<8x1xf32>
    %1152 = arith.mulf %1150, %1151 : vector<8x1xf32>
    %1153 = vector.broadcast %1152 : vector<8x1xf32> to vector<8x256xf32>
    %1154 = arith.subf %1123, %1153 : vector<8x256xf32>
    %1155 = arith.mulf %1154, %1154 : vector<8x256xf32>
    %cst_461 = arith.constant dense<0.000000e+00> : vector<8xf32>
    %1156 = vector.multi_reduction <add>, %1155, %cst_461 [1] : vector<8x256xf32> to vector<8xf32>
    %1157 = vector.shape_cast %1156 : vector<8xf32> to vector<8x1xf32>
    %cst_462 = arith.constant 0.000000e+00 : f32
    %1158 = vector.broadcast %cst_462 : f32 to vector<8x1xf32>
    %1159 = arith.mulf %1157, %1034 : vector<8x1xf32>
    %cst_463 = arith.constant dense<0.000000e+00> : vector<1xf32>
    %1160 = vector.multi_reduction <add>, %1159, %cst_463 [0] : vector<8x1xf32> to vector<1xf32>
    %1161 = vector.shape_cast %1160 : vector<1xf32> to vector<1x1xf32>
    %1162 = vector.broadcast %1161 : vector<1x1xf32> to vector<8x1xf32>
    %1163 = arith.mulf %1034, %1162 : vector<8x1xf32>
    %1164 = arith.addf %1158, %1163 : vector<8x1xf32>
    %1165 = arith.mulf %1157, %1041 : vector<8x1xf32>
    %cst_464 = arith.constant dense<0.000000e+00> : vector<1xf32>
    %1166 = vector.multi_reduction <add>, %1165, %cst_464 [0] : vector<8x1xf32> to vector<1xf32>
    %1167 = vector.shape_cast %1166 : vector<1xf32> to vector<1x1xf32>
    %1168 = vector.broadcast %1167 : vector<1x1xf32> to vector<8x1xf32>
    %1169 = arith.mulf %1041, %1168 : vector<8x1xf32>
    %1170 = arith.addf %1164, %1169 : vector<8x1xf32>
    %1171 = arith.mulf %1157, %1048 : vector<8x1xf32>
    %cst_465 = arith.constant dense<0.000000e+00> : vector<1xf32>
    %1172 = vector.multi_reduction <add>, %1171, %cst_465 [0] : vector<8x1xf32> to vector<1xf32>
    %1173 = vector.shape_cast %1172 : vector<1xf32> to vector<1x1xf32>
    %1174 = vector.broadcast %1173 : vector<1x1xf32> to vector<8x1xf32>
    %1175 = arith.mulf %1048, %1174 : vector<8x1xf32>
    %1176 = arith.addf %1170, %1175 : vector<8x1xf32>
    %1177 = arith.mulf %1157, %1055 : vector<8x1xf32>
    %cst_466 = arith.constant dense<0.000000e+00> : vector<1xf32>
    %1178 = vector.multi_reduction <add>, %1177, %cst_466 [0] : vector<8x1xf32> to vector<1xf32>
    %1179 = vector.shape_cast %1178 : vector<1xf32> to vector<1x1xf32>
    %1180 = vector.broadcast %1179 : vector<1x1xf32> to vector<8x1xf32>
    %1181 = arith.mulf %1055, %1180 : vector<8x1xf32>
    %1182 = arith.addf %1176, %1181 : vector<8x1xf32>
    %cst_467 = arith.constant 0.001953125 : f32
    %1183 = vector.broadcast %cst_467 : f32 to vector<8x1xf32>
    %1184 = arith.mulf %1182, %1183 : vector<8x1xf32>
    %cst_468 = arith.constant 9.99999974E-6 : f32
    %1185 = vector.broadcast %cst_468 : f32 to vector<8x1xf32>
    %1186 = arith.addf %1184, %1185 : vector<8x1xf32>
    %1187 = math.rsqrt %1186 : vector<8x1xf32>
    %1188 = vector.broadcast %1187 : vector<8x1xf32> to vector<8x256xf32>
    %1189 = arith.mulf %1154, %1188 : vector<8x256xf32>
    %1190 = tpu.concatenate %1122, %1189 in 1 : vector<8x256xf32>, vector<8x256xf32> -> vector<8x512xf32>
    %1191 = vector.broadcast %1025 : vector<8x1xf32> to vector<8x512xf32>
    %1192 = arith.mulf %1190, %1191 : vector<8x512xf32>
    %1193 = vector.broadcast %1026 : vector<8x1xf32> to vector<8x512xf32>
    %1194 = arith.addf %1192, %1193 : vector<8x512xf32>
    %cst_469 = arith.constant 0.000000e+00 : f32
    %1195 = vector.broadcast %cst_469 : f32 to vector<8x512xf32>
    %1196 = arith.subf %1195, %1194 : vector<8x512xf32>
    %1197 = math.exp %1196 : vector<8x512xf32>
    %cst_470 = arith.constant 1.000000e+00 : f32
    %1198 = vector.broadcast %cst_470 : f32 to vector<8x512xf32>
    %1199 = arith.addf %1198, %1197 : vector<8x512xf32>
    %1200 = tpu.reciprocal %1199 {approx = true} : vector<8x512xf32> -> vector<8x512xf32>
    %1201 = arith.mulf %1194, %1200 : vector<8x512xf32>
    %1202 = vector.extract_strided_slice %0 {offsets = [0, 84], sizes = [8, 4], strides = [1, 1]} : vector<16x89xf32> to vector<8x4xf32>
    %cst_471 = arith.constant dense<0.000000e+00> : vector<8x512xf32>
    %1203 = tpu.matmul %1202, %2, %cst_471 {dimension_numbers = #tpu.dot_dimension_numbers<[1], [0], [0], [1], [0, 0, 1, 1], [], []>} : vector<8x4xf32>, vector<4x512xf32>, vector<8x512xf32> -> vector<8x512xf32>
    %1204 = vector.extract_strided_slice %0 {offsets = [0, 88], sizes = [8, 1], strides = [1, 1]} : vector<16x89xf32> to vector<8x1xf32>
    %1205 = vector.broadcast %1204 : vector<8x1xf32> to vector<8x512xf32>
    %1206 = arith.addf %1203, %1205 : vector<8x512xf32>
    %1207 = arith.addf %1201, %1206 : vector<8x512xf32>
    %1208 = vector.shape_cast %1207 : vector<8x512xf32> to vector<1x8x512xf32>
    %c0_472 = arith.constant 0 : index
    %c0_473 = arith.constant 0 : index
    %c0_474 = arith.constant 0 : index
    %1209 = vector.load %arg7[%c0_472, %c0_473, %c0_474] : memref<1x8x512xf32, #tpu.memory_space<vmem>>, vector<1x8x512xf32>
    tpu.vector_store %arg7[%c0_472, %c0_473, %c0_474], %1208 {strides = array<i32>} : memref<1x8x512xf32, #tpu.memory_space<vmem>>, vector<1x8x512xf32>,
    return
  }
  func.func @transform_0(%arg0: i32) -> (i32, i32, i32) {
    %c0_i32 = arith.constant 0 : i32
    %c0_i32_0 = arith.constant 0 : i32
    %c0_i32_1 = arith.constant 0 : i32
    return %arg0, %c0_i32, %c0_i32_0 : i32, i32, i32
  }
  func.func @transform_1(%arg0: i32) -> (i32, i32, i32) {
    %c0_i32 = arith.constant 0 : i32
    %c0_i32_0 = arith.constant 0 : i32
    %c0_i32_1 = arith.constant 0 : i32
    return %arg0, %c0_i32, %c0_i32_0 : i32, i32, i32
  }
  func.func @transform_2(%arg0: i32) -> (i32, i32, i32) {
    %c0_i32 = arith.constant 0 : i32
    %c0_i32_0 = arith.constant 0 : i32
    %c0_i32_1 = arith.constant 0 : i32
    return %arg0, %c0_i32, %c0_i32_0 : i32, i32, i32
  }
  func.func @transform_3(%arg0: i32) -> (i32, i32, i32) {
    %c0_i32 = arith.constant 0 : i32
    %c0_i32_0 = arith.constant 0 : i32
    %c0_i32_1 = arith.constant 0 : i32
    %c0_i32_2 = arith.constant 0 : i32
    return %c0_i32, %c0_i32_0, %c0_i32_1 : i32, i32, i32
  }
  func.func @transform_4(%arg0: i32) -> (i32, i32, i32) {
    %c0_i32 = arith.constant 0 : i32
    %c0_i32_0 = arith.constant 0 : i32
    %c0_i32_1 = arith.constant 0 : i32
    %c0_i32_2 = arith.constant 0 : i32
    return %c0_i32, %c0_i32_0, %c0_i32_1 : i32, i32, i32
  }
  func.func @transform_5(%arg0: i32) -> (i32, i32) {
    %c0_i32 = arith.constant 0 : i32
    %c0_i32_0 = arith.constant 0 : i32
    %c0_i32_1 = arith.constant 0 : i32
    return %c0_i32, %c0_i32_0 : i32, i32
  }
  func.func @transform_6(%arg0: i32) -> (i32, i32, i32) {
    %c0_i32 = arith.constant 0 : i32
    %c0_i32_0 = arith.constant 0 : i32
    %c0_i32_1 = arith.constant 0 : i32
    return %arg0, %c0_i32, %c0_i32_0 : i32, i32, i32
  }
}

</mosaic_0001>

<llo_original>
// kernel: tpu_custom_call.1
$region0: #{tpu_custom_call.1}
  #allocation0 [shape = 'u32[]', space=smem, size = 0x4, offset = 0x4, fixed_abs, tag = 'smem constant byte address 0x4 - core index']
  #allocation1 [shape = 'u32[144,128]{1,0:T(1,128)}', space=vmem, size = 0x12000, scoped, tag = 'internal scratch']
  %s0 = inlined_call_operand.hbm [shape: f32[1,4,512], index: 0, kind: input, shape index: {}]
  %s1 = inlined_call_operand.vmem [shape: f32[1,2,16], index: 1, kind: input, shape index: {}]
  %s2 = inlined_call_operand.hbm [shape: f32[1,2,16], index: 2, kind: input, shape index: {}]
  %s3 = inlined_call_operand.hbm [shape: f32[49,4,512], index: 3, kind: input, shape index: {}]
  %s4 = inlined_call_operand.hbm [shape: f32[49,8,512], index: 4, kind: input, shape index: {}]
  %s5 = inlined_call_operand.vmem [shape: f32[16,89], index: 5, kind: input, shape index: {}]
  %s6 = inlined_call_operand.hbm [shape: f32[1,8,512], index: 6, kind: output, shape index: {}]
  %s7 = sld [smem:[#allocation0]]
  $region50: #{tpu_custom_call.1} parent=0
    _
  %s9 = ssub.s32 1, %s7
  %s10 = scalar_select 0, %s9, %s7
  $region1: #{tpu_custom_call.1} parent=0
    #allocation2 [shape = 'u8[8192]{0}', space=vmem, size = 0x2000, scoped, tag = 'input window, operand 0, single buffered']
    #allocation3 [shape = 's32[1]{0}', space=sflag, size = 0x4, scoped, tag = 'scoped memory for tpu_custom_call.1']
    #allocation4 [shape = 's32[1]{0}', space=sflag, size = 0x4, scoped, tag = 'scoped memory for tpu_custom_call.1']
    #allocation5 [shape = 'u8[1024]{0}', space=vmem, size = 0x400, scoped, tag = 'input window, operand 2, single buffered']
    #allocation6 [shape = 's32[1]{0}', space=sflag, size = 0x4, scoped, tag = 'scoped memory for tpu_custom_call.1']
    #allocation7 [shape = 'u8[401408]{0}', space=vmem, size = 0x62000, scoped, tag = 'input window, operand 3, single buffered']
    #allocation8 [shape = 'u8[802816]{0}', space=vmem, size = 0xc4000, scoped, tag = 'input window, operand 4, single buffered']
    #allocation9 [shape = 's32[1]{0}', space=sflag, size = 0x4, scoped, tag = 'scoped memory for tpu_custom_call.1']
    #allocation10 [shape = 'u8[16384]{0}', space=vmem, size = 0x4000, scoped, tag = 'output window, operand 0, single buffered']
    %11 = vsyncpa [#allocation3], 0
    %12 = vsyncpa [#allocation6], 0
    %13 = vsyncpa [#allocation9], 0
    %14 = vsyncpa [#allocation4], 0
    // Predicated region
    $region2: #{tpu_custom_call.1} parent=1 // pred_check
      _
    $region3: #{tpu_custom_call.1} parent=1 // pred_check_branch
      %16 = sbr.rel (0) target = $region5
    $region4: #{tpu_custom_call.1} parent=1 // pred_region
      %s18 = ssub.s32 256, 256
      %19 = vsyncadd [#allocation3], %s18
      %s21 = sshll.u32 [#allocation2], 4
      %s22 = int_to_ptr.vmem [resolvable:$true] %s21
      %24 = dma.hbm_to_vmem [thread:$0]  %s0, 256, %s22, [#allocation3]
    $region5: #{tpu_custom_call.1} parent=1 // pred_fallthru
      _
    // Predicated region
    $region6: #{tpu_custom_call.1} parent=1 // pred_check
      _
    $region7: #{tpu_custom_call.1} parent=1 // pred_check_branch
      %26 = sbr.rel (0) target = $region9
    $region8: #{tpu_custom_call.1} parent=1 // pred_region
      _
    $region9: #{tpu_custom_call.1} parent=1 // pred_fallthru
      _
    // Predicated region
    $region10: #{tpu_custom_call.1} parent=1 // pred_check
      _
    $region11: #{tpu_custom_call.1} parent=1 // pred_check_branch
      %28 = sbr.rel (0) target = $region13
    $region12: #{tpu_custom_call.1} parent=1 // pred_region
      %s30 = ssub.s32 32, 32
      %31 = vsyncadd [#allocation6], %s30
      %s33 = sshll.u32 [#allocation5], 4
      %s34 = int_to_ptr.vmem [resolvable:$true] %s33
      %36 = dma.hbm_to_vmem [thread:$0]  %s2, 32, %s34, [#allocation6]
    $region13: #{tpu_custom_call.1} parent=1 // pred_fallthru
      _
    // Predicated region
    $region14: #{tpu_custom_call.1} parent=1 // pred_check
      _
    $region15: #{tpu_custom_call.1} parent=1 // pred_check_branch
      %38 = sbr.rel (0) target = $region17
    $region16: #{tpu_custom_call.1} parent=1 // pred_region
      %s40 = ssub.s32 12544, 12544
      %41 = vsyncadd [#allocation6], %s40
      %s42 = sshll.u32 [#allocation7], 4
      %s43 = int_to_ptr.vmem [resolvable:$true] %s42
      %48 = dma.hbm_to_vmem [thread:$0]  %s3, 12544, %s43, [#allocation6], 256, 256, 16
    $region17: #{tpu_custom_call.1} parent=1 // pred_fallthru
      _
    // Predicated region
    $region18: #{tpu_custom_call.1} parent=1 // pred_check
      _
    $region19: #{tpu_custom_call.1} parent=1 // pred_check_branch
      %50 = sbr.rel (0) target = $region21
    $region20: #{tpu_custom_call.1} parent=1 // pred_region
      %s52 = ssub.s32 25088, 25088
      %53 = vsyncadd [#allocation9], %s52
      %s54 = sshll.u32 [#allocation8], 4
      %s55 = int_to_ptr.vmem [resolvable:$true] %s54
      %60 = dma.hbm_to_vmem [thread:$0]  %s4, 25088, %s55, [#allocation9], 512, 512, 32
    $region21: #{tpu_custom_call.1} parent=1 // pred_fallthru
      _
    // Predicated region
    $region22: #{tpu_custom_call.1} parent=1 // pred_check
      _
    $region23: #{tpu_custom_call.1} parent=1 // pred_check_branch
      %62 = sbr.rel (0) target = $region25
    $region24: #{tpu_custom_call.1} parent=1 // pred_region
      _
    $region25: #{tpu_custom_call.1} parent=1 // pred_fallthru
      _
    // Predicated region
    $region26: #{tpu_custom_call.1} parent=1 // pred_check
      _
    $region27: #{tpu_custom_call.1} parent=1 // pred_check_branch
      %64 = sbr.rel (0) target = $region29
    $region28: #{tpu_custom_call.1} parent=1 // pred_region
      %65 = dma.done [#allocation3], 256
    $region29: #{tpu_custom_call.1} parent=1 // pred_fallthru
      _
    // Predicated region
    $region30: #{tpu_custom_call.1} parent=1 // pred_check
      _
    $region31: #{tpu_custom_call.1} parent=1 // pred_check_branch
      %67 = sbr.rel (0) target = $region33
    $region32: #{tpu_custom_call.1} parent=1 // pred_region
      %68 = dma.done [#allocation6], 32
    $region33: #{tpu_custom_call.1} parent=1 // pred_fallthru
      _
    // Predicated region
    $region34: #{tpu_custom_call.1} parent=1 // pred_check
      _
    $region35: #{tpu_custom_call.1} parent=1 // pred_check_branch
      %70 = sbr.rel (0) target = $region37
    $region36: #{tpu_custom_call.1} parent=1 // pred_region
      %71 = dma.done [#allocation6], 12544
    $region37: #{tpu_custom_call.1} parent=1 // pred_fallthru
      _
    // Predicated region
    $region38: #{tpu_custom_call.1} parent=1 // pred_check
      _
    $region39: #{tpu_custom_call.1} parent=1 // pred_check_branch
      %73 = sbr.rel (0) target = $region41
    $region40: #{tpu_custom_call.1} parent=1 // pred_region
      %74 = dma.done [#allocation9], 25088
    $region41: #{tpu_custom_call.1} parent=1 // pred_fallthru
      _
    %v75 = vld [vmem:[%s5] sm:$0xff]
    %v76 = vld [vmem:[%s5 + $0x8] sm:$0xff]
    %v77 = vld [vmem:[#allocation2] sm:$0xff]
    %v78 = vld [vmem:[#allocation2 + $0x8] sm:$0xff]
    %v79 = vld [vmem:[%s1] sm:$0x3]
    %v80 = vld [vmem:[#allocation5] sm:$0x3]
    %v81 = vsub.f32 0.0, %v79
    %v82 = vmul.f32 %v81, 1.442695
    %v83 = vpow.pop %v82
    %v84 = vadd.f32 %v83, 1.0
    %v85 = vrcp.pop %v84
    %v86 = vmul.f32 %v79, %v85
    %v87 = vlaneseq
    %v88 = vshrl.u32 %v87, 7
    %v89 = vsub.s32 0, %v88
    %v90 = vrot.slane %v86, %v89
    %v91 = vmul.f32 %v75, %v90
    %vm92 = vcmask 130048
    %v93 = vsel %vm92, %v91, 0.0
    %94 = vadd.xlane.f32.xlu0 %v93
    %v95 = vpop.xlane.xlu0 %94
    %v96 = vadd.f32 %v95, %v75
    %v97 = vsub.f32 0.0, %v80
    %v98 = vmul.f32 %v97, 1.442695
    %v99 = vpow.pop %v98
    %v100 = vadd.f32 %v99, 1.0
    %v101 = vrcp.pop %v100
    %v102 = vmul.f32 %v80, %v101
    %v103 = vlaneseq
    %v104 = vshrl.u32 %v103, 7
    %v105 = vsub.s32 0, %v104
    %v106 = vrot.slane %v102, %v105
    %108 = vrot.lane.b32.xlu0 %v106, 17
    %v109 = vpop.permute.xlu0 %108
    %v111 = vmul.f32 %v75, %v109
    %113 = vrot.lane.b32.xlu0 %v111, 111
    %v114 = vpop.permute.xlu0 %113
    %v116 = vsel %vm92, %v114, 0.0
    %117 = vadd.xlane.f32.xlu0 %v116
    %v118 = vpop.xlane.xlu0 %117
    %v119 = vadd.f32 %v118, %v75
    %121 = vrot.lane.b32.xlu0 %v119, 111
    %v122 = vpop.permute.xlu0 %121
    %v124 = vmul.f32 %v96, %v122
    %126 = vset.pattern.permute.xlu0 16
    %127 = vperm.xlu0 %126, %v124
    %v128 = vpop.permute.xlu0 %127
    %v130 = vlaneseq
    %v131 = vshrl.u32 %v130, 7
    %v132 = vsub.s32 1, %v131
    %v133 = vrot.slane %v86, %v132
    %v134 = vmul.f32 %v75, %v133
    %v135 = vsel %vm92, %v134, 0.0
    %136 = vadd.xlane.f32.xlu0 %v135
    %v137 = vpop.xlane.xlu0 %136
    %v138 = vadd.f32 %v137, %v75
    %v139 = vlaneseq
    %v140 = vshrl.u32 %v139, 7
    %v141 = vsub.s32 1, %v140
    %v142 = vrot.slane %v102, %v141
    %144 = vrot.lane.b32.xlu0 %v142, 17
    %v145 = vpop.permute.xlu0 %144
    %v147 = vmul.f32 %v75, %v145
    %149 = vrot.lane.b32.xlu0 %v147, 111
    %v150 = vpop.permute.xlu0 %149
    %v152 = vsel %vm92, %v150, 0.0
    %153 = vadd.xlane.f32.xlu0 %v152
    %v154 = vpop.xlane.xlu0 %153
    %v155 = vadd.f32 %v154, %v75
    %157 = vrot.lane.b32.xlu0 %v155, 111
    %v158 = vpop.permute.xlu0 %157
    %v160 = vmul.f32 %v138, %v158
    %162 = vset.pattern.permute.xlu0 16
    %163 = vperm.xlu0 %162, %v160
    %v164 = vpop.permute.xlu0 %163
    %v168 = vcombine.high %v77, %v77
    %v169 = vcombine.high %v78, %v78
    %172 = vrot.lane.b32.xlu0 %v77, 51
    %v173 = vpop.permute.xlu0 %172
    %174 = vrot.lane.b32.xlu0 %v168, 51
    %v175 = vpop.permute.xlu0 %174
    %176 = vrot.lane.b32.xlu0 %v78, 51
    %v177 = vpop.permute.xlu0 %176
    %178 = vrot.lane.b32.xlu0 %v169, 51
    %v179 = vpop.permute.xlu0 %178
    %v180 = vlaneseq
    %v181 = vand.u32 %v180, 127
    %vm182 = vcmp.lt.s32.totalorder %v181, 51
    %v183 = vsel %vm182, %v177, %v179
    %v184 = vsel %vm182, %v175, %v177
    %v185 = vsel %vm182, %v173, %v175
    %v186 = vsel %vm182, %v179, %v173
    %v187 = vld [vmem:[#allocation7] sm:$0xff]
    %v188 = vld [vmem:[#allocation7 + $0x8] sm:$0xff]
    %v191 = vcombine.high %v187, %v187
    %v192 = vcombine.high %v188, %v188
    %v195 = vmul.f32 %v186, %v187
    %v196 = vmul.f32 %v185, %v191
    %v197 = vmul.f32 %v184, %v188
    %v198 = vmul.f32 %v183, %v192
    %199 = vrot.lane.b32.xlu0 %v77, 50
    %v200 = vpop.permute.xlu0 %199
    %201 = vrot.lane.b32.xlu0 %v168, 50
    %v202 = vpop.permute.xlu0 %201
    %203 = vrot.lane.b32.xlu0 %v78, 50
    %v204 = vpop.permute.xlu0 %203
    %205 = vrot.lane.b32.xlu0 %v169, 50
    %v206 = vpop.permute.xlu0 %205
    %vm207 = vcmp.lt.s32.totalorder %v181, 50
    %v208 = vsel %vm207, %v204, %v206
    %v209 = vsel %vm207, %v202, %v204
    %v210 = vsel %vm207, %v200, %v202
    %v211 = vsel %vm207, %v206, %v200
    %s212 = scalar_lea.vmem [#allocation7], 16
    %v213 = vld [vmem:[%s212] sm:$0xff]
    %v214 = vld [vmem:[%s212 + $0x8] sm:$0xff]
    %v217 = vcombine.high %v213, %v213
    %v218 = vcombine.high %v214, %v214
    %v221 = vmul.f32 %v211, %v213
    %v222 = vmul.f32 %v210, %v217
    %v223 = vmul.f32 %v209, %v214
    %v224 = vmul.f32 %v208, %v218
    %v225 = vadd.f32 %v195, %v221
    %v226 = vadd.f32 %v196, %v222
    %v227 = vadd.f32 %v197, %v223
    %v228 = vadd.f32 %v198, %v224
    %229 = vrot.lane.b32.xlu0 %v77, 49
    %v230 = vpop.permute.xlu0 %229
    %231 = vrot.lane.b32.xlu0 %v168, 49
    %v232 = vpop.permute.xlu0 %231
    %233 = vrot.lane.b32.xlu0 %v78, 49
    %v234 = vpop.permute.xlu0 %233
    %235 = vrot.lane.b32.xlu0 %v169, 49
    %v236 = vpop.permute.xlu0 %235
    %vm237 = vcmp.lt.s32.totalorder %v181, 49
    %v238 = vsel %vm237, %v234, %v236
    %v239 = vsel %vm237, %v232, %v234
    %v240 = vsel %vm237, %v230, %v232
    %v241 = vsel %vm237, %v236, %v230
    %s242 = scalar_lea.vmem [#allocation7], 32
    %v243 = vld [vmem:[%s242] sm:$0xff]
    %v244 = vld [vmem:[%s242 + $0x8] sm:$0xff]
    %v247 = vcombine.high %v243, %v243
    %v248 = vcombine.high %v244, %v244
    %v251 = vmul.f32 %v241, %v243
    %v252 = vmul.f32 %v240, %v247
    %v253 = vmul.f32 %v239, %v244
    %v254 = vmul.f32 %v238, %v248
    %v255 = vadd.f32 %v225, %v251
    %v256 = vadd.f32 %v226, %v252
    %v257 = vadd.f32 %v227, %v253
    %v258 = vadd.f32 %v228, %v254
    %259 = vrot.lane.b32.xlu0 %v77, 48
    %v260 = vpop.permute.xlu0 %259
    %261 = vrot.lane.b32.xlu0 %v168, 48
    %v262 = vpop.permute.xlu0 %261
    %263 = vrot.lane.b32.xlu0 %v78, 48
    %v264 = vpop.permute.xlu0 %263
    %265 = vrot.lane.b32.xlu0 %v169, 48
    %v266 = vpop.permute.xlu0 %265
    %vm267 = vcmp.lt.s32.totalorder %v181, 48
    %v268 = vsel %vm267, %v264, %v266
    %v269 = vsel %vm267, %v262, %v264
    %v270 = vsel %vm267, %v260, %v262
    %v271 = vsel %vm267, %v266, %v260
    %s272 = scalar_lea.vmem [#allocation7], 48
    %v273 = vld [vmem:[%s272] sm:$0xff]
    %v274 = vld [vmem:[%s272 + $0x8] sm:$0xff]
    %v277 = vcombine.high %v273, %v273
    %v278 = vcombine.high %v274, %v274
    %v281 = vmul.f32 %v271, %v273
    %v282 = vmul.f32 %v270, %v277
    %v283 = vmul.f32 %v269, %v274
    %v284 = vmul.f32 %v268, %v278
    %v285 = vadd.f32 %v255, %v281
    %v286 = vadd.f32 %v256, %v282
    %v287 = vadd.f32 %v257, %v283
    %v288 = vadd.f32 %v258, %v284
    %289 = vrot.lane.b32.xlu0 %v77, 47
    %v290 = vpop.permute.xlu0 %289
    %291 = vrot.lane.b32.xlu0 %v168, 47
    %v292 = vpop.permute.xlu0 %291
    %293 = vrot.lane.b32.xlu0 %v78, 47
    %v294 = vpop.permute.xlu0 %293
    %295 = vrot.lane.b32.xlu0 %v169, 47
    %v296 = vpop.permute.xlu0 %295
    %vm297 = vcmp.lt.s32.totalorder %v181, 47
    %v298 = vsel %vm297, %v294, %v296
    %v299 = vsel %vm297, %v292, %v294
    %v300 = vsel %vm297, %v290, %v292
    %v301 = vsel %vm297, %v296, %v290
    %s302 = scalar_lea.vmem [#allocation7], 64
    %v303 = vld [vmem:[%s302] sm:$0xff]
    %v304 = vld [vmem:[%s302 + $0x8] sm:$0xff]
    %v307 = vcombine.high %v303, %v303
    %v308 = vcombine.high %v304, %v304
    %v311 = vmul.f32 %v301, %v303
    %v312 = vmul.f32 %v300, %v307
    %v313 = vmul.f32 %v299, %v304
    %v314 = vmul.f32 %v298, %v308
    %v315 = vadd.f32 %v285, %v311
    %v316 = vadd.f32 %v286, %v312
    %v317 = vadd.f32 %v287, %v313
    %v318 = vadd.f32 %v288, %v314
    %319 = vrot.lane.b32.xlu0 %v77, 46
    %v320 = vpop.permute.xlu0 %319
    %321 = vrot.lane.b32.xlu0 %v168, 46
    %v322 = vpop.permute.xlu0 %321
    %323 = vrot.lane.b32.xlu0 %v78, 46
    %v324 = vpop.permute.xlu0 %323
    %325 = vrot.lane.b32.xlu0 %v169, 46
    %v326 = vpop.permute.xlu0 %325
    %vm327 = vcmp.lt.s32.totalorder %v181, 46
    %v328 = vsel %vm327, %v324, %v326
    %v329 = vsel %vm327, %v322, %v324
    %v330 = vsel %vm327, %v320, %v322
    %v331 = vsel %vm327, %v326, %v320
    %s332 = scalar_lea.vmem [#allocation7], 80
    %v333 = vld [vmem:[%s332] sm:$0xff]
    %v334 = vld [vmem:[%s332 + $0x8] sm:$0xff]
    %v337 = vcombine.high %v333, %v333
    %v338 = vcombine.high %v334, %v334
    %v341 = vmul.f32 %v331, %v333
    %v342 = vmul.f32 %v330, %v337
    %v343 = vmul.f32 %v329, %v334
    %v344 = vmul.f32 %v328, %v338
    %v345 = vadd.f32 %v315, %v341
    %v346 = vadd.f32 %v316, %v342
    %v347 = vadd.f32 %v317, %v343
    %v348 = vadd.f32 %v318, %v344
    %349 = vrot.lane.b32.xlu0 %v77, 45
    %v350 = vpop.permute.xlu0 %349
    %351 = vrot.lane.b32.xlu0 %v168, 45
    %v352 = vpop.permute.xlu0 %351
    %353 = vrot.lane.b32.xlu0 %v78, 45
    %v354 = vpop.permute.xlu0 %353
    %355 = vrot.lane.b32.xlu0 %v169, 45
    %v356 = vpop.permute.xlu0 %355
    %vm357 = vcmp.lt.s32.totalorder %v181, 45
    %v358 = vsel %vm357, %v354, %v356
    %v359 = vsel %vm357, %v352, %v354
    %v360 = vsel %vm357, %v350, %v352
    %v361 = vsel %vm357, %v356, %v350
    %s362 = scalar_lea.vmem [#allocation7], 96
    %v363 = vld [vmem:[%s362] sm:$0xff]
    %v364 = vld [vmem:[%s362 + $0x8] sm:$0xff]
    %v367 = vcombine.high %v363, %v363
    %v368 = vcombine.high %v364, %v364
    %v371 = vmul.f32 %v361, %v363
    %v372 = vmul.f32 %v360, %v367
    %v373 = vmul.f32 %v359, %v364
    %v374 = vmul.f32 %v358, %v368
    %v375 = vadd.f32 %v345, %v371
    %v376 = vadd.f32 %v346, %v372
    %v377 = vadd.f32 %v347, %v373
    %v378 = vadd.f32 %v348, %v374
    %379 = vrot.lane.b32.xlu0 %v77, 35
    %v380 = vpop.permute.xlu0 %379
    %381 = vrot.lane.b32.xlu0 %v168, 35
    %v382 = vpop.permute.xlu0 %381
    %383 = vrot.lane.b32.xlu0 %v78, 35
    %v384 = vpop.permute.xlu0 %383
    %385 = vrot.lane.b32.xlu0 %v169, 35
    %v386 = vpop.permute.xlu0 %385
    %vm387 = vcmp.lt.s32.totalorder %v181, 35
    %v388 = vsel %vm387, %v384, %v386
    %v389 = vsel %vm387, %v382, %v384
    %v390 = vsel %vm387, %v380, %v382
    %v391 = vsel %vm387, %v386, %v380
    %s392 = scalar_lea.vmem [#allocation7], 112
    %v393 = vld [vmem:[%s392] sm:$0xff]
    %v394 = vld [vmem:[%s392 + $0x8] sm:$0xff]
    %v397 = vcombine.high %v393, %v393
    %v398 = vcombine.high %v394, %v394
    %v401 = vmul.f32 %v391, %v393
    %v402 = vmul.f32 %v390, %v397
    %v403 = vmul.f32 %v389, %v394
    %v404 = vmul.f32 %v388, %v398
    %v405 = vadd.f32 %v375, %v401
    %v406 = vadd.f32 %v376, %v402
    %v407 = vadd.f32 %v377, %v403
    %v408 = vadd.f32 %v378, %v404
    %409 = vrot.lane.b32.xlu0 %v77, 34
    %v410 = vpop.permute.xlu0 %409
    %411 = vrot.lane.b32.xlu0 %v168, 34
    %v412 = vpop.permute.xlu0 %411
    %413 = vrot.lane.b32.xlu0 %v78, 34
    %v414 = vpop.permute.xlu0 %413
    %415 = vrot.lane.b32.xlu0 %v169, 34
    %v416 = vpop.permute.xlu0 %415
    %vm417 = vcmp.lt.s32.totalorder %v181, 34
    %v418 = vsel %vm417, %v414, %v416
    %v419 = vsel %vm417, %v412, %v414
    %v420 = vsel %vm417, %v410, %v412
    %v421 = vsel %vm417, %v416, %v410
    %s422 = scalar_lea.vmem [#allocation7], 128
    %v423 = vld [vmem:[%s422] sm:$0xff]
    %v424 = vld [vmem:[%s422 + $0x8] sm:$0xff]
    %v427 = vcombine.high %v423, %v423
    %v428 = vcombine.high %v424, %v424
    %v431 = vmul.f32 %v421, %v423
    %v432 = vmul.f32 %v420, %v427
    %v433 = vmul.f32 %v419, %v424
    %v434 = vmul.f32 %v418, %v428
    %v435 = vadd.f32 %v405, %v431
    %v436 = vadd.f32 %v406, %v432
    %v437 = vadd.f32 %v407, %v433
    %v438 = vadd.f32 %v408, %v434
    %439 = vrot.lane.b32.xlu0 %v77, 33
    %v440 = vpop.permute.xlu0 %439
    %441 = vrot.lane.b32.xlu0 %v168, 33
    %v442 = vpop.permute.xlu0 %441
    %443 = vrot.lane.b32.xlu0 %v78, 33
    %v444 = vpop.permute.xlu0 %443
    %445 = vrot.lane.b32.xlu0 %v169, 33
    %v446 = vpop.permute.xlu0 %445
    %vm447 = vcmp.lt.s32.totalorder %v181, 33
    %v448 = vsel %vm447, %v444, %v446
    %v449 = vsel %vm447, %v442, %v444
    %v450 = vsel %vm447, %v440, %v442
    %v451 = vsel %vm447, %v446, %v440
    %s452 = scalar_lea.vmem [#allocation7], 144
    %v453 = vld [vmem:[%s452] sm:$0xff]
    %v454 = vld [vmem:[%s452 + $0x8] sm:$0xff]
    %v457 = vcombine.high %v453, %v453
    %v458 = vcombine.high %v454, %v454
    %v461 = vmul.f32 %v451, %v453
    %v462 = vmul.f32 %v450, %v457
    %v463 = vmul.f32 %v449, %v454
    %v464 = vmul.f32 %v448, %v458
    %v465 = vadd.f32 %v435, %v461
    %v466 = vadd.f32 %v436, %v462
    %v467 = vadd.f32 %v437, %v463
    %v468 = vadd.f32 %v438, %v464
    %469 = vrot.lane.b32.xlu0 %v77, 32
    %v470 = vpop.permute.xlu0 %469
    %471 = vrot.lane.b32.xlu0 %v168, 32
    %v472 = vpop.permute.xlu0 %471
    %473 = vrot.lane.b32.xlu0 %v78, 32
    %v474 = vpop.permute.xlu0 %473
    %475 = vrot.lane.b32.xlu0 %v169, 32
    %v476 = vpop.permute.xlu0 %475
    %vm477 = vcmp.lt.s32.totalorder %v181, 32
    %v478 = vsel %vm477, %v474, %v476
    %v479 = vsel %vm477, %v472, %v474
    %v480 = vsel %vm477, %v470, %v472
    %v481 = vsel %vm477, %v476, %v470
    %s482 = scalar_lea.vmem [#allocation7], 160
    %v483 = vld [vmem:[%s482] sm:$0xff]
    %v484 = vld [vmem:[%s482 + $0x8] sm:$0xff]
    %v487 = vcombine.high %v483, %v483
    %v488 = vcombine.high %v484, %v484
    %v491 = vmul.f32 %v481, %v483
    %v492 = vmul.f32 %v480, %v487
    %v493 = vmul.f32 %v479, %v484
    %v494 = vmul.f32 %v478, %v488
    %v495 = vadd.f32 %v465, %v491
    %v496 = vadd.f32 %v466, %v492
    %v497 = vadd.f32 %v467, %v493
    %v498 = vadd.f32 %v468, %v494
    %499 = vrot.lane.b32.xlu0 %v77, 31
    %v500 = vpop.permute.xlu0 %499
    %501 = vrot.lane.b32.xlu0 %v168, 31
    %v502 = vpop.permute.xlu0 %501
    %503 = vrot.lane.b32.xlu0 %v78, 31
    %v504 = vpop.permute.xlu0 %503
    %505 = vrot.lane.b32.xlu0 %v169, 31
    %v506 = vpop.permute.xlu0 %505
    %vm507 = vcmp.lt.s32.totalorder %v181, 31
    %v508 = vsel %vm507, %v504, %v506
    %v509 = vsel %vm507, %v502, %v504
    %v510 = vsel %vm507, %v500, %v502
    %v511 = vsel %vm507, %v506, %v500
    %s512 = scalar_lea.vmem [#allocation7], 176
    %v513 = vld [vmem:[%s512] sm:$0xff]
    %v514 = vld [vmem:[%s512 + $0x8] sm:$0xff]
    %v517 = vcombine.high %v513, %v513
    %v518 = vcombine.high %v514, %v514
    %v521 = vmul.f32 %v511, %v513
    %v522 = vmul.f32 %v510, %v517
    %v523 = vmul.f32 %v509, %v514
    %v524 = vmul.f32 %v508, %v518
    %v525 = vadd.f32 %v495, %v521
    %v526 = vadd.f32 %v496, %v522
    %v527 = vadd.f32 %v497, %v523
    %v528 = vadd.f32 %v498, %v524
    %529 = vrot.lane.b32.xlu0 %v77, 30
    %v530 = vpop.permute.xlu0 %529
    %531 = vrot.lane.b32.xlu0 %v168, 30
    %v532 = vpop.permute.xlu0 %531
    %533 = vrot.lane.b32.xlu0 %v78, 30
    %v534 = vpop.permute.xlu0 %533
    %535 = vrot.lane.b32.xlu0 %v169, 30
    %v536 = vpop.permute.xlu0 %535
    %vm537 = vcmp.lt.s32.totalorder %v181, 30
    %v538 = vsel %vm537, %v534, %v536
    %v539 = vsel %vm537, %v532, %v534
    %v540 = vsel %vm537, %v530, %v532
    %v541 = vsel %vm537, %v536, %v530
    %s542 = scalar_lea.vmem [#allocation7], 192
    %v543 = vld [vmem:[%s542] sm:$0xff]
    %v544 = vld [vmem:[%s542 + $0x8] sm:$0xff]
    %v547 = vcombine.high %v543, %v543
    %v548 = vcombine.high %v544, %v544
    %v551 = vmul.f32 %v541, %v543
    %v552 = vmul.f32 %v540, %v547
    %v553 = vmul.f32 %v539, %v544
    %v554 = vmul.f32 %v538, %v548
    %v555 = vadd.f32 %v525, %v551
    %v556 = vadd.f32 %v526, %v552
    %v557 = vadd.f32 %v527, %v553
    %v558 = vadd.f32 %v528, %v554
    %559 = vrot.lane.b32.xlu0 %v77, 29
    %v560 = vpop.permute.xlu0 %559
    %561 = vrot.lane.b32.xlu0 %v168, 29
    %v562 = vpop.permute.xlu0 %561
    %563 = vrot.lane.b32.xlu0 %v78, 29
    %v564 = vpop.permute.xlu0 %563
    %565 = vrot.lane.b32.xlu0 %v169, 29
    %v566 = vpop.permute.xlu0 %565
    %vm567 = vcmp.lt.s32.totalorder %v181, 29
    %v568 = vsel %vm567, %v564, %v566
    %v569 = vsel %vm567, %v562, %v564
    %v570 = vsel %vm567, %v560, %v562
    %v571 = vsel %vm567, %v566, %v560
    %s572 = scalar_lea.vmem [#allocation7], 208
    %v573 = vld [vmem:[%s572] sm:$0xff]
    %v574 = vld [vmem:[%s572 + $0x8] sm:$0xff]
    %v577 = vcombine.high %v573, %v573
    %v578 = vcombine.high %v574, %v574
    %v581 = vmul.f32 %v571, %v573
    %v582 = vmul.f32 %v570, %v577
    %v583 = vmul.f32 %v569, %v574
    %v584 = vmul.f32 %v568, %v578
    %v585 = vadd.f32 %v555, %v581
    %v586 = vadd.f32 %v556, %v582
    %v587 = vadd.f32 %v557, %v583
    %v588 = vadd.f32 %v558, %v584
    %589 = vrot.lane.b32.xlu0 %v77, 19
    %v590 = vpop.permute.xlu0 %589
    %591 = vrot.lane.b32.xlu0 %v168, 19
    %v592 = vpop.permute.xlu0 %591
    %593 = vrot.lane.b32.xlu0 %v78, 19
    %v594 = vpop.permute.xlu0 %593
    %595 = vrot.lane.b32.xlu0 %v169, 19
    %v596 = vpop.permute.xlu0 %595
    %vm597 = vcmp.lt.s32.totalorder %v181, 19
    %v598 = vsel %vm597, %v594, %v596
    %v599 = vsel %vm597, %v592, %v594
    %v600 = vsel %vm597, %v590, %v592
    %v601 = vsel %vm597, %v596, %v590
    %s602 = scalar_lea.vmem [#allocation7], 224
    %v603 = vld [vmem:[%s602] sm:$0xff]
    %v604 = vld [vmem:[%s602 + $0x8] sm:$0xff]
    %v607 = vcombine.high %v603, %v603
    %v608 = vcombine.high %v604, %v604
    %v611 = vmul.f32 %v601, %v603
    %v612 = vmul.f32 %v600, %v607
    %v613 = vmul.f32 %v599, %v604
    %v614 = vmul.f32 %v598, %v608
    %v615 = vadd.f32 %v585, %v611
    %v616 = vadd.f32 %v586, %v612
    %v617 = vadd.f32 %v587, %v613
    %v618 = vadd.f32 %v588, %v614
    %619 = vrot.lane.b32.xlu0 %v77, 18
    %v620 = vpop.permute.xlu0 %619
    %621 = vrot.lane.b32.xlu0 %v168, 18
    %v622 = vpop.permute.xlu0 %621
    %623 = vrot.lane.b32.xlu0 %v78, 18
    %v624 = vpop.permute.xlu0 %623
    %625 = vrot.lane.b32.xlu0 %v169, 18
    %v626 = vpop.permute.xlu0 %625
    %vm627 = vcmp.lt.s32.totalorder %v181, 18
    %v628 = vsel %vm627, %v624, %v626
    %v629 = vsel %vm627, %v622, %v624
    %v630 = vsel %vm627, %v620, %v622
    %v631 = vsel %vm627, %v626, %v620
    %s632 = scalar_lea.vmem [#allocation7], 240
    %v633 = vld [vmem:[%s632] sm:$0xff]
    %v634 = vld [vmem:[%s632 + $0x8] sm:$0xff]
    %v637 = vcombine.high %v633, %v633
    %v638 = vcombine.high %v634, %v634
    %v641 = vmul.f32 %v631, %v633
    %v642 = vmul.f32 %v630, %v637
    %v643 = vmul.f32 %v629, %v634
    %v644 = vmul.f32 %v628, %v638
    %v645 = vadd.f32 %v615, %v641
    %v646 = vadd.f32 %v616, %v642
    %v647 = vadd.f32 %v617, %v643
    %v648 = vadd.f32 %v618, %v644
    %649 = vrot.lane.b32.xlu0 %v77, 17
    %v650 = vpop.permute.xlu0 %649
    %651 = vrot.lane.b32.xlu0 %v168, 17
    %v652 = vpop.permute.xlu0 %651
    %653 = vrot.lane.b32.xlu0 %v78, 17
    %v654 = vpop.permute.xlu0 %653
    %655 = vrot.lane.b32.xlu0 %v169, 17
    %v656 = vpop.permute.xlu0 %655
    %vm657 = vcmp.lt.s32.totalorder %v181, 17
    %v658 = vsel %vm657, %v654, %v656
    %v659 = vsel %vm657, %v652, %v654
    %v660 = vsel %vm657, %v650, %v652
    %v661 = vsel %vm657, %v656, %v650
    %s662 = scalar_lea.vmem [#allocation7], 256
    %v663 = vld [vmem:[%s662] sm:$0xff]
    %v664 = vld [vmem:[%s662 + $0x8] sm:$0xff]
    %v667 = vcombine.high %v663, %v663
    %v668 = vcombine.high %v664, %v664
    %v671 = vmul.f32 %v661, %v663
    %v672 = vmul.f32 %v660, %v667
    %v673 = vmul.f32 %v659, %v664
    %v674 = vmul.f32 %v658, %v668
    %v675 = vadd.f32 %v645, %v671
    %v676 = vadd.f32 %v646, %v672
    %v677 = vadd.f32 %v647, %v673
    %v678 = vadd.f32 %v648, %v674
    %679 = vrot.lane.b32.xlu0 %v77, 16
    %v680 = vpop.permute.xlu0 %679
    %681 = vrot.lane.b32.xlu0 %v168, 16
    %v682 = vpop.permute.xlu0 %681
    %683 = vrot.lane.b32.xlu0 %v78, 16
    %v684 = vpop.permute.xlu0 %683
    %685 = vrot.lane.b32.xlu0 %v169, 16
    %v686 = vpop.permute.xlu0 %685
    %vm687 = vcmp.lt.s32.totalorder %v181, 16
    %v688 = vsel %vm687, %v684, %v686
    %v689 = vsel %vm687, %v682, %v684
    %v690 = vsel %vm687, %v680, %v682
    %v691 = vsel %vm687, %v686, %v680
    %s692 = scalar_lea.vmem [#allocation7], 272
    %v693 = vld [vmem:[%s692] sm:$0xff]
    %v694 = vld [vmem:[%s692 + $0x8] sm:$0xff]
    %v697 = vcombine.high %v693, %v693
    %v698 = vcombine.high %v694, %v694
    %v701 = vmul.f32 %v691, %v693
    %v702 = vmul.f32 %v690, %v697
    %v703 = vmul.f32 %v689, %v694
    %v704 = vmul.f32 %v688, %v698
    %v705 = vadd.f32 %v675, %v701
    %v706 = vadd.f32 %v676, %v702
    %v707 = vadd.f32 %v677, %v703
    %v708 = vadd.f32 %v678, %v704
    %709 = vrot.lane.b32.xlu0 %v77, 15
    %v710 = vpop.permute.xlu0 %709
    %711 = vrot.lane.b32.xlu0 %v168, 15
    %v712 = vpop.permute.xlu0 %711
    %713 = vrot.lane.b32.xlu0 %v78, 15
    %v714 = vpop.permute.xlu0 %713
    %715 = vrot.lane.b32.xlu0 %v169, 15
    %v716 = vpop.permute.xlu0 %715
    %vm717 = vcmp.lt.s32.totalorder %v181, 15
    %v718 = vsel %vm717, %v714, %v716
    %v719 = vsel %vm717, %v712, %v714
    %v720 = vsel %vm717, %v710, %v712
    %v721 = vsel %vm717, %v716, %v710
    %s722 = scalar_lea.vmem [#allocation7], 288
    %v723 = vld [vmem:[%s722] sm:$0xff]
    %v724 = vld [vmem:[%s722 + $0x8] sm:$0xff]
    %v727 = vcombine.high %v723, %v723
    %v728 = vcombine.high %v724, %v724
    %v731 = vmul.f32 %v721, %v723
    %v732 = vmul.f32 %v720, %v727
    %v733 = vmul.f32 %v719, %v724
    %v734 = vmul.f32 %v718, %v728
    %v735 = vadd.f32 %v705, %v731
    %v736 = vadd.f32 %v706, %v732
    %v737 = vadd.f32 %v707, %v733
    %v738 = vadd.f32 %v708, %v734
    %739 = vrot.lane.b32.xlu0 %v77, 14
    %v740 = vpop.permute.xlu0 %739
    %741 = vrot.lane.b32.xlu0 %v168, 14
    %v742 = vpop.permute.xlu0 %741
    %743 = vrot.lane.b32.xlu0 %v78, 14
    %v744 = vpop.permute.xlu0 %743
    %745 = vrot.lane.b32.xlu0 %v169, 14
    %v746 = vpop.permute.xlu0 %745
    %vm747 = vcmp.lt.s32.totalorder %v181, 14
    %v748 = vsel %vm747, %v744, %v746
    %v749 = vsel %vm747, %v742, %v744
    %v750 = vsel %vm747, %v740, %v742
    %v751 = vsel %vm747, %v746, %v740
    %s752 = scalar_lea.vmem [#allocation7], 304
    %v753 = vld [vmem:[%s752] sm:$0xff]
    %v754 = vld [vmem:[%s752 + $0x8] sm:$0xff]
    %v757 = vcombine.high %v753, %v753
    %v758 = vcombine.high %v754, %v754
    %v761 = vmul.f32 %v751, %v753
    %v762 = vmul.f32 %v750, %v757
    %v763 = vmul.f32 %v749, %v754
    %v764 = vmul.f32 %v748, %v758
    %v765 = vadd.f32 %v735, %v761
    %v766 = vadd.f32 %v736, %v762
    %v767 = vadd.f32 %v737, %v763
    %v768 = vadd.f32 %v738, %v764
    %769 = vrot.lane.b32.xlu0 %v77, 13
    %v770 = vpop.permute.xlu0 %769
    %771 = vrot.lane.b32.xlu0 %v168, 13
    %v772 = vpop.permute.xlu0 %771
    %773 = vrot.lane.b32.xlu0 %v78, 13
    %v774 = vpop.permute.xlu0 %773
    %775 = vrot.lane.b32.xlu0 %v169, 13
    %v776 = vpop.permute.xlu0 %775
    %vm777 = vcmp.lt.s32.totalorder %v181, 13
    %v778 = vsel %vm777, %v774, %v776
    %v779 = vsel %vm777, %v772, %v774
    %v780 = vsel %vm777, %v770, %v772
    %v781 = vsel %vm777, %v776, %v770
    %s782 = scalar_lea.vmem [#allocation7], 320
    %v783 = vld [vmem:[%s782] sm:$0xff]
    %v784 = vld [vmem:[%s782 + $0x8] sm:$0xff]
    %v787 = vcombine.high %v783, %v783
    %v788 = vcombine.high %v784, %v784
    %v791 = vmul.f32 %v781, %v783
    %v792 = vmul.f32 %v780, %v787
    %v793 = vmul.f32 %v779, %v784
    %v794 = vmul.f32 %v778, %v788
    %v795 = vadd.f32 %v765, %v791
    %v796 = vadd.f32 %v766, %v792
    %v797 = vadd.f32 %v767, %v793
    %v798 = vadd.f32 %v768, %v794
    %799 = vrot.lane.b32.xlu0 %v77, 3
    %v800 = vpop.permute.xlu0 %799
    %801 = vrot.lane.b32.xlu0 %v168, 3
    %v802 = vpop.permute.xlu0 %801
    %803 = vrot.lane.b32.xlu0 %v78, 3
    %v804 = vpop.permute.xlu0 %803
    %805 = vrot.lane.b32.xlu0 %v169, 3
    %v806 = vpop.permute.xlu0 %805
    %vm807 = vcmp.lt.s32.totalorder %v181, 3
    %v808 = vsel %vm807, %v804, %v806
    %v809 = vsel %vm807, %v802, %v804
    %v810 = vsel %vm807, %v800, %v802
    %v811 = vsel %vm807, %v806, %v800
    %s812 = scalar_lea.vmem [#allocation7], 336
    %v813 = vld [vmem:[%s812] sm:$0xff]
    %v814 = vld [vmem:[%s812 + $0x8] sm:$0xff]
    %v817 = vcombine.high %v813, %v813
    %v818 = vcombine.high %v814, %v814
    %v821 = vmul.f32 %v811, %v813
    %v822 = vmul.f32 %v810, %v817
    %v823 = vmul.f32 %v809, %v814
    %v824 = vmul.f32 %v808, %v818
    %v825 = vadd.f32 %v795, %v821
    %v826 = vadd.f32 %v796, %v822
    %v827 = vadd.f32 %v797, %v823
    %v828 = vadd.f32 %v798, %v824
    %829 = vrot.lane.b32.xlu0 %v77, 2
    %v830 = vpop.permute.xlu0 %829
    %831 = vrot.lane.b32.xlu0 %v168, 2
    %v832 = vpop.permute.xlu0 %831
    %833 = vrot.lane.b32.xlu0 %v78, 2
    %v834 = vpop.permute.xlu0 %833
    %835 = vrot.lane.b32.xlu0 %v169, 2
    %v836 = vpop.permute.xlu0 %835
    %vm837 = vcmp.lt.s32.totalorder %v181, 2
    %v838 = vsel %vm837, %v834, %v836
    %v839 = vsel %vm837, %v832, %v834
    %v840 = vsel %vm837, %v830, %v832
    %v841 = vsel %vm837, %v836, %v830
    %s842 = scalar_lea.vmem [#allocation7], 352
    %v843 = vld [vmem:[%s842] sm:$0xff]
    %v844 = vld [vmem:[%s842 + $0x8] sm:$0xff]
    %v847 = vcombine.high %v843, %v843
    %v848 = vcombine.high %v844, %v844
    %v851 = vmul.f32 %v841, %v843
    %v852 = vmul.f32 %v840, %v847
    %v853 = vmul.f32 %v839, %v844
    %v854 = vmul.f32 %v838, %v848
    %v855 = vadd.f32 %v825, %v851
    %v856 = vadd.f32 %v826, %v852
    %v857 = vadd.f32 %v827, %v853
    %v858 = vadd.f32 %v828, %v854
    %859 = vrot.lane.b32.xlu0 %v77, 1
    %v860 = vpop.permute.xlu0 %859
    %861 = vrot.lane.b32.xlu0 %v168, 1
    %v862 = vpop.permute.xlu0 %861
    %863 = vrot.lane.b32.xlu0 %v78, 1
    %v864 = vpop.permute.xlu0 %863
    %865 = vrot.lane.b32.xlu0 %v169, 1
    %v866 = vpop.permute.xlu0 %865
    %vm867 = vcmp.lt.s32.totalorder %v181, 1
    %v868 = vsel %vm867, %v864, %v866
    %v869 = vsel %vm867, %v862, %v864
    %v870 = vsel %vm867, %v860, %v862
    %v871 = vsel %vm867, %v866, %v860
    %s872 = scalar_lea.vmem [#allocation7], 368
    %v873 = vld [vmem:[%s872] sm:$0xff]
    %v874 = vld [vmem:[%s872 + $0x8] sm:$0xff]
    %v877 = vcombine.high %v873, %v873
    %v878 = vcombine.high %v874, %v874
    %v881 = vmul.f32 %v871, %v873
    %v882 = vmul.f32 %v870, %v877
    %v883 = vmul.f32 %v869, %v874
    %v884 = vmul.f32 %v868, %v878
    %v885 = vadd.f32 %v855, %v881
    %v886 = vadd.f32 %v856, %v882
    %v887 = vadd.f32 %v857, %v883
    %v888 = vadd.f32 %v858, %v884
    %s889 = scalar_lea.vmem [#allocation7], 384
    %v890 = vld [vmem:[%s889] sm:$0xff]
    %v891 = vld [vmem:[%s889 + $0x8] sm:$0xff]
    %v892 = vmul.f32 %v77, %v890
    %v893 = vmul.f32 %v78, %v891
    %v896 = vcombine.high %v892, %v892
    %v897 = vcombine.high %v893, %v893
    %v900 = vadd.f32 %v885, %v892
    %v901 = vadd.f32 %v886, %v896
    %v902 = vadd.f32 %v887, %v893
    %v903 = vadd.f32 %v888, %v897
    %904 = vrot.lane.b32.xlu0 %v77, 127
    %v905 = vpop.permute.xlu0 %904
    %906 = vrot.lane.b32.xlu0 %v168, 127
    %v907 = vpop.permute.xlu0 %906
    %908 = vrot.lane.b32.xlu0 %v78, 127
    %v909 = vpop.permute.xlu0 %908
    %910 = vrot.lane.b32.xlu0 %v169, 127
    %v911 = vpop.permute.xlu0 %910
    %vm912 = vcmp.lt.s32.totalorder %v181, 127
    %v913 = vsel %vm912, %v909, %v911
    %v914 = vsel %vm912, %v907, %v909
    %v915 = vsel %vm912, %v905, %v907
    %v916 = vsel %vm912, %v911, %v905
    %s917 = scalar_lea.vmem [#allocation7], 400
    %v918 = vld [vmem:[%s917] sm:$0xff]
    %v919 = vld [vmem:[%s917 + $0x8] sm:$0xff]
    %v922 = vcombine.high %v918, %v918
    %v923 = vcombine.high %v919, %v919
    %v926 = vmul.f32 %v915, %v918
    %v927 = vmul.f32 %v914, %v922
    %v928 = vmul.f32 %v913, %v919
    %v929 = vmul.f32 %v916, %v923
    %v930 = vadd.f32 %v900, %v926
    %v931 = vadd.f32 %v901, %v927
    %v932 = vadd.f32 %v902, %v928
    %v933 = vadd.f32 %v903, %v929
    %934 = vrot.lane.b32.xlu0 %v77, 126
    %v935 = vpop.permute.xlu0 %934
    %936 = vrot.lane.b32.xlu0 %v168, 126
    %v937 = vpop.permute.xlu0 %936
    %938 = vrot.lane.b32.xlu0 %v78, 126
    %v939 = vpop.permute.xlu0 %938
    %940 = vrot.lane.b32.xlu0 %v169, 126
    %v941 = vpop.permute.xlu0 %940
    %vm942 = vcmp.lt.s32.totalorder %v181, 126
    %v943 = vsel %vm942, %v939, %v941
    %v944 = vsel %vm942, %v937, %v939
    %v945 = vsel %vm942, %v935, %v937
    %v946 = vsel %vm942, %v941, %v935
    %s947 = scalar_lea.vmem [#allocation7], 416
    %v948 = vld [vmem:[%s947] sm:$0xff]
    %v949 = vld [vmem:[%s947 + $0x8] sm:$0xff]
    %v952 = vcombine.high %v948, %v948
    %v953 = vcombine.high %v949, %v949
    %v956 = vmul.f32 %v945, %v948
    %v957 = vmul.f32 %v944, %v952
    %v958 = vmul.f32 %v943, %v949
    %v959 = vmul.f32 %v946, %v953
    %v960 = vadd.f32 %v930, %v956
    %v961 = vadd.f32 %v931, %v957
    %v962 = vadd.f32 %v932, %v958
    %v963 = vadd.f32 %v933, %v959
    %964 = vrot.lane.b32.xlu0 %v77, 125
    %v965 = vpop.permute.xlu0 %964
    %966 = vrot.lane.b32.xlu0 %v168, 125
    %v967 = vpop.permute.xlu0 %966
    %968 = vrot.lane.b32.xlu0 %v78, 125
    %v969 = vpop.permute.xlu0 %968
    %970 = vrot.lane.b32.xlu0 %v169, 125
    %v971 = vpop.permute.xlu0 %970
    %vm972 = vcmp.lt.s32.totalorder %v181, 125
    %v973 = vsel %vm972, %v969, %v971
    %v974 = vsel %vm972, %v967, %v969
    %v975 = vsel %vm972, %v965, %v967
    %v976 = vsel %vm972, %v971, %v965
    %s977 = scalar_lea.vmem [#allocation7], 432
    %v978 = vld [vmem:[%s977] sm:$0xff]
    %v979 = vld [vmem:[%s977 + $0x8] sm:$0xff]
    %v982 = vcombine.high %v978, %v978
    %v983 = vcombine.high %v979, %v979
    %v986 = vmul.f32 %v975, %v978
    %v987 = vmul.f32 %v974, %v982
    %v988 = vmul.f32 %v973, %v979
    %v989 = vmul.f32 %v976, %v983
    %v990 = vadd.f32 %v960, %v986
    %v991 = vadd.f32 %v961, %v987
    %v992 = vadd.f32 %v962, %v988
    %v993 = vadd.f32 %v963, %v989
    %994 = vrot.lane.b32.xlu0 %v77, 115
    %v995 = vpop.permute.xlu0 %994
    %996 = vrot.lane.b32.xlu0 %v168, 115
    %v997 = vpop.permute.xlu0 %996
    %998 = vrot.lane.b32.xlu0 %v78, 115
    %v999 = vpop.permute.xlu0 %998
    %1000 = vrot.lane.b32.xlu0 %v169, 115
    %v1001 = vpop.permute.xlu0 %1000
    %vm1002 = vcmp.lt.s32.totalorder %v181, 115
    %v1003 = vsel %vm1002, %v999, %v1001
    %v1004 = vsel %vm1002, %v997, %v999
    %v1005 = vsel %vm1002, %v995, %v997
    %v1006 = vsel %vm1002, %v1001, %v995
    %s1007 = scalar_lea.vmem [#allocation7], 448
    %v1008 = vld [vmem:[%s1007] sm:$0xff]
    %v1009 = vld [vmem:[%s1007 + $0x8] sm:$0xff]
    %v1012 = vcombine.high %v1008, %v1008
    %v1013 = vcombine.high %v1009, %v1009
    %v1016 = vmul.f32 %v1005, %v1008
    %v1017 = vmul.f32 %v1004, %v1012
    %v1018 = vmul.f32 %v1003, %v1009
    %v1019 = vmul.f32 %v1006, %v1013
    %v1020 = vadd.f32 %v990, %v1016
    %v1021 = vadd.f32 %v991, %v1017
    %v1022 = vadd.f32 %v992, %v1018
    %v1023 = vadd.f32 %v993, %v1019
    %1024 = vrot.lane.b32.xlu0 %v77, 114
    %v1025 = vpop.permute.xlu0 %1024
    %1026 = vrot.lane.b32.xlu0 %v168, 114
    %v1027 = vpop.permute.xlu0 %1026
    %1028 = vrot.lane.b32.xlu0 %v78, 114
    %v1029 = vpop.permute.xlu0 %1028
    %1030 = vrot.lane.b32.xlu0 %v169, 114
    %v1031 = vpop.permute.xlu0 %1030
    %vm1032 = vcmp.lt.s32.totalorder %v181, 114
    %v1033 = vsel %vm1032, %v1029, %v1031
    %v1034 = vsel %vm1032, %v1027, %v1029
    %v1035 = vsel %vm1032, %v1025, %v1027
    %v1036 = vsel %vm1032, %v1031, %v1025
    %s1037 = scalar_lea.vmem [#allocation7], 464
    %v1038 = vld [vmem:[%s1037] sm:$0xff]
    %v1039 = vld [vmem:[%s1037 + $0x8] sm:$0xff]
    %v1042 = vcombine.high %v1038, %v1038
    %v1043 = vcombine.high %v1039, %v1039
    %v1046 = vmul.f32 %v1035, %v1038
    %v1047 = vmul.f32 %v1034, %v1042
    %v1048 = vmul.f32 %v1033, %v1039
    %v1049 = vmul.f32 %v1036, %v1043
    %v1050 = vadd.f32 %v1020, %v1046
    %v1051 = vadd.f32 %v1021, %v1047
    %v1052 = vadd.f32 %v1022, %v1048
    %v1053 = vadd.f32 %v1023, %v1049
    %1054 = vrot.lane.b32.xlu0 %v77, 113
    %v1055 = vpop.permute.xlu0 %1054
    %1056 = vrot.lane.b32.xlu0 %v168, 113
    %v1057 = vpop.permute.xlu0 %1056
    %1058 = vrot.lane.b32.xlu0 %v78, 113
    %v1059 = vpop.permute.xlu0 %1058
    %1060 = vrot.lane.b32.xlu0 %v169, 113
    %v1061 = vpop.permute.xlu0 %1060
    %vm1062 = vcmp.lt.s32.totalorder %v181, 113
    %v1063 = vsel %vm1062, %v1059, %v1061
    %v1064 = vsel %vm1062, %v1057, %v1059
    %v1065 = vsel %vm1062, %v1055, %v1057
    %v1066 = vsel %vm1062, %v1061, %v1055
    %s1067 = scalar_lea.vmem [#allocation7], 480
    %v1068 = vld [vmem:[%s1067] sm:$0xff]
    %v1069 = vld [vmem:[%s1067 + $0x8] sm:$0xff]
    %v1072 = vcombine.high %v1068, %v1068
    %v1073 = vcombine.high %v1069, %v1069
    %v1076 = vmul.f32 %v1065, %v1068
    %v1077 = vmul.f32 %v1064, %v1072
    %v1078 = vmul.f32 %v1063, %v1069
    %v1079 = vmul.f32 %v1066, %v1073
    %v1080 = vadd.f32 %v1050, %v1076
    %v1081 = vadd.f32 %v1051, %v1077
    %v1082 = vadd.f32 %v1052, %v1078
    %v1083 = vadd.f32 %v1053, %v1079
    %1084 = vrot.lane.b32.xlu0 %v77, 112
    %v1085 = vpop.permute.xlu0 %1084
    %1086 = vrot.lane.b32.xlu0 %v168, 112
    %v1087 = vpop.permute.xlu0 %1086
    %1088 = vrot.lane.b32.xlu0 %v78, 112
    %v1089 = vpop.permute.xlu0 %1088
    %1090 = vrot.lane.b32.xlu0 %v169, 112
    %v1091 = vpop.permute.xlu0 %1090
    %vm1092 = vcmp.lt.s32.totalorder %v181, 112
    %v1093 = vsel %vm1092, %v1089, %v1091
    %v1094 = vsel %vm1092, %v1087, %v1089
    %v1095 = vsel %vm1092, %v1085, %v1087
    %v1096 = vsel %vm1092, %v1091, %v1085
    %s1097 = scalar_lea.vmem [#allocation7], 496
    %v1098 = vld [vmem:[%s1097] sm:$0xff]
    %v1099 = vld [vmem:[%s1097 + $0x8] sm:$0xff]
    %v1102 = vcombine.high %v1098, %v1098
    %v1103 = vcombine.high %v1099, %v1099
    %v1106 = vmul.f32 %v1095, %v1098
    %v1107 = vmul.f32 %v1094, %v1102
    %v1108 = vmul.f32 %v1093, %v1099
    %v1109 = vmul.f32 %v1096, %v1103
    %v1110 = vadd.f32 %v1080, %v1106
    %v1111 = vadd.f32 %v1081, %v1107
    %v1112 = vadd.f32 %v1082, %v1108
    %v1113 = vadd.f32 %v1083, %v1109
    %1114 = vrot.lane.b32.xlu0 %v77, 111
    %v1115 = vpop.permute.xlu0 %1114
    %1116 = vrot.lane.b32.xlu0 %v168, 111
    %v1117 = vpop.permute.xlu0 %1116
    %1118 = vrot.lane.b32.xlu0 %v78, 111
    %v1119 = vpop.permute.xlu0 %1118
    %1120 = vrot.lane.b32.xlu0 %v169, 111
    %v1121 = vpop.permute.xlu0 %1120
    %vm1122 = vcmp.lt.s32.totalorder %v181, 111
    %v1123 = vsel %vm1122, %v1119, %v1121
    %v1124 = vsel %vm1122, %v1117, %v1119
    %v1125 = vsel %vm1122, %v1115, %v1117
    %v1126 = vsel %vm1122, %v1121, %v1115
    %s1127 = scalar_lea.vmem [#allocation7], 512
    %v1128 = vld [vmem:[%s1127] sm:$0xff]
    %v1129 = vld [vmem:[%s1127 + $0x8] sm:$0xff]
    %v1132 = vcombine.high %v1128, %v1128
    %v1133 = vcombine.high %v1129, %v1129
    %v1136 = vmul.f32 %v1125, %v1128
    %v1137 = vmul.f32 %v1124, %v1132
    %v1138 = vmul.f32 %v1123, %v1129
    %v1139 = vmul.f32 %v1126, %v1133
    %v1140 = vadd.f32 %v1110, %v1136
    %v1141 = vadd.f32 %v1111, %v1137
    %v1142 = vadd.f32 %v1112, %v1138
    %v1143 = vadd.f32 %v1113, %v1139
    %1144 = vrot.lane.b32.xlu0 %v77, 110
    %v1145 = vpop.permute.xlu0 %1144
    %1146 = vrot.lane.b32.xlu0 %v168, 110
    %v1147 = vpop.permute.xlu0 %1146
    %1148 = vrot.lane.b32.xlu0 %v78, 110
    %v1149 = vpop.permute.xlu0 %1148
    %1150 = vrot.lane.b32.xlu0 %v169, 110
    %v1151 = vpop.permute.xlu0 %1150
    %vm1152 = vcmp.lt.s32.totalorder %v181, 110
    %v1153 = vsel %vm1152, %v1149, %v1151
    %v1154 = vsel %vm1152, %v1147, %v1149
    %v1155 = vsel %vm1152, %v1145, %v1147
    %v1156 = vsel %vm1152, %v1151, %v1145
    %s1157 = scalar_lea.vmem [#allocation7], 528
    %v1158 = vld [vmem:[%s1157] sm:$0xff]
    %v1159 = vld [vmem:[%s1157 + $0x8] sm:$0xff]
    %v1162 = vcombine.high %v1158, %v1158
    %v1163 = vcombine.high %v1159, %v1159
    %v1166 = vmul.f32 %v1155, %v1158
    %v1167 = vmul.f32 %v1154, %v1162
    %v1168 = vmul.f32 %v1153, %v1159
    %v1169 = vmul.f32 %v1156, %v1163
    %v1170 = vadd.f32 %v1140, %v1166
    %v1171 = vadd.f32 %v1141, %v1167
    %v1172 = vadd.f32 %v1142, %v1168
    %v1173 = vadd.f32 %v1143, %v1169
    %1174 = vrot.lane.b32.xlu0 %v77, 109
    %v1175 = vpop.permute.xlu0 %1174
    %1176 = vrot.lane.b32.xlu0 %v168, 109
    %v1177 = vpop.permute.xlu0 %1176
    %1178 = vrot.lane.b32.xlu0 %v78, 109
    %v1179 = vpop.permute.xlu0 %1178
    %1180 = vrot.lane.b32.xlu0 %v169, 109
    %v1181 = vpop.permute.xlu0 %1180
    %vm1182 = vcmp.lt.s32.totalorder %v181, 109
    %v1183 = vsel %vm1182, %v1179, %v1181
    %v1184 = vsel %vm1182, %v1177, %v1179
    %v1185 = vsel %vm1182, %v1175, %v1177
    %v1186 = vsel %vm1182, %v1181, %v1175
    %s1187 = scalar_lea.vmem [#allocation7], 544
    %v1188 = vld [vmem:[%s1187] sm:$0xff]
    %v1189 = vld [vmem:[%s1187 + $0x8] sm:$0xff]
    %v1192 = vcombine.high %v1188, %v1188
    %v1193 = vcombine.high %v1189, %v1189
    %v1196 = vmul.f32 %v1185, %v1188
    %v1197 = vmul.f32 %v1184, %v1192
    %v1198 = vmul.f32 %v1183, %v1189
    %v1199 = vmul.f32 %v1186, %v1193
    %v1200 = vadd.f32 %v1170, %v1196
    %v1201 = vadd.f32 %v1171, %v1197
    %v1202 = vadd.f32 %v1172, %v1198
    %v1203 = vadd.f32 %v1173, %v1199
    %1204 = vrot.lane.b32.xlu0 %v77, 99
    %v1205 = vpop.permute.xlu0 %1204
    %1206 = vrot.lane.b32.xlu0 %v168, 99
    %v1207 = vpop.permute.xlu0 %1206
    %1208 = vrot.lane.b32.xlu0 %v78, 99
    %v1209 = vpop.permute.xlu0 %1208
    %1210 = vrot.lane.b32.xlu0 %v169, 99
    %v1211 = vpop.permute.xlu0 %1210
    %vm1212 = vcmp.lt.s32.totalorder %v181, 99
    %v1213 = vsel %vm1212, %v1209, %v1211
    %v1214 = vsel %vm1212, %v1207, %v1209
    %v1215 = vsel %vm1212, %v1205, %v1207
    %v1216 = vsel %vm1212, %v1211, %v1205
    %s1217 = scalar_lea.vmem [#allocation7], 560
    %v1218 = vld [vmem:[%s1217] sm:$0xff]
    %v1219 = vld [vmem:[%s1217 + $0x8] sm:$0xff]
    %v1222 = vcombine.high %v1218, %v1218
    %v1223 = vcombine.high %v1219, %v1219
    %v1226 = vmul.f32 %v1215, %v1218
    %v1227 = vmul.f32 %v1214, %v1222
    %v1228 = vmul.f32 %v1213, %v1219
    %v1229 = vmul.f32 %v1216, %v1223
    %v1230 = vadd.f32 %v1200, %v1226
    %v1231 = vadd.f32 %v1201, %v1227
    %v1232 = vadd.f32 %v1202, %v1228
    %v1233 = vadd.f32 %v1203, %v1229
    %1234 = vrot.lane.b32.xlu0 %v77, 98
    %v1235 = vpop.permute.xlu0 %1234
    %1236 = vrot.lane.b32.xlu0 %v168, 98
    %v1237 = vpop.permute.xlu0 %1236
    %1238 = vrot.lane.b32.xlu0 %v78, 98
    %v1239 = vpop.permute.xlu0 %1238
    %1240 = vrot.lane.b32.xlu0 %v169, 98
    %v1241 = vpop.permute.xlu0 %1240
    %vm1242 = vcmp.lt.s32.totalorder %v181, 98
    %v1243 = vsel %vm1242, %v1239, %v1241
    %v1244 = vsel %vm1242, %v1237, %v1239
    %v1245 = vsel %vm1242, %v1235, %v1237
    %v1246 = vsel %vm1242, %v1241, %v1235
    %s1247 = scalar_lea.vmem [#allocation7], 576
    %v1248 = vld [vmem:[%s1247] sm:$0xff]
    %v1249 = vld [vmem:[%s1247 + $0x8] sm:$0xff]
    %v1252 = vcombine.high %v1248, %v1248
    %v1253 = vcombine.high %v1249, %v1249
    %v1256 = vmul.f32 %v1245, %v1248
    %v1257 = vmul.f32 %v1244, %v1252
    %v1258 = vmul.f32 %v1243, %v1249
    %v1259 = vmul.f32 %v1246, %v1253
    %v1260 = vadd.f32 %v1230, %v1256
    %v1261 = vadd.f32 %v1231, %v1257
    %v1262 = vadd.f32 %v1232, %v1258
    %v1263 = vadd.f32 %v1233, %v1259
    %1264 = vrot.lane.b32.xlu0 %v77, 97
    %v1265 = vpop.permute.xlu0 %1264
    %1266 = vrot.lane.b32.xlu0 %v168, 97
    %v1267 = vpop.permute.xlu0 %1266
    %1268 = vrot.lane.b32.xlu0 %v78, 97
    %v1269 = vpop.permute.xlu0 %1268
    %1270 = vrot.lane.b32.xlu0 %v169, 97
    %v1271 = vpop.permute.xlu0 %1270
    %vm1272 = vcmp.lt.s32.totalorder %v181, 97
    %v1273 = vsel %vm1272, %v1269, %v1271
    %v1274 = vsel %vm1272, %v1267, %v1269
    %v1275 = vsel %vm1272, %v1265, %v1267
    %v1276 = vsel %vm1272, %v1271, %v1265
    %s1277 = scalar_lea.vmem [#allocation7], 592
    %v1278 = vld [vmem:[%s1277] sm:$0xff]
    %v1279 = vld [vmem:[%s1277 + $0x8] sm:$0xff]
    %v1282 = vcombine.high %v1278, %v1278
    %v1283 = vcombine.high %v1279, %v1279
    %v1286 = vmul.f32 %v1275, %v1278
    %v1287 = vmul.f32 %v1274, %v1282
    %v1288 = vmul.f32 %v1273, %v1279
    %v1289 = vmul.f32 %v1276, %v1283
    %v1290 = vadd.f32 %v1260, %v1286
    %v1291 = vadd.f32 %v1261, %v1287
    %v1292 = vadd.f32 %v1262, %v1288
    %v1293 = vadd.f32 %v1263, %v1289
    %1294 = vrot.lane.b32.xlu0 %v77, 96
    %v1295 = vpop.permute.xlu0 %1294
    %1296 = vrot.lane.b32.xlu0 %v168, 96
    %v1297 = vpop.permute.xlu0 %1296
    %1298 = vrot.lane.b32.xlu0 %v78, 96
    %v1299 = vpop.permute.xlu0 %1298
    %1300 = vrot.lane.b32.xlu0 %v169, 96
    %v1301 = vpop.permute.xlu0 %1300
    %vm1302 = vcmp.lt.s32.totalorder %v181, 96
    %v1303 = vsel %vm1302, %v1299, %v1301
    %v1304 = vsel %vm1302, %v1297, %v1299
    %v1305 = vsel %vm1302, %v1295, %v1297
    %v1306 = vsel %vm1302, %v1301, %v1295
    %s1307 = scalar_lea.vmem [#allocation7], 608
    %v1308 = vld [vmem:[%s1307] sm:$0xff]
    %v1309 = vld [vmem:[%s1307 + $0x8] sm:$0xff]
    %v1312 = vcombine.high %v1308, %v1308
    %v1313 = vcombine.high %v1309, %v1309
    %v1316 = vmul.f32 %v1305, %v1308
    %v1317 = vmul.f32 %v1304, %v1312
    %v1318 = vmul.f32 %v1303, %v1309
    %v1319 = vmul.f32 %v1306, %v1313
    %v1320 = vadd.f32 %v1290, %v1316
    %v1321 = vadd.f32 %v1291, %v1317
    %v1322 = vadd.f32 %v1292, %v1318
    %v1323 = vadd.f32 %v1293, %v1319
    %1324 = vrot.lane.b32.xlu0 %v77, 95
    %v1325 = vpop.permute.xlu0 %1324
    %1326 = vrot.lane.b32.xlu0 %v168, 95
    %v1327 = vpop.permute.xlu0 %1326
    %1328 = vrot.lane.b32.xlu0 %v78, 95
    %v1329 = vpop.permute.xlu0 %1328
    %1330 = vrot.lane.b32.xlu0 %v169, 95
    %v1331 = vpop.permute.xlu0 %1330
    %vm1332 = vcmp.lt.s32.totalorder %v181, 95
    %v1333 = vsel %vm1332, %v1329, %v1331
    %v1334 = vsel %vm1332, %v1327, %v1329
    %v1335 = vsel %vm1332, %v1325, %v1327
    %v1336 = vsel %vm1332, %v1331, %v1325
    %s1337 = scalar_lea.vmem [#allocation7], 624
    %v1338 = vld [vmem:[%s1337] sm:$0xff]
    %v1339 = vld [vmem:[%s1337 + $0x8] sm:$0xff]
    %v1342 = vcombine.high %v1338, %v1338
    %v1343 = vcombine.high %v1339, %v1339
    %v1346 = vmul.f32 %v1335, %v1338
    %v1347 = vmul.f32 %v1334, %v1342
    %v1348 = vmul.f32 %v1333, %v1339
    %v1349 = vmul.f32 %v1336, %v1343
    %v1350 = vadd.f32 %v1320, %v1346
    %v1351 = vadd.f32 %v1321, %v1347
    %v1352 = vadd.f32 %v1322, %v1348
    %v1353 = vadd.f32 %v1323, %v1349
    %1354 = vrot.lane.b32.xlu0 %v77, 94
    %v1355 = vpop.permute.xlu0 %1354
    %1356 = vrot.lane.b32.xlu0 %v168, 94
    %v1357 = vpop.permute.xlu0 %1356
    %1358 = vrot.lane.b32.xlu0 %v78, 94
    %v1359 = vpop.permute.xlu0 %1358
    %1360 = vrot.lane.b32.xlu0 %v169, 94
    %v1361 = vpop.permute.xlu0 %1360
    %vm1362 = vcmp.lt.s32.totalorder %v181, 94
    %v1363 = vsel %vm1362, %v1359, %v1361
    %v1364 = vsel %vm1362, %v1357, %v1359
    %v1365 = vsel %vm1362, %v1355, %v1357
    %v1366 = vsel %vm1362, %v1361, %v1355
    %s1367 = scalar_lea.vmem [#allocation7], 640
    %v1368 = vld [vmem:[%s1367] sm:$0xff]
    %v1369 = vld [vmem:[%s1367 + $0x8] sm:$0xff]
    %v1372 = vcombine.high %v1368, %v1368
    %v1373 = vcombine.high %v1369, %v1369
    %v1376 = vmul.f32 %v1365, %v1368
    %v1377 = vmul.f32 %v1364, %v1372
    %v1378 = vmul.f32 %v1363, %v1369
    %v1379 = vmul.f32 %v1366, %v1373
    %v1380 = vadd.f32 %v1350, %v1376
    %v1381 = vadd.f32 %v1351, %v1377
    %v1382 = vadd.f32 %v1352, %v1378
    %v1383 = vadd.f32 %v1353, %v1379
    %1384 = vrot.lane.b32.xlu0 %v77, 93
    %v1385 = vpop.permute.xlu0 %1384
    %1386 = vrot.lane.b32.xlu0 %v168, 93
    %v1387 = vpop.permute.xlu0 %1386
    %1388 = vrot.lane.b32.xlu0 %v78, 93
    %v1389 = vpop.permute.xlu0 %1388
    %1390 = vrot.lane.b32.xlu0 %v169, 93
    %v1391 = vpop.permute.xlu0 %1390
    %vm1392 = vcmp.lt.s32.totalorder %v181, 93
    %v1393 = vsel %vm1392, %v1389, %v1391
    %v1394 = vsel %vm1392, %v1387, %v1389
    %v1395 = vsel %vm1392, %v1385, %v1387
    %v1396 = vsel %vm1392, %v1391, %v1385
    %s1397 = scalar_lea.vmem [#allocation7], 656
    %v1398 = vld [vmem:[%s1397] sm:$0xff]
    %v1399 = vld [vmem:[%s1397 + $0x8] sm:$0xff]
    %v1402 = vcombine.high %v1398, %v1398
    %v1403 = vcombine.high %v1399, %v1399
    %v1406 = vmul.f32 %v1395, %v1398
    %v1407 = vmul.f32 %v1394, %v1402
    %v1408 = vmul.f32 %v1393, %v1399
    %v1409 = vmul.f32 %v1396, %v1403
    %v1410 = vadd.f32 %v1380, %v1406
    %v1411 = vadd.f32 %v1381, %v1407
    %v1412 = vadd.f32 %v1382, %v1408
    %v1413 = vadd.f32 %v1383, %v1409
    %1414 = vrot.lane.b32.xlu0 %v77, 83
    %v1415 = vpop.permute.xlu0 %1414
    %1416 = vrot.lane.b32.xlu0 %v168, 83
    %v1417 = vpop.permute.xlu0 %1416
    %1418 = vrot.lane.b32.xlu0 %v78, 83
    %v1419 = vpop.permute.xlu0 %1418
    %1420 = vrot.lane.b32.xlu0 %v169, 83
    %v1421 = vpop.permute.xlu0 %1420
    %vm1422 = vcmp.lt.s32.totalorder %v181, 83
    %v1423 = vsel %vm1422, %v1419, %v1421
    %v1424 = vsel %vm1422, %v1417, %v1419
    %v1425 = vsel %vm1422, %v1415, %v1417
    %v1426 = vsel %vm1422, %v1421, %v1415
    %s1427 = scalar_lea.vmem [#allocation7], 672
    %v1428 = vld [vmem:[%s1427] sm:$0xff]
    %v1429 = vld [vmem:[%s1427 + $0x8] sm:$0xff]
    %v1432 = vcombine.high %v1428, %v1428
    %v1433 = vcombine.high %v1429, %v1429
    %v1436 = vmul.f32 %v1425, %v1428
    %v1437 = vmul.f32 %v1424, %v1432
    %v1438 = vmul.f32 %v1423, %v1429
    %v1439 = vmul.f32 %v1426, %v1433
    %v1440 = vadd.f32 %v1410, %v1436
    %v1441 = vadd.f32 %v1411, %v1437
    %v1442 = vadd.f32 %v1412, %v1438
    %v1443 = vadd.f32 %v1413, %v1439
    %1444 = vrot.lane.b32.xlu0 %v77, 82
    %v1445 = vpop.permute.xlu0 %1444
    %1446 = vrot.lane.b32.xlu0 %v168, 82
    %v1447 = vpop.permute.xlu0 %1446
    %1448 = vrot.lane.b32.xlu0 %v78, 82
    %v1449 = vpop.permute.xlu0 %1448
    %1450 = vrot.lane.b32.xlu0 %v169, 82
    %v1451 = vpop.permute.xlu0 %1450
    %vm1452 = vcmp.lt.s32.totalorder %v181, 82
    %v1453 = vsel %vm1452, %v1449, %v1451
    %v1454 = vsel %vm1452, %v1447, %v1449
    %v1455 = vsel %vm1452, %v1445, %v1447
    %v1456 = vsel %vm1452, %v1451, %v1445
    %s1457 = scalar_lea.vmem [#allocation7], 688
    %v1458 = vld [vmem:[%s1457] sm:$0xff]
    %v1459 = vld [vmem:[%s1457 + $0x8] sm:$0xff]
    %v1462 = vcombine.high %v1458, %v1458
    %v1463 = vcombine.high %v1459, %v1459
    %v1466 = vmul.f32 %v1455, %v1458
    %v1467 = vmul.f32 %v1454, %v1462
    %v1468 = vmul.f32 %v1453, %v1459
    %v1469 = vmul.f32 %v1456, %v1463
    %v1470 = vadd.f32 %v1440, %v1466
    %v1471 = vadd.f32 %v1441, %v1467
    %v1472 = vadd.f32 %v1442, %v1468
    %v1473 = vadd.f32 %v1443, %v1469
    %1474 = vrot.lane.b32.xlu0 %v77, 81
    %v1475 = vpop.permute.xlu0 %1474
    %1476 = vrot.lane.b32.xlu0 %v168, 81
    %v1477 = vpop.permute.xlu0 %1476
    %1478 = vrot.lane.b32.xlu0 %v78, 81
    %v1479 = vpop.permute.xlu0 %1478
    %1480 = vrot.lane.b32.xlu0 %v169, 81
    %v1481 = vpop.permute.xlu0 %1480
    %vm1482 = vcmp.lt.s32.totalorder %v181, 81
    %v1483 = vsel %vm1482, %v1479, %v1481
    %v1484 = vsel %vm1482, %v1477, %v1479
    %v1485 = vsel %vm1482, %v1475, %v1477
    %v1486 = vsel %vm1482, %v1481, %v1475
    %s1487 = scalar_lea.vmem [#allocation7], 704
    %v1488 = vld [vmem:[%s1487] sm:$0xff]
    %v1489 = vld [vmem:[%s1487 + $0x8] sm:$0xff]
    %v1492 = vcombine.high %v1488, %v1488
    %v1493 = vcombine.high %v1489, %v1489
    %v1496 = vmul.f32 %v1485, %v1488
    %v1497 = vmul.f32 %v1484, %v1492
    %v1498 = vmul.f32 %v1483, %v1489
    %v1499 = vmul.f32 %v1486, %v1493
    %v1500 = vadd.f32 %v1470, %v1496
    %v1501 = vadd.f32 %v1471, %v1497
    %v1502 = vadd.f32 %v1472, %v1498
    %v1503 = vadd.f32 %v1473, %v1499
    %1504 = vrot.lane.b32.xlu0 %v77, 80
    %v1505 = vpop.permute.xlu0 %1504
    %1506 = vrot.lane.b32.xlu0 %v168, 80
    %v1507 = vpop.permute.xlu0 %1506
    %1508 = vrot.lane.b32.xlu0 %v78, 80
    %v1509 = vpop.permute.xlu0 %1508
    %1510 = vrot.lane.b32.xlu0 %v169, 80
    %v1511 = vpop.permute.xlu0 %1510
    %vm1512 = vcmp.lt.s32.totalorder %v181, 80
    %v1513 = vsel %vm1512, %v1509, %v1511
    %v1514 = vsel %vm1512, %v1507, %v1509
    %v1515 = vsel %vm1512, %v1505, %v1507
    %v1516 = vsel %vm1512, %v1511, %v1505
    %s1517 = scalar_lea.vmem [#allocation7], 720
    %v1518 = vld [vmem:[%s1517] sm:$0xff]
    %v1519 = vld [vmem:[%s1517 + $0x8] sm:$0xff]
    %v1522 = vcombine.high %v1518, %v1518
    %v1523 = vcombine.high %v1519, %v1519
    %v1526 = vmul.f32 %v1515, %v1518
    %v1527 = vmul.f32 %v1514, %v1522
    %v1528 = vmul.f32 %v1513, %v1519
    %v1529 = vmul.f32 %v1516, %v1523
    %v1530 = vadd.f32 %v1500, %v1526
    %v1531 = vadd.f32 %v1501, %v1527
    %v1532 = vadd.f32 %v1502, %v1528
    %v1533 = vadd.f32 %v1503, %v1529
    %1534 = vrot.lane.b32.xlu0 %v77, 79
    %v1535 = vpop.permute.xlu0 %1534
    %1536 = vrot.lane.b32.xlu0 %v168, 79
    %v1537 = vpop.permute.xlu0 %1536
    %1538 = vrot.lane.b32.xlu0 %v78, 79
    %v1539 = vpop.permute.xlu0 %1538
    %1540 = vrot.lane.b32.xlu0 %v169, 79
    %v1541 = vpop.permute.xlu0 %1540
    %vm1542 = vcmp.lt.s32.totalorder %v181, 79
    %v1543 = vsel %vm1542, %v1539, %v1541
    %v1544 = vsel %vm1542, %v1537, %v1539
    %v1545 = vsel %vm1542, %v1535, %v1537
    %v1546 = vsel %vm1542, %v1541, %v1535
    %s1547 = scalar_lea.vmem [#allocation7], 736
    %v1548 = vld [vmem:[%s1547] sm:$0xff]
    %v1549 = vld [vmem:[%s1547 + $0x8] sm:$0xff]
    %v1552 = vcombine.high %v1548, %v1548
    %v1553 = vcombine.high %v1549, %v1549
    %v1556 = vmul.f32 %v1545, %v1548
    %v1557 = vmul.f32 %v1544, %v1552
    %v1558 = vmul.f32 %v1543, %v1549
    %v1559 = vmul.f32 %v1546, %v1553
    %v1560 = vadd.f32 %v1530, %v1556
    %v1561 = vadd.f32 %v1531, %v1557
    %v1562 = vadd.f32 %v1532, %v1558
    %v1563 = vadd.f32 %v1533, %v1559
    %1564 = vrot.lane.b32.xlu0 %v77, 78
    %v1565 = vpop.permute.xlu0 %1564
    %1566 = vrot.lane.b32.xlu0 %v168, 78
    %v1567 = vpop.permute.xlu0 %1566
    %1568 = vrot.lane.b32.xlu0 %v78, 78
    %v1569 = vpop.permute.xlu0 %1568
    %1570 = vrot.lane.b32.xlu0 %v169, 78
    %v1571 = vpop.permute.xlu0 %1570
    %vm1572 = vcmp.lt.s32.totalorder %v181, 78
    %v1573 = vsel %vm1572, %v1569, %v1571
    %v1574 = vsel %vm1572, %v1567, %v1569
    %v1575 = vsel %vm1572, %v1565, %v1567
    %v1576 = vsel %vm1572, %v1571, %v1565
    %s1577 = scalar_lea.vmem [#allocation7], 752
    %v1578 = vld [vmem:[%s1577] sm:$0xff]
    %v1579 = vld [vmem:[%s1577 + $0x8] sm:$0xff]
    %v1582 = vcombine.high %v1578, %v1578
    %v1583 = vcombine.high %v1579, %v1579
    %v1586 = vmul.f32 %v1575, %v1578
    %v1587 = vmul.f32 %v1574, %v1582
    %v1588 = vmul.f32 %v1573, %v1579
    %v1589 = vmul.f32 %v1576, %v1583
    %v1590 = vadd.f32 %v1560, %v1586
    %v1591 = vadd.f32 %v1561, %v1587
    %v1592 = vadd.f32 %v1562, %v1588
    %v1593 = vadd.f32 %v1563, %v1589
    %1594 = vrot.lane.b32.xlu0 %v77, 77
    %v1595 = vpop.permute.xlu0 %1594
    %1596 = vrot.lane.b32.xlu0 %v168, 77
    %v1597 = vpop.permute.xlu0 %1596
    %1598 = vrot.lane.b32.xlu0 %v78, 77
    %v1599 = vpop.permute.xlu0 %1598
    %1600 = vrot.lane.b32.xlu0 %v169, 77
    %v1601 = vpop.permute.xlu0 %1600
    %vm1602 = vcmp.lt.s32.totalorder %v181, 77
    %v1603 = vsel %vm1602, %v1599, %v1601
    %v1604 = vsel %vm1602, %v1597, %v1599
    %v1605 = vsel %vm1602, %v1595, %v1597
    %v1606 = vsel %vm1602, %v1601, %v1595
    %s1607 = scalar_lea.vmem [#allocation7], 768
    %v1608 = vld [vmem:[%s1607] sm:$0xff]
    %v1609 = vld [vmem:[%s1607 + $0x8] sm:$0xff]
    %v1612 = vcombine.high %v1608, %v1608
    %v1613 = vcombine.high %v1609, %v1609
    %v1616 = vmul.f32 %v1605, %v1608
    %v1617 = vmul.f32 %v1604, %v1612
    %v1618 = vmul.f32 %v1603, %v1609
    %v1619 = vmul.f32 %v1606, %v1613
    %v1620 = vadd.f32 %v1590, %v1616
    %v1621 = vadd.f32 %v1591, %v1617
    %v1622 = vadd.f32 %v1592, %v1618
    %v1623 = vadd.f32 %v1593, %v1619
    %1625 = vset.pattern.permute.xlu0 34
    %1626 = vperm.xlu0 %1625, %v75
    %v1627 = vpop.permute.xlu0 %1626
    %v1629 = vadd.f32 %v1620, %v1627
    %v1630 = vadd.f32 %v1621, %v1627
    %v1631 = vadd.f32 %v1622, %v1627
    %v1632 = vadd.f32 %v1623, %v1627
    %v1633 = vlaneseq
    %v1634 = vshrl.u32 %v1633, 7
    %vm1635 = vcmp.ge.s32.totalorder %v1634, 0
    %vm1636 = vcmp.lt.s32.totalorder %v1634, 4
    %vm1637 = vmand %vm1635, %vm1636
    %v1638 = vsel %vm1637, 1, 0
    %v1639 = vcvt.s32.f32 %v1638
    %vm1640 = vcmask 1043456
    %v1641 = vsel %vm1640, %v1629, 0.0
    %v1642 = vsel %vm1640, %v1630, 0.0
    %v1643 = vadd.f32 %v1641, %v1642
    %1644 = vadd.xlane.f32.xlu0 %v1643
    %v1645 = vpop.xlane.xlu0 %1644
    %v1646 = vmul.f32 %v1645, %v1639
    %v1647 = vsel %vm1640, %v1646, 0.0
    %v1648 = vrot.slane %v1647, 4
    %v1649 = vadd.f32 %v1647, %v1648
    %v1650 = vrot.slane %v1649, 2
    %v1651 = vadd.f32 %v1649, %v1650
    %v1652 = vrot.slane %v1651, 1
    %v1653 = vadd.f32 %v1651, %v1652
    %v1654 = vmul.f32 %v1639, %v1653
    %v1655 = vadd.f32 %v1654, 0.0
    %v1656 = vmul.f32 %v1655, 0.0009765625
    %v1657 = vsub.f32 %v1629, %v1656
    %v1658 = vsub.f32 %v1630, %v1656
    %v1659 = vmul.f32 %v1657, %v1657
    %v1660 = vmul.f32 %v1658, %v1658
    %v1661 = vsel %vm1640, %v1659, 0.0
    %v1662 = vsel %vm1640, %v1660, 0.0
    %v1663 = vadd.f32 %v1661, %v1662
    %1664 = vadd.xlane.f32.xlu0 %v1663
    %v1665 = vpop.xlane.xlu0 %1664
    %v1666 = vmul.f32 %v1665, %v1639
    %v1667 = vsel %vm1640, %v1666, 0.0
    %v1668 = vrot.slane %v1667, 4
    %v1669 = vadd.f32 %v1667, %v1668
    %v1670 = vrot.slane %v1669, 2
    %v1671 = vadd.f32 %v1669, %v1670
    %v1672 = vrot.slane %v1671, 1
    %v1673 = vadd.f32 %v1671, %v1672
    %v1674 = vmul.f32 %v1639, %v1673
    %v1675 = vadd.f32 %v1674, 0.0
    %v1676 = vmul.f32 %v1675, 0.0009765625
    %v1677 = vadd.f32 %v1676, 1e-05
    %v1678 = vrsqrt.pop %v1677
    %v1679 = vmul.f32 %v1657, %v1678
    %v1680 = vmul.f32 %v1658, %v1678
    %v1681 = vsel %vm1640, %v1631, 0.0
    %v1682 = vsel %vm1640, %v1632, 0.0
    %v1683 = vadd.f32 %v1681, %v1682
    %1684 = vadd.xlane.f32.xlu0 %v1683
    %v1685 = vpop.xlane.xlu0 %1684
    %v1686 = vmul.f32 %v1685, %v1639
    %v1687 = vsel %vm1640, %v1686, 0.0
    %v1688 = vrot.slane %v1687, 4
    %v1689 = vadd.f32 %v1687, %v1688
    %v1690 = vrot.slane %v1689, 2
    %v1691 = vadd.f32 %v1689, %v1690
    %v1692 = vrot.slane %v1691, 1
    %v1693 = vadd.f32 %v1691, %v1692
    %v1694 = vmul.f32 %v1639, %v1693
    %v1695 = vadd.f32 %v1694, 0.0
    %v1696 = vmul.f32 %v1695, 0.0009765625
    %v1697 = vsub.f32 %v1631, %v1696
    %v1698 = vsub.f32 %v1632, %v1696
    %v1699 = vmul.f32 %v1697, %v1697
    %v1700 = vmul.f32 %v1698, %v1698
    %v1701 = vsel %vm1640, %v1699, 0.0
    %v1702 = vsel %vm1640, %v1700, 0.0
    %v1703 = vadd.f32 %v1701, %v1702
    %1704 = vadd.xlane.f32.xlu0 %v1703
    %v1705 = vpop.xlane.xlu0 %1704
    %v1706 = vmul.f32 %v1705, %v1639
    %v1707 = vsel %vm1640, %v1706, 0.0
    %v1708 = vrot.slane %v1707, 4
    %v1709 = vadd.f32 %v1707, %v1708
    %v1710 = vrot.slane %v1709, 2
    %v1711 = vadd.f32 %v1709, %v1710
    %v1712 = vrot.slane %v1711, 1
    %v1713 = vadd.f32 %v1711, %v1712
    %v1714 = vmul.f32 %v1639, %v1713
    %v1715 = vadd.f32 %v1714, 0.0
    %v1716 = vmul.f32 %v1715, 0.0009765625
    %v1717 = vadd.f32 %v1716, 1e-05
    %v1718 = vrsqrt.pop %v1717
    %v1719 = vmul.f32 %v1697, %v1718
    %v1720 = vmul.f32 %v1698, %v1718
    %1721 = vset.pattern.permute.xlu0 35
    %1722 = vperm.xlu0 %1721, %v75
    %v1723 = vpop.permute.xlu0 %1722
    %v1725 = vmul.f32 %v1679, %v1723
    %v1726 = vmul.f32 %v1680, %v1723
    %v1727 = vmul.f32 %v1719, %v1723
    %v1728 = vmul.f32 %v1720, %v1723
    %1729 = vset.pattern.permute.xlu0 36
    %1730 = vperm.xlu0 %1729, %v75
    %v1731 = vpop.permute.xlu0 %1730
    %v1733 = vadd.f32 %v1725, %v1731
    %v1734 = vadd.f32 %v1726, %v1731
    %v1735 = vadd.f32 %v1727, %v1731
    %v1736 = vadd.f32 %v1728, %v1731
    %1737 = vset.pattern.permute.xlu0 41
    %1738 = vperm.xlu0 %1737, %v75
    %v1739 = vpop.permute.xlu0 %1738
    %1741 = vrot.lane.b32.xlu0 %v75, 91
    %v1742 = vpop.permute.xlu0 %1741
    %vm1743 = vcmask 31744
    %v1744 = vsel %vm1743, %v1742, 0
    %v1747 = vsel %vm1640, %v1733, 0
    %v1750 = vsel %vm1640, %v1734, 0
    %v1753 = vsel %vm1640, %v1735, 0
    %v1756 = vsel %vm1640, %v1736, 0
    %1758 = vmatprep.subr.mxu0 %v1750
    %1759 = vmatpush1.msra.mxu0 %v1747
    %1760 = vmatprep.subr.mxu0 0.0
    %1761 = vmatpush1.msra.mxu0 0.0
    %1762 = vmatprep.subr.mxu0 0.0
    %1763 = vmatpush1.msra.mxu0 0.0
    %1764 = vmatprep.subr.mxu0 0.0
    %1765 = vmatpush1.msra.mxu0 0.0
    %1766 = vmatprep.subr.mxu0 0.0
    %1767 = vmatpush1.msra.mxu0 0.0
    %1768 = vmatprep.subr.mxu0 0.0
    %1769 = vmatpush1.msra.mxu0 0.0
    %1770 = vmatprep.subr.mxu0 0.0
    %1771 = vmatpush1.msra.mxu0 0.0
    %1772 = vmatprep.subr.mxu0 0.0
    %1773 = vmatpush1.msra.mxu0 0.0
    %1774 = vmatprep.subr.mxu0 0.0
    %1775 = vmatpush1.msra.mxu0 0.0
    %1776 = vmatprep.subr.mxu0 0.0
    %1777 = vmatpush1.msra.mxu0 0.0
    %1778 = vmatprep.subr.mxu0 0.0
    %1779 = vmatpush1.msra.mxu0 0.0
    %1780 = vmatprep.subr.mxu0 0.0
    %1781 = vmatpush1.msra.mxu0 0.0
    %1782 = vmatprep.subr.mxu0 0.0
    %1783 = vmatpush1.msra.mxu0 0.0
    %1784 = vmatprep.subr.mxu0 0.0
    %1785 = vmatpush1.msra.mxu0 0.0
    %1786 = vmatprep.subr.mxu0 0.0
    %1787 = vmatpush1.msra.mxu0 0.0
    %1788 = vmatprep.subr.mxu0 0.0
    %1789 = vmatpush1.msra.mxu0 0.0
    %1790 = vmatprep.subr.mxu0 0.0
    %1791 = vmatpush1.msra.mxu0 0.0
    %1792 = vmatprep.subr.mxu0 0.0
    %1793 = vmatpush1.msra.mxu0 0.0
    %1794 = vmatprep.subr.mxu0 0.0
    %1795 = vmatpush1.msra.mxu0 0.0
    %1796 = vmatprep.subr.mxu0 0.0
    %1797 = vmatpush1.msra.mxu0 0.0
    %1798 = vmatprep.subr.mxu0 0.0
    %1799 = vmatpush1.msra.mxu0 0.0
    %1800 = vmatprep.subr.mxu0 0.0
    %1801 = vmatpush1.msra.mxu0 0.0
    %1802 = vmatprep.subr.mxu0 0.0
    %1803 = vmatpush1.msra.mxu0 0.0
    %1804 = vmatprep.subr.mxu0 0.0
    %1805 = vmatpush1.msra.mxu0 0.0
    %1806 = vmatprep.subr.mxu0 0.0
    %1807 = vmatpush1.msra.mxu0 0.0
    %1808 = vmatprep.subr.mxu0 0.0
    %1809 = vmatpush1.msra.mxu0 0.0
    %1810 = vmatprep.subr.mxu0 0.0
    %1811 = vmatpush1.msra.mxu0 0.0
    %1812 = vmatprep.subr.mxu0 0.0
    %1813 = vmatpush1.msra.mxu0 0.0
    %1814 = vmatprep.subr.mxu0 0.0
    %1815 = vmatpush1.msra.mxu0 0.0
    %1816 = vmatprep.subr.mxu0 0.0
    %1817 = vmatpush1.msra.mxu0 0.0
    %1818 = vmatprep.subr.mxu0 0.0
    %1819 = vmatpush1.msra.mxu0 0.0
    %1820 = vmatprep.subr.mxu0 0.0
    %1821 = vmatpush1.msra.mxu0 0.0
    %1822 = vmatprep.mubr.f32.mxu0 0.0
    %1823 = vmatmul.mubr.f32.gmra.mrb[0].mxu0 %v1744
    %v1824 = vpop.f32.mrb[0].mxu0
    %v1825 = vadd.f32 %v1739, %v1824
    %v1826 = vpop.f32.mrb[0].mxu0
    %v1827 = vadd.f32 %v1739, %v1826
    %1828 = vdwg.mxu0
    %1829 = vmatprep.subr.mxu0 %v1756
    %1830 = vmatpush1.msra.mxu0 %v1753
    %1831 = vmatprep.subr.mxu0 0.0
    %1832 = vmatpush1.msra.mxu0 0.0
    %1833 = vmatprep.subr.mxu0 0.0
    %1834 = vmatpush1.msra.mxu0 0.0
    %1835 = vmatprep.subr.mxu0 0.0
    %1836 = vmatpush1.msra.mxu0 0.0
    %1837 = vmatprep.subr.mxu0 0.0
    %1838 = vmatpush1.msra.mxu0 0.0
    %1839 = vmatprep.subr.mxu0 0.0
    %1840 = vmatpush1.msra.mxu0 0.0
    %1841 = vmatprep.subr.mxu0 0.0
    %1842 = vmatpush1.msra.mxu0 0.0
    %1843 = vmatprep.subr.mxu0 0.0
    %1844 = vmatpush1.msra.mxu0 0.0
    %1845 = vmatprep.subr.mxu0 0.0
    %1846 = vmatpush1.msra.mxu0 0.0
    %1847 = vmatprep.subr.mxu0 0.0
    %1848 = vmatpush1.msra.mxu0 0.0
    %1849 = vmatprep.subr.mxu0 0.0
    %1850 = vmatpush1.msra.mxu0 0.0
    %1851 = vmatprep.subr.mxu0 0.0
    %1852 = vmatpush1.msra.mxu0 0.0
    %1853 = vmatprep.subr.mxu0 0.0
    %1854 = vmatpush1.msra.mxu0 0.0
    %1855 = vmatprep.subr.mxu0 0.0
    %1856 = vmatpush1.msra.mxu0 0.0
    %1857 = vmatprep.subr.mxu0 0.0
    %1858 = vmatpush1.msra.mxu0 0.0
    %1859 = vmatprep.subr.mxu0 0.0
    %1860 = vmatpush1.msra.mxu0 0.0
    %1861 = vmatprep.subr.mxu0 0.0
    %1862 = vmatpush1.msra.mxu0 0.0
    %1863 = vmatprep.subr.mxu0 0.0
    %1864 = vmatpush1.msra.mxu0 0.0
    %1865 = vmatprep.subr.mxu0 0.0
    %1866 = vmatpush1.msra.mxu0 0.0
    %1867 = vmatprep.subr.mxu0 0.0
    %1868 = vmatpush1.msra.mxu0 0.0
    %1869 = vmatprep.subr.mxu0 0.0
    %1870 = vmatpush1.msra.mxu0 0.0
    %1871 = vmatprep.subr.mxu0 0.0
    %1872 = vmatpush1.msra.mxu0 0.0
    %1873 = vmatprep.subr.mxu0 0.0
    %1874 = vmatpush1.msra.mxu0 0.0
    %1875 = vmatprep.subr.mxu0 0.0
    %1876 = vmatpush1.msra.mxu0 0.0
    %1877 = vmatprep.subr.mxu0 0.0
    %1878 = vmatpush1.msra.mxu0 0.0
    %1879 = vmatprep.subr.mxu0 0.0
    %1880 = vmatpush1.msra.mxu0 0.0
    %1881 = vmatprep.subr.mxu0 0.0
    %1882 = vmatpush1.msra.mxu0 0.0
    %1883 = vmatprep.subr.mxu0 0.0
    %1884 = vmatpush1.msra.mxu0 0.0
    %1885 = vmatprep.subr.mxu0 0.0
    %1886 = vmatpush1.msra.mxu0 0.0
    %1887 = vmatprep.subr.mxu0 0.0
    %1888 = vmatpush1.msra.mxu0 0.0
    %1889 = vmatprep.subr.mxu0 0.0
    %1890 = vmatpush1.msra.mxu0 0.0
    %1891 = vmatprep.subr.mxu0 0.0
    %1892 = vmatpush1.msra.mxu0 0.0
    %1893 = vmatprep.mubr.f32.mxu0 0.0
    %1894 = vmatmul.mubr.f32.gmra.mrb[0].mxu0 %v1744
    %v1895 = vpop.f32.mrb[0].mxu0
    %v1896 = vadd.f32 %v1739, %v1895
    %v1897 = vpop.f32.mrb[0].mxu0
    %v1898 = vadd.f32 %v1739, %v1897
    %1899 = vdwg.mxu0
    %v1900 = vmul.f32 %v1825, 0.5
    %v1901 = vmul.f32 %v1827, 0.5
    %v1902 = vmul.f32 %v1896, 0.5
    %v1903 = vmul.f32 %v1898, 0.5
    %v1904 = vmul.f32 %v1825, 0.70710677
    %v1905 = vmul.f32 %v1827, 0.70710677
    %v1906 = vmul.f32 %v1896, 0.70710677
    %v1907 = vmul.f32 %v1898, 0.70710677
    %vm1908 = vcmp.ge.f32.partialorder %v1904, 0.0
    %vm1909 = vcmp.ge.f32.partialorder %v1905, 0.0
    %vm1910 = vcmp.ge.f32.partialorder %v1906, 0.0
    %vm1911 = vcmp.ge.f32.partialorder %v1907, 0.0
    %v1912 = vsel %vm1908, 1.0, -1.0
    %v1913 = vsel %vm1909, 1.0, -1.0
    %v1914 = vsel %vm1910, 1.0, -1.0
    %v1915 = vsel %vm1911, 1.0, -1.0
    %v1916 = vand.u32 2147483647, %v1904
    %v1917 = vand.u32 2147483647, %v1905
    %v1918 = vand.u32 2147483647, %v1906
    %v1919 = vand.u32 2147483647, %v1907
    %v1920 = vmul.f32 %v1916, 0.3275911
    %v1921 = vmul.f32 %v1917, 0.3275911
    %v1922 = vmul.f32 %v1918, 0.3275911
    %v1923 = vmul.f32 %v1919, 0.3275911
    %v1924 = vadd.f32 %v1920, 1.0
    %v1925 = vadd.f32 %v1921, 1.0
    %v1926 = vadd.f32 %v1922, 1.0
    %v1927 = vadd.f32 %v1923, 1.0
    %v1928 = vrcp.pop %v1924
    %v1929 = vrcp.pop %v1925
    %v1930 = vrcp.pop %v1926
    %v1931 = vrcp.pop %v1927
    %v1932 = vmul.f32 %v1928, 1.0614054
    %v1933 = vmul.f32 %v1929, 1.0614054
    %v1934 = vmul.f32 %v1930, 1.0614054
    %v1935 = vmul.f32 %v1931, 1.0614054
    %v1936 = vadd.f32 %v1932, -1.4531521
    %v1937 = vadd.f32 %v1933, -1.4531521
    %v1938 = vadd.f32 %v1934, -1.4531521
    %v1939 = vadd.f32 %v1935, -1.4531521
    %v1940 = vmul.f32 %v1936, %v1928
    %v1941 = vmul.f32 %v1937, %v1929
    %v1942 = vmul.f32 %v1938, %v1930
    %v1943 = vmul.f32 %v1939, %v1931
    %v1944 = vadd.f32 %v1940, 1.4214138
    %v1945 = vadd.f32 %v1941, 1.4214138
    %v1946 = vadd.f32 %v1942, 1.4214138
    %v1947 = vadd.f32 %v1943, 1.4214138
    %v1948 = vmul.f32 %v1944, %v1928
    %v1949 = vmul.f32 %v1945, %v1929
    %v1950 = vmul.f32 %v1946, %v1930
    %v1951 = vmul.f32 %v1947, %v1931
    %v1952 = vadd.f32 %v1948, -0.28449672
    %v1953 = vadd.f32 %v1949, -0.28449672
    %v1954 = vadd.f32 %v1950, -0.28449672
    %v1955 = vadd.f32 %v1951, -0.28449672
    %v1956 = vmul.f32 %v1952, %v1928
    %v1957 = vmul.f32 %v1953, %v1929
    %v1958 = vmul.f32 %v1954, %v1930
    %v1959 = vmul.f32 %v1955, %v1931
    %v1960 = vadd.f32 %v1956, 0.2548296
    %v1961 = vadd.f32 %v1957, 0.2548296
    %v1962 = vadd.f32 %v1958, 0.2548296
    %v1963 = vadd.f32 %v1959, 0.2548296
    %v1964 = vmul.f32 %v1960, %v1928
    %v1965 = vmul.f32 %v1961, %v1929
    %v1966 = vmul.f32 %v1962, %v1930
    %v1967 = vmul.f32 %v1963, %v1931
    %v1968 = vsub.f32 0.0, %v1916
    %v1969 = vsub.f32 0.0, %v1917
    %v1970 = vsub.f32 0.0, %v1918
    %v1971 = vsub.f32 0.0, %v1919
    %v1972 = vmul.f32 %v1968, %v1916
    %v1973 = vmul.f32 %v1969, %v1917
    %v1974 = vmul.f32 %v1970, %v1918
    %v1975 = vmul.f32 %v1971, %v1919
    %v1976 = vmul.f32 %v1972, 1.442695
    %v1977 = vpow.pop %v1976
    %v1978 = vmul.f32 %v1973, 1.442695
    %v1979 = vpow.pop %v1978
    %v1980 = vmul.f32 %v1974, 1.442695
    %v1981 = vpow.pop %v1980
    %v1982 = vmul.f32 %v1975, 1.442695
    %v1983 = vpow.pop %v1982
    %v1984 = vmul.f32 %v1964, %v1977
    %v1985 = vmul.f32 %v1965, %v1979
    %v1986 = vmul.f32 %v1966, %v1981
    %v1987 = vmul.f32 %v1967, %v1983
    %v1988 = vsub.f32 1.0, %v1984
    %v1989 = vsub.f32 1.0, %v1985
    %v1990 = vsub.f32 1.0, %v1986
    %v1991 = vsub.f32 1.0, %v1987
    %v1992 = vmul.f32 %v1912, %v1988
    %v1993 = vmul.f32 %v1913, %v1989
    %v1994 = vmul.f32 %v1914, %v1990
    %v1995 = vmul.f32 %v1915, %v1991
    %v1996 = vadd.f32 %v1992, 1.0
    %v1997 = vadd.f32 %v1993, 1.0
    %v1998 = vadd.f32 %v1994, 1.0
    %v1999 = vadd.f32 %v1995, 1.0
    %v2000 = vmul.f32 %v1900, %v1996
    %v2001 = vmul.f32 %v1901, %v1997
    %v2002 = vmul.f32 %v1902, %v1998
    %v2003 = vmul.f32 %v1903, %v1999
    %2004 = vset.pattern.permute.xlu0 50
    %2005 = vperm.xlu0 %2004, %v75
    %v2006 = vpop.permute.xlu0 %2005
    %2008 = vrot.lane.b32.xlu0 %v75, 86
    %v2009 = vpop.permute.xlu0 %2008
    %vm2010 = vcmask 64512
    %v2011 = vsel %vm2010, %v2009, 0
    %2013 = vmatprep.subr.mxu0 %v2001
    %2014 = vmatpush1.msra.mxu0 %v2000
    %2015 = vmatprep.subr.mxu0 0.0
    %2016 = vmatpush1.msra.mxu0 0.0
    %2017 = vmatprep.subr.mxu0 0.0
    %2018 = vmatpush1.msra.mxu0 0.0
    %2019 = vmatprep.subr.mxu0 0.0
    %2020 = vmatpush1.msra.mxu0 0.0
    %2021 = vmatprep.subr.mxu0 0.0
    %2022 = vmatpush1.msra.mxu0 0.0
    %2023 = vmatprep.subr.mxu0 0.0
    %2024 = vmatpush1.msra.mxu0 0.0
    %2025 = vmatprep.subr.mxu0 0.0
    %2026 = vmatpush1.msra.mxu0 0.0
    %2027 = vmatprep.subr.mxu0 0.0
    %2028 = vmatpush1.msra.mxu0 0.0
    %2029 = vmatprep.subr.mxu0 0.0
    %2030 = vmatpush1.msra.mxu0 0.0
    %2031 = vmatprep.subr.mxu0 0.0
    %2032 = vmatpush1.msra.mxu0 0.0
    %2033 = vmatprep.subr.mxu0 0.0
    %2034 = vmatpush1.msra.mxu0 0.0
    %2035 = vmatprep.subr.mxu0 0.0
    %2036 = vmatpush1.msra.mxu0 0.0
    %2037 = vmatprep.subr.mxu0 0.0
    %2038 = vmatpush1.msra.mxu0 0.0
    %2039 = vmatprep.subr.mxu0 0.0
    %2040 = vmatpush1.msra.mxu0 0.0
    %2041 = vmatprep.subr.mxu0 0.0
    %2042 = vmatpush1.msra.mxu0 0.0
    %2043 = vmatprep.subr.mxu0 0.0
    %2044 = vmatpush1.msra.mxu0 0.0
    %2045 = vmatprep.subr.mxu0 0.0
    %2046 = vmatpush1.msra.mxu0 0.0
    %2047 = vmatprep.subr.mxu0 0.0
    %2048 = vmatpush1.msra.mxu0 0.0
    %2049 = vmatprep.subr.mxu0 0.0
    %2050 = vmatpush1.msra.mxu0 0.0
    %2051 = vmatprep.subr.mxu0 0.0
    %2052 = vmatpush1.msra.mxu0 0.0
    %2053 = vmatprep.subr.mxu0 0.0
    %2054 = vmatpush1.msra.mxu0 0.0
    %2055 = vmatprep.subr.mxu0 0.0
    %2056 = vmatpush1.msra.mxu0 0.0
    %2057 = vmatprep.subr.mxu0 0.0
    %2058 = vmatpush1.msra.mxu0 0.0
    %2059 = vmatprep.subr.mxu0 0.0
    %2060 = vmatpush1.msra.mxu0 0.0
    %2061 = vmatprep.subr.mxu0 0.0
    %2062 = vmatpush1.msra.mxu0 0.0
    %2063 = vmatprep.subr.mxu0 0.0
    %2064 = vmatpush1.msra.mxu0 0.0
    %2065 = vmatprep.subr.mxu0 0.0
    %2066 = vmatpush1.msra.mxu0 0.0
    %2067 = vmatprep.subr.mxu0 0.0
    %2068 = vmatpush1.msra.mxu0 0.0
    %2069 = vmatprep.subr.mxu0 0.0
    %2070 = vmatpush1.msra.mxu0 0.0
    %2071 = vmatprep.subr.mxu0 0.0
    %2072 = vmatpush1.msra.mxu0 0.0
    %2073 = vmatprep.subr.mxu0 0.0
    %2074 = vmatpush1.msra.mxu0 0.0
    %2075 = vmatprep.subr.mxu0 0.0
    %2076 = vmatpush1.msra.mxu0 0.0
    %2077 = vmatprep.mubr.f32.mxu0 0.0
    %2078 = vmatmul.mubr.f32.gmra.mrb[0].mxu0 %v2011
    %v2079 = vpop.f32.mrb[0].mxu0
    %v2080 = vadd.f32 %v2006, %v2079
    %v2081 = vpop.f32.mrb[0].mxu0
    %v2082 = vadd.f32 %v2006, %v2081
    %2083 = vdwg.mxu0
    %2084 = vmatprep.subr.mxu0 %v2003
    %2085 = vmatpush1.msra.mxu0 %v2002
    %2086 = vmatprep.subr.mxu0 0.0
    %2087 = vmatpush1.msra.mxu0 0.0
    %2088 = vmatprep.subr.mxu0 0.0
    %2089 = vmatpush1.msra.mxu0 0.0
    %2090 = vmatprep.subr.mxu0 0.0
    %2091 = vmatpush1.msra.mxu0 0.0
    %2092 = vmatprep.subr.mxu0 0.0
    %2093 = vmatpush1.msra.mxu0 0.0
    %2094 = vmatprep.subr.mxu0 0.0
    %2095 = vmatpush1.msra.mxu0 0.0
    %2096 = vmatprep.subr.mxu0 0.0
    %2097 = vmatpush1.msra.mxu0 0.0
    %2098 = vmatprep.subr.mxu0 0.0
    %2099 = vmatpush1.msra.mxu0 0.0
    %2100 = vmatprep.subr.mxu0 0.0
    %2101 = vmatpush1.msra.mxu0 0.0
    %2102 = vmatprep.subr.mxu0 0.0
    %2103 = vmatpush1.msra.mxu0 0.0
    %2104 = vmatprep.subr.mxu0 0.0
    %2105 = vmatpush1.msra.mxu0 0.0
    %2106 = vmatprep.subr.mxu0 0.0
    %2107 = vmatpush1.msra.mxu0 0.0
    %2108 = vmatprep.subr.mxu0 0.0
    %2109 = vmatpush1.msra.mxu0 0.0
    %2110 = vmatprep.subr.mxu0 0.0
    %2111 = vmatpush1.msra.mxu0 0.0
    %2112 = vmatprep.subr.mxu0 0.0
    %2113 = vmatpush1.msra.mxu0 0.0
    %2114 = vmatprep.subr.mxu0 0.0
    %2115 = vmatpush1.msra.mxu0 0.0
    %2116 = vmatprep.subr.mxu0 0.0
    %2117 = vmatpush1.msra.mxu0 0.0
    %2118 = vmatprep.subr.mxu0 0.0
    %2119 = vmatpush1.msra.mxu0 0.0
    %2120 = vmatprep.subr.mxu0 0.0
    %2121 = vmatpush1.msra.mxu0 0.0
    %2122 = vmatprep.subr.mxu0 0.0
    %2123 = vmatpush1.msra.mxu0 0.0
    %2124 = vmatprep.subr.mxu0 0.0
    %2125 = vmatpush1.msra.mxu0 0.0
    %2126 = vmatprep.subr.mxu0 0.0
    %2127 = vmatpush1.msra.mxu0 0.0
    %2128 = vmatprep.subr.mxu0 0.0
    %2129 = vmatpush1.msra.mxu0 0.0
    %2130 = vmatprep.subr.mxu0 0.0
    %2131 = vmatpush1.msra.mxu0 0.0
    %2132 = vmatprep.subr.mxu0 0.0
    %2133 = vmatpush1.msra.mxu0 0.0
    %2134 = vmatprep.subr.mxu0 0.0
    %2135 = vmatpush1.msra.mxu0 0.0
    %2136 = vmatprep.subr.mxu0 0.0
    %2137 = vmatpush1.msra.mxu0 0.0
    %2138 = vmatprep.subr.mxu0 0.0
    %2139 = vmatpush1.msra.mxu0 0.0
    %2140 = vmatprep.subr.mxu0 0.0
    %2141 = vmatpush1.msra.mxu0 0.0
    %2142 = vmatprep.subr.mxu0 0.0
    %2143 = vmatpush1.msra.mxu0 0.0
    %2144 = vmatprep.subr.mxu0 0.0
    %2145 = vmatpush1.msra.mxu0 0.0
    %2146 = vmatprep.subr.mxu0 0.0
    %2147 = vmatpush1.msra.mxu0 0.0
    %2148 = vmatprep.mubr.f32.mxu0 0.0
    %2149 = vmatmul.mubr.f32.gmra.mrb[0].mxu0 %v2011
    %v2150 = vpop.f32.mrb[0].mxu0
    %v2151 = vadd.f32 %v2006, %v2150
    %v2152 = vpop.f32.mrb[0].mxu0
    %v2153 = vadd.f32 %v2006, %v2152
    %2154 = vdwg.mxu0
    %vm2155 = vcmp.lt.s32.totalorder %v1634, 2
    %vm2156 = vmand %vm1635, %vm2155
    %v2157 = vsel %vm2156, 1, 0
    %v2158 = vcvt.s32.f32 %v2157
    %vm2159 = vcmp.ge.s32.totalorder %v1634, 2
    %vm2160 = vmand %vm2159, %vm1636
    %v2161 = vsel %vm2160, 1, 0
    %v2162 = vcvt.s32.f32 %v2161
    %vm2163 = vcmp.ge.s32.totalorder %v1634, 4
    %vm2164 = vcmp.lt.s32.totalorder %v1634, 6
    %vm2165 = vmand %vm2163, %vm2164
    %v2166 = vsel %vm2165, 1, 0
    %v2167 = vcvt.s32.f32 %v2166
    %vm2168 = vcmp.ge.s32.totalorder %v1634, 6
    %vm2169 = vcmp.lt.s32.totalorder %v1634, 8
    %vm2170 = vmand %vm2168, %vm2169
    %v2171 = vsel %vm2170, 1, 0
    %v2172 = vcvt.s32.f32 %v2171
    %v2173 = vadd.f32 %v2080, %v2082
    %2174 = vadd.xlane.f32.xlu0 %v2173
    %v2175 = vpop.xlane.xlu0 %2174
    %v2176 = vmul.f32 %v2175, %v2158
    %v2177 = vrot.slane %v2176, 4
    %v2178 = vadd.f32 %v2176, %v2177
    %v2179 = vrot.slane %v2178, 2
    %v2180 = vadd.f32 %v2178, %v2179
    %v2181 = vrot.slane %v2180, 1
    %v2182 = vadd.f32 %v2180, %v2181
    %v2183 = vmul.f32 %v2158, %v2182
    %v2184 = vadd.f32 %v2183, 0.0
    %v2185 = vmul.f32 %v2175, %v2162
    %v2186 = vrot.slane %v2185, 4
    %v2187 = vadd.f32 %v2185, %v2186
    %v2188 = vrot.slane %v2187, 2
    %v2189 = vadd.f32 %v2187, %v2188
    %v2190 = vrot.slane %v2189, 1
    %v2191 = vadd.f32 %v2189, %v2190
    %v2192 = vmul.f32 %v2162, %v2191
    %v2193 = vadd.f32 %v2184, %v2192
    %v2194 = vmul.f32 %v2175, %v2167
    %v2195 = vrot.slane %v2194, 4
    %v2196 = vadd.f32 %v2194, %v2195
    %v2197 = vrot.slane %v2196, 2
    %v2198 = vadd.f32 %v2196, %v2197
    %v2199 = vrot.slane %v2198, 1
    %v2200 = vadd.f32 %v2198, %v2199
    %v2201 = vmul.f32 %v2167, %v2200
    %v2202 = vadd.f32 %v2193, %v2201
    %v2203 = vmul.f32 %v2175, %v2172
    %v2204 = vrot.slane %v2203, 4
    %v2205 = vadd.f32 %v2203, %v2204
    %v2206 = vrot.slane %v2205, 2
    %v2207 = vadd.f32 %v2205, %v2206
    %v2208 = vrot.slane %v2207, 1
    %v2209 = vadd.f32 %v2207, %v2208
    %v2210 = vmul.f32 %v2172, %v2209
    %v2211 = vadd.f32 %v2202, %v2210
    %v2212 = vmul.f32 %v2211, 0.001953125
    %v2213 = vsub.f32 %v2080, %v2212
    %v2214 = vsub.f32 %v2082, %v2212
    %v2215 = vmul.f32 %v2213, %v2213
    %v2216 = vmul.f32 %v2214, %v2214
    %v2217 = vadd.f32 %v2215, %v2216
    %2218 = vadd.xlane.f32.xlu0 %v2217
    %v2219 = vpop.xlane.xlu0 %2218
    %v2220 = vmul.f32 %v2219, %v2158
    %v2221 = vrot.slane %v2220, 4
    %v2222 = vadd.f32 %v2220, %v2221
    %v2223 = vrot.slane %v2222, 2
    %v2224 = vadd.f32 %v2222, %v2223
    %v2225 = vrot.slane %v2224, 1
    %v2226 = vadd.f32 %v2224, %v2225
    %v2227 = vmul.f32 %v2158, %v2226
    %v2228 = vadd.f32 %v2227, 0.0
    %v2229 = vmul.f32 %v2219, %v2162
    %v2230 = vrot.slane %v2229, 4
    %v2231 = vadd.f32 %v2229, %v2230
    %v2232 = vrot.slane %v2231, 2
    %v2233 = vadd.f32 %v2231, %v2232
    %v2234 = vrot.slane %v2233, 1
    %v2235 = vadd.f32 %v2233, %v2234
    %v2236 = vmul.f32 %v2162, %v2235
    %v2237 = vadd.f32 %v2228, %v2236
    %v2238 = vmul.f32 %v2219, %v2167
    %v2239 = vrot.slane %v2238, 4
    %v2240 = vadd.f32 %v2238, %v2239
    %v2241 = vrot.slane %v2240, 2
    %v2242 = vadd.f32 %v2240, %v2241
    %v2243 = vrot.slane %v2242, 1
    %v2244 = vadd.f32 %v2242, %v2243
    %v2245 = vmul.f32 %v2167, %v2244
    %v2246 = vadd.f32 %v2237, %v2245
    %v2247 = vmul.f32 %v2219, %v2172
    %v2248 = vrot.slane %v2247, 4
    %v2249 = vadd.f32 %v2247, %v2248
    %v2250 = vrot.slane %v2249, 2
    %v2251 = vadd.f32 %v2249, %v2250
    %v2252 = vrot.slane %v2251, 1
    %v2253 = vadd.f32 %v2251, %v2252
    %v2254 = vmul.f32 %v2172, %v2253
    %v2255 = vadd.f32 %v2246, %v2254
    %v2256 = vmul.f32 %v2255, 0.001953125
    %v2257 = vadd.f32 %v2256, 1e-05
    %v2258 = vrsqrt.pop %v2257
    %v2259 = vmul.f32 %v2213, %v2258
    %v2260 = vmul.f32 %v2214, %v2258
    %v2261 = vadd.f32 %v2151, %v2153
    %2262 = vadd.xlane.f32.xlu0 %v2261
    %v2263 = vpop.xlane.xlu0 %2262
    %v2264 = vmul.f32 %v2263, %v2158
    %v2265 = vrot.slane %v2264, 4
    %v2266 = vadd.f32 %v2264, %v2265
    %v2267 = vrot.slane %v2266, 2
    %v2268 = vadd.f32 %v2266, %v2267
    %v2269 = vrot.slane %v2268, 1
    %v2270 = vadd.f32 %v2268, %v2269
    %v2271 = vmul.f32 %v2158, %v2270
    %v2272 = vadd.f32 %v2271, 0.0
    %v2273 = vmul.f32 %v2263, %v2162
    %v2274 = vrot.slane %v2273, 4
    %v2275 = vadd.f32 %v2273, %v2274
    %v2276 = vrot.slane %v2275, 2
    %v2277 = vadd.f32 %v2275, %v2276
    %v2278 = vrot.slane %v2277, 1
    %v2279 = vadd.f32 %v2277, %v2278
    %v2280 = vmul.f32 %v2162, %v2279
    %v2281 = vadd.f32 %v2272, %v2280
    %v2282 = vmul.f32 %v2263, %v2167
    %v2283 = vrot.slane %v2282, 4
    %v2284 = vadd.f32 %v2282, %v2283
    %v2285 = vrot.slane %v2284, 2
    %v2286 = vadd.f32 %v2284, %v2285
    %v2287 = vrot.slane %v2286, 1
    %v2288 = vadd.f32 %v2286, %v2287
    %v2289 = vmul.f32 %v2167, %v2288
    %v2290 = vadd.f32 %v2281, %v2289
    %v2291 = vmul.f32 %v2263, %v2172
    %v2292 = vrot.slane %v2291, 4
    %v2293 = vadd.f32 %v2291, %v2292
    %v2294 = vrot.slane %v2293, 2
    %v2295 = vadd.f32 %v2293, %v2294
    %v2296 = vrot.slane %v2295, 1
    %v2297 = vadd.f32 %v2295, %v2296
    %v2298 = vmul.f32 %v2172, %v2297
    %v2299 = vadd.f32 %v2290, %v2298
    %v2300 = vmul.f32 %v2299, 0.001953125
    %v2301 = vsub.f32 %v2151, %v2300
    %v2302 = vsub.f32 %v2153, %v2300
    %v2303 = vmul.f32 %v2301, %v2301
    %v2304 = vmul.f32 %v2302, %v2302
    %v2305 = vadd.f32 %v2303, %v2304
    %2306 = vadd.xlane.f32.xlu0 %v2305
    %v2307 = vpop.xlane.xlu0 %2306
    %v2308 = vmul.f32 %v2307, %v2158
    %v2309 = vrot.slane %v2308, 4
    %v2310 = vadd.f32 %v2308, %v2309
    %v2311 = vrot.slane %v2310, 2
    %v2312 = vadd.f32 %v2310, %v2311
    %v2313 = vrot.slane %v2312, 1
    %v2314 = vadd.f32 %v2312, %v2313
    %v2315 = vmul.f32 %v2158, %v2314
    %v2316 = vadd.f32 %v2315, 0.0
    %v2317 = vmul.f32 %v2307, %v2162
    %v2318 = vrot.slane %v2317, 4
    %v2319 = vadd.f32 %v2317, %v2318
    %v2320 = vrot.slane %v2319, 2
    %v2321 = vadd.f32 %v2319, %v2320
    %v2322 = vrot.slane %v2321, 1
    %v2323 = vadd.f32 %v2321, %v2322
    %v2324 = vmul.f32 %v2162, %v2323
    %v2325 = vadd.f32 %v2316, %v2324
    %v2326 = vmul.f32 %v2307, %v2167
    %v2327 = vrot.slane %v2326, 4
    %v2328 = vadd.f32 %v2326, %v2327
    %v2329 = vrot.slane %v2328, 2
    %v2330 = vadd.f32 %v2328, %v2329
    %v2331 = vrot.slane %v2330, 1
    %v2332 = vadd.f32 %v2330, %v2331
    %v2333 = vmul.f32 %v2167, %v2332
    %v2334 = vadd.f32 %v2325, %v2333
    %v2335 = vmul.f32 %v2307, %v2172
    %v2336 = vrot.slane %v2335, 4
    %v2337 = vadd.f32 %v2335, %v2336
    %v2338 = vrot.slane %v2337, 2
    %v2339 = vadd.f32 %v2337, %v2338
    %v2340 = vrot.slane %v2339, 1
    %v2341 = vadd.f32 %v2339, %v2340
    %v2342 = vmul.f32 %v2172, %v2341
    %v2343 = vadd.f32 %v2334, %v2342
    %v2344 = vmul.f32 %v2343, 0.001953125
    %v2345 = vadd.f32 %v2344, 1e-05
    %v2346 = vrsqrt.pop %v2345
    %v2347 = vmul.f32 %v2301, %v2346
    %v2348 = vmul.f32 %v2302, %v2346
    %2349 = vset.pattern.permute.xlu0 51
    %2350 = vperm.xlu0 %2349, %v75
    %v2351 = vpop.permute.xlu0 %2350
    %v2353 = vmul.f32 %v2259, %v2351
    %v2354 = vmul.f32 %v2260, %v2351
    %v2355 = vmul.f32 %v2347, %v2351
    %v2356 = vmul.f32 %v2348, %v2351
    %2357 = vset.pattern.permute.xlu0 52
    %2358 = vperm.xlu0 %2357, %v75
    %v2359 = vpop.permute.xlu0 %2358
    %v2361 = vadd.f32 %v2353, %v2359
    %v2362 = vadd.f32 %v2354, %v2359
    %v2363 = vadd.f32 %v2355, %v2359
    %v2364 = vadd.f32 %v2356, %v2359
    %v2365 = vmul.f32 %v2361, %v128
    %v2366 = vmul.f32 %v2362, %v128
    %v2367 = vmul.f32 %v2363, %v164
    %v2368 = vmul.f32 %v2364, %v164
    %v2369 = vsub.f32 0.0, %v2365
    %v2370 = vsub.f32 0.0, %v2366
    %v2371 = vsub.f32 0.0, %v2367
    %v2372 = vsub.f32 0.0, %v2368
    %v2373 = vmul.f32 %v2369, 1.442695
    %v2374 = vpow.pop %v2373
    %v2375 = vmul.f32 %v2370, 1.442695
    %v2376 = vpow.pop %v2375
    %v2377 = vmul.f32 %v2371, 1.442695
    %v2378 = vpow.pop %v2377
    %v2379 = vmul.f32 %v2372, 1.442695
    %v2380 = vpow.pop %v2379
    %v2381 = vadd.f32 %v2374, 1.0
    %v2382 = vadd.f32 %v2376, 1.0
    %v2383 = vadd.f32 %v2378, 1.0
    %v2384 = vadd.f32 %v2380, 1.0
    %v2385 = vrcp.pop %v2381
    %v2386 = vrcp.pop %v2382
    %v2387 = vrcp.pop %v2383
    %v2388 = vrcp.pop %v2384
    %v2389 = vmul.f32 %v2365, %v2385
    %v2390 = vmul.f32 %v2366, %v2386
    %v2391 = vmul.f32 %v2367, %v2387
    %v2392 = vmul.f32 %v2368, %v2388
    %2393 = vrot.lane.b32.xlu0 %v2389, 51
    %v2394 = vpop.permute.xlu0 %2393
    %2395 = vrot.lane.b32.xlu0 %v2390, 51
    %v2396 = vpop.permute.xlu0 %2395
    %2397 = vrot.lane.b32.xlu0 %v2391, 51
    %v2398 = vpop.permute.xlu0 %2397
    %2399 = vrot.lane.b32.xlu0 %v2392, 51
    %v2400 = vpop.permute.xlu0 %2399
    %v2401 = vsel %vm182, %v2398, %v2400
    %v2402 = vsel %vm182, %v2396, %v2398
    %v2403 = vsel %vm182, %v2394, %v2396
    %v2404 = vsel %vm182, %v2400, %v2394
    %v2405 = vld [vmem:[#allocation8] sm:$0xff]
    %v2406 = vld [vmem:[#allocation8 + $0x8] sm:$0xff]
    %v2407 = vld [vmem:[#allocation8 + $0x10] sm:$0xff]
    %v2408 = vld [vmem:[#allocation8 + $0x18] sm:$0xff]
    %v2409 = vmul.f32 %v2404, %v2405
    %v2410 = vmul.f32 %v2403, %v2406
    %v2411 = vmul.f32 %v2402, %v2407
    %v2412 = vmul.f32 %v2401, %v2408
    %2413 = vrot.lane.b32.xlu0 %v2389, 50
    %v2414 = vpop.permute.xlu0 %2413
    %2415 = vrot.lane.b32.xlu0 %v2390, 50
    %v2416 = vpop.permute.xlu0 %2415
    %2417 = vrot.lane.b32.xlu0 %v2391, 50
    %v2418 = vpop.permute.xlu0 %2417
    %2419 = vrot.lane.b32.xlu0 %v2392, 50
    %v2420 = vpop.permute.xlu0 %2419
    %v2421 = vsel %vm207, %v2418, %v2420
    %v2422 = vsel %vm207, %v2416, %v2418
    %v2423 = vsel %vm207, %v2414, %v2416
    %v2424 = vsel %vm207, %v2420, %v2414
    %s2425 = scalar_lea.vmem [#allocation8], 32
    %v2426 = vld [vmem:[%s2425] sm:$0xff]
    %v2427 = vld [vmem:[%s2425 + $0x8] sm:$0xff]
    %v2428 = vld [vmem:[%s2425 + $0x10] sm:$0xff]
    %v2429 = vld [vmem:[%s2425 + $0x18] sm:$0xff]
    %v2430 = vmul.f32 %v2424, %v2426
    %v2431 = vmul.f32 %v2423, %v2427
    %v2432 = vmul.f32 %v2422, %v2428
    %v2433 = vmul.f32 %v2421, %v2429
    %v2434 = vadd.f32 %v2409, %v2430
    %v2435 = vadd.f32 %v2410, %v2431
    %v2436 = vadd.f32 %v2411, %v2432
    %v2437 = vadd.f32 %v2412, %v2433
    %2438 = vrot.lane.b32.xlu0 %v2389, 49
    %v2439 = vpop.permute.xlu0 %2438
    %2440 = vrot.lane.b32.xlu0 %v2390, 49
    %v2441 = vpop.permute.xlu0 %2440
    %2442 = vrot.lane.b32.xlu0 %v2391, 49
    %v2443 = vpop.permute.xlu0 %2442
    %2444 = vrot.lane.b32.xlu0 %v2392, 49
    %v2445 = vpop.permute.xlu0 %2444
    %v2446 = vsel %vm237, %v2443, %v2445
    %v2447 = vsel %vm237, %v2441, %v2443
    %v2448 = vsel %vm237, %v2439, %v2441
    %v2449 = vsel %vm237, %v2445, %v2439
    %s2450 = scalar_lea.vmem [#allocation8], 64
    %v2451 = vld [vmem:[%s2450] sm:$0xff]
    %v2452 = vld [vmem:[%s2450 + $0x8] sm:$0xff]
    %v2453 = vld [vmem:[%s2450 + $0x10] sm:$0xff]
    %v2454 = vld [vmem:[%s2450 + $0x18] sm:$0xff]
    %v2455 = vmul.f32 %v2449, %v2451
    %v2456 = vmul.f32 %v2448, %v2452
    %v2457 = vmul.f32 %v2447, %v2453
    %v2458 = vmul.f32 %v2446, %v2454
    %v2459 = vadd.f32 %v2434, %v2455
    %v2460 = vadd.f32 %v2435, %v2456
    %v2461 = vadd.f32 %v2436, %v2457
    %v2462 = vadd.f32 %v2437, %v2458
    %2463 = vrot.lane.b32.xlu0 %v2389, 48
    %v2464 = vpop.permute.xlu0 %2463
    %2465 = vrot.lane.b32.xlu0 %v2390, 48
    %v2466 = vpop.permute.xlu0 %2465
    %2467 = vrot.lane.b32.xlu0 %v2391, 48
    %v2468 = vpop.permute.xlu0 %2467
    %2469 = vrot.lane.b32.xlu0 %v2392, 48
    %v2470 = vpop.permute.xlu0 %2469
    %v2471 = vsel %vm267, %v2468, %v2470
    %v2472 = vsel %vm267, %v2466, %v2468
    %v2473 = vsel %vm267, %v2464, %v2466
    %v2474 = vsel %vm267, %v2470, %v2464
    %s2475 = scalar_lea.vmem [#allocation8], 96
    %v2476 = vld [vmem:[%s2475] sm:$0xff]
    %v2477 = vld [vmem:[%s2475 + $0x8] sm:$0xff]
    %v2478 = vld [vmem:[%s2475 + $0x10] sm:$0xff]
    %v2479 = vld [vmem:[%s2475 + $0x18] sm:$0xff]
    %v2480 = vmul.f32 %v2474, %v2476
    %v2481 = vmul.f32 %v2473, %v2477
    %v2482 = vmul.f32 %v2472, %v2478
    %v2483 = vmul.f32 %v2471, %v2479
    %v2484 = vadd.f32 %v2459, %v2480
    %v2485 = vadd.f32 %v2460, %v2481
    %v2486 = vadd.f32 %v2461, %v2482
    %v2487 = vadd.f32 %v2462, %v2483
    %2488 = vrot.lane.b32.xlu0 %v2389, 47
    %v2489 = vpop.permute.xlu0 %2488
    %2490 = vrot.lane.b32.xlu0 %v2390, 47
    %v2491 = vpop.permute.xlu0 %2490
    %2492 = vrot.lane.b32.xlu0 %v2391, 47
    %v2493 = vpop.permute.xlu0 %2492
    %2494 = vrot.lane.b32.xlu0 %v2392, 47
    %v2495 = vpop.permute.xlu0 %2494
    %v2496 = vsel %vm297, %v2493, %v2495
    %v2497 = vsel %vm297, %v2491, %v2493
    %v2498 = vsel %vm297, %v2489, %v2491
    %v2499 = vsel %vm297, %v2495, %v2489
    %s2500 = scalar_lea.vmem [#allocation8], 128
    %v2501 = vld [vmem:[%s2500] sm:$0xff]
    %v2502 = vld [vmem:[%s2500 + $0x8] sm:$0xff]
    %v2503 = vld [vmem:[%s2500 + $0x10] sm:$0xff]
    %v2504 = vld [vmem:[%s2500 + $0x18] sm:$0xff]
    %v2505 = vmul.f32 %v2499, %v2501
    %v2506 = vmul.f32 %v2498, %v2502
    %v2507 = vmul.f32 %v2497, %v2503
    %v2508 = vmul.f32 %v2496, %v2504
    %v2509 = vadd.f32 %v2484, %v2505
    %v2510 = vadd.f32 %v2485, %v2506
    %v2511 = vadd.f32 %v2486, %v2507
    %v2512 = vadd.f32 %v2487, %v2508
    %2513 = vrot.lane.b32.xlu0 %v2389, 46
    %v2514 = vpop.permute.xlu0 %2513
    %2515 = vrot.lane.b32.xlu0 %v2390, 46
    %v2516 = vpop.permute.xlu0 %2515
    %2517 = vrot.lane.b32.xlu0 %v2391, 46
    %v2518 = vpop.permute.xlu0 %2517
    %2519 = vrot.lane.b32.xlu0 %v2392, 46
    %v2520 = vpop.permute.xlu0 %2519
    %v2521 = vsel %vm327, %v2518, %v2520
    %v2522 = vsel %vm327, %v2516, %v2518
    %v2523 = vsel %vm327, %v2514, %v2516
    %v2524 = vsel %vm327, %v2520, %v2514
    %s2525 = scalar_lea.vmem [#allocation8], 160
    %v2526 = vld [vmem:[%s2525] sm:$0xff]
    %v2527 = vld [vmem:[%s2525 + $0x8] sm:$0xff]
    %v2528 = vld [vmem:[%s2525 + $0x10] sm:$0xff]
    %v2529 = vld [vmem:[%s2525 + $0x18] sm:$0xff]
    %v2530 = vmul.f32 %v2524, %v2526
    %v2531 = vmul.f32 %v2523, %v2527
    %v2532 = vmul.f32 %v2522, %v2528
    %v2533 = vmul.f32 %v2521, %v2529
    %v2534 = vadd.f32 %v2509, %v2530
    %v2535 = vadd.f32 %v2510, %v2531
    %v2536 = vadd.f32 %v2511, %v2532
    %v2537 = vadd.f32 %v2512, %v2533
    %2538 = vrot.lane.b32.xlu0 %v2389, 45
    %v2539 = vpop.permute.xlu0 %2538
    %2540 = vrot.lane.b32.xlu0 %v2390, 45
    %v2541 = vpop.permute.xlu0 %2540
    %2542 = vrot.lane.b32.xlu0 %v2391, 45
    %v2543 = vpop.permute.xlu0 %2542
    %2544 = vrot.lane.b32.xlu0 %v2392, 45
    %v2545 = vpop.permute.xlu0 %2544
    %v2546 = vsel %vm357, %v2543, %v2545
    %v2547 = vsel %vm357, %v2541, %v2543
    %v2548 = vsel %vm357, %v2539, %v2541
    %v2549 = vsel %vm357, %v2545, %v2539
    %s2550 = scalar_lea.vmem [#allocation8], 192
    %v2551 = vld [vmem:[%s2550] sm:$0xff]
    %v2552 = vld [vmem:[%s2550 + $0x8] sm:$0xff]
    %v2553 = vld [vmem:[%s2550 + $0x10] sm:$0xff]
    %v2554 = vld [vmem:[%s2550 + $0x18] sm:$0xff]
    %v2555 = vmul.f32 %v2549, %v2551
    %v2556 = vmul.f32 %v2548, %v2552
    %v2557 = vmul.f32 %v2547, %v2553
    %v2558 = vmul.f32 %v2546, %v2554
    %v2559 = vadd.f32 %v2534, %v2555
    %v2560 = vadd.f32 %v2535, %v2556
    %v2561 = vadd.f32 %v2536, %v2557
    %v2562 = vadd.f32 %v2537, %v2558
    %2563 = vrot.lane.b32.xlu0 %v2389, 35
    %v2564 = vpop.permute.xlu0 %2563
    %2565 = vrot.lane.b32.xlu0 %v2390, 35
    %v2566 = vpop.permute.xlu0 %2565
    %2567 = vrot.lane.b32.xlu0 %v2391, 35
    %v2568 = vpop.permute.xlu0 %2567
    %2569 = vrot.lane.b32.xlu0 %v2392, 35
    %v2570 = vpop.permute.xlu0 %2569
    %v2571 = vsel %vm387, %v2568, %v2570
    %v2572 = vsel %vm387, %v2566, %v2568
    %v2573 = vsel %vm387, %v2564, %v2566
    %v2574 = vsel %vm387, %v2570, %v2564
    %s2575 = scalar_lea.vmem [#allocation8], 224
    %v2576 = vld [vmem:[%s2575] sm:$0xff]
    %v2577 = vld [vmem:[%s2575 + $0x8] sm:$0xff]
    %v2578 = vld [vmem:[%s2575 + $0x10] sm:$0xff]
    %v2579 = vld [vmem:[%s2575 + $0x18] sm:$0xff]
    %v2580 = vmul.f32 %v2574, %v2576
    %v2581 = vmul.f32 %v2573, %v2577
    %v2582 = vmul.f32 %v2572, %v2578
    %v2583 = vmul.f32 %v2571, %v2579
    %v2584 = vadd.f32 %v2559, %v2580
    %v2585 = vadd.f32 %v2560, %v2581
    %v2586 = vadd.f32 %v2561, %v2582
    %v2587 = vadd.f32 %v2562, %v2583
    %2588 = vrot.lane.b32.xlu0 %v2389, 34
    %v2589 = vpop.permute.xlu0 %2588
    %2590 = vrot.lane.b32.xlu0 %v2390, 34
    %v2591 = vpop.permute.xlu0 %2590
    %2592 = vrot.lane.b32.xlu0 %v2391, 34
    %v2593 = vpop.permute.xlu0 %2592
    %2594 = vrot.lane.b32.xlu0 %v2392, 34
    %v2595 = vpop.permute.xlu0 %2594
    %v2596 = vsel %vm417, %v2593, %v2595
    %v2597 = vsel %vm417, %v2591, %v2593
    %v2598 = vsel %vm417, %v2589, %v2591
    %v2599 = vsel %vm417, %v2595, %v2589
    %s2600 = scalar_lea.vmem [#allocation8], 256
    %v2601 = vld [vmem:[%s2600] sm:$0xff]
    %v2602 = vld [vmem:[%s2600 + $0x8] sm:$0xff]
    %v2603 = vld [vmem:[%s2600 + $0x10] sm:$0xff]
    %v2604 = vld [vmem:[%s2600 + $0x18] sm:$0xff]
    %v2605 = vmul.f32 %v2599, %v2601
    %v2606 = vmul.f32 %v2598, %v2602
    %v2607 = vmul.f32 %v2597, %v2603
    %v2608 = vmul.f32 %v2596, %v2604
    %v2609 = vadd.f32 %v2584, %v2605
    %v2610 = vadd.f32 %v2585, %v2606
    %v2611 = vadd.f32 %v2586, %v2607
    %v2612 = vadd.f32 %v2587, %v2608
    %2613 = vrot.lane.b32.xlu0 %v2389, 33
    %v2614 = vpop.permute.xlu0 %2613
    %2615 = vrot.lane.b32.xlu0 %v2390, 33
    %v2616 = vpop.permute.xlu0 %2615
    %2617 = vrot.lane.b32.xlu0 %v2391, 33
    %v2618 = vpop.permute.xlu0 %2617
    %2619 = vrot.lane.b32.xlu0 %v2392, 33
    %v2620 = vpop.permute.xlu0 %2619
    %v2621 = vsel %vm447, %v2618, %v2620
    %v2622 = vsel %vm447, %v2616, %v2618
    %v2623 = vsel %vm447, %v2614, %v2616
    %v2624 = vsel %vm447, %v2620, %v2614
    %s2625 = scalar_lea.vmem [#allocation8], 288
    %v2626 = vld [vmem:[%s2625] sm:$0xff]
    %v2627 = vld [vmem:[%s2625 + $0x8] sm:$0xff]
    %v2628 = vld [vmem:[%s2625 + $0x10] sm:$0xff]
    %v2629 = vld [vmem:[%s2625 + $0x18] sm:$0xff]
    %v2630 = vmul.f32 %v2624, %v2626
    %v2631 = vmul.f32 %v2623, %v2627
    %v2632 = vmul.f32 %v2622, %v2628
    %v2633 = vmul.f32 %v2621, %v2629
    %v2634 = vadd.f32 %v2609, %v2630
    %v2635 = vadd.f32 %v2610, %v2631
    %v2636 = vadd.f32 %v2611, %v2632
    %v2637 = vadd.f32 %v2612, %v2633
    %2638 = vrot.lane.b32.xlu0 %v2389, 32
    %v2639 = vpop.permute.xlu0 %2638
    %2640 = vrot.lane.b32.xlu0 %v2390, 32
    %v2641 = vpop.permute.xlu0 %2640
    %2642 = vrot.lane.b32.xlu0 %v2391, 32
    %v2643 = vpop.permute.xlu0 %2642
    %2644 = vrot.lane.b32.xlu0 %v2392, 32
    %v2645 = vpop.permute.xlu0 %2644
    %v2646 = vsel %vm477, %v2643, %v2645
    %v2647 = vsel %vm477, %v2641, %v2643
    %v2648 = vsel %vm477, %v2639, %v2641
    %v2649 = vsel %vm477, %v2645, %v2639
    %s2650 = scalar_lea.vmem [#allocation8], 320
    %v2651 = vld [vmem:[%s2650] sm:$0xff]
    %v2652 = vld [vmem:[%s2650 + $0x8] sm:$0xff]
    %v2653 = vld [vmem:[%s2650 + $0x10] sm:$0xff]
    %v2654 = vld [vmem:[%s2650 + $0x18] sm:$0xff]
    %v2655 = vmul.f32 %v2649, %v2651
    %v2656 = vmul.f32 %v2648, %v2652
    %v2657 = vmul.f32 %v2647, %v2653
    %v2658 = vmul.f32 %v2646, %v2654
    %v2659 = vadd.f32 %v2634, %v2655
    %v2660 = vadd.f32 %v2635, %v2656
    %v2661 = vadd.f32 %v2636, %v2657
    %v2662 = vadd.f32 %v2637, %v2658
    %2663 = vrot.lane.b32.xlu0 %v2389, 31
    %v2664 = vpop.permute.xlu0 %2663
    %2665 = vrot.lane.b32.xlu0 %v2390, 31
    %v2666 = vpop.permute.xlu0 %2665
    %2667 = vrot.lane.b32.xlu0 %v2391, 31
    %v2668 = vpop.permute.xlu0 %2667
    %2669 = vrot.lane.b32.xlu0 %v2392, 31
    %v2670 = vpop.permute.xlu0 %2669
    %v2671 = vsel %vm507, %v2668, %v2670
    %v2672 = vsel %vm507, %v2666, %v2668
    %v2673 = vsel %vm507, %v2664, %v2666
    %v2674 = vsel %vm507, %v2670, %v2664
    %s2675 = scalar_lea.vmem [#allocation8], 352
    %v2676 = vld [vmem:[%s2675] sm:$0xff]
    %v2677 = vld [vmem:[%s2675 + $0x8] sm:$0xff]
    %v2678 = vld [vmem:[%s2675 + $0x10] sm:$0xff]
    %v2679 = vld [vmem:[%s2675 + $0x18] sm:$0xff]
    %v2680 = vmul.f32 %v2674, %v2676
    %v2681 = vmul.f32 %v2673, %v2677
    %v2682 = vmul.f32 %v2672, %v2678
    %v2683 = vmul.f32 %v2671, %v2679
    %v2684 = vadd.f32 %v2659, %v2680
    %v2685 = vadd.f32 %v2660, %v2681
    %v2686 = vadd.f32 %v2661, %v2682
    %v2687 = vadd.f32 %v2662, %v2683
    %2688 = vrot.lane.b32.xlu0 %v2389, 30
    %v2689 = vpop.permute.xlu0 %2688
    %2690 = vrot.lane.b32.xlu0 %v2390, 30
    %v2691 = vpop.permute.xlu0 %2690
    %2692 = vrot.lane.b32.xlu0 %v2391, 30
    %v2693 = vpop.permute.xlu0 %2692
    %2694 = vrot.lane.b32.xlu0 %v2392, 30
    %v2695 = vpop.permute.xlu0 %2694
    %v2696 = vsel %vm537, %v2693, %v2695
    %v2697 = vsel %vm537, %v2691, %v2693
    %v2698 = vsel %vm537, %v2689, %v2691
    %v2699 = vsel %vm537, %v2695, %v2689
    %s2700 = scalar_lea.vmem [#allocation8], 384
    %v2701 = vld [vmem:[%s2700] sm:$0xff]
    %v2702 = vld [vmem:[%s2700 + $0x8] sm:$0xff]
    %v2703 = vld [vmem:[%s2700 + $0x10] sm:$0xff]
    %v2704 = vld [vmem:[%s2700 + $0x18] sm:$0xff]
    %v2705 = vmul.f32 %v2699, %v2701
    %v2706 = vmul.f32 %v2698, %v2702
    %v2707 = vmul.f32 %v2697, %v2703
    %v2708 = vmul.f32 %v2696, %v2704
    %v2709 = vadd.f32 %v2684, %v2705
    %v2710 = vadd.f32 %v2685, %v2706
    %v2711 = vadd.f32 %v2686, %v2707
    %v2712 = vadd.f32 %v2687, %v2708
    %2713 = vrot.lane.b32.xlu0 %v2389, 29
    %v2714 = vpop.permute.xlu0 %2713
    %2715 = vrot.lane.b32.xlu0 %v2390, 29
    %v2716 = vpop.permute.xlu0 %2715
    %2717 = vrot.lane.b32.xlu0 %v2391, 29
    %v2718 = vpop.permute.xlu0 %2717
    %2719 = vrot.lane.b32.xlu0 %v2392, 29
    %v2720 = vpop.permute.xlu0 %2719
    %v2721 = vsel %vm567, %v2718, %v2720
    %v2722 = vsel %vm567, %v2716, %v2718
    %v2723 = vsel %vm567, %v2714, %v2716
    %v2724 = vsel %vm567, %v2720, %v2714
    %s2725 = scalar_lea.vmem [#allocation8], 416
    %v2726 = vld [vmem:[%s2725] sm:$0xff]
    %v2727 = vld [vmem:[%s2725 + $0x8] sm:$0xff]
    %v2728 = vld [vmem:[%s2725 + $0x10] sm:$0xff]
    %v2729 = vld [vmem:[%s2725 + $0x18] sm:$0xff]
    %v2730 = vmul.f32 %v2724, %v2726
    %v2731 = vmul.f32 %v2723, %v2727
    %v2732 = vmul.f32 %v2722, %v2728
    %v2733 = vmul.f32 %v2721, %v2729
    %v2734 = vadd.f32 %v2709, %v2730
    %v2735 = vadd.f32 %v2710, %v2731
    %v2736 = vadd.f32 %v2711, %v2732
    %v2737 = vadd.f32 %v2712, %v2733
    %2738 = vrot.lane.b32.xlu0 %v2389, 19
    %v2739 = vpop.permute.xlu0 %2738
    %2740 = vrot.lane.b32.xlu0 %v2390, 19
    %v2741 = vpop.permute.xlu0 %2740
    %2742 = vrot.lane.b32.xlu0 %v2391, 19
    %v2743 = vpop.permute.xlu0 %2742
    %2744 = vrot.lane.b32.xlu0 %v2392, 19
    %v2745 = vpop.permute.xlu0 %2744
    %v2746 = vsel %vm597, %v2743, %v2745
    %v2747 = vsel %vm597, %v2741, %v2743
    %v2748 = vsel %vm597, %v2739, %v2741
    %v2749 = vsel %vm597, %v2745, %v2739
    %s2750 = scalar_lea.vmem [#allocation8], 448
    %v2751 = vld [vmem:[%s2750] sm:$0xff]
    %v2752 = vld [vmem:[%s2750 + $0x8] sm:$0xff]
    %v2753 = vld [vmem:[%s2750 + $0x10] sm:$0xff]
    %v2754 = vld [vmem:[%s2750 + $0x18] sm:$0xff]
    %v2755 = vmul.f32 %v2749, %v2751
    %v2756 = vmul.f32 %v2748, %v2752
    %v2757 = vmul.f32 %v2747, %v2753
    %v2758 = vmul.f32 %v2746, %v2754
    %v2759 = vadd.f32 %v2734, %v2755
    %v2760 = vadd.f32 %v2735, %v2756
    %v2761 = vadd.f32 %v2736, %v2757
    %v2762 = vadd.f32 %v2737, %v2758
    %2763 = vrot.lane.b32.xlu0 %v2389, 18
    %v2764 = vpop.permute.xlu0 %2763
    %2765 = vrot.lane.b32.xlu0 %v2390, 18
    %v2766 = vpop.permute.xlu0 %2765
    %2767 = vrot.lane.b32.xlu0 %v2391, 18
    %v2768 = vpop.permute.xlu0 %2767
    %2769 = vrot.lane.b32.xlu0 %v2392, 18
    %v2770 = vpop.permute.xlu0 %2769
    %v2771 = vsel %vm627, %v2768, %v2770
    %v2772 = vsel %vm627, %v2766, %v2768
    %v2773 = vsel %vm627, %v2764, %v2766
    %v2774 = vsel %vm627, %v2770, %v2764
    %s2775 = scalar_lea.vmem [#allocation8], 480
    %v2776 = vld [vmem:[%s2775] sm:$0xff]
    %v2777 = vld [vmem:[%s2775 + $0x8] sm:$0xff]
    %v2778 = vld [vmem:[%s2775 + $0x10] sm:$0xff]
    %v2779 = vld [vmem:[%s2775 + $0x18] sm:$0xff]
    %v2780 = vmul.f32 %v2774, %v2776
    %v2781 = vmul.f32 %v2773, %v2777
    %v2782 = vmul.f32 %v2772, %v2778
    %v2783 = vmul.f32 %v2771, %v2779
    %v2784 = vadd.f32 %v2759, %v2780
    %v2785 = vadd.f32 %v2760, %v2781
    %v2786 = vadd.f32 %v2761, %v2782
    %v2787 = vadd.f32 %v2762, %v2783
    %2788 = vrot.lane.b32.xlu0 %v2389, 17
    %v2789 = vpop.permute.xlu0 %2788
    %2790 = vrot.lane.b32.xlu0 %v2390, 17
    %v2791 = vpop.permute.xlu0 %2790
    %2792 = vrot.lane.b32.xlu0 %v2391, 17
    %v2793 = vpop.permute.xlu0 %2792
    %2794 = vrot.lane.b32.xlu0 %v2392, 17
    %v2795 = vpop.permute.xlu0 %2794
    %v2796 = vsel %vm657, %v2793, %v2795
    %v2797 = vsel %vm657, %v2791, %v2793
    %v2798 = vsel %vm657, %v2789, %v2791
    %v2799 = vsel %vm657, %v2795, %v2789
    %s2800 = scalar_lea.vmem [#allocation8], 512
    %v2801 = vld [vmem:[%s2800] sm:$0xff]
    %v2802 = vld [vmem:[%s2800 + $0x8] sm:$0xff]
    %v2803 = vld [vmem:[%s2800 + $0x10] sm:$0xff]
    %v2804 = vld [vmem:[%s2800 + $0x18] sm:$0xff]
    %v2805 = vmul.f32 %v2799, %v2801
    %v2806 = vmul.f32 %v2798, %v2802
    %v2807 = vmul.f32 %v2797, %v2803
    %v2808 = vmul.f32 %v2796, %v2804
    %v2809 = vadd.f32 %v2784, %v2805
    %v2810 = vadd.f32 %v2785, %v2806
    %v2811 = vadd.f32 %v2786, %v2807
    %v2812 = vadd.f32 %v2787, %v2808
    %2813 = vrot.lane.b32.xlu0 %v2389, 16
    %v2814 = vpop.permute.xlu0 %2813
    %2815 = vrot.lane.b32.xlu0 %v2390, 16
    %v2816 = vpop.permute.xlu0 %2815
    %2817 = vrot.lane.b32.xlu0 %v2391, 16
    %v2818 = vpop.permute.xlu0 %2817
    %2819 = vrot.lane.b32.xlu0 %v2392, 16
    %v2820 = vpop.permute.xlu0 %2819
    %v2821 = vsel %vm687, %v2818, %v2820
    %v2822 = vsel %vm687, %v2816, %v2818
    %v2823 = vsel %vm687, %v2814, %v2816
    %v2824 = vsel %vm687, %v2820, %v2814
    %s2825 = scalar_lea.vmem [#allocation8], 544
    %v2826 = vld [vmem:[%s2825] sm:$0xff]
    %v2827 = vld [vmem:[%s2825 + $0x8] sm:$0xff]
    %v2828 = vld [vmem:[%s2825 + $0x10] sm:$0xff]
    %v2829 = vld [vmem:[%s2825 + $0x18] sm:$0xff]
    %v2830 = vmul.f32 %v2824, %v2826
    %v2831 = vmul.f32 %v2823, %v2827
    %v2832 = vmul.f32 %v2822, %v2828
    %v2833 = vmul.f32 %v2821, %v2829
    %v2834 = vadd.f32 %v2809, %v2830
    %v2835 = vadd.f32 %v2810, %v2831
    %v2836 = vadd.f32 %v2811, %v2832
    %v2837 = vadd.f32 %v2812, %v2833
    %2838 = vrot.lane.b32.xlu0 %v2389, 15
    %v2839 = vpop.permute.xlu0 %2838
    %2840 = vrot.lane.b32.xlu0 %v2390, 15
    %v2841 = vpop.permute.xlu0 %2840
    %2842 = vrot.lane.b32.xlu0 %v2391, 15
    %v2843 = vpop.permute.xlu0 %2842
    %2844 = vrot.lane.b32.xlu0 %v2392, 15
    %v2845 = vpop.permute.xlu0 %2844
    %v2846 = vsel %vm717, %v2843, %v2845
    %v2847 = vsel %vm717, %v2841, %v2843
    %v2848 = vsel %vm717, %v2839, %v2841
    %v2849 = vsel %vm717, %v2845, %v2839
    %s2850 = scalar_lea.vmem [#allocation8], 576
    %v2851 = vld [vmem:[%s2850] sm:$0xff]
    %v2852 = vld [vmem:[%s2850 + $0x8] sm:$0xff]
    %v2853 = vld [vmem:[%s2850 + $0x10] sm:$0xff]
    %v2854 = vld [vmem:[%s2850 + $0x18] sm:$0xff]
    %v2855 = vmul.f32 %v2849, %v2851
    %v2856 = vmul.f32 %v2848, %v2852
    %v2857 = vmul.f32 %v2847, %v2853
    %v2858 = vmul.f32 %v2846, %v2854
    %v2859 = vadd.f32 %v2834, %v2855
    %v2860 = vadd.f32 %v2835, %v2856
    %v2861 = vadd.f32 %v2836, %v2857
    %v2862 = vadd.f32 %v2837, %v2858
    %2863 = vrot.lane.b32.xlu0 %v2389, 14
    %v2864 = vpop.permute.xlu0 %2863
    %2865 = vrot.lane.b32.xlu0 %v2390, 14
    %v2866 = vpop.permute.xlu0 %2865
    %2867 = vrot.lane.b32.xlu0 %v2391, 14
    %v2868 = vpop.permute.xlu0 %2867
    %2869 = vrot.lane.b32.xlu0 %v2392, 14
    %v2870 = vpop.permute.xlu0 %2869
    %v2871 = vsel %vm747, %v2868, %v2870
    %v2872 = vsel %vm747, %v2866, %v2868
    %v2873 = vsel %vm747, %v2864, %v2866
    %v2874 = vsel %vm747, %v2870, %v2864
    %s2875 = scalar_lea.vmem [#allocation8], 608
    %v2876 = vld [vmem:[%s2875] sm:$0xff]
    %v2877 = vld [vmem:[%s2875 + $0x8] sm:$0xff]
    %v2878 = vld [vmem:[%s2875 + $0x10] sm:$0xff]
    %v2879 = vld [vmem:[%s2875 + $0x18] sm:$0xff]
    %v2880 = vmul.f32 %v2874, %v2876
    %v2881 = vmul.f32 %v2873, %v2877
    %v2882 = vmul.f32 %v2872, %v2878
    %v2883 = vmul.f32 %v2871, %v2879
    %v2884 = vadd.f32 %v2859, %v2880
    %v2885 = vadd.f32 %v2860, %v2881
    %v2886 = vadd.f32 %v2861, %v2882
    %v2887 = vadd.f32 %v2862, %v2883
    %2888 = vrot.lane.b32.xlu0 %v2389, 13
    %v2889 = vpop.permute.xlu0 %2888
    %2890 = vrot.lane.b32.xlu0 %v2390, 13
    %v2891 = vpop.permute.xlu0 %2890
    %2892 = vrot.lane.b32.xlu0 %v2391, 13
    %v2893 = vpop.permute.xlu0 %2892
    %2894 = vrot.lane.b32.xlu0 %v2392, 13
    %v2895 = vpop.permute.xlu0 %2894
    %v2896 = vsel %vm777, %v2893, %v2895
    %v2897 = vsel %vm777, %v2891, %v2893
    %v2898 = vsel %vm777, %v2889, %v2891
    %v2899 = vsel %vm777, %v2895, %v2889
    %s2900 = scalar_lea.vmem [#allocation8], 640
    %v2901 = vld [vmem:[%s2900] sm:$0xff]
    %v2902 = vld [vmem:[%s2900 + $0x8] sm:$0xff]
    %v2903 = vld [vmem:[%s2900 + $0x10] sm:$0xff]
    %v2904 = vld [vmem:[%s2900 + $0x18] sm:$0xff]
    %v2905 = vmul.f32 %v2899, %v2901
    %v2906 = vmul.f32 %v2898, %v2902
    %v2907 = vmul.f32 %v2897, %v2903
    %v2908 = vmul.f32 %v2896, %v2904
    %v2909 = vadd.f32 %v2884, %v2905
    %v2910 = vadd.f32 %v2885, %v2906
    %v2911 = vadd.f32 %v2886, %v2907
    %v2912 = vadd.f32 %v2887, %v2908
    %2913 = vrot.lane.b32.xlu0 %v2389, 3
    %v2914 = vpop.permute.xlu0 %2913
    %2915 = vrot.lane.b32.xlu0 %v2390, 3
    %v2916 = vpop.permute.xlu0 %2915
    %2917 = vrot.lane.b32.xlu0 %v2391, 3
    %v2918 = vpop.permute.xlu0 %2917
    %2919 = vrot.lane.b32.xlu0 %v2392, 3
    %v2920 = vpop.permute.xlu0 %2919
    %v2921 = vsel %vm807, %v2918, %v2920
    %v2922 = vsel %vm807, %v2916, %v2918
    %v2923 = vsel %vm807, %v2914, %v2916
    %v2924 = vsel %vm807, %v2920, %v2914
    %s2925 = scalar_lea.vmem [#allocation8], 672
    %v2926 = vld [vmem:[%s2925] sm:$0xff]
    %v2927 = vld [vmem:[%s2925 + $0x8] sm:$0xff]
    %v2928 = vld [vmem:[%s2925 + $0x10] sm:$0xff]
    %v2929 = vld [vmem:[%s2925 + $0x18] sm:$0xff]
    %v2930 = vmul.f32 %v2924, %v2926
    %v2931 = vmul.f32 %v2923, %v2927
    %v2932 = vmul.f32 %v2922, %v2928
    %v2933 = vmul.f32 %v2921, %v2929
    %v2934 = vadd.f32 %v2909, %v2930
    %v2935 = vadd.f32 %v2910, %v2931
    %v2936 = vadd.f32 %v2911, %v2932
    %v2937 = vadd.f32 %v2912, %v2933
    %2938 = vrot.lane.b32.xlu0 %v2389, 2
    %v2939 = vpop.permute.xlu0 %2938
    %2940 = vrot.lane.b32.xlu0 %v2390, 2
    %v2941 = vpop.permute.xlu0 %2940
    %2942 = vrot.lane.b32.xlu0 %v2391, 2
    %v2943 = vpop.permute.xlu0 %2942
    %2944 = vrot.lane.b32.xlu0 %v2392, 2
    %v2945 = vpop.permute.xlu0 %2944
    %v2946 = vsel %vm837, %v2943, %v2945
    %v2947 = vsel %vm837, %v2941, %v2943
    %v2948 = vsel %vm837, %v2939, %v2941
    %v2949 = vsel %vm837, %v2945, %v2939
    %s2950 = scalar_lea.vmem [#allocation8], 704
    %v2951 = vld [vmem:[%s2950] sm:$0xff]
    %v2952 = vld [vmem:[%s2950 + $0x8] sm:$0xff]
    %v2953 = vld [vmem:[%s2950 + $0x10] sm:$0xff]
    %v2954 = vld [vmem:[%s2950 + $0x18] sm:$0xff]
    %v2955 = vmul.f32 %v2949, %v2951
    %v2956 = vmul.f32 %v2948, %v2952
    %v2957 = vmul.f32 %v2947, %v2953
    %v2958 = vmul.f32 %v2946, %v2954
    %v2959 = vadd.f32 %v2934, %v2955
    %v2960 = vadd.f32 %v2935, %v2956
    %v2961 = vadd.f32 %v2936, %v2957
    %v2962 = vadd.f32 %v2937, %v2958
    %2963 = vrot.lane.b32.xlu0 %v2389, 1
    %v2964 = vpop.permute.xlu0 %2963
    %2965 = vrot.lane.b32.xlu0 %v2390, 1
    %v2966 = vpop.permute.xlu0 %2965
    %2967 = vrot.lane.b32.xlu0 %v2391, 1
    %v2968 = vpop.permute.xlu0 %2967
    %2969 = vrot.lane.b32.xlu0 %v2392, 1
    %v2970 = vpop.permute.xlu0 %2969
    %v2971 = vsel %vm867, %v2968, %v2970
    %v2972 = vsel %vm867, %v2966, %v2968
    %v2973 = vsel %vm867, %v2964, %v2966
    %v2974 = vsel %vm867, %v2970, %v2964
    %s2975 = scalar_lea.vmem [#allocation8], 736
    %v2976 = vld [vmem:[%s2975] sm:$0xff]
    %v2977 = vld [vmem:[%s2975 + $0x8] sm:$0xff]
    %v2978 = vld [vmem:[%s2975 + $0x10] sm:$0xff]
    %v2979 = vld [vmem:[%s2975 + $0x18] sm:$0xff]
    %v2980 = vmul.f32 %v2974, %v2976
    %v2981 = vmul.f32 %v2973, %v2977
    %v2982 = vmul.f32 %v2972, %v2978
    %v2983 = vmul.f32 %v2971, %v2979
    %v2984 = vadd.f32 %v2959, %v2980
    %v2985 = vadd.f32 %v2960, %v2981
    %v2986 = vadd.f32 %v2961, %v2982
    %v2987 = vadd.f32 %v2962, %v2983
    %s2988 = scalar_lea.vmem [#allocation8], 768
    %v2989 = vld [vmem:[%s2988] sm:$0xff]
    %v2990 = vld [vmem:[%s2988 + $0x8] sm:$0xff]
    %v2991 = vld [vmem:[%s2988 + $0x10] sm:$0xff]
    %v2992 = vld [vmem:[%s2988 + $0x18] sm:$0xff]
    %v2993 = vmul.f32 %v2389, %v2989
    %v2994 = vmul.f32 %v2390, %v2990
    %v2995 = vmul.f32 %v2391, %v2991
    %v2996 = vmul.f32 %v2392, %v2992
    %v2997 = vadd.f32 %v2984, %v2993
    %v2998 = vadd.f32 %v2985, %v2994
    %v2999 = vadd.f32 %v2986, %v2995
    %v3000 = vadd.f32 %v2987, %v2996
    %3001 = vrot.lane.b32.xlu0 %v2389, 127
    %v3002 = vpop.permute.xlu0 %3001
    %3003 = vrot.lane.b32.xlu0 %v2390, 127
    %v3004 = vpop.permute.xlu0 %3003
    %3005 = vrot.lane.b32.xlu0 %v2391, 127
    %v3006 = vpop.permute.xlu0 %3005
    %3007 = vrot.lane.b32.xlu0 %v2392, 127
    %v3008 = vpop.permute.xlu0 %3007
    %v3009 = vsel %vm912, %v3006, %v3008
    %v3010 = vsel %vm912, %v3004, %v3006
    %v3011 = vsel %vm912, %v3002, %v3004
    %v3012 = vsel %vm912, %v3008, %v3002
    %s3013 = scalar_lea.vmem [#allocation8], 800
    %v3014 = vld [vmem:[%s3013] sm:$0xff]
    %v3015 = vld [vmem:[%s3013 + $0x8] sm:$0xff]
    %v3016 = vld [vmem:[%s3013 + $0x10] sm:$0xff]
    %v3017 = vld [vmem:[%s3013 + $0x18] sm:$0xff]
    %v3018 = vmul.f32 %v3011, %v3014
    %v3019 = vmul.f32 %v3010, %v3015
    %v3020 = vmul.f32 %v3009, %v3016
    %v3021 = vmul.f32 %v3012, %v3017
    %v3022 = vadd.f32 %v2997, %v3018
    %v3023 = vadd.f32 %v2998, %v3019
    %v3024 = vadd.f32 %v2999, %v3020
    %v3025 = vadd.f32 %v3000, %v3021
    %3026 = vrot.lane.b32.xlu0 %v2389, 126
    %v3027 = vpop.permute.xlu0 %3026
    %3028 = vrot.lane.b32.xlu0 %v2390, 126
    %v3029 = vpop.permute.xlu0 %3028
    %3030 = vrot.lane.b32.xlu0 %v2391, 126
    %v3031 = vpop.permute.xlu0 %3030
    %3032 = vrot.lane.b32.xlu0 %v2392, 126
    %v3033 = vpop.permute.xlu0 %3032
    %v3034 = vsel %vm942, %v3031, %v3033
    %v3035 = vsel %vm942, %v3029, %v3031
    %v3036 = vsel %vm942, %v3027, %v3029
    %v3037 = vsel %vm942, %v3033, %v3027
    %s3038 = scalar_lea.vmem [#allocation8], 832
    %v3039 = vld [vmem:[%s3038] sm:$0xff]
    %v3040 = vld [vmem:[%s3038 + $0x8] sm:$0xff]
    %v3041 = vld [vmem:[%s3038 + $0x10] sm:$0xff]
    %v3042 = vld [vmem:[%s3038 + $0x18] sm:$0xff]
    %v3043 = vmul.f32 %v3036, %v3039
    %v3044 = vmul.f32 %v3035, %v3040
    %v3045 = vmul.f32 %v3034, %v3041
    %v3046 = vmul.f32 %v3037, %v3042
    %v3047 = vadd.f32 %v3022, %v3043
    %v3048 = vadd.f32 %v3023, %v3044
    %v3049 = vadd.f32 %v3024, %v3045
    %v3050 = vadd.f32 %v3025, %v3046
    %3051 = vrot.lane.b32.xlu0 %v2389, 125
    %v3052 = vpop.permute.xlu0 %3051
    %3053 = vrot.lane.b32.xlu0 %v2390, 125
    %v3054 = vpop.permute.xlu0 %3053
    %3055 = vrot.lane.b32.xlu0 %v2391, 125
    %v3056 = vpop.permute.xlu0 %3055
    %3057 = vrot.lane.b32.xlu0 %v2392, 125
    %v3058 = vpop.permute.xlu0 %3057
    %v3059 = vsel %vm972, %v3056, %v3058
    %v3060 = vsel %vm972, %v3054, %v3056
    %v3061 = vsel %vm972, %v3052, %v3054
    %v3062 = vsel %vm972, %v3058, %v3052
    %s3063 = scalar_lea.vmem [#allocation8], 864
    %v3064 = vld [vmem:[%s3063] sm:$0xff]
    %v3065 = vld [vmem:[%s3063 + $0x8] sm:$0xff]
    %v3066 = vld [vmem:[%s3063 + $0x10] sm:$0xff]
    %v3067 = vld [vmem:[%s3063 + $0x18] sm:$0xff]
    %v3068 = vmul.f32 %v3061, %v3064
    %v3069 = vmul.f32 %v3060, %v3065
    %v3070 = vmul.f32 %v3059, %v3066
    %v3071 = vmul.f32 %v3062, %v3067
    %v3072 = vadd.f32 %v3047, %v3068
    %v3073 = vadd.f32 %v3048, %v3069
    %v3074 = vadd.f32 %v3049, %v3070
    %v3075 = vadd.f32 %v3050, %v3071
    %3076 = vrot.lane.b32.xlu0 %v2389, 115
    %v3077 = vpop.permute.xlu0 %3076
    %3078 = vrot.lane.b32.xlu0 %v2390, 115
    %v3079 = vpop.permute.xlu0 %3078
    %3080 = vrot.lane.b32.xlu0 %v2391, 115
    %v3081 = vpop.permute.xlu0 %3080
    %3082 = vrot.lane.b32.xlu0 %v2392, 115
    %v3083 = vpop.permute.xlu0 %3082
    %v3084 = vsel %vm1002, %v3081, %v3083
    %v3085 = vsel %vm1002, %v3079, %v3081
    %v3086 = vsel %vm1002, %v3077, %v3079
    %v3087 = vsel %vm1002, %v3083, %v3077
    %s3088 = scalar_lea.vmem [#allocation8], 896
    %v3089 = vld [vmem:[%s3088] sm:$0xff]
    %v3090 = vld [vmem:[%s3088 + $0x8] sm:$0xff]
    %v3091 = vld [vmem:[%s3088 + $0x10] sm:$0xff]
    %v3092 = vld [vmem:[%s3088 + $0x18] sm:$0xff]
    %v3093 = vmul.f32 %v3086, %v3089
    %v3094 = vmul.f32 %v3085, %v3090
    %v3095 = vmul.f32 %v3084, %v3091
    %v3096 = vmul.f32 %v3087, %v3092
    %v3097 = vadd.f32 %v3072, %v3093
    %v3098 = vadd.f32 %v3073, %v3094
    %v3099 = vadd.f32 %v3074, %v3095
    %v3100 = vadd.f32 %v3075, %v3096
    %3101 = vrot.lane.b32.xlu0 %v2389, 114
    %v3102 = vpop.permute.xlu0 %3101
    %3103 = vrot.lane.b32.xlu0 %v2390, 114
    %v3104 = vpop.permute.xlu0 %3103
    %3105 = vrot.lane.b32.xlu0 %v2391, 114
    %v3106 = vpop.permute.xlu0 %3105
    %3107 = vrot.lane.b32.xlu0 %v2392, 114
    %v3108 = vpop.permute.xlu0 %3107
    %v3109 = vsel %vm1032, %v3106, %v3108
    %v3110 = vsel %vm1032, %v3104, %v3106
    %v3111 = vsel %vm1032, %v3102, %v3104
    %v3112 = vsel %vm1032, %v3108, %v3102
    %s3113 = scalar_lea.vmem [#allocation8], 928
    %v3114 = vld [vmem:[%s3113] sm:$0xff]
    %v3115 = vld [vmem:[%s3113 + $0x8] sm:$0xff]
    %v3116 = vld [vmem:[%s3113 + $0x10] sm:$0xff]
    %v3117 = vld [vmem:[%s3113 + $0x18] sm:$0xff]
    %v3118 = vmul.f32 %v3111, %v3114
    %v3119 = vmul.f32 %v3110, %v3115
    %v3120 = vmul.f32 %v3109, %v3116
    %v3121 = vmul.f32 %v3112, %v3117
    %v3122 = vadd.f32 %v3097, %v3118
    %v3123 = vadd.f32 %v3098, %v3119
    %v3124 = vadd.f32 %v3099, %v3120
    %v3125 = vadd.f32 %v3100, %v3121
    %3126 = vrot.lane.b32.xlu0 %v2389, 113
    %v3127 = vpop.permute.xlu0 %3126
    %3128 = vrot.lane.b32.xlu0 %v2390, 113
    %v3129 = vpop.permute.xlu0 %3128
    %3130 = vrot.lane.b32.xlu0 %v2391, 113
    %v3131 = vpop.permute.xlu0 %3130
    %3132 = vrot.lane.b32.xlu0 %v2392, 113
    %v3133 = vpop.permute.xlu0 %3132
    %v3134 = vsel %vm1062, %v3131, %v3133
    %v3135 = vsel %vm1062, %v3129, %v3131
    %v3136 = vsel %vm1062, %v3127, %v3129
    %v3137 = vsel %vm1062, %v3133, %v3127
    %s3138 = scalar_lea.vmem [#allocation8], 960
    %v3139 = vld [vmem:[%s3138] sm:$0xff]
    %v3140 = vld [vmem:[%s3138 + $0x8] sm:$0xff]
    %v3141 = vld [vmem:[%s3138 + $0x10] sm:$0xff]
    %v3142 = vld [vmem:[%s3138 + $0x18] sm:$0xff]
    %v3143 = vmul.f32 %v3136, %v3139
    %v3144 = vmul.f32 %v3135, %v3140
    %v3145 = vmul.f32 %v3134, %v3141
    %v3146 = vmul.f32 %v3137, %v3142
    %v3147 = vadd.f32 %v3122, %v3143
    %v3148 = vadd.f32 %v3123, %v3144
    %v3149 = vadd.f32 %v3124, %v3145
    %v3150 = vadd.f32 %v3125, %v3146
    %3151 = vrot.lane.b32.xlu0 %v2389, 112
    %v3152 = vpop.permute.xlu0 %3151
    %3153 = vrot.lane.b32.xlu0 %v2390, 112
    %v3154 = vpop.permute.xlu0 %3153
    %3155 = vrot.lane.b32.xlu0 %v2391, 112
    %v3156 = vpop.permute.xlu0 %3155
    %3157 = vrot.lane.b32.xlu0 %v2392, 112
    %v3158 = vpop.permute.xlu0 %3157
    %v3159 = vsel %vm1092, %v3156, %v3158
    %v3160 = vsel %vm1092, %v3154, %v3156
    %v3161 = vsel %vm1092, %v3152, %v3154
    %v3162 = vsel %vm1092, %v3158, %v3152
    %s3163 = scalar_lea.vmem [#allocation8], 992
    %v3164 = vld [vmem:[%s3163] sm:$0xff]
    %v3165 = vld [vmem:[%s3163 + $0x8] sm:$0xff]
    %v3166 = vld [vmem:[%s3163 + $0x10] sm:$0xff]
    %v3167 = vld [vmem:[%s3163 + $0x18] sm:$0xff]
    %v3168 = vmul.f32 %v3161, %v3164
    %v3169 = vmul.f32 %v3160, %v3165
    %v3170 = vmul.f32 %v3159, %v3166
    %v3171 = vmul.f32 %v3162, %v3167
    %v3172 = vadd.f32 %v3147, %v3168
    %v3173 = vadd.f32 %v3148, %v3169
    %v3174 = vadd.f32 %v3149, %v3170
    %v3175 = vadd.f32 %v3150, %v3171
    %3176 = vrot.lane.b32.xlu0 %v2389, 111
    %v3177 = vpop.permute.xlu0 %3176
    %3178 = vrot.lane.b32.xlu0 %v2390, 111
    %v3179 = vpop.permute.xlu0 %3178
    %3180 = vrot.lane.b32.xlu0 %v2391, 111
    %v3181 = vpop.permute.xlu0 %3180
    %3182 = vrot.lane.b32.xlu0 %v2392, 111
    %v3183 = vpop.permute.xlu0 %3182
    %v3184 = vsel %vm1122, %v3181, %v3183
    %v3185 = vsel %vm1122, %v3179, %v3181
    %v3186 = vsel %vm1122, %v3177, %v3179
    %v3187 = vsel %vm1122, %v3183, %v3177
    %s3188 = scalar_lea.vmem [#allocation8], 1024
    %v3189 = vld [vmem:[%s3188] sm:$0xff]
    %v3190 = vld [vmem:[%s3188 + $0x8] sm:$0xff]
    %v3191 = vld [vmem:[%s3188 + $0x10] sm:$0xff]
    %v3192 = vld [vmem:[%s3188 + $0x18] sm:$0xff]
    %v3193 = vmul.f32 %v3186, %v3189
    %v3194 = vmul.f32 %v3185, %v3190
    %v3195 = vmul.f32 %v3184, %v3191
    %v3196 = vmul.f32 %v3187, %v3192
    %v3197 = vadd.f32 %v3172, %v3193
    %v3198 = vadd.f32 %v3173, %v3194
    %v3199 = vadd.f32 %v3174, %v3195
    %v3200 = vadd.f32 %v3175, %v3196
    %3201 = vrot.lane.b32.xlu0 %v2389, 110
    %v3202 = vpop.permute.xlu0 %3201
    %3203 = vrot.lane.b32.xlu0 %v2390, 110
    %v3204 = vpop.permute.xlu0 %3203
    %3205 = vrot.lane.b32.xlu0 %v2391, 110
    %v3206 = vpop.permute.xlu0 %3205
    %3207 = vrot.lane.b32.xlu0 %v2392, 110
    %v3208 = vpop.permute.xlu0 %3207
    %v3209 = vsel %vm1152, %v3206, %v3208
    %v3210 = vsel %vm1152, %v3204, %v3206
    %v3211 = vsel %vm1152, %v3202, %v3204
    %v3212 = vsel %vm1152, %v3208, %v3202
    %s3213 = scalar_lea.vmem [#allocation8], 1056
    %v3214 = vld [vmem:[%s3213] sm:$0xff]
    %v3215 = vld [vmem:[%s3213 + $0x8] sm:$0xff]
    %v3216 = vld [vmem:[%s3213 + $0x10] sm:$0xff]
    %v3217 = vld [vmem:[%s3213 + $0x18] sm:$0xff]
    %v3218 = vmul.f32 %v3211, %v3214
    %v3219 = vmul.f32 %v3210, %v3215
    %v3220 = vmul.f32 %v3209, %v3216
    %v3221 = vmul.f32 %v3212, %v3217
    %v3222 = vadd.f32 %v3197, %v3218
    %v3223 = vadd.f32 %v3198, %v3219
    %v3224 = vadd.f32 %v3199, %v3220
    %v3225 = vadd.f32 %v3200, %v3221
    %3226 = vrot.lane.b32.xlu0 %v2389, 109
    %v3227 = vpop.permute.xlu0 %3226
    %3228 = vrot.lane.b32.xlu0 %v2390, 109
    %v3229 = vpop.permute.xlu0 %3228
    %3230 = vrot.lane.b32.xlu0 %v2391, 109
    %v3231 = vpop.permute.xlu0 %3230
    %3232 = vrot.lane.b32.xlu0 %v2392, 109
    %v3233 = vpop.permute.xlu0 %3232
    %v3234 = vsel %vm1182, %v3231, %v3233
    %v3235 = vsel %vm1182, %v3229, %v3231
    %v3236 = vsel %vm1182, %v3227, %v3229
    %v3237 = vsel %vm1182, %v3233, %v3227
    %s3238 = scalar_lea.vmem [#allocation8], 1088
    %v3239 = vld [vmem:[%s3238] sm:$0xff]
    %v3240 = vld [vmem:[%s3238 + $0x8] sm:$0xff]
    %v3241 = vld [vmem:[%s3238 + $0x10] sm:$0xff]
    %v3242 = vld [vmem:[%s3238 + $0x18] sm:$0xff]
    %v3243 = vmul.f32 %v3236, %v3239
    %v3244 = vmul.f32 %v3235, %v3240
    %v3245 = vmul.f32 %v3234, %v3241
    %v3246 = vmul.f32 %v3237, %v3242
    %v3247 = vadd.f32 %v3222, %v3243
    %v3248 = vadd.f32 %v3223, %v3244
    %v3249 = vadd.f32 %v3224, %v3245
    %v3250 = vadd.f32 %v3225, %v3246
    %3251 = vrot.lane.b32.xlu0 %v2389, 99
    %v3252 = vpop.permute.xlu0 %3251
    %3253 = vrot.lane.b32.xlu0 %v2390, 99
    %v3254 = vpop.permute.xlu0 %3253
    %3255 = vrot.lane.b32.xlu0 %v2391, 99
    %v3256 = vpop.permute.xlu0 %3255
    %3257 = vrot.lane.b32.xlu0 %v2392, 99
    %v3258 = vpop.permute.xlu0 %3257
    %v3259 = vsel %vm1212, %v3256, %v3258
    %v3260 = vsel %vm1212, %v3254, %v3256
    %v3261 = vsel %vm1212, %v3252, %v3254
    %v3262 = vsel %vm1212, %v3258, %v3252
    %s3263 = scalar_lea.vmem [#allocation8], 1120
    %v3264 = vld [vmem:[%s3263] sm:$0xff]
    %v3265 = vld [vmem:[%s3263 + $0x8] sm:$0xff]
    %v3266 = vld [vmem:[%s3263 + $0x10] sm:$0xff]
    %v3267 = vld [vmem:[%s3263 + $0x18] sm:$0xff]
    %v3268 = vmul.f32 %v3261, %v3264
    %v3269 = vmul.f32 %v3260, %v3265
    %v3270 = vmul.f32 %v3259, %v3266
    %v3271 = vmul.f32 %v3262, %v3267
    %v3272 = vadd.f32 %v3247, %v3268
    %v3273 = vadd.f32 %v3248, %v3269
    %v3274 = vadd.f32 %v3249, %v3270
    %v3275 = vadd.f32 %v3250, %v3271
    %3276 = vrot.lane.b32.xlu0 %v2389, 98
    %v3277 = vpop.permute.xlu0 %3276
    %3278 = vrot.lane.b32.xlu0 %v2390, 98
    %v3279 = vpop.permute.xlu0 %3278
    %3280 = vrot.lane.b32.xlu0 %v2391, 98
    %v3281 = vpop.permute.xlu0 %3280
    %3282 = vrot.lane.b32.xlu0 %v2392, 98
    %v3283 = vpop.permute.xlu0 %3282
    %v3284 = vsel %vm1242, %v3281, %v3283
    %v3285 = vsel %vm1242, %v3279, %v3281
    %v3286 = vsel %vm1242, %v3277, %v3279
    %v3287 = vsel %vm1242, %v3283, %v3277
    %s3288 = scalar_lea.vmem [#allocation8], 1152
    %v3289 = vld [vmem:[%s3288] sm:$0xff]
    %v3290 = vld [vmem:[%s3288 + $0x8] sm:$0xff]
    %v3291 = vld [vmem:[%s3288 + $0x10] sm:$0xff]
    %v3292 = vld [vmem:[%s3288 + $0x18] sm:$0xff]
    %v3293 = vmul.f32 %v3286, %v3289
    %v3294 = vmul.f32 %v3285, %v3290
    %v3295 = vmul.f32 %v3284, %v3291
    %v3296 = vmul.f32 %v3287, %v3292
    %v3297 = vadd.f32 %v3272, %v3293
    %v3298 = vadd.f32 %v3273, %v3294
    %v3299 = vadd.f32 %v3274, %v3295
    %v3300 = vadd.f32 %v3275, %v3296
    %3301 = vrot.lane.b32.xlu0 %v2389, 97
    %v3302 = vpop.permute.xlu0 %3301
    %3303 = vrot.lane.b32.xlu0 %v2390, 97
    %v3304 = vpop.permute.xlu0 %3303
    %3305 = vrot.lane.b32.xlu0 %v2391, 97
    %v3306 = vpop.permute.xlu0 %3305
    %3307 = vrot.lane.b32.xlu0 %v2392, 97
    %v3308 = vpop.permute.xlu0 %3307
    %v3309 = vsel %vm1272, %v3306, %v3308
    %v3310 = vsel %vm1272, %v3304, %v3306
    %v3311 = vsel %vm1272, %v3302, %v3304
    %v3312 = vsel %vm1272, %v3308, %v3302
    %s3313 = scalar_lea.vmem [#allocation8], 1184
    %v3314 = vld [vmem:[%s3313] sm:$0xff]
    %v3315 = vld [vmem:[%s3313 + $0x8] sm:$0xff]
    %v3316 = vld [vmem:[%s3313 + $0x10] sm:$0xff]
    %v3317 = vld [vmem:[%s3313 + $0x18] sm:$0xff]
    %v3318 = vmul.f32 %v3311, %v3314
    %v3319 = vmul.f32 %v3310, %v3315
    %v3320 = vmul.f32 %v3309, %v3316
    %v3321 = vmul.f32 %v3312, %v3317
    %v3322 = vadd.f32 %v3297, %v3318
    %v3323 = vadd.f32 %v3298, %v3319
    %v3324 = vadd.f32 %v3299, %v3320
    %v3325 = vadd.f32 %v3300, %v3321
    %3326 = vrot.lane.b32.xlu0 %v2389, 96
    %v3327 = vpop.permute.xlu0 %3326
    %3328 = vrot.lane.b32.xlu0 %v2390, 96
    %v3329 = vpop.permute.xlu0 %3328
    %3330 = vrot.lane.b32.xlu0 %v2391, 96
    %v3331 = vpop.permute.xlu0 %3330
    %3332 = vrot.lane.b32.xlu0 %v2392, 96
    %v3333 = vpop.permute.xlu0 %3332
    %v3334 = vsel %vm1302, %v3331, %v3333
    %v3335 = vsel %vm1302, %v3329, %v3331
    %v3336 = vsel %vm1302, %v3327, %v3329
    %v3337 = vsel %vm1302, %v3333, %v3327
    %s3338 = scalar_lea.vmem [#allocation8], 1216
    %v3339 = vld [vmem:[%s3338] sm:$0xff]
    %v3340 = vld [vmem:[%s3338 + $0x8] sm:$0xff]
    %v3341 = vld [vmem:[%s3338 + $0x10] sm:$0xff]
    %v3342 = vld [vmem:[%s3338 + $0x18] sm:$0xff]
    %v3343 = vmul.f32 %v3336, %v3339
    %v3344 = vmul.f32 %v3335, %v3340
    %v3345 = vmul.f32 %v3334, %v3341
    %v3346 = vmul.f32 %v3337, %v3342
    %v3347 = vadd.f32 %v3322, %v3343
    %v3348 = vadd.f32 %v3323, %v3344
    %v3349 = vadd.f32 %v3324, %v3345
    %v3350 = vadd.f32 %v3325, %v3346
    %3351 = vrot.lane.b32.xlu0 %v2389, 95
    %v3352 = vpop.permute.xlu0 %3351
    %3353 = vrot.lane.b32.xlu0 %v2390, 95
    %v3354 = vpop.permute.xlu0 %3353
    %3355 = vrot.lane.b32.xlu0 %v2391, 95
    %v3356 = vpop.permute.xlu0 %3355
    %3357 = vrot.lane.b32.xlu0 %v2392, 95
    %v3358 = vpop.permute.xlu0 %3357
    %v3359 = vsel %vm1332, %v3356, %v3358
    %v3360 = vsel %vm1332, %v3354, %v3356
    %v3361 = vsel %vm1332, %v3352, %v3354
    %v3362 = vsel %vm1332, %v3358, %v3352
    %s3363 = scalar_lea.vmem [#allocation8], 1248
    %v3364 = vld [vmem:[%s3363] sm:$0xff]
    %v3365 = vld [vmem:[%s3363 + $0x8] sm:$0xff]
    %v3366 = vld [vmem:[%s3363 + $0x10] sm:$0xff]
    %v3367 = vld [vmem:[%s3363 + $0x18] sm:$0xff]
    %v3368 = vmul.f32 %v3361, %v3364
    %v3369 = vmul.f32 %v3360, %v3365
    %v3370 = vmul.f32 %v3359, %v3366
    %v3371 = vmul.f32 %v3362, %v3367
    %v3372 = vadd.f32 %v3347, %v3368
    %v3373 = vadd.f32 %v3348, %v3369
    %v3374 = vadd.f32 %v3349, %v3370
    %v3375 = vadd.f32 %v3350, %v3371
    %3376 = vrot.lane.b32.xlu0 %v2389, 94
    %v3377 = vpop.permute.xlu0 %3376
    %3378 = vrot.lane.b32.xlu0 %v2390, 94
    %v3379 = vpop.permute.xlu0 %3378
    %3380 = vrot.lane.b32.xlu0 %v2391, 94
    %v3381 = vpop.permute.xlu0 %3380
    %3382 = vrot.lane.b32.xlu0 %v2392, 94
    %v3383 = vpop.permute.xlu0 %3382
    %v3384 = vsel %vm1362, %v3381, %v3383
    %v3385 = vsel %vm1362, %v3379, %v3381
    %v3386 = vsel %vm1362, %v3377, %v3379
    %v3387 = vsel %vm1362, %v3383, %v3377
    %s3388 = scalar_lea.vmem [#allocation8], 1280
    %v3389 = vld [vmem:[%s3388] sm:$0xff]
    %v3390 = vld [vmem:[%s3388 + $0x8] sm:$0xff]
    %v3391 = vld [vmem:[%s3388 + $0x10] sm:$0xff]
    %v3392 = vld [vmem:[%s3388 + $0x18] sm:$0xff]
    %v3393 = vmul.f32 %v3386, %v3389
    %v3394 = vmul.f32 %v3385, %v3390
    %v3395 = vmul.f32 %v3384, %v3391
    %v3396 = vmul.f32 %v3387, %v3392
    %v3397 = vadd.f32 %v3372, %v3393
    %v3398 = vadd.f32 %v3373, %v3394
    %v3399 = vadd.f32 %v3374, %v3395
    %v3400 = vadd.f32 %v3375, %v3396
    %3401 = vrot.lane.b32.xlu0 %v2389, 93
    %v3402 = vpop.permute.xlu0 %3401
    %3403 = vrot.lane.b32.xlu0 %v2390, 93
    %v3404 = vpop.permute.xlu0 %3403
    %3405 = vrot.lane.b32.xlu0 %v2391, 93
    %v3406 = vpop.permute.xlu0 %3405
    %3407 = vrot.lane.b32.xlu0 %v2392, 93
    %v3408 = vpop.permute.xlu0 %3407
    %v3409 = vsel %vm1392, %v3406, %v3408
    %v3410 = vsel %vm1392, %v3404, %v3406
    %v3411 = vsel %vm1392, %v3402, %v3404
    %v3412 = vsel %vm1392, %v3408, %v3402
    %s3413 = scalar_lea.vmem [#allocation8], 1312
    %v3414 = vld [vmem:[%s3413] sm:$0xff]
    %v3415 = vld [vmem:[%s3413 + $0x8] sm:$0xff]
    %v3416 = vld [vmem:[%s3413 + $0x10] sm:$0xff]
    %v3417 = vld [vmem:[%s3413 + $0x18] sm:$0xff]
    %v3418 = vmul.f32 %v3411, %v3414
    %v3419 = vmul.f32 %v3410, %v3415
    %v3420 = vmul.f32 %v3409, %v3416
    %v3421 = vmul.f32 %v3412, %v3417
    %v3422 = vadd.f32 %v3397, %v3418
    %v3423 = vadd.f32 %v3398, %v3419
    %v3424 = vadd.f32 %v3399, %v3420
    %v3425 = vadd.f32 %v3400, %v3421
    %3426 = vrot.lane.b32.xlu0 %v2389, 83
    %v3427 = vpop.permute.xlu0 %3426
    %3428 = vrot.lane.b32.xlu0 %v2390, 83
    %v3429 = vpop.permute.xlu0 %3428
    %3430 = vrot.lane.b32.xlu0 %v2391, 83
    %v3431 = vpop.permute.xlu0 %3430
    %3432 = vrot.lane.b32.xlu0 %v2392, 83
    %v3433 = vpop.permute.xlu0 %3432
    %v3434 = vsel %vm1422, %v3431, %v3433
    %v3435 = vsel %vm1422, %v3429, %v3431
    %v3436 = vsel %vm1422, %v3427, %v3429
    %v3437 = vsel %vm1422, %v3433, %v3427
    %s3438 = scalar_lea.vmem [#allocation8], 1344
    %v3439 = vld [vmem:[%s3438] sm:$0xff]
    %v3440 = vld [vmem:[%s3438 + $0x8] sm:$0xff]
    %v3441 = vld [vmem:[%s3438 + $0x10] sm:$0xff]
    %v3442 = vld [vmem:[%s3438 + $0x18] sm:$0xff]
    %v3443 = vmul.f32 %v3436, %v3439
    %v3444 = vmul.f32 %v3435, %v3440
    %v3445 = vmul.f32 %v3434, %v3441
    %v3446 = vmul.f32 %v3437, %v3442
    %v3447 = vadd.f32 %v3422, %v3443
    %v3448 = vadd.f32 %v3423, %v3444
    %v3449 = vadd.f32 %v3424, %v3445
    %v3450 = vadd.f32 %v3425, %v3446
    %3451 = vrot.lane.b32.xlu0 %v2389, 82
    %v3452 = vpop.permute.xlu0 %3451
    %3453 = vrot.lane.b32.xlu0 %v2390, 82
    %v3454 = vpop.permute.xlu0 %3453
    %3455 = vrot.lane.b32.xlu0 %v2391, 82
    %v3456 = vpop.permute.xlu0 %3455
    %3457 = vrot.lane.b32.xlu0 %v2392, 82
    %v3458 = vpop.permute.xlu0 %3457
    %v3459 = vsel %vm1452, %v3456, %v3458
    %v3460 = vsel %vm1452, %v3454, %v3456
    %v3461 = vsel %vm1452, %v3452, %v3454
    %v3462 = vsel %vm1452, %v3458, %v3452
    %s3463 = scalar_lea.vmem [#allocation8], 1376
    %v3464 = vld [vmem:[%s3463] sm:$0xff]
    %v3465 = vld [vmem:[%s3463 + $0x8] sm:$0xff]
    %v3466 = vld [vmem:[%s3463 + $0x10] sm:$0xff]
    %v3467 = vld [vmem:[%s3463 + $0x18] sm:$0xff]
    %v3468 = vmul.f32 %v3461, %v3464
    %v3469 = vmul.f32 %v3460, %v3465
    %v3470 = vmul.f32 %v3459, %v3466
    %v3471 = vmul.f32 %v3462, %v3467
    %v3472 = vadd.f32 %v3447, %v3468
    %v3473 = vadd.f32 %v3448, %v3469
    %v3474 = vadd.f32 %v3449, %v3470
    %v3475 = vadd.f32 %v3450, %v3471
    %3476 = vrot.lane.b32.xlu0 %v2389, 81
    %v3477 = vpop.permute.xlu0 %3476
    %3478 = vrot.lane.b32.xlu0 %v2390, 81
    %v3479 = vpop.permute.xlu0 %3478
    %3480 = vrot.lane.b32.xlu0 %v2391, 81
    %v3481 = vpop.permute.xlu0 %3480
    %3482 = vrot.lane.b32.xlu0 %v2392, 81
    %v3483 = vpop.permute.xlu0 %3482
    %v3484 = vsel %vm1482, %v3481, %v3483
    %v3485 = vsel %vm1482, %v3479, %v3481
    %v3486 = vsel %vm1482, %v3477, %v3479
    %v3487 = vsel %vm1482, %v3483, %v3477
    %s3488 = scalar_lea.vmem [#allocation8], 1408
    %v3489 = vld [vmem:[%s3488] sm:$0xff]
    %v3490 = vld [vmem:[%s3488 + $0x8] sm:$0xff]
    %v3491 = vld [vmem:[%s3488 + $0x10] sm:$0xff]
    %v3492 = vld [vmem:[%s3488 + $0x18] sm:$0xff]
    %v3493 = vmul.f32 %v3486, %v3489
    %v3494 = vmul.f32 %v3485, %v3490
    %v3495 = vmul.f32 %v3484, %v3491
    %v3496 = vmul.f32 %v3487, %v3492
    %v3497 = vadd.f32 %v3472, %v3493
    %v3498 = vadd.f32 %v3473, %v3494
    %v3499 = vadd.f32 %v3474, %v3495
    %v3500 = vadd.f32 %v3475, %v3496
    %3501 = vrot.lane.b32.xlu0 %v2389, 80
    %v3502 = vpop.permute.xlu0 %3501
    %3503 = vrot.lane.b32.xlu0 %v2390, 80
    %v3504 = vpop.permute.xlu0 %3503
    %3505 = vrot.lane.b32.xlu0 %v2391, 80
    %v3506 = vpop.permute.xlu0 %3505
    %3507 = vrot.lane.b32.xlu0 %v2392, 80
    %v3508 = vpop.permute.xlu0 %3507
    %v3509 = vsel %vm1512, %v3506, %v3508
    %v3510 = vsel %vm1512, %v3504, %v3506
    %v3511 = vsel %vm1512, %v3502, %v3504
    %v3512 = vsel %vm1512, %v3508, %v3502
    %s3513 = scalar_lea.vmem [#allocation8], 1440
    %v3514 = vld [vmem:[%s3513] sm:$0xff]
    %v3515 = vld [vmem:[%s3513 + $0x8] sm:$0xff]
    %v3516 = vld [vmem:[%s3513 + $0x10] sm:$0xff]
    %v3517 = vld [vmem:[%s3513 + $0x18] sm:$0xff]
    %v3518 = vmul.f32 %v3511, %v3514
    %v3519 = vmul.f32 %v3510, %v3515
    %v3520 = vmul.f32 %v3509, %v3516
    %v3521 = vmul.f32 %v3512, %v3517
    %v3522 = vadd.f32 %v3497, %v3518
    %v3523 = vadd.f32 %v3498, %v3519
    %v3524 = vadd.f32 %v3499, %v3520
    %v3525 = vadd.f32 %v3500, %v3521
    %3526 = vrot.lane.b32.xlu0 %v2389, 79
    %v3527 = vpop.permute.xlu0 %3526
    %3528 = vrot.lane.b32.xlu0 %v2390, 79
    %v3529 = vpop.permute.xlu0 %3528
    %3530 = vrot.lane.b32.xlu0 %v2391, 79
    %v3531 = vpop.permute.xlu0 %3530
    %3532 = vrot.lane.b32.xlu0 %v2392, 79
    %v3533 = vpop.permute.xlu0 %3532
    %v3534 = vsel %vm1542, %v3531, %v3533
    %v3535 = vsel %vm1542, %v3529, %v3531
    %v3536 = vsel %vm1542, %v3527, %v3529
    %v3537 = vsel %vm1542, %v3533, %v3527
    %s3538 = scalar_lea.vmem [#allocation8], 1472
    %v3539 = vld [vmem:[%s3538] sm:$0xff]
    %v3540 = vld [vmem:[%s3538 + $0x8] sm:$0xff]
    %v3541 = vld [vmem:[%s3538 + $0x10] sm:$0xff]
    %v3542 = vld [vmem:[%s3538 + $0x18] sm:$0xff]
    %v3543 = vmul.f32 %v3536, %v3539
    %v3544 = vmul.f32 %v3535, %v3540
    %v3545 = vmul.f32 %v3534, %v3541
    %v3546 = vmul.f32 %v3537, %v3542
    %v3547 = vadd.f32 %v3522, %v3543
    %v3548 = vadd.f32 %v3523, %v3544
    %v3549 = vadd.f32 %v3524, %v3545
    %v3550 = vadd.f32 %v3525, %v3546
    %3551 = vrot.lane.b32.xlu0 %v2389, 78
    %v3552 = vpop.permute.xlu0 %3551
    %3553 = vrot.lane.b32.xlu0 %v2390, 78
    %v3554 = vpop.permute.xlu0 %3553
    %3555 = vrot.lane.b32.xlu0 %v2391, 78
    %v3556 = vpop.permute.xlu0 %3555
    %3557 = vrot.lane.b32.xlu0 %v2392, 78
    %v3558 = vpop.permute.xlu0 %3557
    %v3559 = vsel %vm1572, %v3556, %v3558
    %v3560 = vsel %vm1572, %v3554, %v3556
    %v3561 = vsel %vm1572, %v3552, %v3554
    %v3562 = vsel %vm1572, %v3558, %v3552
    %s3563 = scalar_lea.vmem [#allocation8], 1504
    %v3564 = vld [vmem:[%s3563] sm:$0xff]
    %v3565 = vld [vmem:[%s3563 + $0x8] sm:$0xff]
    %v3566 = vld [vmem:[%s3563 + $0x10] sm:$0xff]
    %v3567 = vld [vmem:[%s3563 + $0x18] sm:$0xff]
    %v3568 = vmul.f32 %v3561, %v3564
    %v3569 = vmul.f32 %v3560, %v3565
    %v3570 = vmul.f32 %v3559, %v3566
    %v3571 = vmul.f32 %v3562, %v3567
    %v3572 = vadd.f32 %v3547, %v3568
    %v3573 = vadd.f32 %v3548, %v3569
    %v3574 = vadd.f32 %v3549, %v3570
    %v3575 = vadd.f32 %v3550, %v3571
    %3576 = vrot.lane.b32.xlu0 %v2389, 77
    %v3577 = vpop.permute.xlu0 %3576
    %3578 = vrot.lane.b32.xlu0 %v2390, 77
    %v3579 = vpop.permute.xlu0 %3578
    %3580 = vrot.lane.b32.xlu0 %v2391, 77
    %v3581 = vpop.permute.xlu0 %3580
    %3582 = vrot.lane.b32.xlu0 %v2392, 77
    %v3583 = vpop.permute.xlu0 %3582
    %v3584 = vsel %vm1602, %v3581, %v3583
    %v3585 = vsel %vm1602, %v3579, %v3581
    %v3586 = vsel %vm1602, %v3577, %v3579
    %v3587 = vsel %vm1602, %v3583, %v3577
    %s3588 = scalar_lea.vmem [#allocation8], 1536
    %v3589 = vld [vmem:[%s3588] sm:$0xff]
    %v3590 = vld [vmem:[%s3588 + $0x8] sm:$0xff]
    %v3591 = vld [vmem:[%s3588 + $0x10] sm:$0xff]
    %v3592 = vld [vmem:[%s3588 + $0x18] sm:$0xff]
    %v3593 = vmul.f32 %v3586, %v3589
    %v3594 = vmul.f32 %v3585, %v3590
    %v3595 = vmul.f32 %v3584, %v3591
    %v3596 = vmul.f32 %v3587, %v3592
    %v3597 = vadd.f32 %v3572, %v3593
    %v3598 = vadd.f32 %v3573, %v3594
    %v3599 = vadd.f32 %v3574, %v3595
    %v3600 = vadd.f32 %v3575, %v3596
    %3601 = vset.pattern.permute.xlu0 53
    %3602 = vperm.xlu0 %3601, %v75
    %v3603 = vpop.permute.xlu0 %3602
    %v3605 = vadd.f32 %v3597, %v3603
    %v3606 = vadd.f32 %v3598, %v3603
    %v3607 = vadd.f32 %v3599, %v3603
    %v3608 = vadd.f32 %v3600, %v3603
    %vm3609 = vmand %vm2163, %vm2169
    %v3610 = vsel %vm3609, 1, 0
    %v3611 = vcvt.s32.f32 %v3610
    %v3612 = vadd.f32 %v3605, %v3606
    %3613 = vadd.xlane.f32.xlu0 %v3612
    %v3614 = vpop.xlane.xlu0 %3613
    %v3615 = vmul.f32 %v3614, %v1639
    %v3616 = vrot.slane %v3615, 4
    %v3617 = vadd.f32 %v3615, %v3616
    %v3618 = vrot.slane %v3617, 2
    %v3619 = vadd.f32 %v3617, %v3618
    %v3620 = vrot.slane %v3619, 1
    %v3621 = vadd.f32 %v3619, %v3620
    %v3622 = vmul.f32 %v1639, %v3621
    %v3623 = vadd.f32 %v3622, 0.0
    %v3624 = vmul.f32 %v3614, %v3611
    %v3625 = vrot.slane %v3624, 4
    %v3626 = vadd.f32 %v3624, %v3625
    %v3627 = vrot.slane %v3626, 2
    %v3628 = vadd.f32 %v3626, %v3627
    %v3629 = vrot.slane %v3628, 1
    %v3630 = vadd.f32 %v3628, %v3629
    %v3631 = vmul.f32 %v3611, %v3630
    %v3632 = vadd.f32 %v3623, %v3631
    %v3633 = vmul.f32 %v3632, 0.0009765625
    %v3634 = vsub.f32 %v3605, %v3633
    %v3635 = vsub.f32 %v3606, %v3633
    %v3636 = vmul.f32 %v3634, %v3634
    %v3637 = vmul.f32 %v3635, %v3635
    %v3638 = vadd.f32 %v3636, %v3637
    %3639 = vadd.xlane.f32.xlu0 %v3638
    %v3640 = vpop.xlane.xlu0 %3639
    %v3641 = vmul.f32 %v3640, %v1639
    %v3642 = vrot.slane %v3641, 4
    %v3643 = vadd.f32 %v3641, %v3642
    %v3644 = vrot.slane %v3643, 2
    %v3645 = vadd.f32 %v3643, %v3644
    %v3646 = vrot.slane %v3645, 1
    %v3647 = vadd.f32 %v3645, %v3646
    %v3648 = vmul.f32 %v1639, %v3647
    %v3649 = vadd.f32 %v3648, 0.0
    %v3650 = vmul.f32 %v3640, %v3611
    %v3651 = vrot.slane %v3650, 4
    %v3652 = vadd.f32 %v3650, %v3651
    %v3653 = vrot.slane %v3652, 2
    %v3654 = vadd.f32 %v3652, %v3653
    %v3655 = vrot.slane %v3654, 1
    %v3656 = vadd.f32 %v3654, %v3655
    %v3657 = vmul.f32 %v3611, %v3656
    %v3658 = vadd.f32 %v3649, %v3657
    %v3659 = vmul.f32 %v3658, 0.0009765625
    %v3660 = vadd.f32 %v3659, 1e-05
    %v3661 = vrsqrt.pop %v3660
    %v3662 = vmul.f32 %v3634, %v3661
    %v3663 = vmul.f32 %v3635, %v3661
    %v3664 = vadd.f32 %v3607, %v3608
    %3665 = vadd.xlane.f32.xlu0 %v3664
    %v3666 = vpop.xlane.xlu0 %3665
    %v3667 = vmul.f32 %v3666, %v1639
    %v3668 = vrot.slane %v3667, 4
    %v3669 = vadd.f32 %v3667, %v3668
    %v3670 = vrot.slane %v3669, 2
    %v3671 = vadd.f32 %v3669, %v3670
    %v3672 = vrot.slane %v3671, 1
    %v3673 = vadd.f32 %v3671, %v3672
    %v3674 = vmul.f32 %v1639, %v3673
    %v3675 = vadd.f32 %v3674, 0.0
    %v3676 = vmul.f32 %v3666, %v3611
    %v3677 = vrot.slane %v3676, 4
    %v3678 = vadd.f32 %v3676, %v3677
    %v3679 = vrot.slane %v3678, 2
    %v3680 = vadd.f32 %v3678, %v3679
    %v3681 = vrot.slane %v3680, 1
    %v3682 = vadd.f32 %v3680, %v3681
    %v3683 = vmul.f32 %v3611, %v3682
    %v3684 = vadd.f32 %v3675, %v3683
    %v3685 = vmul.f32 %v3684, 0.0009765625
    %v3686 = vsub.f32 %v3607, %v3685
    %v3687 = vsub.f32 %v3608, %v3685
    %v3688 = vmul.f32 %v3686, %v3686
    %v3689 = vmul.f32 %v3687, %v3687
    %v3690 = vadd.f32 %v3688, %v3689
    %3691 = vadd.xlane.f32.xlu0 %v3690
    %v3692 = vpop.xlane.xlu0 %3691
    %v3693 = vmul.f32 %v3692, %v1639
    %v3694 = vrot.slane %v3693, 4
    %v3695 = vadd.f32 %v3693, %v3694
    %v3696 = vrot.slane %v3695, 2
    %v3697 = vadd.f32 %v3695, %v3696
    %v3698 = vrot.slane %v3697, 1
    %v3699 = vadd.f32 %v3697, %v3698
    %v3700 = vmul.f32 %v1639, %v3699
    %v3701 = vadd.f32 %v3700, 0.0
    %v3702 = vmul.f32 %v3692, %v3611
    %v3703 = vrot.slane %v3702, 4
    %v3704 = vadd.f32 %v3702, %v3703
    %v3705 = vrot.slane %v3704, 2
    %v3706 = vadd.f32 %v3704, %v3705
    %v3707 = vrot.slane %v3706, 1
    %v3708 = vadd.f32 %v3706, %v3707
    %v3709 = vmul.f32 %v3611, %v3708
    %v3710 = vadd.f32 %v3701, %v3709
    %v3711 = vmul.f32 %v3710, 0.0009765625
    %v3712 = vadd.f32 %v3711, 1e-05
    %v3713 = vrsqrt.pop %v3712
    %v3714 = vmul.f32 %v3686, %v3713
    %v3715 = vmul.f32 %v3687, %v3713
    %3716 = vset.pattern.permute.xlu0 54
    %3717 = vperm.xlu0 %3716, %v75
    %v3718 = vpop.permute.xlu0 %3717
    %v3720 = vmul.f32 %v3662, %v3718
    %v3721 = vmul.f32 %v3663, %v3718
    %v3722 = vmul.f32 %v3714, %v3718
    %v3723 = vmul.f32 %v3715, %v3718
    %3724 = vset.pattern.permute.xlu0 55
    %3725 = vperm.xlu0 %3724, %v75
    %v3726 = vpop.permute.xlu0 %3725
    %v3728 = vadd.f32 %v3720, %v3726
    %v3729 = vadd.f32 %v3721, %v3726
    %v3730 = vadd.f32 %v3722, %v3726
    %v3731 = vadd.f32 %v3723, %v3726
    %3732 = vset.pattern.permute.xlu0 64
    %3733 = vperm.xlu0 %3732, %v75
    %v3734 = vpop.permute.xlu0 %3733
    %3737 = vset.pattern.permute.xlu0 64
    %3738 = vperm.xlu0 %3737, %v76
    %v3739 = vpop.permute.xlu0 %3738
    %3741 = vrot.lane.b32.xlu0 %v75, 72
    %v3742 = vpop.permute.xlu0 %3741
    %3743 = vrot.lane.b32.xlu0 %v76, 72
    %v3744 = vpop.permute.xlu0 %3743
    %v3745 = vsel %vm2010, %v3742, 0
    %v3747 = vsel %vm2010, %v3744, 0
    %3749 = vmatprep.subr.mxu0 %v3729
    %3750 = vmatpush1.msra.mxu0 %v3728
    %3751 = vmatprep.subr.mxu0 0.0
    %3752 = vmatpush1.msra.mxu0 0.0
    %3753 = vmatprep.subr.mxu0 0.0
    %3754 = vmatpush1.msra.mxu0 0.0
    %3755 = vmatprep.subr.mxu0 0.0
    %3756 = vmatpush1.msra.mxu0 0.0
    %3757 = vmatprep.subr.mxu0 0.0
    %3758 = vmatpush1.msra.mxu0 0.0
    %3759 = vmatprep.subr.mxu0 0.0
    %3760 = vmatpush1.msra.mxu0 0.0
    %3761 = vmatprep.subr.mxu0 0.0
    %3762 = vmatpush1.msra.mxu0 0.0
    %3763 = vmatprep.subr.mxu0 0.0
    %3764 = vmatpush1.msra.mxu0 0.0
    %3765 = vmatprep.subr.mxu0 0.0
    %3766 = vmatpush1.msra.mxu0 0.0
    %3767 = vmatprep.subr.mxu0 0.0
    %3768 = vmatpush1.msra.mxu0 0.0
    %3769 = vmatprep.subr.mxu0 0.0
    %3770 = vmatpush1.msra.mxu0 0.0
    %3771 = vmatprep.subr.mxu0 0.0
    %3772 = vmatpush1.msra.mxu0 0.0
    %3773 = vmatprep.subr.mxu0 0.0
    %3774 = vmatpush1.msra.mxu0 0.0
    %3775 = vmatprep.subr.mxu0 0.0
    %3776 = vmatpush1.msra.mxu0 0.0
    %3777 = vmatprep.subr.mxu0 0.0
    %3778 = vmatpush1.msra.mxu0 0.0
    %3779 = vmatprep.subr.mxu0 0.0
    %3780 = vmatpush1.msra.mxu0 0.0
    %3781 = vmatprep.subr.mxu0 0.0
    %3782 = vmatpush1.msra.mxu0 0.0
    %3783 = vmatprep.subr.mxu0 0.0
    %3784 = vmatpush1.msra.mxu0 0.0
    %3785 = vmatprep.subr.mxu0 0.0
    %3786 = vmatpush1.msra.mxu0 0.0
    %3787 = vmatprep.subr.mxu0 0.0
    %3788 = vmatpush1.msra.mxu0 0.0
    %3789 = vmatprep.subr.mxu0 0.0
    %3790 = vmatpush1.msra.mxu0 0.0
    %3791 = vmatprep.subr.mxu0 0.0
    %3792 = vmatpush1.msra.mxu0 0.0
    %3793 = vmatprep.subr.mxu0 0.0
    %3794 = vmatpush1.msra.mxu0 0.0
    %3795 = vmatprep.subr.mxu0 0.0
    %3796 = vmatpush1.msra.mxu0 0.0
    %3797 = vmatprep.subr.mxu0 0.0
    %3798 = vmatpush1.msra.mxu0 0.0
    %3799 = vmatprep.subr.mxu0 0.0
    %3800 = vmatpush1.msra.mxu0 0.0
    %3801 = vmatprep.subr.mxu0 0.0
    %3802 = vmatpush1.msra.mxu0 0.0
    %3803 = vmatprep.subr.mxu0 0.0
    %3804 = vmatpush1.msra.mxu0 0.0
    %3805 = vmatprep.subr.mxu0 0.0
    %3806 = vmatpush1.msra.mxu0 0.0
    %3807 = vmatprep.subr.mxu0 0.0
    %3808 = vmatpush1.msra.mxu0 0.0
    %3809 = vmatprep.subr.mxu0 0.0
    %3810 = vmatpush1.msra.mxu0 0.0
    %3811 = vmatprep.subr.mxu0 0.0
    %3812 = vmatpush1.msra.mxu0 0.0
    %3813 = vmatprep.mubr.f32.mxu0 0.0
    %3814 = vmatmul.mubr.f32.gmra.mrb[0].mxu0 %v3745
    %v3815 = vpop.f32.mrb[0].mxu0
    %v3816 = vadd.f32 %v3734, %v3815
    %v3817 = vpop.f32.mrb[0].mxu0
    %v3818 = vadd.f32 %v3734, %v3817
    %3819 = vmatprep.mubr.f32.mxu0 0.0
    %3820 = vmatmul.mubr.f32.gmra.mrb[0].mxu0 %v3747
    %v3821 = vpop.f32.mrb[0].mxu0
    %v3822 = vadd.f32 %v3739, %v3821
    %v3823 = vpop.f32.mrb[0].mxu0
    %v3824 = vadd.f32 %v3739, %v3823
    %3825 = vdwg.mxu0
    %3826 = vmatprep.subr.mxu0 %v3731
    %3827 = vmatpush1.msra.mxu0 %v3730
    %3828 = vmatprep.subr.mxu0 0.0
    %3829 = vmatpush1.msra.mxu0 0.0
    %3830 = vmatprep.subr.mxu0 0.0
    %3831 = vmatpush1.msra.mxu0 0.0
    %3832 = vmatprep.subr.mxu0 0.0
    %3833 = vmatpush1.msra.mxu0 0.0
    %3834 = vmatprep.subr.mxu0 0.0
    %3835 = vmatpush1.msra.mxu0 0.0
    %3836 = vmatprep.subr.mxu0 0.0
    %3837 = vmatpush1.msra.mxu0 0.0
    %3838 = vmatprep.subr.mxu0 0.0
    %3839 = vmatpush1.msra.mxu0 0.0
    %3840 = vmatprep.subr.mxu0 0.0
    %3841 = vmatpush1.msra.mxu0 0.0
    %3842 = vmatprep.subr.mxu0 0.0
    %3843 = vmatpush1.msra.mxu0 0.0
    %3844 = vmatprep.subr.mxu0 0.0
    %3845 = vmatpush1.msra.mxu0 0.0
    %3846 = vmatprep.subr.mxu0 0.0
    %3847 = vmatpush1.msra.mxu0 0.0
    %3848 = vmatprep.subr.mxu0 0.0
    %3849 = vmatpush1.msra.mxu0 0.0
    %3850 = vmatprep.subr.mxu0 0.0
    %3851 = vmatpush1.msra.mxu0 0.0
    %3852 = vmatprep.subr.mxu0 0.0
    %3853 = vmatpush1.msra.mxu0 0.0
    %3854 = vmatprep.subr.mxu0 0.0
    %3855 = vmatpush1.msra.mxu0 0.0
    %3856 = vmatprep.subr.mxu0 0.0
    %3857 = vmatpush1.msra.mxu0 0.0
    %3858 = vmatprep.subr.mxu0 0.0
    %3859 = vmatpush1.msra.mxu0 0.0
    %3860 = vmatprep.subr.mxu0 0.0
    %3861 = vmatpush1.msra.mxu0 0.0
    %3862 = vmatprep.subr.mxu0 0.0
    %3863 = vmatpush1.msra.mxu0 0.0
    %3864 = vmatprep.subr.mxu0 0.0
    %3865 = vmatpush1.msra.mxu0 0.0
    %3866 = vmatprep.subr.mxu0 0.0
    %3867 = vmatpush1.msra.mxu0 0.0
    %3868 = vmatprep.subr.mxu0 0.0
    %3869 = vmatpush1.msra.mxu0 0.0
    %3870 = vmatprep.subr.mxu0 0.0
    %3871 = vmatpush1.msra.mxu0 0.0
    %3872 = vmatprep.subr.mxu0 0.0
    %3873 = vmatpush1.msra.mxu0 0.0
    %3874 = vmatprep.subr.mxu0 0.0
    %3875 = vmatpush1.msra.mxu0 0.0
    %3876 = vmatprep.subr.mxu0 0.0
    %3877 = vmatpush1.msra.mxu0 0.0
    %3878 = vmatprep.subr.mxu0 0.0
    %3879 = vmatpush1.msra.mxu0 0.0
    %3880 = vmatprep.subr.mxu0 0.0
    %3881 = vmatpush1.msra.mxu0 0.0
    %3882 = vmatprep.subr.mxu0 0.0
    %3883 = vmatpush1.msra.mxu0 0.0
    %3884 = vmatprep.subr.mxu0 0.0
    %3885 = vmatpush1.msra.mxu0 0.0
    %3886 = vmatprep.subr.mxu0 0.0
    %3887 = vmatpush1.msra.mxu0 0.0
    %3888 = vmatprep.subr.mxu0 0.0
    %3889 = vmatpush1.msra.mxu0 0.0
    %3890 = vmatprep.mubr.f32.mxu0 0.0
    %3891 = vmatmul.mubr.f32.gmra.mrb[0].mxu0 %v3745
    %v3892 = vpop.f32.mrb[0].mxu0
    %v3893 = vadd.f32 %v3734, %v3892
    %v3894 = vpop.f32.mrb[0].mxu0
    %v3895 = vadd.f32 %v3734, %v3894
    %3896 = vmatprep.mubr.f32.mxu0 0.0
    %3897 = vmatmul.mubr.f32.gmra.mrb[0].mxu0 %v3747
    %v3898 = vpop.f32.mrb[0].mxu0
    %v3899 = vadd.f32 %v3739, %v3898
    %v3900 = vpop.f32.mrb[0].mxu0
    %v3901 = vadd.f32 %v3739, %v3900
    %3902 = vdwg.mxu0
    %v3903 = vmul.f32 %v3816, 0.5
    %v3904 = vmul.f32 %v3818, 0.5
    %v3905 = vmul.f32 %v3893, 0.5
    %v3906 = vmul.f32 %v3895, 0.5
    %v3907 = vmul.f32 %v3822, 0.5
    %v3908 = vmul.f32 %v3824, 0.5
    %v3909 = vmul.f32 %v3899, 0.5
    %v3910 = vmul.f32 %v3901, 0.5
    %v3911 = vmul.f32 %v3816, 0.70710677
    %v3912 = vmul.f32 %v3818, 0.70710677
    %v3913 = vmul.f32 %v3893, 0.70710677
    %v3914 = vmul.f32 %v3895, 0.70710677
    %v3915 = vmul.f32 %v3822, 0.70710677
    %v3916 = vmul.f32 %v3824, 0.70710677
    %v3917 = vmul.f32 %v3899, 0.70710677
    %v3918 = vmul.f32 %v3901, 0.70710677
    %vm3919 = vcmp.ge.f32.partialorder %v3911, 0.0
    %vm3920 = vcmp.ge.f32.partialorder %v3912, 0.0
    %vm3921 = vcmp.ge.f32.partialorder %v3913, 0.0
    %vm3922 = vcmp.ge.f32.partialorder %v3914, 0.0
    %vm3923 = vcmp.ge.f32.partialorder %v3915, 0.0
    %vm3924 = vcmp.ge.f32.partialorder %v3916, 0.0
    %vm3925 = vcmp.ge.f32.partialorder %v3917, 0.0
    %vm3926 = vcmp.ge.f32.partialorder %v3918, 0.0
    %v3927 = vsel %vm3919, 1.0, -1.0
    %v3928 = vsel %vm3920, 1.0, -1.0
    %v3929 = vsel %vm3921, 1.0, -1.0
    %v3930 = vsel %vm3922, 1.0, -1.0
    %v3931 = vsel %vm3923, 1.0, -1.0
    %v3932 = vsel %vm3924, 1.0, -1.0
    %v3933 = vsel %vm3925, 1.0, -1.0
    %v3934 = vsel %vm3926, 1.0, -1.0
    %v3935 = vand.u32 2147483647, %v3911
    %v3936 = vand.u32 2147483647, %v3912
    %v3937 = vand.u32 2147483647, %v3913
    %v3938 = vand.u32 2147483647, %v3914
    %v3939 = vand.u32 2147483647, %v3915
    %v3940 = vand.u32 2147483647, %v3916
    %v3941 = vand.u32 2147483647, %v3917
    %v3942 = vand.u32 2147483647, %v3918
    %v3943 = vmul.f32 %v3935, 0.3275911
    %v3944 = vmul.f32 %v3936, 0.3275911
    %v3945 = vmul.f32 %v3937, 0.3275911
    %v3946 = vmul.f32 %v3938, 0.3275911
    %v3947 = vmul.f32 %v3939, 0.3275911
    %v3948 = vmul.f32 %v3940, 0.3275911
    %v3949 = vmul.f32 %v3941, 0.3275911
    %v3950 = vmul.f32 %v3942, 0.3275911
    %v3951 = vadd.f32 %v3943, 1.0
    %v3952 = vadd.f32 %v3944, 1.0
    %v3953 = vadd.f32 %v3945, 1.0
    %v3954 = vadd.f32 %v3946, 1.0
    %v3955 = vadd.f32 %v3947, 1.0
    %v3956 = vadd.f32 %v3948, 1.0
    %v3957 = vadd.f32 %v3949, 1.0
    %v3958 = vadd.f32 %v3950, 1.0
    %v3959 = vrcp.pop %v3951
    %v3960 = vrcp.pop %v3952
    %v3961 = vrcp.pop %v3953
    %v3962 = vrcp.pop %v3954
    %v3963 = vrcp.pop %v3955
    %v3964 = vrcp.pop %v3956
    %v3965 = vrcp.pop %v3957
    %v3966 = vrcp.pop %v3958
    %v3967 = vmul.f32 %v3959, 1.0614054
    %v3968 = vmul.f32 %v3960, 1.0614054
    %v3969 = vmul.f32 %v3961, 1.0614054
    %v3970 = vmul.f32 %v3962, 1.0614054
    %v3971 = vmul.f32 %v3963, 1.0614054
    %v3972 = vmul.f32 %v3964, 1.0614054
    %v3973 = vmul.f32 %v3965, 1.0614054
    %v3974 = vmul.f32 %v3966, 1.0614054
    %v3975 = vadd.f32 %v3967, -1.4531521
    %v3976 = vadd.f32 %v3968, -1.4531521
    %v3977 = vadd.f32 %v3969, -1.4531521
    %v3978 = vadd.f32 %v3970, -1.4531521
    %v3979 = vadd.f32 %v3971, -1.4531521
    %v3980 = vadd.f32 %v3972, -1.4531521
    %v3981 = vadd.f32 %v3973, -1.4531521
    %v3982 = vadd.f32 %v3974, -1.4531521
    %v3983 = vmul.f32 %v3975, %v3959
    %v3984 = vmul.f32 %v3976, %v3960
    %v3985 = vmul.f32 %v3977, %v3961
    %v3986 = vmul.f32 %v3978, %v3962
    %v3987 = vmul.f32 %v3979, %v3963
    %v3988 = vmul.f32 %v3980, %v3964
    %v3989 = vmul.f32 %v3981, %v3965
    %v3990 = vmul.f32 %v3982, %v3966
    %v3991 = vadd.f32 %v3983, 1.4214138
    %v3992 = vadd.f32 %v3984, 1.4214138
    %v3993 = vadd.f32 %v3985, 1.4214138
    %v3994 = vadd.f32 %v3986, 1.4214138
    %v3995 = vadd.f32 %v3987, 1.4214138
    %v3996 = vadd.f32 %v3988, 1.4214138
    %v3997 = vadd.f32 %v3989, 1.4214138
    %v3998 = vadd.f32 %v3990, 1.4214138
    %v3999 = vmul.f32 %v3991, %v3959
    %v4000 = vmul.f32 %v3992, %v3960
    %v4001 = vmul.f32 %v3993, %v3961
    %v4002 = vmul.f32 %v3994, %v3962
    %v4003 = vmul.f32 %v3995, %v3963
    %v4004 = vmul.f32 %v3996, %v3964
    %v4005 = vmul.f32 %v3997, %v3965
    %v4006 = vmul.f32 %v3998, %v3966
    %v4007 = vadd.f32 %v3999, -0.28449672
    %v4008 = vadd.f32 %v4000, -0.28449672
    %v4009 = vadd.f32 %v4001, -0.28449672
    %v4010 = vadd.f32 %v4002, -0.28449672
    %v4011 = vadd.f32 %v4003, -0.28449672
    %v4012 = vadd.f32 %v4004, -0.28449672
    %v4013 = vadd.f32 %v4005, -0.28449672
    %v4014 = vadd.f32 %v4006, -0.28449672
    %v4015 = vmul.f32 %v4007, %v3959
    %v4016 = vmul.f32 %v4008, %v3960
    %v4017 = vmul.f32 %v4009, %v3961
    %v4018 = vmul.f32 %v4010, %v3962
    %v4019 = vmul.f32 %v4011, %v3963
    %v4020 = vmul.f32 %v4012, %v3964
    %v4021 = vmul.f32 %v4013, %v3965
    %v4022 = vmul.f32 %v4014, %v3966
    %v4023 = vadd.f32 %v4015, 0.2548296
    %v4024 = vadd.f32 %v4016, 0.2548296
    %v4025 = vadd.f32 %v4017, 0.2548296
    %v4026 = vadd.f32 %v4018, 0.2548296
    %v4027 = vadd.f32 %v4019, 0.2548296
    %v4028 = vadd.f32 %v4020, 0.2548296
    %v4029 = vadd.f32 %v4021, 0.2548296
    %v4030 = vadd.f32 %v4022, 0.2548296
    %v4031 = vmul.f32 %v4023, %v3959
    %v4032 = vmul.f32 %v4024, %v3960
    %v4033 = vmul.f32 %v4025, %v3961
    %v4034 = vmul.f32 %v4026, %v3962
    %v4035 = vmul.f32 %v4027, %v3963
    %v4036 = vmul.f32 %v4028, %v3964
    %v4037 = vmul.f32 %v4029, %v3965
    %v4038 = vmul.f32 %v4030, %v3966
    %v4039 = vsub.f32 0.0, %v3935
    %v4040 = vsub.f32 0.0, %v3936
    %v4041 = vsub.f32 0.0, %v3937
    %v4042 = vsub.f32 0.0, %v3938
    %v4043 = vsub.f32 0.0, %v3939
    %v4044 = vsub.f32 0.0, %v3940
    %v4045 = vsub.f32 0.0, %v3941
    %v4046 = vsub.f32 0.0, %v3942
    %v4047 = vmul.f32 %v4039, %v3935
    %v4048 = vmul.f32 %v4040, %v3936
    %v4049 = vmul.f32 %v4041, %v3937
    %v4050 = vmul.f32 %v4042, %v3938
    %v4051 = vmul.f32 %v4043, %v3939
    %v4052 = vmul.f32 %v4044, %v3940
    %v4053 = vmul.f32 %v4045, %v3941
    %v4054 = vmul.f32 %v4046, %v3942
    %v4055 = vmul.f32 %v4047, 1.442695
    %v4056 = vpow.pop %v4055
    %v4057 = vmul.f32 %v4048, 1.442695
    %v4058 = vpow.pop %v4057
    %v4059 = vmul.f32 %v4049, 1.442695
    %v4060 = vpow.pop %v4059
    %v4061 = vmul.f32 %v4050, 1.442695
    %v4062 = vpow.pop %v4061
    %v4063 = vmul.f32 %v4051, 1.442695
    %v4064 = vpow.pop %v4063
    %v4065 = vmul.f32 %v4052, 1.442695
    %v4066 = vpow.pop %v4065
    %v4067 = vmul.f32 %v4053, 1.442695
    %v4068 = vpow.pop %v4067
    %v4069 = vmul.f32 %v4054, 1.442695
    %v4070 = vpow.pop %v4069
    %v4071 = vmul.f32 %v4031, %v4056
    %v4072 = vmul.f32 %v4032, %v4058
    %v4073 = vmul.f32 %v4033, %v4060
    %v4074 = vmul.f32 %v4034, %v4062
    %v4075 = vmul.f32 %v4035, %v4064
    %v4076 = vmul.f32 %v4036, %v4066
    %v4077 = vmul.f32 %v4037, %v4068
    %v4078 = vmul.f32 %v4038, %v4070
    %v4079 = vsub.f32 1.0, %v4071
    %v4080 = vsub.f32 1.0, %v4072
    %v4081 = vsub.f32 1.0, %v4073
    %v4082 = vsub.f32 1.0, %v4074
    %v4083 = vsub.f32 1.0, %v4075
    %v4084 = vsub.f32 1.0, %v4076
    %v4085 = vsub.f32 1.0, %v4077
    %v4086 = vsub.f32 1.0, %v4078
    %v4087 = vmul.f32 %v3927, %v4079
    %v4088 = vmul.f32 %v3928, %v4080
    %v4089 = vmul.f32 %v3929, %v4081
    %v4090 = vmul.f32 %v3930, %v4082
    %v4091 = vmul.f32 %v3931, %v4083
    %v4092 = vmul.f32 %v3932, %v4084
    %v4093 = vmul.f32 %v3933, %v4085
    %v4094 = vmul.f32 %v3934, %v4086
    %v4095 = vadd.f32 %v4087, 1.0
    %v4096 = vadd.f32 %v4088, 1.0
    %v4097 = vadd.f32 %v4089, 1.0
    %v4098 = vadd.f32 %v4090, 1.0
    %v4099 = vadd.f32 %v4091, 1.0
    %v4100 = vadd.f32 %v4092, 1.0
    %v4101 = vadd.f32 %v4093, 1.0
    %v4102 = vadd.f32 %v4094, 1.0
    %v4103 = vmul.f32 %v3903, %v4095
    %v4104 = vmul.f32 %v3904, %v4096
    %v4105 = vmul.f32 %v3905, %v4097
    %v4106 = vmul.f32 %v3906, %v4098
    %v4107 = vmul.f32 %v3907, %v4099
    %v4108 = vmul.f32 %v3908, %v4100
    %v4109 = vmul.f32 %v3909, %v4101
    %v4110 = vmul.f32 %v3910, %v4102
    %4111 = vset.pattern.permute.xlu0 81
    %4112 = vperm.xlu0 %4111, %v75
    %v4113 = vpop.permute.xlu0 %4112
    %4115 = vrot.lane.b32.xlu0 %v75, 63
    %v4116 = vpop.permute.xlu0 %4115
    %v4117 = vsel %vm92, %v4116, 0
    %4119 = vmatprep.subr.mxu0 %v4104
    %4120 = vmatpush1.msra.mxu0 %v4103
    %4121 = vmatprep.subr.mxu0 %v4108
    %4122 = vmatpush1.msra.mxu0 %v4107
    %4123 = vmatprep.subr.mxu0 0.0
    %4124 = vmatpush1.msra.mxu0 0.0
    %4125 = vmatprep.subr.mxu0 0.0
    %4126 = vmatpush1.msra.mxu0 0.0
    %4127 = vmatprep.subr.mxu0 0.0
    %4128 = vmatpush1.msra.mxu0 0.0
    %4129 = vmatprep.subr.mxu0 0.0
    %4130 = vmatpush1.msra.mxu0 0.0
    %4131 = vmatprep.subr.mxu0 0.0
    %4132 = vmatpush1.msra.mxu0 0.0
    %4133 = vmatprep.subr.mxu0 0.0
    %4134 = vmatpush1.msra.mxu0 0.0
    %4135 = vmatprep.subr.mxu0 0.0
    %4136 = vmatpush1.msra.mxu0 0.0
    %4137 = vmatprep.subr.mxu0 0.0
    %4138 = vmatpush1.msra.mxu0 0.0
    %4139 = vmatprep.subr.mxu0 0.0
    %4140 = vmatpush1.msra.mxu0 0.0
    %4141 = vmatprep.subr.mxu0 0.0
    %4142 = vmatpush1.msra.mxu0 0.0
    %4143 = vmatprep.subr.mxu0 0.0
    %4144 = vmatpush1.msra.mxu0 0.0
    %4145 = vmatprep.subr.mxu0 0.0
    %4146 = vmatpush1.msra.mxu0 0.0
    %4147 = vmatprep.subr.mxu0 0.0
    %4148 = vmatpush1.msra.mxu0 0.0
    %4149 = vmatprep.subr.mxu0 0.0
    %4150 = vmatpush1.msra.mxu0 0.0
    %4151 = vmatprep.subr.mxu0 0.0
    %4152 = vmatpush1.msra.mxu0 0.0
    %4153 = vmatprep.subr.mxu0 0.0
    %4154 = vmatpush1.msra.mxu0 0.0
    %4155 = vmatprep.subr.mxu0 0.0
    %4156 = vmatpush1.msra.mxu0 0.0
    %4157 = vmatprep.subr.mxu0 0.0
    %4158 = vmatpush1.msra.mxu0 0.0
    %4159 = vmatprep.subr.mxu0 0.0
    %4160 = vmatpush1.msra.mxu0 0.0
    %4161 = vmatprep.subr.mxu0 0.0
    %4162 = vmatpush1.msra.mxu0 0.0
    %4163 = vmatprep.subr.mxu0 0.0
    %4164 = vmatpush1.msra.mxu0 0.0
    %4165 = vmatprep.subr.mxu0 0.0
    %4166 = vmatpush1.msra.mxu0 0.0
    %4167 = vmatprep.subr.mxu0 0.0
    %4168 = vmatpush1.msra.mxu0 0.0
    %4169 = vmatprep.subr.mxu0 0.0
    %4170 = vmatpush1.msra.mxu0 0.0
    %4171 = vmatprep.subr.mxu0 0.0
    %4172 = vmatpush1.msra.mxu0 0.0
    %4173 = vmatprep.subr.mxu0 0.0
    %4174 = vmatpush1.msra.mxu0 0.0
    %4175 = vmatprep.subr.mxu0 0.0
    %4176 = vmatpush1.msra.mxu0 0.0
    %4177 = vmatprep.subr.mxu0 0.0
    %4178 = vmatpush1.msra.mxu0 0.0
    %4179 = vmatprep.subr.mxu0 0.0
    %4180 = vmatpush1.msra.mxu0 0.0
    %4181 = vmatprep.subr.mxu0 0.0
    %4182 = vmatpush1.msra.mxu0 0.0
    %4183 = vmatprep.mubr.f32.mxu0 0.0
    %4184 = vmatmul.mubr.f32.gmra.mrb[0].mxu0 %v4117
    %v4185 = vpop.f32.mrb[0].mxu0
    %v4186 = vadd.f32 %v4113, %v4185
    %v4187 = vpop.f32.mrb[0].mxu0
    %v4188 = vadd.f32 %v4113, %v4187
    %4189 = vdwg.mxu0
    %4190 = vmatprep.subr.mxu0 %v4106
    %4191 = vmatpush1.msra.mxu0 %v4105
    %4192 = vmatprep.subr.mxu0 %v4110
    %4193 = vmatpush1.msra.mxu0 %v4109
    %4194 = vmatprep.subr.mxu0 0.0
    %4195 = vmatpush1.msra.mxu0 0.0
    %4196 = vmatprep.subr.mxu0 0.0
    %4197 = vmatpush1.msra.mxu0 0.0
    %4198 = vmatprep.subr.mxu0 0.0
    %4199 = vmatpush1.msra.mxu0 0.0
    %4200 = vmatprep.subr.mxu0 0.0
    %4201 = vmatpush1.msra.mxu0 0.0
    %4202 = vmatprep.subr.mxu0 0.0
    %4203 = vmatpush1.msra.mxu0 0.0
    %4204 = vmatprep.subr.mxu0 0.0
    %4205 = vmatpush1.msra.mxu0 0.0
    %4206 = vmatprep.subr.mxu0 0.0
    %4207 = vmatpush1.msra.mxu0 0.0
    %4208 = vmatprep.subr.mxu0 0.0
    %4209 = vmatpush1.msra.mxu0 0.0
    %4210 = vmatprep.subr.mxu0 0.0
    %4211 = vmatpush1.msra.mxu0 0.0
    %4212 = vmatprep.subr.mxu0 0.0
    %4213 = vmatpush1.msra.mxu0 0.0
    %4214 = vmatprep.subr.mxu0 0.0
    %4215 = vmatpush1.msra.mxu0 0.0
    %4216 = vmatprep.subr.mxu0 0.0
    %4217 = vmatpush1.msra.mxu0 0.0
    %4218 = vmatprep.subr.mxu0 0.0
    %4219 = vmatpush1.msra.mxu0 0.0
    %4220 = vmatprep.subr.mxu0 0.0
    %4221 = vmatpush1.msra.mxu0 0.0
    %4222 = vmatprep.subr.mxu0 0.0
    %4223 = vmatpush1.msra.mxu0 0.0
    %4224 = vmatprep.subr.mxu0 0.0
    %4225 = vmatpush1.msra.mxu0 0.0
    %4226 = vmatprep.subr.mxu0 0.0
    %4227 = vmatpush1.msra.mxu0 0.0
    %4228 = vmatprep.subr.mxu0 0.0
    %4229 = vmatpush1.msra.mxu0 0.0
    %4230 = vmatprep.subr.mxu0 0.0
    %4231 = vmatpush1.msra.mxu0 0.0
    %4232 = vmatprep.subr.mxu0 0.0
    %4233 = vmatpush1.msra.mxu0 0.0
    %4234 = vmatprep.subr.mxu0 0.0
    %4235 = vmatpush1.msra.mxu0 0.0
    %4236 = vmatprep.subr.mxu0 0.0
    %4237 = vmatpush1.msra.mxu0 0.0
    %4238 = vmatprep.subr.mxu0 0.0
    %4239 = vmatpush1.msra.mxu0 0.0
    %4240 = vmatprep.subr.mxu0 0.0
    %4241 = vmatpush1.msra.mxu0 0.0
    %4242 = vmatprep.subr.mxu0 0.0
    %4243 = vmatpush1.msra.mxu0 0.0
    %4244 = vmatprep.subr.mxu0 0.0
    %4245 = vmatpush1.msra.mxu0 0.0
    %4246 = vmatprep.subr.mxu0 0.0
    %4247 = vmatpush1.msra.mxu0 0.0
    %4248 = vmatprep.subr.mxu0 0.0
    %4249 = vmatpush1.msra.mxu0 0.0
    %4250 = vmatprep.subr.mxu0 0.0
    %4251 = vmatpush1.msra.mxu0 0.0
    %4252 = vmatprep.subr.mxu0 0.0
    %4253 = vmatpush1.msra.mxu0 0.0
    %4254 = vmatprep.mubr.f32.mxu0 0.0
    %4255 = vmatmul.mubr.f32.gmra.mrb[0].mxu0 %v4117
    %v4256 = vpop.f32.mrb[0].mxu0
    %v4257 = vadd.f32 %v4113, %v4256
    %v4258 = vpop.f32.mrb[0].mxu0
    %v4259 = vadd.f32 %v4113, %v4258
    %4260 = vdwg.mxu0
    %v4261 = vadd.f32 %v4186, %v4188
    %4262 = vadd.xlane.f32.xlu0 %v4261
    %v4263 = vpop.xlane.xlu0 %4262
    %v4264 = vmul.f32 %v4263, %v2158
    %v4265 = vrot.slane %v4264, 4
    %v4266 = vadd.f32 %v4264, %v4265
    %v4267 = vrot.slane %v4266, 2
    %v4268 = vadd.f32 %v4266, %v4267
    %v4269 = vrot.slane %v4268, 1
    %v4270 = vadd.f32 %v4268, %v4269
    %v4271 = vmul.f32 %v2158, %v4270
    %v4272 = vadd.f32 %v4271, 0.0
    %v4273 = vmul.f32 %v4263, %v2162
    %v4274 = vrot.slane %v4273, 4
    %v4275 = vadd.f32 %v4273, %v4274
    %v4276 = vrot.slane %v4275, 2
    %v4277 = vadd.f32 %v4275, %v4276
    %v4278 = vrot.slane %v4277, 1
    %v4279 = vadd.f32 %v4277, %v4278
    %v4280 = vmul.f32 %v2162, %v4279
    %v4281 = vadd.f32 %v4272, %v4280
    %v4282 = vmul.f32 %v4263, %v2167
    %v4283 = vrot.slane %v4282, 4
    %v4284 = vadd.f32 %v4282, %v4283
    %v4285 = vrot.slane %v4284, 2
    %v4286 = vadd.f32 %v4284, %v4285
    %v4287 = vrot.slane %v4286, 1
    %v4288 = vadd.f32 %v4286, %v4287
    %v4289 = vmul.f32 %v2167, %v4288
    %v4290 = vadd.f32 %v4281, %v4289
    %v4291 = vmul.f32 %v4263, %v2172
    %v4292 = vrot.slane %v4291, 4
    %v4293 = vadd.f32 %v4291, %v4292
    %v4294 = vrot.slane %v4293, 2
    %v4295 = vadd.f32 %v4293, %v4294
    %v4296 = vrot.slane %v4295, 1
    %v4297 = vadd.f32 %v4295, %v4296
    %v4298 = vmul.f32 %v2172, %v4297
    %v4299 = vadd.f32 %v4290, %v4298
    %v4300 = vmul.f32 %v4299, 0.001953125
    %v4301 = vsub.f32 %v4186, %v4300
    %v4302 = vsub.f32 %v4188, %v4300
    %v4303 = vmul.f32 %v4301, %v4301
    %v4304 = vmul.f32 %v4302, %v4302
    %v4305 = vadd.f32 %v4303, %v4304
    %4306 = vadd.xlane.f32.xlu0 %v4305
    %v4307 = vpop.xlane.xlu0 %4306
    %v4308 = vmul.f32 %v4307, %v2158
    %v4309 = vrot.slane %v4308, 4
    %v4310 = vadd.f32 %v4308, %v4309
    %v4311 = vrot.slane %v4310, 2
    %v4312 = vadd.f32 %v4310, %v4311
    %v4313 = vrot.slane %v4312, 1
    %v4314 = vadd.f32 %v4312, %v4313
    %v4315 = vmul.f32 %v2158, %v4314
    %v4316 = vadd.f32 %v4315, 0.0
    %v4317 = vmul.f32 %v4307, %v2162
    %v4318 = vrot.slane %v4317, 4
    %v4319 = vadd.f32 %v4317, %v4318
    %v4320 = vrot.slane %v4319, 2
    %v4321 = vadd.f32 %v4319, %v4320
    %v4322 = vrot.slane %v4321, 1
    %v4323 = vadd.f32 %v4321, %v4322
    %v4324 = vmul.f32 %v2162, %v4323
    %v4325 = vadd.f32 %v4316, %v4324
    %v4326 = vmul.f32 %v4307, %v2167
    %v4327 = vrot.slane %v4326, 4
    %v4328 = vadd.f32 %v4326, %v4327
    %v4329 = vrot.slane %v4328, 2
    %v4330 = vadd.f32 %v4328, %v4329
    %v4331 = vrot.slane %v4330, 1
    %v4332 = vadd.f32 %v4330, %v4331
    %v4333 = vmul.f32 %v2167, %v4332
    %v4334 = vadd.f32 %v4325, %v4333
    %v4335 = vmul.f32 %v4307, %v2172
    %v4336 = vrot.slane %v4335, 4
    %v4337 = vadd.f32 %v4335, %v4336
    %v4338 = vrot.slane %v4337, 2
    %v4339 = vadd.f32 %v4337, %v4338
    %v4340 = vrot.slane %v4339, 1
    %v4341 = vadd.f32 %v4339, %v4340
    %v4342 = vmul.f32 %v2172, %v4341
    %v4343 = vadd.f32 %v4334, %v4342
    %v4344 = vmul.f32 %v4343, 0.001953125
    %v4345 = vadd.f32 %v4344, 1e-05
    %v4346 = vrsqrt.pop %v4345
    %v4347 = vmul.f32 %v4301, %v4346
    %v4348 = vmul.f32 %v4302, %v4346
    %v4349 = vadd.f32 %v4257, %v4259
    %4350 = vadd.xlane.f32.xlu0 %v4349
    %v4351 = vpop.xlane.xlu0 %4350
    %v4352 = vmul.f32 %v4351, %v2158
    %v4353 = vrot.slane %v4352, 4
    %v4354 = vadd.f32 %v4352, %v4353
    %v4355 = vrot.slane %v4354, 2
    %v4356 = vadd.f32 %v4354, %v4355
    %v4357 = vrot.slane %v4356, 1
    %v4358 = vadd.f32 %v4356, %v4357
    %v4359 = vmul.f32 %v2158, %v4358
    %v4360 = vadd.f32 %v4359, 0.0
    %v4361 = vmul.f32 %v4351, %v2162
    %v4362 = vrot.slane %v4361, 4
    %v4363 = vadd.f32 %v4361, %v4362
    %v4364 = vrot.slane %v4363, 2
    %v4365 = vadd.f32 %v4363, %v4364
    %v4366 = vrot.slane %v4365, 1
    %v4367 = vadd.f32 %v4365, %v4366
    %v4368 = vmul.f32 %v2162, %v4367
    %v4369 = vadd.f32 %v4360, %v4368
    %v4370 = vmul.f32 %v4351, %v2167
    %v4371 = vrot.slane %v4370, 4
    %v4372 = vadd.f32 %v4370, %v4371
    %v4373 = vrot.slane %v4372, 2
    %v4374 = vadd.f32 %v4372, %v4373
    %v4375 = vrot.slane %v4374, 1
    %v4376 = vadd.f32 %v4374, %v4375
    %v4377 = vmul.f32 %v2167, %v4376
    %v4378 = vadd.f32 %v4369, %v4377
    %v4379 = vmul.f32 %v4351, %v2172
    %v4380 = vrot.slane %v4379, 4
    %v4381 = vadd.f32 %v4379, %v4380
    %v4382 = vrot.slane %v4381, 2
    %v4383 = vadd.f32 %v4381, %v4382
    %v4384 = vrot.slane %v4383, 1
    %v4385 = vadd.f32 %v4383, %v4384
    %v4386 = vmul.f32 %v2172, %v4385
    %v4387 = vadd.f32 %v4378, %v4386
    %v4388 = vmul.f32 %v4387, 0.001953125
    %v4389 = vsub.f32 %v4257, %v4388
    %v4390 = vsub.f32 %v4259, %v4388
    %v4391 = vmul.f32 %v4389, %v4389
    %v4392 = vmul.f32 %v4390, %v4390
    %v4393 = vadd.f32 %v4391, %v4392
    %4394 = vadd.xlane.f32.xlu0 %v4393
    %v4395 = vpop.xlane.xlu0 %4394
    %v4396 = vmul.f32 %v4395, %v2158
    %v4397 = vrot.slane %v4396, 4
    %v4398 = vadd.f32 %v4396, %v4397
    %v4399 = vrot.slane %v4398, 2
    %v4400 = vadd.f32 %v4398, %v4399
    %v4401 = vrot.slane %v4400, 1
    %v4402 = vadd.f32 %v4400, %v4401
    %v4403 = vmul.f32 %v2158, %v4402
    %v4404 = vadd.f32 %v4403, 0.0
    %v4405 = vmul.f32 %v4395, %v2162
    %v4406 = vrot.slane %v4405, 4
    %v4407 = vadd.f32 %v4405, %v4406
    %v4408 = vrot.slane %v4407, 2
    %v4409 = vadd.f32 %v4407, %v4408
    %v4410 = vrot.slane %v4409, 1
    %v4411 = vadd.f32 %v4409, %v4410
    %v4412 = vmul.f32 %v2162, %v4411
    %v4413 = vadd.f32 %v4404, %v4412
    %v4414 = vmul.f32 %v4395, %v2167
    %v4415 = vrot.slane %v4414, 4
    %v4416 = vadd.f32 %v4414, %v4415
    %v4417 = vrot.slane %v4416, 2
    %v4418 = vadd.f32 %v4416, %v4417
    %v4419 = vrot.slane %v4418, 1
    %v4420 = vadd.f32 %v4418, %v4419
    %v4421 = vmul.f32 %v2167, %v4420
    %v4422 = vadd.f32 %v4413, %v4421
    %v4423 = vmul.f32 %v4395, %v2172
    %v4424 = vrot.slane %v4423, 4
    %v4425 = vadd.f32 %v4423, %v4424
    %v4426 = vrot.slane %v4425, 2
    %v4427 = vadd.f32 %v4425, %v4426
    %v4428 = vrot.slane %v4427, 1
    %v4429 = vadd.f32 %v4427, %v4428
    %v4430 = vmul.f32 %v2172, %v4429
    %v4431 = vadd.f32 %v4422, %v4430
    %v4432 = vmul.f32 %v4431, 0.001953125
    %v4433 = vadd.f32 %v4432, 1e-05
    %v4434 = vrsqrt.pop %v4433
    %v4435 = vmul.f32 %v4389, %v4434
    %v4436 = vmul.f32 %v4390, %v4434
    %4437 = vset.pattern.permute.xlu0 82
    %4438 = vperm.xlu0 %4437, %v75
    %v4439 = vpop.permute.xlu0 %4438
    %v4441 = vmul.f32 %v4347, %v4439
    %v4442 = vmul.f32 %v4348, %v4439
    %v4443 = vmul.f32 %v4435, %v4439
    %v4444 = vmul.f32 %v4436, %v4439
    %4445 = vset.pattern.permute.xlu0 83
    %4446 = vperm.xlu0 %4445, %v75
    %v4447 = vpop.permute.xlu0 %4446
    %v4449 = vadd.f32 %v4441, %v4447
    %v4450 = vadd.f32 %v4442, %v4447
    %v4451 = vadd.f32 %v4443, %v4447
    %v4452 = vadd.f32 %v4444, %v4447
    %v4453 = vsub.f32 0.0, %v4449
    %v4454 = vsub.f32 0.0, %v4450
    %v4455 = vsub.f32 0.0, %v4451
    %v4456 = vsub.f32 0.0, %v4452
    %v4457 = vmul.f32 %v4453, 1.442695
    %v4458 = vpow.pop %v4457
    %v4459 = vmul.f32 %v4454, 1.442695
    %v4460 = vpow.pop %v4459
    %v4461 = vmul.f32 %v4455, 1.442695
    %v4462 = vpow.pop %v4461
    %v4463 = vmul.f32 %v4456, 1.442695
    %v4464 = vpow.pop %v4463
    %v4465 = vadd.f32 %v4458, 1.0
    %v4466 = vadd.f32 %v4460, 1.0
    %v4467 = vadd.f32 %v4462, 1.0
    %v4468 = vadd.f32 %v4464, 1.0
    %v4469 = vrcp.pop %v4465
    %v4470 = vrcp.pop %v4466
    %v4471 = vrcp.pop %v4467
    %v4472 = vrcp.pop %v4468
    %v4473 = vmul.f32 %v4449, %v4469
    %v4474 = vmul.f32 %v4450, %v4470
    %v4475 = vmul.f32 %v4451, %v4471
    %v4476 = vmul.f32 %v4452, %v4472
    %4477 = vset.pattern.permute.xlu0 88
    %4478 = vperm.xlu0 %4477, %v75
    %v4479 = vpop.permute.xlu0 %4478
    %4481 = vrot.lane.b32.xlu0 %v75, 44
    %v4482 = vpop.permute.xlu0 %4481
    %v4483 = vsel %vm1743, %v4482, 0
    %v4485 = vsel %vm1640, %v77, 0
    %v4487 = vsel %vm1640, %v168, 0
    %v4489 = vsel %vm1640, %v78, 0
    %v4491 = vsel %vm1640, %v169, 0
    %4493 = vmatprep.subr.mxu0 %v4487
    %4494 = vmatpush1.msra.mxu0 %v4485
    %4495 = vmatprep.subr.mxu0 0.0
    %4496 = vmatpush1.msra.mxu0 0.0
    %4497 = vmatprep.subr.mxu0 0.0
    %4498 = vmatpush1.msra.mxu0 0.0
    %4499 = vmatprep.subr.mxu0 0.0
    %4500 = vmatpush1.msra.mxu0 0.0
    %4501 = vmatprep.subr.mxu0 0.0
    %4502 = vmatpush1.msra.mxu0 0.0
    %4503 = vmatprep.subr.mxu0 0.0
    %4504 = vmatpush1.msra.mxu0 0.0
    %4505 = vmatprep.subr.mxu0 0.0
    %4506 = vmatpush1.msra.mxu0 0.0
    %4507 = vmatprep.subr.mxu0 0.0
    %4508 = vmatpush1.msra.mxu0 0.0
    %4509 = vmatprep.subr.mxu0 0.0
    %4510 = vmatpush1.msra.mxu0 0.0
    %4511 = vmatprep.subr.mxu0 0.0
    %4512 = vmatpush1.msra.mxu0 0.0
    %4513 = vmatprep.subr.mxu0 0.0
    %4514 = vmatpush1.msra.mxu0 0.0
    %4515 = vmatprep.subr.mxu0 0.0
    %4516 = vmatpush1.msra.mxu0 0.0
    %4517 = vmatprep.subr.mxu0 0.0
    %4518 = vmatpush1.msra.mxu0 0.0
    %4519 = vmatprep.subr.mxu0 0.0
    %4520 = vmatpush1.msra.mxu0 0.0
    %4521 = vmatprep.subr.mxu0 0.0
    %4522 = vmatpush1.msra.mxu0 0.0
    %4523 = vmatprep.subr.mxu0 0.0
    %4524 = vmatpush1.msra.mxu0 0.0
    %4525 = vmatprep.subr.mxu0 0.0
    %4526 = vmatpush1.msra.mxu0 0.0
    %4527 = vmatprep.subr.mxu0 0.0
    %4528 = vmatpush1.msra.mxu0 0.0
    %4529 = vmatprep.subr.mxu0 0.0
    %4530 = vmatpush1.msra.mxu0 0.0
    %4531 = vmatprep.subr.mxu0 0.0
    %4532 = vmatpush1.msra.mxu0 0.0
    %4533 = vmatprep.subr.mxu0 0.0
    %4534 = vmatpush1.msra.mxu0 0.0
    %4535 = vmatprep.subr.mxu0 0.0
    %4536 = vmatpush1.msra.mxu0 0.0
    %4537 = vmatprep.subr.mxu0 0.0
    %4538 = vmatpush1.msra.mxu0 0.0
    %4539 = vmatprep.subr.mxu0 0.0
    %4540 = vmatpush1.msra.mxu0 0.0
    %4541 = vmatprep.subr.mxu0 0.0
    %4542 = vmatpush1.msra.mxu0 0.0
    %4543 = vmatprep.subr.mxu0 0.0
    %4544 = vmatpush1.msra.mxu0 0.0
    %4545 = vmatprep.subr.mxu0 0.0
    %4546 = vmatpush1.msra.mxu0 0.0
    %4547 = vmatprep.subr.mxu0 0.0
    %4548 = vmatpush1.msra.mxu0 0.0
    %4549 = vmatprep.subr.mxu0 0.0
    %4550 = vmatpush1.msra.mxu0 0.0
    %4551 = vmatprep.subr.mxu0 0.0
    %4552 = vmatpush1.msra.mxu0 0.0
    %4553 = vmatprep.subr.mxu0 0.0
    %4554 = vmatpush1.msra.mxu0 0.0
    %4555 = vmatprep.subr.mxu0 0.0
    %4556 = vmatpush1.msra.mxu0 0.0
    %4557 = vmatprep.mubr.f32.mxu0 0.0
    %4558 = vmatmul.mubr.f32.gmra.mrb[0].mxu0 %v4483
    %v4559 = vpop.f32.mrb[0].mxu0
    %v4560 = vadd.f32 %v4479, %v4559
    %v4561 = vpop.f32.mrb[0].mxu0
    %v4562 = vadd.f32 %v4479, %v4561
    %4563 = vdwg.mxu0
    %4564 = vmatprep.subr.mxu0 %v4491
    %4565 = vmatpush1.msra.mxu0 %v4489
    %4566 = vmatprep.subr.mxu0 0.0
    %4567 = vmatpush1.msra.mxu0 0.0
    %4568 = vmatprep.subr.mxu0 0.0
    %4569 = vmatpush1.msra.mxu0 0.0
    %4570 = vmatprep.subr.mxu0 0.0
    %4571 = vmatpush1.msra.mxu0 0.0
    %4572 = vmatprep.subr.mxu0 0.0
    %4573 = vmatpush1.msra.mxu0 0.0
    %4574 = vmatprep.subr.mxu0 0.0
    %4575 = vmatpush1.msra.mxu0 0.0
    %4576 = vmatprep.subr.mxu0 0.0
    %4577 = vmatpush1.msra.mxu0 0.0
    %4578 = vmatprep.subr.mxu0 0.0
    %4579 = vmatpush1.msra.mxu0 0.0
    %4580 = vmatprep.subr.mxu0 0.0
    %4581 = vmatpush1.msra.mxu0 0.0
    %4582 = vmatprep.subr.mxu0 0.0
    %4583 = vmatpush1.msra.mxu0 0.0
    %4584 = vmatprep.subr.mxu0 0.0
    %4585 = vmatpush1.msra.mxu0 0.0
    %4586 = vmatprep.subr.mxu0 0.0
    %4587 = vmatpush1.msra.mxu0 0.0
    %4588 = vmatprep.subr.mxu0 0.0
    %4589 = vmatpush1.msra.mxu0 0.0
    %4590 = vmatprep.subr.mxu0 0.0
    %4591 = vmatpush1.msra.mxu0 0.0
    %4592 = vmatprep.subr.mxu0 0.0
    %4593 = vmatpush1.msra.mxu0 0.0
    %4594 = vmatprep.subr.mxu0 0.0
    %4595 = vmatpush1.msra.mxu0 0.0
    %4596 = vmatprep.subr.mxu0 0.0
    %4597 = vmatpush1.msra.mxu0 0.0
    %4598 = vmatprep.subr.mxu0 0.0
    %4599 = vmatpush1.msra.mxu0 0.0
    %4600 = vmatprep.subr.mxu0 0.0
    %4601 = vmatpush1.msra.mxu0 0.0
    %4602 = vmatprep.subr.mxu0 0.0
    %4603 = vmatpush1.msra.mxu0 0.0
    %4604 = vmatprep.subr.mxu0 0.0
    %4605 = vmatpush1.msra.mxu0 0.0
    %4606 = vmatprep.subr.mxu0 0.0
    %4607 = vmatpush1.msra.mxu0 0.0
    %4608 = vmatprep.subr.mxu0 0.0
    %4609 = vmatpush1.msra.mxu0 0.0
    %4610 = vmatprep.subr.mxu0 0.0
    %4611 = vmatpush1.msra.mxu0 0.0
    %4612 = vmatprep.subr.mxu0 0.0
    %4613 = vmatpush1.msra.mxu0 0.0
    %4614 = vmatprep.subr.mxu0 0.0
    %4615 = vmatpush1.msra.mxu0 0.0
    %4616 = vmatprep.subr.mxu0 0.0
    %4617 = vmatpush1.msra.mxu0 0.0
    %4618 = vmatprep.subr.mxu0 0.0
    %4619 = vmatpush1.msra.mxu0 0.0
    %4620 = vmatprep.subr.mxu0 0.0
    %4621 = vmatpush1.msra.mxu0 0.0
    %4622 = vmatprep.subr.mxu0 0.0
    %4623 = vmatpush1.msra.mxu0 0.0
    %4624 = vmatprep.subr.mxu0 0.0
    %4625 = vmatpush1.msra.mxu0 0.0
    %4626 = vmatprep.subr.mxu0 0.0
    %4627 = vmatpush1.msra.mxu0 0.0
    %4628 = vmatprep.mubr.f32.mxu0 0.0
    %4629 = vmatmul.mubr.f32.gmra.mrb[0].mxu0 %v4483
    %v4630 = vpop.f32.mrb[0].mxu0
    %v4631 = vadd.f32 %v4479, %v4630
    %v4632 = vpop.f32.mrb[0].mxu0
    %v4633 = vadd.f32 %v4479, %v4632
    %4634 = vdwg.mxu0
    %v4635 = vadd.f32 %v4473, %v4560
    %v4636 = vadd.f32 %v4474, %v4562
    %v4637 = vadd.f32 %v4475, %v4631
    %v4638 = vadd.f32 %v4476, %v4633
    %4639 = vst [vmem:[#allocation10] sm:$0xff] %v4635
    %4640 = vst [vmem:[#allocation10 + $0x8] sm:$0xff] %v4636
    %4641 = vst [vmem:[#allocation10 + $0x10] sm:$0xff] %v4637
    %4642 = vst [vmem:[#allocation10 + $0x18] sm:$0xff] %v4638
    // Predicated region
    $region42: #{tpu_custom_call.1} parent=1 // pred_check
      _
    $region43: #{tpu_custom_call.1} parent=1 // pred_check_branch
      %4644 = sbr.rel (0) target = $region45
    $region44: #{tpu_custom_call.1} parent=1 // pred_region
      %s4646 = ssub.s32 512, 512
      %4647 = vsyncadd [#allocation4], %s4646
      %s4649 = sshll.u32 [#allocation10], 4
      %s4650 = int_to_ptr.vmem [resolvable:$true] %s4649
      %4652 = dma.vmem_to_hbm [thread:$0]  %s4650, 512, %s6, [#allocation4]
    $region45: #{tpu_custom_call.1} parent=1 // pred_fallthru
      _
    // Predicated region
    $region46: #{tpu_custom_call.1} parent=1 // pred_check
      _
    $region47: #{tpu_custom_call.1} parent=1 // pred_check_branch
      %4654 = sbr.rel (0) target = $region49
    $region48: #{tpu_custom_call.1} parent=1 // pred_region
      %4655 = dma.done [#allocation4], 512
    $region49: #{tpu_custom_call.1} parent=1 // pred_fallthru
      _
    %4656 = vsyncpa [#allocation3], 1
    %4657 = vsyncpa [#allocation6], 1
    %4658 = vsyncpa [#allocation9], 1
    %4659 = vsyncpa [#allocation4], 1

</llo_original>
